<compile_context>
chip_gen: v5e
topology: v5e:2x2
jax: 0.10.0
libtpu: 0.0.40
codegen_flags: <defaults>
</compile_context>

<pallas_src>
import functools

import jax
import jax.numpy as jnp
from jax.experimental import pallas as pl
from jax.experimental.pallas import tpu as pltpu


# ----------------------------- helpers ------------------------------------

def _round_up(x, m):
    return ((x + m - 1) // m) * m


def _num_tensorcores():
    # v7x has 2 TensorCores/chip that shard "parallel" grid axes; v5e/v6e have 1.
    try:
        kind = jax.devices()[0].device_kind.lower()
    except Exception:
        return 1
    return 2 if ("v7" in kind or "tpu7" in kind) else 1


_NUM_TC = _num_tensorcores()
_TM_CAP = 512 if _NUM_TC >= 2 else 1024
_K_SINGLE_STEP_MAX = 2048        # full-K (no accumulator) fast path up to this K


def _pick_tile(n, cap, mult):
    """Largest tile <= cap that divides n (multiple of `mult` when splitting).
    Falls back to n itself (one oversized tile) when no such divisor exists --
    harmless at the shapes used here; callers assert divisibility."""
    if n <= cap:
        return n
    start = cap - (cap % mult)
    for t in range(start, 0, -mult):
        if n % t == 0:
            return t
    return n


def _pick_tm(M):
    cap = _TM_CAP
    if _NUM_TC >= 2 and M >= 64:
        cap = min(cap, max(8, M // 2))   # >= 2 parallel tiles so both TCs get work
    return _pick_tile(M, cap, 8)


# ------------------- Pallas matmul + bias + activation ---------------------

def _matmul_bias_act_kernel(x_ref, w_ref, b_ref, o_ref, *, act):
    # Single K step: no VMEM accumulator, compute + epilogue + direct store.
    r = jnp.dot(x_ref[...], w_ref[...], preferred_element_type=jnp.float32)
    r = r + b_ref[...]                      # f32 epilogue (v5e-safe)
    if act == "relu":
        r = jnp.maximum(r, 0.0)
    o_ref[...] = r.astype(o_ref.dtype)


def _matmul_bias_act_acc_kernel(x_ref, w_ref, b_ref, o_ref, acc_ref, *, act):
    # Large-K fallback (unused at this model's shapes).
    @pl.when(pl.program_id(1) == 0)
    def _():
        acc_ref[...] = jnp.zeros_like(acc_ref)

    acc_ref[...] += jnp.dot(x_ref[...], w_ref[...],
                            preferred_element_type=jnp.float32)

    @pl.when(pl.program_id(1) == pl.num_programs(1) - 1)
    def _():
        r = acc_ref[...] + b_ref[...]
        if act == "relu":
            r = jnp.maximum(r, 0.0)
        o_ref[...] = r.astype(o_ref.dtype)


def matmul_bias_act(x, w, b, *, act="none", out_dtype=jnp.bfloat16):
    """o = act(x @ w + b).

    x: (M, Kp) bf16 activation (Kp a multiple of 128, zero-padded columns ok)
    w: (Kp, Np) bf16 pre-padded weight (Np a multiple of 128)
    b: (1, Np) f32 pre-padded bias
    """
    M, Kp = x.shape
    Kp2, Np = w.shape
    assert Kp == Kp2 and b.shape == (1, Np)

    tm = _pick_tm(M)
    assert M % tm == 0

    if Kp <= _K_SINGLE_STEP_MAX:
        return pl.pallas_call(
            functools.partial(_matmul_bias_act_kernel, act=act),
            out_shape=jax.ShapeDtypeStruct((M, Np), out_dtype),
            grid_spec=pltpu.PrefetchScalarGridSpec(
                num_scalar_prefetch=0,
                grid=(M // tm,),
                in_specs=[
                    pl.BlockSpec((tm, Kp), lambda i: (i, 0)),
                    pl.BlockSpec((Kp, Np), lambda i: (0, 0)),
                    pl.BlockSpec((1, Np), lambda i: (0, 0)),
                ],
                out_specs=pl.BlockSpec((tm, Np), lambda i: (i, 0)),
            ),
            compiler_params=pltpu.CompilerParams(
                dimension_semantics=("parallel",)),
        )(x, w, b)

    # Fallback: K tiled ("arbitrary") with a VMEM f32 accumulator (P3 pattern).
    tk = _pick_tile(Kp, 2048, 128)
    assert Kp % tk == 0
    return pl.pallas_call(
        functools.partial(_matmul_bias_act_acc_kernel, act=act),
        out_shape=jax.ShapeDtypeStruct((M, Np), out_dtype),
        grid_spec=pltpu.PrefetchScalarGridSpec(
            num_scalar_prefetch=0,
            grid=(M // tm, Kp // tk),
            in_specs=[
                pl.BlockSpec((tm, tk), lambda i, k: (i, k)),
                pl.BlockSpec((tk, Np), lambda i, k: (k, 0)),
                pl.BlockSpec((1, Np), lambda i, k: (0, 0)),
            ],
            out_specs=pl.BlockSpec((tm, Np), lambda i, k: (i, 0)),
            scratch_shapes=[pltpu.VMEM((tm, Np), jnp.float32)],
        ),
        compiler_params=pltpu.CompilerParams(
            dimension_semantics=("parallel", "arbitrary")),
    )(x, w, b)


# -------- fused enc_fc -> chunk -> reparametrize -> dec_fc kernel ----------

def _fc_reparam_fc_kernel(h_ref, wenc_ref, benc_ref, eps_ref, wdec_ref, bdec_ref,
                          mu_ref, lv_ref, hdec_ref, *, e):
    h = h_ref[...]
    # Single (K=4096, N=2E) MXU pass; chunk(2, dim=1) done in-register.
    enc = jnp.dot(h, wenc_ref[...], preferred_element_type=jnp.float32) + benc_ref[...]
    mu = enc[:, :e]
    lv = enc[:, e:]
    z = mu + eps_ref[...] * jnp.exp(0.5 * lv)          # reparametrize (EUP exp)
    hd = jnp.dot(z.astype(jnp.bfloat16), wdec_ref[...],
                 preferred_element_type=jnp.float32) + bdec_ref[...]
    hd = jnp.maximum(hd, 0.0)                          # ReLU after Unflatten
    mu_ref[...] = mu
    lv_ref[...] = lv
    hdec_ref[...] = hd.astype(hdec_ref.dtype)


def fc_reparam_fc(h, wenc, benc, eps, wdec, bdec):
    B = h.shape[0]
    e = wenc.shape[1] // 2
    N2 = wdec.shape[1]
    args = (h, wenc, benc, eps.astype(jnp.float32), wdec, bdec)
    in_specs = [pl.BlockSpec(a.shape, lambda i: (0, 0)) for a in args]
    mu, lv, hd = pl.pallas_call(
        functools.partial(_fc_reparam_fc_kernel, e=e),
        out_shape=(jax.ShapeDtypeStruct((B, e), jnp.float32),
                   jax.ShapeDtypeStruct((B, e), jnp.float32),
                   jax.ShapeDtypeStruct((B, N2), jnp.bfloat16)),
        grid_spec=pltpu.PrefetchScalarGridSpec(
            num_scalar_prefetch=0,
            grid=(1,),
            in_specs=in_specs,
            out_specs=[pl.BlockSpec((B, e), lambda i: (0, 0)),
                       pl.BlockSpec((B, e), lambda i: (0, 0)),
                       pl.BlockSpec((B, N2), lambda i: (0, 0))],
        ),
        compiler_params=pltpu.CompilerParams(
            dimension_semantics=("arbitrary",)),
    )(*args)
    return mu, lv, hd


# ----------------------------- conv lowerings -------------------------------

def _im2col_padded(xp, kh, kw, stride, Ho, Wo, Kp):
    """Strided im2col in (ky, kx, ic) column order; the Kp-K zero columns are
    appended inside the single concatenate (no separate pad pass over HBM)."""
    # TODO(synk): fuse this gather into the matmul's input DMA (allow_input_fusion
    # or in-kernel tap gather) to remove one HBM round trip per conv layer.
    B, _, _, C = xp.shape
    taps = []
    for dy in range(kh):
        for dx in range(kw):
            taps.append(xp[:, dy: dy + stride * (Ho - 1) + 1: stride,
                              dx: dx + stride * (Wo - 1) + 1: stride, :])
    K = kh * kw * C
    if Kp > K:
        taps.append(jnp.zeros((B, Ho, Wo, Kp - K), xp.dtype))
    col = jnp.concatenate(taps, axis=-1)
    return col.reshape(B * Ho * Wo, Kp)


def conv2d(x, layer, *, stride, pad, act, out_dtype=jnp.bfloat16):
    w, b, n = layer["w"], layer["b"], layer["n"]     # pre-padded bf16 / f32
    B, H, W, _ = x.shape
    kh = kw = 3
    Kp, Np = w.shape
    Ho = (H + 2 * pad - kh) // stride + 1
    Wo = (W + 2 * pad - kw) // stride + 1
    xp = jnp.pad(x, ((0, 0), (pad, pad), (pad, pad), (0, 0)))
    col = _im2col_padded(xp, kh, kw, stride, Ho, Wo, Kp)
    y = matmul_bias_act(col, w, b, act=act, out_dtype=out_dtype)
    if Np != n:
        y = y[:, :n]
    return y.reshape(B, Ho, Wo, n)


def conv_transpose2d_s2(x, layer, *, act, out_dtype=jnp.bfloat16):
    """ConvTranspose2d(k=3, s=2, p=1, output_padding=1) via sub-pixel phase
    decomposition: one matmul on the UNDILATED input with a pre-built
    (4*Cin, 4*Cout) phase weight, then interleave the 4 phases."""
    w, b, cout, n4 = layer["w"], layer["b"], layer["cout"], layer["n4"]
    B, H, W, C = x.shape
    xp = jnp.pad(x, ((0, 0), (0, 1), (0, 1), (0, 0)))      # halo on bottom/right
    taps = [xp[:, dy:dy + H, dx:dx + W, :] for dy in (0, 1) for dx in (0, 1)]
    col = jnp.concatenate(taps, axis=-1).reshape(B * H * W, 4 * C)
    y = matmul_bias_act(col, w, b, act=act, out_dtype=out_dtype)
    if y.shape[1] != n4:
        y = y[:, :n4]
    # TODO(synk): the phase de-interleave below is one extra HBM round trip per
    # decoder layer; could be folded into the next layer's tap gather.
    y = y.reshape(B, H, W, 2, 2, cout)                      # (b, m, n, py, px, oc)
    y = jnp.transpose(y, (0, 1, 3, 2, 4, 5)).reshape(B, 2 * H, 2 * W, cout)
    return y


# ----------------------- parameters & weight preprocessing ------------------

def _phase_weight(w_t):
    """(Cin, Cout, 3, 3) ConvTranspose weight -> (4*Cin, 4*Cout) sub-pixel matrix.
    Rows: (tap dy,dx in {0,1}^2, ic); Cols: (phase py,px in {0,1}^2, oc).
    Entry = w_t[ic, oc, py+1-2*dy, px+1-2*dx] when the kernel index is valid else 0."""
    C, O = w_t.shape[0], w_t.shape[1]
    zero = jnp.zeros((C, O), w_t.dtype)
    rows = []
    for dy in (0, 1):
        for dx in (0, 1):
            cols = []
            for py in (0, 1):
                for px in (0, 1):
                    ky = py + 1 - 2 * dy
                    kx = px + 1 - 2 * dx
                    if 0 <= ky <= 2 and 0 <= kx <= 2:
                        cols.append(w_t[:, :, ky, kx])
                    else:
                        cols.append(zero)
            rows.append(jnp.concatenate(cols, axis=1))      # (C, 4*O)
    return jnp.concatenate(rows, axis=0)                    # (4*C, 4*O)


def init_params(key, input_channel, encoding_size):
    keys = iter(jax.random.split(key, 64))

    def conv_w(cin, cout):                    # HWIO for regular conv
        return jax.random.normal(next(keys), (3, 3, cin, cout), jnp.float32) \
            * ((9 * cin) ** -0.5)

    def convt_w(cin, cout):                   # PyTorch ConvT layout (Cin,Cout,kH,kW)
        return jax.random.normal(next(keys), (cin, cout, 3, 3), jnp.float32) \
            * ((9 * cin) ** -0.5)

    def bias(n):
        return jax.random.normal(next(keys), (n,), jnp.float32) * 0.01

    def lin(fin, fout):
        w = jax.random.normal(next(keys), (fin, fout), jnp.float32) * (fin ** -0.5)
        return w, bias(fout)

    p = {}
    p["enc_conv"] = [
        (conv_w(input_channel, 32), bias(32)),
        (conv_w(32, 64), bias(64)),
        (conv_w(64, 128), bias(128)),
        (conv_w(128, 256), bias(256)),
    ]
    p["enc_fc"] = lin(256 * 4 * 4, 2 * encoding_size)
    p["dec_fc"] = lin(encoding_size, 128 * 4 * 4)
    p["dec_convt"] = [
        (convt_w(128, 256), bias(256)),   # stride 1, pad 1
        (convt_w(256, 128), bias(128)),   # stride 2, pad 1, out_pad 1
        (convt_w(128, 64), bias(64)),
        (convt_w(64, 32), bias(32)),
        (convt_w(32, 3), bias(3)),
    ]
    return p


def prepare_params(raw):
    """One-time weight preprocessing (bf16 casts, K/N padding, phase weights,
    bias tiling, stride-1 ConvT kernel flip) hoisted OUT of the traced forward."""
    prep = {}

    enc = []
    for (w_hwio, b) in raw["enc_conv"]:
        kh, kw, cin, cout = w_hwio.shape
        K = kh * kw * cin
        Kp, Np = _round_up(K, 128), _round_up(cout, 128)
        wm = jnp.pad(w_hwio.reshape(K, cout),
                     ((0, Kp - K), (0, Np - cout))).astype(jnp.bfloat16)
        bp = jnp.pad(b, (0, Np - cout)).astype(jnp.float32).reshape(1, Np)
        enc.append(dict(w=wm, b=bp, n=cout))
    prep["enc_conv"] = enc

    wf, bfc = raw["enc_fc"]
    prep["enc_fc"] = dict(w=wf.astype(jnp.bfloat16),
                          b=bfc.astype(jnp.float32).reshape(1, -1))
    wd, bd = raw["dec_fc"]
    prep["dec_fc"] = dict(w=wd.astype(jnp.bfloat16),
                          b=bd.astype(jnp.float32).reshape(1, -1))

    # decoder[0]: ConvTranspose2d(k3,s1,p1) == regular conv with flipped kernel
    w0, b0 = raw["dec_convt"][0]
    cin, cout = w0.shape[0], w0.shape[1]
    w0c = jnp.transpose(w0, (2, 3, 0, 1))[::-1, ::-1, :, :].reshape(9 * cin, cout)
    K = 9 * cin
    Kp, Np = _round_up(K, 128), _round_up(cout, 128)
    prep["dec0"] = dict(
        w=jnp.pad(w0c, ((0, Kp - K), (0, Np - cout))).astype(jnp.bfloat16),
        b=jnp.pad(b0, (0, Np - cout)).astype(jnp.float32).reshape(1, Np),
        n=cout)

    dect = []
    for (w_t, b) in raw["dec_convt"][1:]:
        cout = w_t.shape[1]
        wph = _phase_weight(w_t)                      # (4*Cin, 4*Cout)
        n4 = 4 * cout
        Np = _round_up(n4, 128)
        wph = jnp.pad(wph, ((0, 0), (0, Np - n4))).astype(jnp.bfloat16)
        bph = jnp.pad(jnp.tile(b, 4), (0, Np - n4)).astype(jnp.float32).reshape(1, Np)
        dect.append(dict(w=wph, b=bph, cout=cout, n4=n4))
    prep["dec_convt"] = dect
    return prep


# --------------------------------- forward ----------------------------------

def vae_forward(prep, x, eps):
    """x: (B, 64, 64, C_in) NHWC.  Returns (x_recon NHWC f32, mu, logvar).
    `prep` is closed over (not a traced argument), so its int metadata stays static."""
    h = x.astype(jnp.bfloat16)
    for layer in prep["enc_conv"]:                # 64->32->16->8->4 spatial
        h = conv2d(h, layer, stride=2, pad=1, act="relu")
    B = h.shape[0]
    h = h.reshape(B, -1)                          # Flatten (NHWC order; synthetic weights)

    # fused: enc_fc -> chunk(mu,logvar) -> reparametrize -> dec_fc -> ReLU
    mu, logvar, hdec = fc_reparam_fc(
        h, prep["enc_fc"]["w"], prep["enc_fc"]["b"], eps,
        prep["dec_fc"]["w"], prep["dec_fc"]["b"])

    h = hdec.reshape(B, 4, 4, 128)                # Unflatten
    h = conv2d(h, prep["dec0"], stride=1, pad=1, act="relu")
    n = len(prep["dec_convt"])
    for idx, layer in enumerate(prep["dec_convt"]):
        last = (idx == n - 1)
        h = conv_transpose2d_s2(h, layer, act="none" if last else "relu",
                                out_dtype=jnp.bfloat16)
    # Only the small final tensor is cast to f32 (the padded 128-lane writeback
    # stays bf16 inside the last layer).
    return h.astype(jnp.float32), mu, logvar
    # TODO(synk): decoder2 / ResidualBlock exist in __init__ but are unused by forward().


# --------------------------------- main -------------------------------------

if __name__ == "__main__":
    key = jax.random.PRNGKey(0)
    B, C_in, H, W = 2, 3, 64, 64                  # encoder needs 64x64 -> 4x4 spatial
    encoding_size = 32

    raw = init_params(key, C_in, encoding_size)
    prep = prepare_params(raw)                    # one-time, outside the jitted forward
    jax.block_until_ready(prep)

    x = jax.random.normal(jax.random.fold_in(key, 1), (B, H, W, C_in), jnp.float32)
    eps = jax.random.normal(jax.random.fold_in(key, 2), (B, encoding_size), jnp.float32)

    fwd = jax.jit(lambda xx, ee: vae_forward(prep, xx, ee))
    x_recon, mu, logvar = fwd(x, eps)
    jax.block_until_ready((x_recon, mu, logvar))

    assert x_recon.shape == (B, 64, 64, 3) and x_recon.dtype == jnp.float32
    assert mu.shape == (B, encoding_size) and logvar.shape == (B, encoding_size)
    assert bool(jnp.all(jnp.isfinite(x_recon)))
    assert bool(jnp.all(jnp.isfinite(mu))) and bool(jnp.all(jnp.isfinite(logvar)))
    print("KERNEL_OK")
</pallas_src>

<mosaic_0001>
module attributes {stable_mosaic.version = 11 : i64} {
  func.func @_matmul_bias_act_kernel(%arg0: i32, %arg1: memref<1024x128xbf16, #tpu.memory_space<vmem>>, %arg2: memref<128x128xbf16, #tpu.memory_space<vmem>>, %arg3: memref<1x128xf32, #tpu.memory_space<vmem>>, %arg4: memref<1024x128xbf16, #tpu.memory_space<vmem>>) attributes {dimension_semantics = [#tpu.dimension_semantics<parallel>], iteration_bounds = array<i64: 2>, scalar_prefetch = 0 : i64, scratch_operands = 0 : i64, tpu.core_type = #tpu.core_type<tc>, window_params = [{transform_indices = @transform_0, window_bounds = array<i64: 1024, 128>}, {pipeline_mode = #tpu.pipeline_mode<synchronous>, transform_indices = @transform_1, window_bounds = array<i64: 128, 128>}, {pipeline_mode = #tpu.pipeline_mode<synchronous>, transform_indices = @transform_2, window_bounds = array<i64: 1, 128>}, {transform_indices = @transform_3, window_bounds = array<i64: 1024, 128>}]} {
    %c0 = arith.constant 0 : index
    %c0_0 = arith.constant 0 : index
    %0 = vector.load %arg1[%c0, %c0_0] : memref<1024x128xbf16, #tpu.memory_space<vmem>>, vector<1024x128xbf16>
    %c0_1 = arith.constant 0 : index
    %c0_2 = arith.constant 0 : index
    %1 = vector.load %arg2[%c0_1, %c0_2] : memref<128x128xbf16, #tpu.memory_space<vmem>>, vector<128x128xbf16>
    %cst = arith.constant dense<0.000000e+00> : vector<1024x128xf32>
    %2 = tpu.matmul %0, %1, %cst {dimension_numbers = #tpu.dot_dimension_numbers<[1], [0], [0], [1], [0, 0, 1, 1], [], []>} : vector<1024x128xbf16>, vector<128x128xbf16>, vector<1024x128xf32> -> vector<1024x128xf32>
    %c0_3 = arith.constant 0 : index
    %c0_4 = arith.constant 0 : index
    %3 = vector.load %arg3[%c0_3, %c0_4] : memref<1x128xf32, #tpu.memory_space<vmem>>, vector<1x128xf32>
    %4 = vector.broadcast %3 : vector<1x128xf32> to vector<1024x128xf32>
    %5 = arith.addf %2, %4 : vector<1024x128xf32>
    %cst_5 = arith.constant 0.000000e+00 : f32
    %6 = vector.broadcast %cst_5 : f32 to vector<1024x128xf32>
    %7 = arith.maximumf %5, %6 : vector<1024x128xf32>
    %8 = arith.truncf %7 : vector<1024x128xf32> to vector<1024x128xbf16>
    %c0_6 = arith.constant 0 : index
    %c0_7 = arith.constant 0 : index
    %9 = vector.load %arg4[%c0_6, %c0_7] : memref<1024x128xbf16, #tpu.memory_space<vmem>>, vector<1024x128xbf16>
    tpu.vector_store %arg4[%c0_6, %c0_7], %8 {strides = array<i32>} : memref<1024x128xbf16, #tpu.memory_space<vmem>>, vector<1024x128xbf16>,
    return
  }
  func.func @transform_0(%arg0: i32) -> (i32, i32) {
    %c0_i32 = arith.constant 0 : i32
    %c0_i32_0 = arith.constant 0 : i32
    return %arg0, %c0_i32 : i32, i32
  }
  func.func @transform_1(%arg0: i32) -> (i32, i32) {
    %c0_i32 = arith.constant 0 : i32
    %c0_i32_0 = arith.constant 0 : i32
    %c0_i32_1 = arith.constant 0 : i32
    return %c0_i32, %c0_i32_0 : i32, i32
  }
  func.func @transform_2(%arg0: i32) -> (i32, i32) {
    %c0_i32 = arith.constant 0 : i32
    %c0_i32_0 = arith.constant 0 : i32
    %c0_i32_1 = arith.constant 0 : i32
    return %c0_i32, %c0_i32_0 : i32, i32
  }
  func.func @transform_3(%arg0: i32) -> (i32, i32) {
    %c0_i32 = arith.constant 0 : i32
    %c0_i32_0 = arith.constant 0 : i32
    return %arg0, %c0_i32 : i32, i32
  }
}

module attributes {stable_mosaic.version = 11 : i64} {
  func.func @_matmul_bias_act_kernel(%arg0: i32, %arg1: memref<512x384xbf16, #tpu.memory_space<vmem>>, %arg2: memref<384x128xbf16, #tpu.memory_space<vmem>>, %arg3: memref<1x128xf32, #tpu.memory_space<vmem>>, %arg4: memref<512x128xbf16, #tpu.memory_space<vmem>>) attributes {dimension_semantics = [#tpu.dimension_semantics<parallel>], iteration_bounds = array<i64: 1>, scalar_prefetch = 0 : i64, scratch_operands = 0 : i64, tpu.core_type = #tpu.core_type<tc>, window_params = [{transform_indices = @transform_0, window_bounds = array<i64: 512, 384>}, {pipeline_mode = #tpu.pipeline_mode<synchronous>, transform_indices = @transform_1, window_bounds = array<i64: 384, 128>}, {pipeline_mode = #tpu.pipeline_mode<synchronous>, transform_indices = @transform_2, window_bounds = array<i64: 1, 128>}, {transform_indices = @transform_3, window_bounds = array<i64: 512, 128>}]} {
    %c0 = arith.constant 0 : index
    %c0_0 = arith.constant 0 : index
    %0 = vector.load %arg1[%c0, %c0_0] : memref<512x384xbf16, #tpu.memory_space<vmem>>, vector<512x384xbf16>
    %c0_1 = arith.constant 0 : index
    %c0_2 = arith.constant 0 : index
    %1 = vector.load %arg2[%c0_1, %c0_2] : memref<384x128xbf16, #tpu.memory_space<vmem>>, vector<384x128xbf16>
    %cst = arith.constant dense<0.000000e+00> : vector<512x128xf32>
    %2 = tpu.matmul %0, %1, %cst {dimension_numbers = #tpu.dot_dimension_numbers<[1], [0], [0], [1], [0, 0, 1, 1], [], []>} : vector<512x384xbf16>, vector<384x128xbf16>, vector<512x128xf32> -> vector<512x128xf32>
    %c0_3 = arith.constant 0 : index
    %c0_4 = arith.constant 0 : index
    %3 = vector.load %arg3[%c0_3, %c0_4] : memref<1x128xf32, #tpu.memory_space<vmem>>, vector<1x128xf32>
    %4 = vector.broadcast %3 : vector<1x128xf32> to vector<512x128xf32>
    %5 = arith.addf %2, %4 : vector<512x128xf32>
    %cst_5 = arith.constant 0.000000e+00 : f32
    %6 = vector.broadcast %cst_5 : f32 to vector<512x128xf32>
    %7 = arith.maximumf %5, %6 : vector<512x128xf32>
    %8 = arith.truncf %7 : vector<512x128xf32> to vector<512x128xbf16>
    %c0_6 = arith.constant 0 : index
    %c0_7 = arith.constant 0 : index
    %9 = vector.load %arg4[%c0_6, %c0_7] : memref<512x128xbf16, #tpu.memory_space<vmem>>, vector<512x128xbf16>
    tpu.vector_store %arg4[%c0_6, %c0_7], %8 {strides = array<i32>} : memref<512x128xbf16, #tpu.memory_space<vmem>>, vector<512x128xbf16>,
    return
  }
  func.func @transform_0(%arg0: i32) -> (i32, i32) {
    %c0_i32 = arith.constant 0 : i32
    %c0_i32_0 = arith.constant 0 : i32
    return %arg0, %c0_i32 : i32, i32
  }
  func.func @transform_1(%arg0: i32) -> (i32, i32) {
    %c0_i32 = arith.constant 0 : i32
    %c0_i32_0 = arith.constant 0 : i32
    %c0_i32_1 = arith.constant 0 : i32
    return %c0_i32, %c0_i32_0 : i32, i32
  }
  func.func @transform_2(%arg0: i32) -> (i32, i32) {
    %c0_i32 = arith.constant 0 : i32
    %c0_i32_0 = arith.constant 0 : i32
    %c0_i32_1 = arith.constant 0 : i32
    return %c0_i32, %c0_i32_0 : i32, i32
  }
  func.func @transform_3(%arg0: i32) -> (i32, i32) {
    %c0_i32 = arith.constant 0 : i32
    %c0_i32_0 = arith.constant 0 : i32
    return %arg0, %c0_i32 : i32, i32
  }
}

module attributes {stable_mosaic.version = 11 : i64} {
  func.func @_matmul_bias_act_kernel(%arg0: i32, %arg1: memref<128x640xbf16, #tpu.memory_space<vmem>>, %arg2: memref<640x128xbf16, #tpu.memory_space<vmem>>, %arg3: memref<1x128xf32, #tpu.memory_space<vmem>>, %arg4: memref<128x128xbf16, #tpu.memory_space<vmem>>) attributes {dimension_semantics = [#tpu.dimension_semantics<parallel>], iteration_bounds = array<i64: 1>, scalar_prefetch = 0 : i64, scratch_operands = 0 : i64, tpu.core_type = #tpu.core_type<tc>, window_params = [{transform_indices = @transform_0, window_bounds = array<i64: 128, 640>}, {pipeline_mode = #tpu.pipeline_mode<synchronous>, transform_indices = @transform_1, window_bounds = array<i64: 640, 128>}, {pipeline_mode = #tpu.pipeline_mode<synchronous>, transform_indices = @transform_2, window_bounds = array<i64: 1, 128>}, {transform_indices = @transform_3, window_bounds = array<i64: 128, 128>}]} {
    %c0 = arith.constant 0 : index
    %c0_0 = arith.constant 0 : index
    %0 = vector.load %arg1[%c0, %c0_0] : memref<128x640xbf16, #tpu.memory_space<vmem>>, vector<128x640xbf16>
    %c0_1 = arith.constant 0 : index
    %c0_2 = arith.constant 0 : index
    %1 = vector.load %arg2[%c0_1, %c0_2] : memref<640x128xbf16, #tpu.memory_space<vmem>>, vector<640x128xbf16>
    %cst = arith.constant dense<0.000000e+00> : vector<128x128xf32>
    %2 = tpu.matmul %0, %1, %cst {dimension_numbers = #tpu.dot_dimension_numbers<[1], [0], [0], [1], [0, 0, 1, 1], [], []>} : vector<128x640xbf16>, vector<640x128xbf16>, vector<128x128xf32> -> vector<128x128xf32>
    %c0_3 = arith.constant 0 : index
    %c0_4 = arith.constant 0 : index
    %3 = vector.load %arg3[%c0_3, %c0_4] : memref<1x128xf32, #tpu.memory_space<vmem>>, vector<1x128xf32>
    %4 = vector.broadcast %3 : vector<1x128xf32> to vector<128x128xf32>
    %5 = arith.addf %2, %4 : vector<128x128xf32>
    %cst_5 = arith.constant 0.000000e+00 : f32
    %6 = vector.broadcast %cst_5 : f32 to vector<128x128xf32>
    %7 = arith.maximumf %5, %6 : vector<128x128xf32>
    %8 = arith.truncf %7 : vector<128x128xf32> to vector<128x128xbf16>
    %c0_6 = arith.constant 0 : index
    %c0_7 = arith.constant 0 : index
    %9 = vector.load %arg4[%c0_6, %c0_7] : memref<128x128xbf16, #tpu.memory_space<vmem>>, vector<128x128xbf16>
    tpu.vector_store %arg4[%c0_6, %c0_7], %8 {strides = array<i32>} : memref<128x128xbf16, #tpu.memory_space<vmem>>, vector<128x128xbf16>,
    return
  }
  func.func @transform_0(%arg0: i32) -> (i32, i32) {
    %c0_i32 = arith.constant 0 : i32
    %c0_i32_0 = arith.constant 0 : i32
    return %arg0, %c0_i32 : i32, i32
  }
  func.func @transform_1(%arg0: i32) -> (i32, i32) {
    %c0_i32 = arith.constant 0 : i32
    %c0_i32_0 = arith.constant 0 : i32
    %c0_i32_1 = arith.constant 0 : i32
    return %c0_i32, %c0_i32_0 : i32, i32
  }
  func.func @transform_2(%arg0: i32) -> (i32, i32) {
    %c0_i32 = arith.constant 0 : i32
    %c0_i32_0 = arith.constant 0 : i32
    %c0_i32_1 = arith.constant 0 : i32
    return %c0_i32, %c0_i32_0 : i32, i32
  }
  func.func @transform_3(%arg0: i32) -> (i32, i32) {
    %c0_i32 = arith.constant 0 : i32
    %c0_i32_0 = arith.constant 0 : i32
    return %arg0, %c0_i32 : i32, i32
  }
}

module attributes {stable_mosaic.version = 11 : i64} {
  func.func @_matmul_bias_act_kernel(%arg0: i32, %arg1: memref<32x1152xbf16, #tpu.memory_space<vmem>>, %arg2: memref<1152x256xbf16, #tpu.memory_space<vmem>>, %arg3: memref<1x256xf32, #tpu.memory_space<vmem>>, %arg4: memref<32x256xbf16, #tpu.memory_space<vmem>>) attributes {dimension_semantics = [#tpu.dimension_semantics<parallel>], iteration_bounds = array<i64: 1>, scalar_prefetch = 0 : i64, scratch_operands = 0 : i64, tpu.core_type = #tpu.core_type<tc>, window_params = [{transform_indices = @transform_0, window_bounds = array<i64: 32, 1152>}, {pipeline_mode = #tpu.pipeline_mode<synchronous>, transform_indices = @transform_1, window_bounds = array<i64: 1152, 256>}, {pipeline_mode = #tpu.pipeline_mode<synchronous>, transform_indices = @transform_2, window_bounds = array<i64: 1, 256>}, {transform_indices = @transform_3, window_bounds = array<i64: 32, 256>}]} {
    %c0 = arith.constant 0 : index
    %c0_0 = arith.constant 0 : index
    %0 = vector.load %arg1[%c0, %c0_0] : memref<32x1152xbf16, #tpu.memory_space<vmem>>, vector<32x1152xbf16>
    %c0_1 = arith.constant 0 : index
    %c0_2 = arith.constant 0 : index
    %1 = vector.load %arg2[%c0_1, %c0_2] : memref<1152x256xbf16, #tpu.memory_space<vmem>>, vector<1152x256xbf16>
    %cst = arith.constant dense<0.000000e+00> : vector<32x256xf32>
    %2 = tpu.matmul %0, %1, %cst {dimension_numbers = #tpu.dot_dimension_numbers<[1], [0], [0], [1], [0, 0, 1, 1], [], []>} : vector<32x1152xbf16>, vector<1152x256xbf16>, vector<32x256xf32> -> vector<32x256xf32>
    %c0_3 = arith.constant 0 : index
    %c0_4 = arith.constant 0 : index
    %3 = vector.load %arg3[%c0_3, %c0_4] : memref<1x256xf32, #tpu.memory_space<vmem>>, vector<1x256xf32>
    %4 = vector.broadcast %3 : vector<1x256xf32> to vector<32x256xf32>
    %5 = arith.addf %2, %4 : vector<32x256xf32>
    %cst_5 = arith.constant 0.000000e+00 : f32
    %6 = vector.broadcast %cst_5 : f32 to vector<32x256xf32>
    %7 = arith.maximumf %5, %6 : vector<32x256xf32>
    %8 = arith.truncf %7 : vector<32x256xf32> to vector<32x256xbf16>
    %c0_6 = arith.constant 0 : index
    %c0_7 = arith.constant 0 : index
    %9 = vector.load %arg4[%c0_6, %c0_7] : memref<32x256xbf16, #tpu.memory_space<vmem>>, vector<32x256xbf16>
    tpu.vector_store %arg4[%c0_6, %c0_7], %8 {strides = array<i32>} : memref<32x256xbf16, #tpu.memory_space<vmem>>, vector<32x256xbf16>,
    return
  }
  func.func @transform_0(%arg0: i32) -> (i32, i32) {
    %c0_i32 = arith.constant 0 : i32
    %c0_i32_0 = arith.constant 0 : i32
    return %arg0, %c0_i32 : i32, i32
  }
  func.func @transform_1(%arg0: i32) -> (i32, i32) {
    %c0_i32 = arith.constant 0 : i32
    %c0_i32_0 = arith.constant 0 : i32
    %c0_i32_1 = arith.constant 0 : i32
    return %c0_i32, %c0_i32_0 : i32, i32
  }
  func.func @transform_2(%arg0: i32) -> (i32, i32) {
    %c0_i32 = arith.constant 0 : i32
    %c0_i32_0 = arith.constant 0 : i32
    %c0_i32_1 = arith.constant 0 : i32
    return %c0_i32, %c0_i32_0 : i32, i32
  }
  func.func @transform_3(%arg0: i32) -> (i32, i32) {
    %c0_i32 = arith.constant 0 : i32
    %c0_i32_0 = arith.constant 0 : i32
    return %arg0, %c0_i32 : i32, i32
  }
}

module attributes {stable_mosaic.version = 11 : i64} {
  func.func @_fc_reparam_fc_kernel(%arg0: i32, %arg1: memref<2x4096xbf16, #tpu.memory_space<vmem>>, %arg2: memref<4096x64xbf16, #tpu.memory_space<vmem>>, %arg3: memref<1x64xf32, #tpu.memory_space<vmem>>, %arg4: memref<2x32xf32, #tpu.memory_space<vmem>>, %arg5: memref<32x2048xbf16, #tpu.memory_space<vmem>>, %arg6: memref<1x2048xf32, #tpu.memory_space<vmem>>, %arg7: memref<2x32xf32, #tpu.memory_space<vmem>>, %arg8: memref<2x32xf32, #tpu.memory_space<vmem>>, %arg9: memref<2x2048xbf16, #tpu.memory_space<vmem>>) attributes {dimension_semantics = [#tpu.dimension_semantics<arbitrary>], iteration_bounds = array<i64: 1>, scalar_prefetch = 0 : i64, scratch_operands = 0 : i64, tpu.core_type = #tpu.core_type<tc>, window_params = [{pipeline_mode = #tpu.pipeline_mode<synchronous>, transform_indices = @transform_0, window_bounds = array<i64: 2, 4096>}, {pipeline_mode = #tpu.pipeline_mode<synchronous>, transform_indices = @transform_1, window_bounds = array<i64: 4096, 64>}, {pipeline_mode = #tpu.pipeline_mode<synchronous>, transform_indices = @transform_2, window_bounds = array<i64: 1, 64>}, {pipeline_mode = #tpu.pipeline_mode<synchronous>, transform_indices = @transform_3, window_bounds = array<i64: 2, 32>}, {pipeline_mode = #tpu.pipeline_mode<synchronous>, transform_indices = @transform_4, window_bounds = array<i64: 32, 2048>}, {pipeline_mode = #tpu.pipeline_mode<synchronous>, transform_indices = @transform_5, window_bounds = array<i64: 1, 2048>}, {pipeline_mode = #tpu.pipeline_mode<synchronous>, transform_indices = @transform_6, window_bounds = array<i64: 2, 32>}, {pipeline_mode = #tpu.pipeline_mode<synchronous>, transform_indices = @transform_7, window_bounds = array<i64: 2, 32>}, {pipeline_mode = #tpu.pipeline_mode<synchronous>, transform_indices = @transform_8, window_bounds = array<i64: 2, 2048>}]} {
    %c0 = arith.constant 0 : index
    %c0_0 = arith.constant 0 : index
    %0 = vector.load %arg1[%c0, %c0_0] : memref<2x4096xbf16, #tpu.memory_space<vmem>>, vector<2x4096xbf16>
    %c0_1 = arith.constant 0 : index
    %c0_2 = arith.constant 0 : index
    %1 = vector.load %arg2[%c0_1, %c0_2] : memref<4096x64xbf16, #tpu.memory_space<vmem>>, vector<4096x64xbf16>
    %cst = arith.constant dense<0.000000e+00> : vector<2x64xf32>
    %2 = tpu.matmul %0, %1, %cst {dimension_numbers = #tpu.dot_dimension_numbers<[1], [0], [0], [1], [0, 0, 1, 1], [], []>} : vector<2x4096xbf16>, vector<4096x64xbf16>, vector<2x64xf32> -> vector<2x64xf32>
    %c0_3 = arith.constant 0 : index
    %c0_4 = arith.constant 0 : index
    %3 = vector.load %arg3[%c0_3, %c0_4] : memref<1x64xf32, #tpu.memory_space<vmem>>, vector<1x64xf32>
    %4 = vector.broadcast %3 : vector<1x64xf32> to vector<2x64xf32>
    %5 = arith.addf %2, %4 : vector<2x64xf32>
    %6 = vector.extract_strided_slice %5 {offsets = [0, 0], sizes = [2, 32], strides = [1, 1]} : vector<2x64xf32> to vector<2x32xf32>
    %7 = vector.extract_strided_slice %5 {offsets = [0, 32], sizes = [2, 32], strides = [1, 1]} : vector<2x64xf32> to vector<2x32xf32>
    %c0_5 = arith.constant 0 : index
    %c0_6 = arith.constant 0 : index
    %8 = vector.load %arg4[%c0_5, %c0_6] : memref<2x32xf32, #tpu.memory_space<vmem>>, vector<2x32xf32>
    %cst_7 = arith.constant 5.000000e-01 : f32
    %9 = vector.broadcast %cst_7 : f32 to vector<2x32xf32>
    %10 = arith.mulf %9, %7 : vector<2x32xf32>
    %11 = math.exp %10 : vector<2x32xf32>
    %12 = arith.mulf %8, %11 : vector<2x32xf32>
    %13 = arith.addf %6, %12 : vector<2x32xf32>
    %14 = arith.truncf %13 : vector<2x32xf32> to vector<2x32xbf16>
    %c0_8 = arith.constant 0 : index
    %c0_9 = arith.constant 0 : index
    %15 = vector.load %arg5[%c0_8, %c0_9] : memref<32x2048xbf16, #tpu.memory_space<vmem>>, vector<32x2048xbf16>
    %cst_10 = arith.constant dense<0.000000e+00> : vector<2x2048xf32>
    %16 = tpu.matmul %14, %15, %cst_10 {dimension_numbers = #tpu.dot_dimension_numbers<[1], [0], [0], [1], [0, 0, 1, 1], [], []>} : vector<2x32xbf16>, vector<32x2048xbf16>, vector<2x2048xf32> -> vector<2x2048xf32>
    %c0_11 = arith.constant 0 : index
    %c0_12 = arith.constant 0 : index
    %17 = vector.load %arg6[%c0_11, %c0_12] : memref<1x2048xf32, #tpu.memory_space<vmem>>, vector<1x2048xf32>
    %18 = vector.broadcast %17 : vector<1x2048xf32> to vector<2x2048xf32>
    %19 = arith.addf %16, %18 : vector<2x2048xf32>
    %cst_13 = arith.constant 0.000000e+00 : f32
    %20 = vector.broadcast %cst_13 : f32 to vector<2x2048xf32>
    %21 = arith.maximumf %19, %20 : vector<2x2048xf32>
    %c0_14 = arith.constant 0 : index
    %c0_15 = arith.constant 0 : index
    %22 = vector.load %arg7[%c0_14, %c0_15] : memref<2x32xf32, #tpu.memory_space<vmem>>, vector<2x32xf32>
    tpu.vector_store %arg7[%c0_14, %c0_15], %6 {strides = array<i32>} : memref<2x32xf32, #tpu.memory_space<vmem>>, vector<2x32xf32>,
    %c0_16 = arith.constant 0 : index
    %c0_17 = arith.constant 0 : index
    %23 = vector.load %arg8[%c0_16, %c0_17] : memref<2x32xf32, #tpu.memory_space<vmem>>, vector<2x32xf32>
    tpu.vector_store %arg8[%c0_16, %c0_17], %7 {strides = array<i32>} : memref<2x32xf32, #tpu.memory_space<vmem>>, vector<2x32xf32>,
    %24 = arith.truncf %21 : vector<2x2048xf32> to vector<2x2048xbf16>
    %c0_18 = arith.constant 0 : index
    %c0_19 = arith.constant 0 : index
    %25 = vector.load %arg9[%c0_18, %c0_19] : memref<2x2048xbf16, #tpu.memory_space<vmem>>, vector<2x2048xbf16>
    tpu.vector_store %arg9[%c0_18, %c0_19], %24 {strides = array<i32>} : memref<2x2048xbf16, #tpu.memory_space<vmem>>, vector<2x2048xbf16>,
    return
  }
  func.func @transform_0(%arg0: i32) -> (i32, i32) {
    %c0_i32 = arith.constant 0 : i32
    %c0_i32_0 = arith.constant 0 : i32
    %c0_i32_1 = arith.constant 0 : i32
    return %c0_i32, %c0_i32_0 : i32, i32
  }
  func.func @transform_1(%arg0: i32) -> (i32, i32) {
    %c0_i32 = arith.constant 0 : i32
    %c0_i32_0 = arith.constant 0 : i32
    %c0_i32_1 = arith.constant 0 : i32
    return %c0_i32, %c0_i32_0 : i32, i32
  }
  func.func @transform_2(%arg0: i32) -> (i32, i32) {
    %c0_i32 = arith.constant 0 : i32
    %c0_i32_0 = arith.constant 0 : i32
    %c0_i32_1 = arith.constant 0 : i32
    return %c0_i32, %c0_i32_0 : i32, i32
  }
  func.func @transform_3(%arg0: i32) -> (i32, i32) {
    %c0_i32 = arith.constant 0 : i32
    %c0_i32_0 = arith.constant 0 : i32
    %c0_i32_1 = arith.constant 0 : i32
    return %c0_i32, %c0_i32_0 : i32, i32
  }
  func.func @transform_4(%arg0: i32) -> (i32, i32) {
    %c0_i32 = arith.constant 0 : i32
    %c0_i32_0 = arith.constant 0 : i32
    %c0_i32_1 = arith.constant 0 : i32
    return %c0_i32, %c0_i32_0 : i32, i32
  }
  func.func @transform_5(%arg0: i32) -> (i32, i32) {
    %c0_i32 = arith.constant 0 : i32
    %c0_i32_0 = arith.constant 0 : i32
    %c0_i32_1 = arith.constant 0 : i32
    return %c0_i32, %c0_i32_0 : i32, i32
  }
  func.func @transform_6(%arg0: i32) -> (i32, i32) {
    %c0_i32 = arith.constant 0 : i32
    %c0_i32_0 = arith.constant 0 : i32
    %c0_i32_1 = arith.constant 0 : i32
    return %c0_i32, %c0_i32_0 : i32, i32
  }
  func.func @transform_7(%arg0: i32) -> (i32, i32) {
    %c0_i32 = arith.constant 0 : i32
    %c0_i32_0 = arith.constant 0 : i32
    %c0_i32_1 = arith.constant 0 : i32
    return %c0_i32, %c0_i32_0 : i32, i32
  }
  func.func @transform_8(%arg0: i32) -> (i32, i32) {
    %c0_i32 = arith.constant 0 : i32
    %c0_i32_0 = arith.constant 0 : i32
    %c0_i32_1 = arith.constant 0 : i32
    return %c0_i32, %c0_i32_0 : i32, i32
  }
}

module attributes {stable_mosaic.version = 11 : i64} {
  func.func @_matmul_bias_act_kernel(%arg0: i32, %arg1: memref<32x1024xbf16, #tpu.memory_space<vmem>>, %arg2: memref<1024x512xbf16, #tpu.memory_space<vmem>>, %arg3: memref<1x512xf32, #tpu.memory_space<vmem>>, %arg4: memref<32x512xbf16, #tpu.memory_space<vmem>>) attributes {dimension_semantics = [#tpu.dimension_semantics<parallel>], iteration_bounds = array<i64: 1>, scalar_prefetch = 0 : i64, scratch_operands = 0 : i64, tpu.core_type = #tpu.core_type<tc>, window_params = [{transform_indices = @transform_0, window_bounds = array<i64: 32, 1024>}, {pipeline_mode = #tpu.pipeline_mode<synchronous>, transform_indices = @transform_1, window_bounds = array<i64: 1024, 512>}, {pipeline_mode = #tpu.pipeline_mode<synchronous>, transform_indices = @transform_2, window_bounds = array<i64: 1, 512>}, {transform_indices = @transform_3, window_bounds = array<i64: 32, 512>}]} {
    %c0 = arith.constant 0 : index
    %c0_0 = arith.constant 0 : index
    %0 = vector.load %arg1[%c0, %c0_0] : memref<32x1024xbf16, #tpu.memory_space<vmem>>, vector<32x1024xbf16>
    %c0_1 = arith.constant 0 : index
    %c0_2 = arith.constant 0 : index
    %1 = vector.load %arg2[%c0_1, %c0_2] : memref<1024x512xbf16, #tpu.memory_space<vmem>>, vector<1024x512xbf16>
    %cst = arith.constant dense<0.000000e+00> : vector<32x512xf32>
    %2 = tpu.matmul %0, %1, %cst {dimension_numbers = #tpu.dot_dimension_numbers<[1], [0], [0], [1], [0, 0, 1, 1], [], []>} : vector<32x1024xbf16>, vector<1024x512xbf16>, vector<32x512xf32> -> vector<32x512xf32>
    %c0_3 = arith.constant 0 : index
    %c0_4 = arith.constant 0 : index
    %3 = vector.load %arg3[%c0_3, %c0_4] : memref<1x512xf32, #tpu.memory_space<vmem>>, vector<1x512xf32>
    %4 = vector.broadcast %3 : vector<1x512xf32> to vector<32x512xf32>
    %5 = arith.addf %2, %4 : vector<32x512xf32>
    %cst_5 = arith.constant 0.000000e+00 : f32
    %6 = vector.broadcast %cst_5 : f32 to vector<32x512xf32>
    %7 = arith.maximumf %5, %6 : vector<32x512xf32>
    %8 = arith.truncf %7 : vector<32x512xf32> to vector<32x512xbf16>
    %c0_6 = arith.constant 0 : index
    %c0_7 = arith.constant 0 : index
    %9 = vector.load %arg4[%c0_6, %c0_7] : memref<32x512xbf16, #tpu.memory_space<vmem>>, vector<32x512xbf16>
    tpu.vector_store %arg4[%c0_6, %c0_7], %8 {strides = array<i32>} : memref<32x512xbf16, #tpu.memory_space<vmem>>, vector<32x512xbf16>,
    return
  }
  func.func @transform_0(%arg0: i32) -> (i32, i32) {
    %c0_i32 = arith.constant 0 : i32
    %c0_i32_0 = arith.constant 0 : i32
    return %arg0, %c0_i32 : i32, i32
  }
  func.func @transform_1(%arg0: i32) -> (i32, i32) {
    %c0_i32 = arith.constant 0 : i32
    %c0_i32_0 = arith.constant 0 : i32
    %c0_i32_1 = arith.constant 0 : i32
    return %c0_i32, %c0_i32_0 : i32, i32
  }
  func.func @transform_2(%arg0: i32) -> (i32, i32) {
    %c0_i32 = arith.constant 0 : i32
    %c0_i32_0 = arith.constant 0 : i32
    %c0_i32_1 = arith.constant 0 : i32
    return %c0_i32, %c0_i32_0 : i32, i32
  }
  func.func @transform_3(%arg0: i32) -> (i32, i32) {
    %c0_i32 = arith.constant 0 : i32
    %c0_i32_0 = arith.constant 0 : i32
    return %arg0, %c0_i32 : i32, i32
  }
}

module attributes {stable_mosaic.version = 11 : i64} {
  func.func @_matmul_bias_act_kernel(%arg0: i32, %arg1: memref<128x512xbf16, #tpu.memory_space<vmem>>, %arg2: memref<512x256xbf16, #tpu.memory_space<vmem>>, %arg3: memref<1x256xf32, #tpu.memory_space<vmem>>, %arg4: memref<128x256xbf16, #tpu.memory_space<vmem>>) attributes {dimension_semantics = [#tpu.dimension_semantics<parallel>], iteration_bounds = array<i64: 1>, scalar_prefetch = 0 : i64, scratch_operands = 0 : i64, tpu.core_type = #tpu.core_type<tc>, window_params = [{transform_indices = @transform_0, window_bounds = array<i64: 128, 512>}, {pipeline_mode = #tpu.pipeline_mode<synchronous>, transform_indices = @transform_1, window_bounds = array<i64: 512, 256>}, {pipeline_mode = #tpu.pipeline_mode<synchronous>, transform_indices = @transform_2, window_bounds = array<i64: 1, 256>}, {transform_indices = @transform_3, window_bounds = array<i64: 128, 256>}]} {
    %c0 = arith.constant 0 : index
    %c0_0 = arith.constant 0 : index
    %0 = vector.load %arg1[%c0, %c0_0] : memref<128x512xbf16, #tpu.memory_space<vmem>>, vector<128x512xbf16>
    %c0_1 = arith.constant 0 : index
    %c0_2 = arith.constant 0 : index
    %1 = vector.load %arg2[%c0_1, %c0_2] : memref<512x256xbf16, #tpu.memory_space<vmem>>, vector<512x256xbf16>
    %cst = arith.constant dense<0.000000e+00> : vector<128x256xf32>
    %2 = tpu.matmul %0, %1, %cst {dimension_numbers = #tpu.dot_dimension_numbers<[1], [0], [0], [1], [0, 0, 1, 1], [], []>} : vector<128x512xbf16>, vector<512x256xbf16>, vector<128x256xf32> -> vector<128x256xf32>
    %c0_3 = arith.constant 0 : index
    %c0_4 = arith.constant 0 : index
    %3 = vector.load %arg3[%c0_3, %c0_4] : memref<1x256xf32, #tpu.memory_space<vmem>>, vector<1x256xf32>
    %4 = vector.broadcast %3 : vector<1x256xf32> to vector<128x256xf32>
    %5 = arith.addf %2, %4 : vector<128x256xf32>
    %cst_5 = arith.constant 0.000000e+00 : f32
    %6 = vector.broadcast %cst_5 : f32 to vector<128x256xf32>
    %7 = arith.maximumf %5, %6 : vector<128x256xf32>
    %8 = arith.truncf %7 : vector<128x256xf32> to vector<128x256xbf16>
    %c0_6 = arith.constant 0 : index
    %c0_7 = arith.constant 0 : index
    %9 = vector.load %arg4[%c0_6, %c0_7] : memref<128x256xbf16, #tpu.memory_space<vmem>>, vector<128x256xbf16>
    tpu.vector_store %arg4[%c0_6, %c0_7], %8 {strides = array<i32>} : memref<128x256xbf16, #tpu.memory_space<vmem>>, vector<128x256xbf16>,
    return
  }
  func.func @transform_0(%arg0: i32) -> (i32, i32) {
    %c0_i32 = arith.constant 0 : i32
    %c0_i32_0 = arith.constant 0 : i32
    return %arg0, %c0_i32 : i32, i32
  }
  func.func @transform_1(%arg0: i32) -> (i32, i32) {
    %c0_i32 = arith.constant 0 : i32
    %c0_i32_0 = arith.constant 0 : i32
    %c0_i32_1 = arith.constant 0 : i32
    return %c0_i32, %c0_i32_0 : i32, i32
  }
  func.func @transform_2(%arg0: i32) -> (i32, i32) {
    %c0_i32 = arith.constant 0 : i32
    %c0_i32_0 = arith.constant 0 : i32
    %c0_i32_1 = arith.constant 0 : i32
    return %c0_i32, %c0_i32_0 : i32, i32
  }
  func.func @transform_3(%arg0: i32) -> (i32, i32) {
    %c0_i32 = arith.constant 0 : i32
    %c0_i32_0 = arith.constant 0 : i32
    return %arg0, %c0_i32 : i32, i32
  }
}

module attributes {stable_mosaic.version = 11 : i64} {
  func.func @_matmul_bias_act_kernel(%arg0: i32, %arg1: memref<512x256xbf16, #tpu.memory_space<vmem>>, %arg2: memref<256x128xbf16, #tpu.memory_space<vmem>>, %arg3: memref<1x128xf32, #tpu.memory_space<vmem>>, %arg4: memref<512x128xbf16, #tpu.memory_space<vmem>>) attributes {dimension_semantics = [#tpu.dimension_semantics<parallel>], iteration_bounds = array<i64: 1>, scalar_prefetch = 0 : i64, scratch_operands = 0 : i64, tpu.core_type = #tpu.core_type<tc>, window_params = [{transform_indices = @transform_0, window_bounds = array<i64: 512, 256>}, {pipeline_mode = #tpu.pipeline_mode<synchronous>, transform_indices = @transform_1, window_bounds = array<i64: 256, 128>}, {pipeline_mode = #tpu.pipeline_mode<synchronous>, transform_indices = @transform_2, window_bounds = array<i64: 1, 128>}, {transform_indices = @transform_3, window_bounds = array<i64: 512, 128>}]} {
    %c0 = arith.constant 0 : index
    %c0_0 = arith.constant 0 : index
    %0 = vector.load %arg1[%c0, %c0_0] : memref<512x256xbf16, #tpu.memory_space<vmem>>, vector<512x256xbf16>
    %c0_1 = arith.constant 0 : index
    %c0_2 = arith.constant 0 : index
    %1 = vector.load %arg2[%c0_1, %c0_2] : memref<256x128xbf16, #tpu.memory_space<vmem>>, vector<256x128xbf16>
    %cst = arith.constant dense<0.000000e+00> : vector<512x128xf32>
    %2 = tpu.matmul %0, %1, %cst {dimension_numbers = #tpu.dot_dimension_numbers<[1], [0], [0], [1], [0, 0, 1, 1], [], []>} : vector<512x256xbf16>, vector<256x128xbf16>, vector<512x128xf32> -> vector<512x128xf32>
    %c0_3 = arith.constant 0 : index
    %c0_4 = arith.constant 0 : index
    %3 = vector.load %arg3[%c0_3, %c0_4] : memref<1x128xf32, #tpu.memory_space<vmem>>, vector<1x128xf32>
    %4 = vector.broadcast %3 : vector<1x128xf32> to vector<512x128xf32>
    %5 = arith.addf %2, %4 : vector<512x128xf32>
    %cst_5 = arith.constant 0.000000e+00 : f32
    %6 = vector.broadcast %cst_5 : f32 to vector<512x128xf32>
    %7 = arith.maximumf %5, %6 : vector<512x128xf32>
    %8 = arith.truncf %7 : vector<512x128xf32> to vector<512x128xbf16>
    %c0_6 = arith.constant 0 : index
    %c0_7 = arith.constant 0 : index
    %9 = vector.load %arg4[%c0_6, %c0_7] : memref<512x128xbf16, #tpu.memory_space<vmem>>, vector<512x128xbf16>
    tpu.vector_store %arg4[%c0_6, %c0_7], %8 {strides = array<i32>} : memref<512x128xbf16, #tpu.memory_space<vmem>>, vector<512x128xbf16>,
    return
  }
  func.func @transform_0(%arg0: i32) -> (i32, i32) {
    %c0_i32 = arith.constant 0 : i32
    %c0_i32_0 = arith.constant 0 : i32
    return %arg0, %c0_i32 : i32, i32
  }
  func.func @transform_1(%arg0: i32) -> (i32, i32) {
    %c0_i32 = arith.constant 0 : i32
    %c0_i32_0 = arith.constant 0 : i32
    %c0_i32_1 = arith.constant 0 : i32
    return %c0_i32, %c0_i32_0 : i32, i32
  }
  func.func @transform_2(%arg0: i32) -> (i32, i32) {
    %c0_i32 = arith.constant 0 : i32
    %c0_i32_0 = arith.constant 0 : i32
    %c0_i32_1 = arith.constant 0 : i32
    return %c0_i32, %c0_i32_0 : i32, i32
  }
  func.func @transform_3(%arg0: i32) -> (i32, i32) {
    %c0_i32 = arith.constant 0 : i32
    %c0_i32_0 = arith.constant 0 : i32
    return %arg0, %c0_i32 : i32, i32
  }
}

module attributes {stable_mosaic.version = 11 : i64} {
  func.func @_matmul_bias_act_kernel(%arg0: i32, %arg1: memref<1024x128xbf16, #tpu.memory_space<vmem>>, %arg2: memref<128x128xbf16, #tpu.memory_space<vmem>>, %arg3: memref<1x128xf32, #tpu.memory_space<vmem>>, %arg4: memref<1024x128xbf16, #tpu.memory_space<vmem>>) attributes {dimension_semantics = [#tpu.dimension_semantics<parallel>], iteration_bounds = array<i64: 2>, scalar_prefetch = 0 : i64, scratch_operands = 0 : i64, tpu.core_type = #tpu.core_type<tc>, window_params = [{transform_indices = @transform_0, window_bounds = array<i64: 1024, 128>}, {pipeline_mode = #tpu.pipeline_mode<synchronous>, transform_indices = @transform_1, window_bounds = array<i64: 128, 128>}, {pipeline_mode = #tpu.pipeline_mode<synchronous>, transform_indices = @transform_2, window_bounds = array<i64: 1, 128>}, {transform_indices = @transform_3, window_bounds = array<i64: 1024, 128>}]} {
    %c0 = arith.constant 0 : index
    %c0_0 = arith.constant 0 : index
    %0 = vector.load %arg1[%c0, %c0_0] : memref<1024x128xbf16, #tpu.memory_space<vmem>>, vector<1024x128xbf16>
    %c0_1 = arith.constant 0 : index
    %c0_2 = arith.constant 0 : index
    %1 = vector.load %arg2[%c0_1, %c0_2] : memref<128x128xbf16, #tpu.memory_space<vmem>>, vector<128x128xbf16>
    %cst = arith.constant dense<0.000000e+00> : vector<1024x128xf32>
    %2 = tpu.matmul %0, %1, %cst {dimension_numbers = #tpu.dot_dimension_numbers<[1], [0], [0], [1], [0, 0, 1, 1], [], []>} : vector<1024x128xbf16>, vector<128x128xbf16>, vector<1024x128xf32> -> vector<1024x128xf32>
    %c0_3 = arith.constant 0 : index
    %c0_4 = arith.constant 0 : index
    %3 = vector.load %arg3[%c0_3, %c0_4] : memref<1x128xf32, #tpu.memory_space<vmem>>, vector<1x128xf32>
    %4 = vector.broadcast %3 : vector<1x128xf32> to vector<1024x128xf32>
    %5 = arith.addf %2, %4 : vector<1024x128xf32>
    %6 = arith.truncf %5 : vector<1024x128xf32> to vector<1024x128xbf16>
    %c0_5 = arith.constant 0 : index
    %c0_6 = arith.constant 0 : index
    %7 = vector.load %arg4[%c0_5, %c0_6] : memref<1024x128xbf16, #tpu.memory_space<vmem>>, vector<1024x128xbf16>
    tpu.vector_store %arg4[%c0_5, %c0_6], %6 {strides = array<i32>} : memref<1024x128xbf16, #tpu.memory_space<vmem>>, vector<1024x128xbf16>,
    return
  }
  func.func @transform_0(%arg0: i32) -> (i32, i32) {
    %c0_i32 = arith.constant 0 : i32
    %c0_i32_0 = arith.constant 0 : i32
    return %arg0, %c0_i32 : i32, i32
  }
  func.func @transform_1(%arg0: i32) -> (i32, i32) {
    %c0_i32 = arith.constant 0 : i32
    %c0_i32_0 = arith.constant 0 : i32
    %c0_i32_1 = arith.constant 0 : i32
    return %c0_i32, %c0_i32_0 : i32, i32
  }
  func.func @transform_2(%arg0: i32) -> (i32, i32) {
    %c0_i32 = arith.constant 0 : i32
    %c0_i32_0 = arith.constant 0 : i32
    %c0_i32_1 = arith.constant 0 : i32
    return %c0_i32, %c0_i32_0 : i32, i32
  }
  func.func @transform_3(%arg0: i32) -> (i32, i32) {
    %c0_i32 = arith.constant 0 : i32
    %c0_i32_0 = arith.constant 0 : i32
    return %arg0, %c0_i32 : i32, i32
  }
}

</mosaic_0001>

<llo_original>
// kernel: _lambda_.10
$region0: #{_lambda_.10}
  #allocation0 [shape = 'u32[]', space=smem, size = 0x4, offset = 0x4, fixed_abs, tag = 'smem constant byte address 0x4 - core index']
  #allocation1 [shape = 'u32[72,128]{1,0:T(1,128)}', space=vmem, size = 0x9000, scoped, tag = 'internal scratch']
  %s0 = inlined_call_operand.vmem [shape: bf16[2048,128], index: 0, kind: input, shape index: {}]
  %s1 = inlined_call_operand.vmem [shape: bf16[128,128], index: 1, kind: input, shape index: {}]
  %s2 = inlined_call_operand.vmem [shape: f32[1,128], index: 2, kind: input, shape index: {}]
  %s3 = inlined_call_operand.vmem [shape: bf16[2048,128], index: 3, kind: output, shape index: {}]
  %s4 = sld [smem:[#allocation0]]
  $region45: #{_lambda_.10} parent=0
    _
  %s6 = ssub.s32 1, %s4
  %s7 = scalar_select 0, %s6, %s4
  loop: start=0, step=1, limit=4
  $region2: #{_lambda_.10} parent=0 // loop_pre_header
    _
  $region3: #{_lambda_.10} parent=0 // loop_header
    %s9 = sphi 0, %s13
    %p10 = scmp.ge.s32.totalorder %s9, 4
    %s19 = sphi 0, %s21
    %s22 = sphi 0, %s19
    %s23 = sphi 0, %s22
    %s39 = sphi 0, %s23
    %s43 = sphi 0, %s43
    %s45 = sphi 0, %s43
    %s46 = sphi 0, %s45
    %s60 = sphi 0, %s46
    %s64 = sphi 0, %s64
    %s66 = sphi 0, %s64
    %s67 = sphi 0, %s66
    %s81 = sphi 0, %s67
    %s87 = sphi 0, %s89
    %s90 = sphi 0, %s87
    %s91 = sphi 0, %s90
    %s107 = sphi 0, %s91
  $region4: #{_lambda_.10} parent=0 // loop_header_branch
    %12 = sbr.rel (%p10) target = $region8
  $region5: #{_lambda_.10} parent=0 // loop_body
    %s14 = ssub.s32 %s9, 1
    %s15 = ssub.s32 %s9, 2
    %s16 = sadd.s32 %s9, 1
    %s17 = ssub.s32 %s9, %s16
    %p18 = scmp.eq.s32.totalorder %s17, 0
    %s20 = sadd.s32 %s19, 1
    %s21 = scalar_select %p18, %s19, %s20
    %p24 = pneg %p18
    %p25 = scmp.eq.s32.totalorder %s9, 1
    %p26 = por %p24, %p25
    %p27 = scmp.ne.s32.totalorder %s19, %s22
    %p28 = scmp.eq.s32.totalorder %s9, 0
    %p29 = por %p27, %p28
    %p30 = scmp.ne.s32.totalorder %s19, %s22
    %p31 = scmp.eq.s32.totalorder %s14, 1
    %p32 = por %p30, %p31
    %p33 = scmp.ne.s32.totalorder %s22, %s23
    %p34 = scmp.eq.s32.totalorder %s14, 0
    %p35 = por %p33, %p34
    %p36 = scmp.ne.s32.totalorder %s22, %s23
    %p37 = scmp.eq.s32.totalorder %s15, 1
    %p38 = por %p36, %p37
    %p40 = scmp.ne.s32.totalorder %s23, %s39
    %p41 = scmp.eq.s32.totalorder %s15, 0
    %p42 = por %p40, %p41
    %s44 = sadd.s32 %s43, 1
    %p47 = scmp.eq.s32.totalorder %s9, 1
    %p48 = scmp.ne.s32.totalorder %s43, %s45
    %p49 = scmp.eq.s32.totalorder %s9, 0
    %p50 = por %p48, %p49
    %p51 = scmp.ne.s32.totalorder %s43, %s45
    %p52 = scmp.eq.s32.totalorder %s14, 1
    %p53 = por %p51, %p52
    %p54 = scmp.ne.s32.totalorder %s45, %s46
    %p55 = scmp.eq.s32.totalorder %s14, 0
    %p56 = por %p54, %p55
    %p57 = scmp.ne.s32.totalorder %s45, %s46
    %p58 = scmp.eq.s32.totalorder %s15, 1
    %p59 = por %p57, %p58
    %p61 = scmp.ne.s32.totalorder %s46, %s60
    %p62 = scmp.eq.s32.totalorder %s15, 0
    %p63 = por %p61, %p62
    %s65 = sadd.s32 %s64, 1
    %p68 = scmp.eq.s32.totalorder %s9, 1
    %p69 = scmp.ne.s32.totalorder %s64, %s66
    %p70 = scmp.eq.s32.totalorder %s9, 0
    %p71 = por %p69, %p70
    %p72 = scmp.ne.s32.totalorder %s64, %s66
    %p73 = scmp.eq.s32.totalorder %s14, 1
    %p74 = por %p72, %p73
    %p75 = scmp.ne.s32.totalorder %s66, %s67
    %p76 = scmp.eq.s32.totalorder %s14, 0
    %p77 = por %p75, %p76
    %p78 = scmp.ne.s32.totalorder %s66, %s67
    %p79 = scmp.eq.s32.totalorder %s15, 1
    %p80 = por %p78, %p79
    %p82 = scmp.ne.s32.totalorder %s67, %s81
    %p83 = scmp.eq.s32.totalorder %s15, 0
    %p84 = por %p82, %p83
    %s85 = ssub.s32 %s9, %s16
    %p86 = scmp.eq.s32.totalorder %s85, 0
    %s88 = sadd.s32 %s87, 1
    %s89 = scalar_select %p86, %s87, %s88
    %p92 = pneg %p86
    %p93 = scmp.eq.s32.totalorder %s9, 1
    %p94 = por %p92, %p93
    %p95 = scmp.ne.s32.totalorder %s87, %s90
    %p96 = scmp.eq.s32.totalorder %s9, 0
    %p97 = por %p95, %p96
    %p98 = scmp.ne.s32.totalorder %s87, %s90
    %p99 = scmp.eq.s32.totalorder %s14, 1
    %p100 = por %p98, %p99
    %p101 = scmp.ne.s32.totalorder %s90, %s91
    %p102 = scmp.eq.s32.totalorder %s14, 0
    %p103 = por %p101, %p102
    %p104 = scmp.ne.s32.totalorder %s90, %s91
    %p105 = scmp.eq.s32.totalorder %s15, 1
    %p106 = por %p104, %p105
    %p108 = scmp.ne.s32.totalorder %s91, %s107
    %p109 = scmp.eq.s32.totalorder %s15, 0
    %p110 = por %p108, %p109
    %p111 = scmp.le.s32.totalorder 1, %s9
    %p112 = scmp.lt.s32.totalorder %s9, 3
    %p113 = pnand %p111, %p112
    %p114 = pneg %p113
    // Predicated region
    $region9: #{_lambda_.10} parent=5 // pred_check
      _
    $region10: #{_lambda_.10} parent=5 // pred_check_branch
      %116 = sbr.rel (%p113) target = $region12
    $region11: #{_lambda_.10} parent=5 // pred_region
      %s117 = ssub.s32 %s9, 1
      // Predicated region
      $region13: #{_lambda_.10} parent=11 // pred_check
        %p118 = pneg %p56
      $region14: #{_lambda_.10} parent=11 // pred_check_branch
        %120 = sbr.rel (%p118) target = $region16
      $region15: #{_lambda_.10} parent=11 // pred_region
        _
      $region16: #{_lambda_.10} parent=11 // pred_fallthru
        _
      // Predicated region
      $region17: #{_lambda_.10} parent=11 // pred_check
        %p121 = pneg %p77
      $region18: #{_lambda_.10} parent=11 // pred_check_branch
        %123 = sbr.rel (%p121) target = $region20
      $region19: #{_lambda_.10} parent=11 // pred_region
        _
      $region20: #{_lambda_.10} parent=11 // pred_fallthru
        _
    $region12: #{_lambda_.10} parent=5 // pred_fallthru
      _
    %p124 = scmp.lt.s32.totalorder %s9, 2
    // Predicated region
    $region21: #{_lambda_.10} parent=5 // pred_check
      %p125 = pneg %p124
    $region22: #{_lambda_.10} parent=5 // pred_check_branch
      %127 = sbr.rel (%p125) target = $region24
    $region23: #{_lambda_.10} parent=5 // pred_region
      // Predicated region
      $region25: #{_lambda_.10} parent=23 // pred_check
        %p128 = pneg %p29
      $region26: #{_lambda_.10} parent=23 // pred_check_branch
        %130 = sbr.rel (%p128) target = $region28
      $region27: #{_lambda_.10} parent=23 // pred_region
        %s131 = smul.u32 128, %s9
        %p132 = scmp.lt.s32.totalorder %s131, 255
        %s133 = scalar_select %p132, %s131, 255
        %s134 = smul.addr %s133, 4
        %s135 = scalar_lea.vmem %s0, %s134
        %s136 = smul.u32 128, %s9
      $region28: #{_lambda_.10} parent=23 // pred_fallthru
        _
    $region24: #{_lambda_.10} parent=5 // pred_fallthru
      _
    %p137 = scmp.le.s32.totalorder 1, %s9
    %p138 = scmp.lt.s32.totalorder %s9, 3
    %p139 = pnand %p137, %p138
    %p140 = pneg %p139
    // Predicated region
    $region29: #{_lambda_.10} parent=5 // pred_check
      _
    $region30: #{_lambda_.10} parent=5 // pred_check_branch
      %142 = sbr.rel (%p139) target = $region32
    $region31: #{_lambda_.10} parent=5 // pred_region
      %s143 = ssub.s32 %s9, 1
      %s144 = smul.u32 128, %s14
      %p145 = scmp.lt.s32.totalorder %s144, 255
      %s146 = scalar_select %p145, %s144, 255
      %s147 = smul.addr %s146, 4
      %s148 = scalar_lea.vmem %s0, %s147
      %p149 = pneg %p35
      %p150 = pneg %p32
      %p151 = pneg %p56
      %p152 = pneg %p53
      %p153 = pneg %p77
      %p154 = pneg %p74
      %p155 = pneg %p103
      %p156 = pneg %p100
      %s157 = smul.u32 128, %s14
      %p158 = scmp.lt.s32.totalorder %s157, 255
      %s159 = scalar_select %p158, %s157, 255
      %s160 = smul.addr %s159, 4
      %s161 = scalar_lea.vmem %s3, %s160
      %s162 = smul.u32 128, %s14
      %p163 = scmp.lt.s32.totalorder %s162, 255
      %s164 = scalar_select %p163, %s162, 255
      %s165 = smul.addr %s164, 4
      %s166 = scalar_lea.vmem %s0, %s165
      %s167 = smul.u32 128, %s14
      %s168 = smul.u32 128, %s14
      %p169 = scmp.lt.s32.totalorder %s168, 255
      %s170 = scalar_select %p169, %s168, 255
      %s171 = smul.addr %s170, 4
      %s172 = scalar_lea.vmem %s3, %s171
      %s173 = smul.u32 128, %s14
      %v174 = vld [vmem:[%s166] sm:$0xf]
      %v175 = vld [vmem:[%s166 + $0x4] sm:$0xf]
      %v176 = vld [vmem:[%s166 + $0x8] sm:$0xf]
      %v177 = vld [vmem:[%s166 + $0xc] sm:$0xf]
      %v178 = vld [vmem:[%s166 + $0x10] sm:$0xf]
      %v179 = vld [vmem:[%s166 + $0x14] sm:$0xf]
      %v180 = vld [vmem:[%s166 + $0x18] sm:$0xf]
      %v181 = vld [vmem:[%s166 + $0x1c] sm:$0xf]
      %v182 = vld [vmem:[%s166 + $0x20] sm:$0xf]
      %v183 = vld [vmem:[%s166 + $0x24] sm:$0xf]
      %v184 = vld [vmem:[%s166 + $0x28] sm:$0xf]
      %v185 = vld [vmem:[%s166 + $0x2c] sm:$0xf]
      %v186 = vld [vmem:[%s166 + $0x30] sm:$0xf]
      %v187 = vld [vmem:[%s166 + $0x34] sm:$0xf]
      %v188 = vld [vmem:[%s166 + $0x38] sm:$0xf]
      %v189 = vld [vmem:[%s166 + $0x3c] sm:$0xf]
      %v190 = vld [vmem:[%s166 + $0x40] sm:$0xf]
      %v191 = vld [vmem:[%s166 + $0x44] sm:$0xf]
      %v192 = vld [vmem:[%s166 + $0x48] sm:$0xf]
      %v193 = vld [vmem:[%s166 + $0x4c] sm:$0xf]
      %v194 = vld [vmem:[%s166 + $0x50] sm:$0xf]
      %v195 = vld [vmem:[%s166 + $0x54] sm:$0xf]
      %v196 = vld [vmem:[%s166 + $0x58] sm:$0xf]
      %v197 = vld [vmem:[%s166 + $0x5c] sm:$0xf]
      %v198 = vld [vmem:[%s166 + $0x60] sm:$0xf]
      %v199 = vld [vmem:[%s166 + $0x64] sm:$0xf]
      %v200 = vld [vmem:[%s166 + $0x68] sm:$0xf]
      %v201 = vld [vmem:[%s166 + $0x6c] sm:$0xf]
      %v202 = vld [vmem:[%s166 + $0x70] sm:$0xf]
      %v203 = vld [vmem:[%s166 + $0x74] sm:$0xf]
      %v204 = vld [vmem:[%s166 + $0x78] sm:$0xf]
      %v205 = vld [vmem:[%s166 + $0x7c] sm:$0xf]
      %v206 = vld [vmem:[%s166 + $0x80] sm:$0xf]
      %v207 = vld [vmem:[%s166 + $0x84] sm:$0xf]
      %v208 = vld [vmem:[%s166 + $0x88] sm:$0xf]
      %v209 = vld [vmem:[%s166 + $0x8c] sm:$0xf]
      %v210 = vld [vmem:[%s166 + $0x90] sm:$0xf]
      %v211 = vld [vmem:[%s166 + $0x94] sm:$0xf]
      %v212 = vld [vmem:[%s166 + $0x98] sm:$0xf]
      %v213 = vld [vmem:[%s166 + $0x9c] sm:$0xf]
      %v214 = vld [vmem:[%s166 + $0xa0] sm:$0xf]
      %v215 = vld [vmem:[%s166 + $0xa4] sm:$0xf]
      %v216 = vld [vmem:[%s166 + $0xa8] sm:$0xf]
      %v217 = vld [vmem:[%s166 + $0xac] sm:$0xf]
      %v218 = vld [vmem:[%s166 + $0xb0] sm:$0xf]
      %v219 = vld [vmem:[%s166 + $0xb4] sm:$0xf]
      %v220 = vld [vmem:[%s166 + $0xb8] sm:$0xf]
      %v221 = vld [vmem:[%s166 + $0xbc] sm:$0xf]
      %v222 = vld [vmem:[%s166 + $0xc0] sm:$0xf]
      %v223 = vld [vmem:[%s166 + $0xc4] sm:$0xf]
      %v224 = vld [vmem:[%s166 + $0xc8] sm:$0xf]
      %v225 = vld [vmem:[%s166 + $0xcc] sm:$0xf]
      %v226 = vld [vmem:[%s166 + $0xd0] sm:$0xf]
      %v227 = vld [vmem:[%s166 + $0xd4] sm:$0xf]
      %v228 = vld [vmem:[%s166 + $0xd8] sm:$0xf]
      %v229 = vld [vmem:[%s166 + $0xdc] sm:$0xf]
      %v230 = vld [vmem:[%s166 + $0xe0] sm:$0xf]
      %v231 = vld [vmem:[%s166 + $0xe4] sm:$0xf]
      %v232 = vld [vmem:[%s166 + $0xe8] sm:$0xf]
      %v233 = vld [vmem:[%s166 + $0xec] sm:$0xf]
      %v234 = vld [vmem:[%s166 + $0xf0] sm:$0xf]
      %v235 = vld [vmem:[%s166 + $0xf4] sm:$0xf]
      %v236 = vld [vmem:[%s166 + $0xf8] sm:$0xf]
      %v237 = vld [vmem:[%s166 + $0xfc] sm:$0xf]
      %v238 = vld [vmem:[%s166 + $0x100] sm:$0xf]
      %v239 = vld [vmem:[%s166 + $0x104] sm:$0xf]
      %v240 = vld [vmem:[%s166 + $0x108] sm:$0xf]
      %v241 = vld [vmem:[%s166 + $0x10c] sm:$0xf]
      %v242 = vld [vmem:[%s166 + $0x110] sm:$0xf]
      %v243 = vld [vmem:[%s166 + $0x114] sm:$0xf]
      %v244 = vld [vmem:[%s166 + $0x118] sm:$0xf]
      %v245 = vld [vmem:[%s166 + $0x11c] sm:$0xf]
      %v246 = vld [vmem:[%s166 + $0x120] sm:$0xf]
      %v247 = vld [vmem:[%s166 + $0x124] sm:$0xf]
      %v248 = vld [vmem:[%s166 + $0x128] sm:$0xf]
      %v249 = vld [vmem:[%s166 + $0x12c] sm:$0xf]
      %v250 = vld [vmem:[%s166 + $0x130] sm:$0xf]
      %v251 = vld [vmem:[%s166 + $0x134] sm:$0xf]
      %v252 = vld [vmem:[%s166 + $0x138] sm:$0xf]
      %v253 = vld [vmem:[%s166 + $0x13c] sm:$0xf]
      %v254 = vld [vmem:[%s166 + $0x140] sm:$0xf]
      %v255 = vld [vmem:[%s166 + $0x144] sm:$0xf]
      %v256 = vld [vmem:[%s166 + $0x148] sm:$0xf]
      %v257 = vld [vmem:[%s166 + $0x14c] sm:$0xf]
      %v258 = vld [vmem:[%s166 + $0x150] sm:$0xf]
      %v259 = vld [vmem:[%s166 + $0x154] sm:$0xf]
      %v260 = vld [vmem:[%s166 + $0x158] sm:$0xf]
      %v261 = vld [vmem:[%s166 + $0x15c] sm:$0xf]
      %v262 = vld [vmem:[%s166 + $0x160] sm:$0xf]
      %v263 = vld [vmem:[%s166 + $0x164] sm:$0xf]
      %v264 = vld [vmem:[%s166 + $0x168] sm:$0xf]
      %v265 = vld [vmem:[%s166 + $0x16c] sm:$0xf]
      %v266 = vld [vmem:[%s166 + $0x170] sm:$0xf]
      %v267 = vld [vmem:[%s166 + $0x174] sm:$0xf]
      %v268 = vld [vmem:[%s166 + $0x178] sm:$0xf]
      %v269 = vld [vmem:[%s166 + $0x17c] sm:$0xf]
      %v270 = vld [vmem:[%s166 + $0x180] sm:$0xf]
      %v271 = vld [vmem:[%s166 + $0x184] sm:$0xf]
      %v272 = vld [vmem:[%s166 + $0x188] sm:$0xf]
      %v273 = vld [vmem:[%s166 + $0x18c] sm:$0xf]
      %v274 = vld [vmem:[%s166 + $0x190] sm:$0xf]
      %v275 = vld [vmem:[%s166 + $0x194] sm:$0xf]
      %v276 = vld [vmem:[%s166 + $0x198] sm:$0xf]
      %v277 = vld [vmem:[%s166 + $0x19c] sm:$0xf]
      %v278 = vld [vmem:[%s166 + $0x1a0] sm:$0xf]
      %v279 = vld [vmem:[%s166 + $0x1a4] sm:$0xf]
      %v280 = vld [vmem:[%s166 + $0x1a8] sm:$0xf]
      %v281 = vld [vmem:[%s166 + $0x1ac] sm:$0xf]
      %v282 = vld [vmem:[%s166 + $0x1b0] sm:$0xf]
      %v283 = vld [vmem:[%s166 + $0x1b4] sm:$0xf]
      %v284 = vld [vmem:[%s166 + $0x1b8] sm:$0xf]
      %v285 = vld [vmem:[%s166 + $0x1bc] sm:$0xf]
      %v286 = vld [vmem:[%s166 + $0x1c0] sm:$0xf]
      %v287 = vld [vmem:[%s166 + $0x1c4] sm:$0xf]
      %v288 = vld [vmem:[%s166 + $0x1c8] sm:$0xf]
      %v289 = vld [vmem:[%s166 + $0x1cc] sm:$0xf]
      %v290 = vld [vmem:[%s166 + $0x1d0] sm:$0xf]
      %v291 = vld [vmem:[%s166 + $0x1d4] sm:$0xf]
      %v292 = vld [vmem:[%s166 + $0x1d8] sm:$0xf]
      %v293 = vld [vmem:[%s166 + $0x1dc] sm:$0xf]
      %v294 = vld [vmem:[%s166 + $0x1e0] sm:$0xf]
      %v295 = vld [vmem:[%s166 + $0x1e4] sm:$0xf]
      %v296 = vld [vmem:[%s166 + $0x1e8] sm:$0xf]
      %v297 = vld [vmem:[%s166 + $0x1ec] sm:$0xf]
      %v298 = vld [vmem:[%s166 + $0x1f0] sm:$0xf]
      %v299 = vld [vmem:[%s166 + $0x1f4] sm:$0xf]
      %v300 = vld [vmem:[%s166 + $0x1f8] sm:$0xf]
      %v301 = vld [vmem:[%s166 + $0x1fc] sm:$0xf]
      %v302 = vld [vmem:[%s1] sm:$0xf]
      %v303 = vld [vmem:[%s1 + $0x4] sm:$0xf]
      %v304 = vld [vmem:[%s1 + $0x8] sm:$0xf]
      %v305 = vld [vmem:[%s1 + $0xc] sm:$0xf]
      %v306 = vld [vmem:[%s1 + $0x10] sm:$0xf]
      %v307 = vld [vmem:[%s1 + $0x14] sm:$0xf]
      %v308 = vld [vmem:[%s1 + $0x18] sm:$0xf]
      %v309 = vld [vmem:[%s1 + $0x1c] sm:$0xf]
      %v310 = vld [vmem:[%s1 + $0x20] sm:$0xf]
      %v311 = vld [vmem:[%s1 + $0x24] sm:$0xf]
      %v312 = vld [vmem:[%s1 + $0x28] sm:$0xf]
      %v313 = vld [vmem:[%s1 + $0x2c] sm:$0xf]
      %v314 = vld [vmem:[%s1 + $0x30] sm:$0xf]
      %v315 = vld [vmem:[%s1 + $0x34] sm:$0xf]
      %v316 = vld [vmem:[%s1 + $0x38] sm:$0xf]
      %v317 = vld [vmem:[%s1 + $0x3c] sm:$0xf]
      %v318 = vld [vmem:[%s2] sm:$0x1]
      %v320 = vperm.slane %v318, 0
      %v450 = vunpack.c.l.b16 %v174
      %v451 = vunpack.c.l.b16 %v175
      %v452 = vunpack.c.l.b16 %v176
      %v453 = vunpack.c.l.b16 %v177
      %v454 = vunpack.c.l.b16 %v178
      %v455 = vunpack.c.l.b16 %v179
      %v456 = vunpack.c.l.b16 %v180
      %v457 = vunpack.c.l.b16 %v181
      %v458 = vunpack.c.l.b16 %v182
      %v459 = vunpack.c.l.b16 %v183
      %v460 = vunpack.c.l.b16 %v184
      %v461 = vunpack.c.l.b16 %v185
      %v462 = vunpack.c.l.b16 %v186
      %v463 = vunpack.c.l.b16 %v187
      %v464 = vunpack.c.l.b16 %v188
      %v465 = vunpack.c.l.b16 %v189
      %v466 = vunpack.c.l.b16 %v190
      %v467 = vunpack.c.l.b16 %v191
      %v468 = vunpack.c.l.b16 %v192
      %v469 = vunpack.c.l.b16 %v193
      %v470 = vunpack.c.l.b16 %v194
      %v471 = vunpack.c.l.b16 %v195
      %v472 = vunpack.c.l.b16 %v196
      %v473 = vunpack.c.l.b16 %v197
      %v474 = vunpack.c.l.b16 %v198
      %v475 = vunpack.c.l.b16 %v199
      %v476 = vunpack.c.l.b16 %v200
      %v477 = vunpack.c.l.b16 %v201
      %v478 = vunpack.c.l.b16 %v202
      %v479 = vunpack.c.l.b16 %v203
      %v480 = vunpack.c.l.b16 %v204
      %v481 = vunpack.c.l.b16 %v205
      %v482 = vunpack.c.l.b16 %v206
      %v483 = vunpack.c.l.b16 %v207
      %v484 = vunpack.c.l.b16 %v208
      %v485 = vunpack.c.l.b16 %v209
      %v486 = vunpack.c.l.b16 %v210
      %v487 = vunpack.c.l.b16 %v211
      %v488 = vunpack.c.l.b16 %v212
      %v489 = vunpack.c.l.b16 %v213
      %v490 = vunpack.c.l.b16 %v214
      %v491 = vunpack.c.l.b16 %v215
      %v492 = vunpack.c.l.b16 %v216
      %v493 = vunpack.c.l.b16 %v217
      %v494 = vunpack.c.l.b16 %v218
      %v495 = vunpack.c.l.b16 %v219
      %v496 = vunpack.c.l.b16 %v220
      %v497 = vunpack.c.l.b16 %v221
      %v498 = vunpack.c.l.b16 %v222
      %v499 = vunpack.c.l.b16 %v223
      %v500 = vunpack.c.l.b16 %v224
      %v501 = vunpack.c.l.b16 %v225
      %v502 = vunpack.c.l.b16 %v226
      %v503 = vunpack.c.l.b16 %v227
      %v504 = vunpack.c.l.b16 %v228
      %v505 = vunpack.c.l.b16 %v229
      %v506 = vunpack.c.l.b16 %v230
      %v507 = vunpack.c.l.b16 %v231
      %v508 = vunpack.c.l.b16 %v232
      %v509 = vunpack.c.l.b16 %v233
      %v510 = vunpack.c.l.b16 %v234
      %v511 = vunpack.c.l.b16 %v235
      %v512 = vunpack.c.l.b16 %v236
      %v513 = vunpack.c.l.b16 %v237
      %v514 = vunpack.c.l.b16 %v238
      %v515 = vunpack.c.l.b16 %v239
      %v516 = vunpack.c.l.b16 %v240
      %v517 = vunpack.c.l.b16 %v241
      %v518 = vunpack.c.l.b16 %v242
      %v519 = vunpack.c.l.b16 %v243
      %v520 = vunpack.c.l.b16 %v244
      %v521 = vunpack.c.l.b16 %v245
      %v522 = vunpack.c.l.b16 %v246
      %v523 = vunpack.c.l.b16 %v247
      %v524 = vunpack.c.l.b16 %v248
      %v525 = vunpack.c.l.b16 %v249
      %v526 = vunpack.c.l.b16 %v250
      %v527 = vunpack.c.l.b16 %v251
      %v528 = vunpack.c.l.b16 %v252
      %v529 = vunpack.c.l.b16 %v253
      %v530 = vunpack.c.l.b16 %v254
      %v531 = vunpack.c.l.b16 %v255
      %v532 = vunpack.c.l.b16 %v256
      %v533 = vunpack.c.l.b16 %v257
      %v534 = vunpack.c.l.b16 %v258
      %v535 = vunpack.c.l.b16 %v259
      %v536 = vunpack.c.l.b16 %v260
      %v537 = vunpack.c.l.b16 %v261
      %v538 = vunpack.c.l.b16 %v262
      %v539 = vunpack.c.l.b16 %v263
      %v540 = vunpack.c.l.b16 %v264
      %v541 = vunpack.c.l.b16 %v265
      %v542 = vunpack.c.l.b16 %v266
      %v543 = vunpack.c.l.b16 %v267
      %v544 = vunpack.c.l.b16 %v268
      %v545 = vunpack.c.l.b16 %v269
      %v546 = vunpack.c.l.b16 %v270
      %v547 = vunpack.c.l.b16 %v271
      %v548 = vunpack.c.l.b16 %v272
      %v549 = vunpack.c.l.b16 %v273
      %v550 = vunpack.c.l.b16 %v274
      %v551 = vunpack.c.l.b16 %v275
      %v552 = vunpack.c.l.b16 %v276
      %v553 = vunpack.c.l.b16 %v277
      %v554 = vunpack.c.l.b16 %v278
      %v555 = vunpack.c.l.b16 %v279
      %v556 = vunpack.c.l.b16 %v280
      %v557 = vunpack.c.l.b16 %v281
      %v558 = vunpack.c.l.b16 %v282
      %v559 = vunpack.c.l.b16 %v283
      %v560 = vunpack.c.l.b16 %v284
      %v561 = vunpack.c.l.b16 %v285
      %v562 = vunpack.c.l.b16 %v286
      %v563 = vunpack.c.l.b16 %v287
      %v564 = vunpack.c.l.b16 %v288
      %v565 = vunpack.c.l.b16 %v289
      %v566 = vunpack.c.l.b16 %v290
      %v567 = vunpack.c.l.b16 %v291
      %v568 = vunpack.c.l.b16 %v292
      %v569 = vunpack.c.l.b16 %v293
      %v570 = vunpack.c.l.b16 %v294
      %v571 = vunpack.c.l.b16 %v295
      %v572 = vunpack.c.l.b16 %v296
      %v573 = vunpack.c.l.b16 %v297
      %v574 = vunpack.c.l.b16 %v298
      %v575 = vunpack.c.l.b16 %v299
      %v576 = vunpack.c.l.b16 %v300
      %v577 = vunpack.c.l.b16 %v301
      %v578 = vpack.c.b16 %v451, %v450
      %v579 = vpack.c.b16 %v453, %v452
      %v580 = vpack.c.b16 %v455, %v454
      %v581 = vpack.c.b16 %v457, %v456
      %v582 = vpack.c.b16 %v459, %v458
      %v583 = vpack.c.b16 %v461, %v460
      %v584 = vpack.c.b16 %v463, %v462
      %v585 = vpack.c.b16 %v465, %v464
      %v586 = vpack.c.b16 %v467, %v466
      %v587 = vpack.c.b16 %v469, %v468
      %v588 = vpack.c.b16 %v471, %v470
      %v589 = vpack.c.b16 %v473, %v472
      %v590 = vpack.c.b16 %v475, %v474
      %v591 = vpack.c.b16 %v477, %v476
      %v592 = vpack.c.b16 %v479, %v478
      %v593 = vpack.c.b16 %v481, %v480
      %v594 = vpack.c.b16 %v483, %v482
      %v595 = vpack.c.b16 %v485, %v484
      %v596 = vpack.c.b16 %v487, %v486
      %v597 = vpack.c.b16 %v489, %v488
      %v598 = vpack.c.b16 %v491, %v490
      %v599 = vpack.c.b16 %v493, %v492
      %v600 = vpack.c.b16 %v495, %v494
      %v601 = vpack.c.b16 %v497, %v496
      %v602 = vpack.c.b16 %v499, %v498
      %v603 = vpack.c.b16 %v501, %v500
      %v604 = vpack.c.b16 %v503, %v502
      %v605 = vpack.c.b16 %v505, %v504
      %v606 = vpack.c.b16 %v507, %v506
      %v607 = vpack.c.b16 %v509, %v508
      %v608 = vpack.c.b16 %v511, %v510
      %v609 = vpack.c.b16 %v513, %v512
      %v610 = vpack.c.b16 %v515, %v514
      %v611 = vpack.c.b16 %v517, %v516
      %v612 = vpack.c.b16 %v519, %v518
      %v613 = vpack.c.b16 %v521, %v520
      %v614 = vpack.c.b16 %v523, %v522
      %v615 = vpack.c.b16 %v525, %v524
      %v616 = vpack.c.b16 %v527, %v526
      %v617 = vpack.c.b16 %v529, %v528
      %v618 = vpack.c.b16 %v531, %v530
      %v619 = vpack.c.b16 %v533, %v532
      %v620 = vpack.c.b16 %v535, %v534
      %v621 = vpack.c.b16 %v537, %v536
      %v622 = vpack.c.b16 %v539, %v538
      %v623 = vpack.c.b16 %v541, %v540
      %v624 = vpack.c.b16 %v543, %v542
      %v625 = vpack.c.b16 %v545, %v544
      %v626 = vpack.c.b16 %v547, %v546
      %v627 = vpack.c.b16 %v549, %v548
      %v628 = vpack.c.b16 %v551, %v550
      %v629 = vpack.c.b16 %v553, %v552
      %v630 = vpack.c.b16 %v555, %v554
      %v631 = vpack.c.b16 %v557, %v556
      %v632 = vpack.c.b16 %v559, %v558
      %v633 = vpack.c.b16 %v561, %v560
      %v634 = vpack.c.b16 %v563, %v562
      %v635 = vpack.c.b16 %v565, %v564
      %v636 = vpack.c.b16 %v567, %v566
      %v637 = vpack.c.b16 %v569, %v568
      %v638 = vpack.c.b16 %v571, %v570
      %v639 = vpack.c.b16 %v573, %v572
      %v640 = vpack.c.b16 %v575, %v574
      %v641 = vpack.c.b16 %v577, %v576
      %v722 = vunpack.c.l.b16 %v302
      %v723 = vunpack.c.l.b16 %v303
      %v724 = vunpack.c.l.b16 %v304
      %v725 = vunpack.c.l.b16 %v305
      %v726 = vunpack.c.l.b16 %v306
      %v727 = vunpack.c.l.b16 %v307
      %v728 = vunpack.c.l.b16 %v308
      %v729 = vunpack.c.l.b16 %v309
      %v730 = vunpack.c.l.b16 %v310
      %v731 = vunpack.c.l.b16 %v311
      %v732 = vunpack.c.l.b16 %v312
      %v733 = vunpack.c.l.b16 %v313
      %v734 = vunpack.c.l.b16 %v314
      %v735 = vunpack.c.l.b16 %v315
      %v736 = vunpack.c.l.b16 %v316
      %v737 = vunpack.c.l.b16 %v317
      %v738 = vpack.c.b16 %v723, %v722
      %v739 = vpack.c.b16 %v725, %v724
      %v740 = vpack.c.b16 %v727, %v726
      %v741 = vpack.c.b16 %v729, %v728
      %v742 = vpack.c.b16 %v731, %v730
      %v743 = vpack.c.b16 %v733, %v732
      %v744 = vpack.c.b16 %v735, %v734
      %v745 = vpack.c.b16 %v737, %v736
      %754 = vmatpush.bf16.msra.mxu0 %v745
      %755 = vmatpush.bf16.msra.mxu0 %v744
      %756 = vmatpush.bf16.msra.mxu0 %v743
      %757 = vmatpush.bf16.msra.mxu0 %v742
      %758 = vmatpush.bf16.msra.mxu0 %v741
      %759 = vmatpush.bf16.msra.mxu0 %v740
      %760 = vmatpush.bf16.msra.mxu0 %v739
      %761 = vmatpush.bf16.msra.mxu0 %v738
      %762 = vmatmul.bf16.gmra.mxu0 %v578
      %v763 = vpop.f32.mrf.mxu0
      %v764 = vadd.f32 %v320, %v763
      %v765 = vpop.f32.mrf.mxu0
      %v766 = vadd.f32 %v320, %v765
      %767 = vmatmul.bf16.gmra.mxu0 %v579
      %v768 = vpop.f32.mrf.mxu0
      %v769 = vadd.f32 %v320, %v768
      %v770 = vpop.f32.mrf.mxu0
      %v771 = vadd.f32 %v320, %v770
      %772 = vmatmul.bf16.gmra.mxu0 %v580
      %v773 = vpop.f32.mrf.mxu0
      %v774 = vadd.f32 %v320, %v773
      %v775 = vpop.f32.mrf.mxu0
      %v776 = vadd.f32 %v320, %v775
      %777 = vmatmul.bf16.gmra.mxu0 %v581
      %v778 = vpop.f32.mrf.mxu0
      %v779 = vadd.f32 %v320, %v778
      %v780 = vpop.f32.mrf.mxu0
      %v781 = vadd.f32 %v320, %v780
      %782 = vmatmul.bf16.gmra.mxu0 %v582
      %v783 = vpop.f32.mrf.mxu0
      %v784 = vadd.f32 %v320, %v783
      %v785 = vpop.f32.mrf.mxu0
      %v786 = vadd.f32 %v320, %v785
      %787 = vmatmul.bf16.gmra.mxu0 %v583
      %v788 = vpop.f32.mrf.mxu0
      %v789 = vadd.f32 %v320, %v788
      %v790 = vpop.f32.mrf.mxu0
      %v791 = vadd.f32 %v320, %v790
      %792 = vmatmul.bf16.gmra.mxu0 %v584
      %v793 = vpop.f32.mrf.mxu0
      %v794 = vadd.f32 %v320, %v793
      %v795 = vpop.f32.mrf.mxu0
      %v796 = vadd.f32 %v320, %v795
      %797 = vmatmul.bf16.gmra.mxu0 %v585
      %v798 = vpop.f32.mrf.mxu0
      %v799 = vadd.f32 %v320, %v798
      %v800 = vpop.f32.mrf.mxu0
      %v801 = vadd.f32 %v320, %v800
      %802 = vmatmul.bf16.gmra.mxu0 %v586
      %v803 = vpop.f32.mrf.mxu0
      %v804 = vadd.f32 %v320, %v803
      %v805 = vpop.f32.mrf.mxu0
      %v806 = vadd.f32 %v320, %v805
      %807 = vmatmul.bf16.gmra.mxu0 %v587
      %v808 = vpop.f32.mrf.mxu0
      %v809 = vadd.f32 %v320, %v808
      %v810 = vpop.f32.mrf.mxu0
      %v811 = vadd.f32 %v320, %v810
      %812 = vmatmul.bf16.gmra.mxu0 %v588
      %v813 = vpop.f32.mrf.mxu0
      %v814 = vadd.f32 %v320, %v813
      %v815 = vpop.f32.mrf.mxu0
      %v816 = vadd.f32 %v320, %v815
      %817 = vmatmul.bf16.gmra.mxu0 %v589
      %v818 = vpop.f32.mrf.mxu0
      %v819 = vadd.f32 %v320, %v818
      %v820 = vpop.f32.mrf.mxu0
      %v821 = vadd.f32 %v320, %v820
      %822 = vmatmul.bf16.gmra.mxu0 %v590
      %v823 = vpop.f32.mrf.mxu0
      %v824 = vadd.f32 %v320, %v823
      %v825 = vpop.f32.mrf.mxu0
      %v826 = vadd.f32 %v320, %v825
      %827 = vmatmul.bf16.gmra.mxu0 %v591
      %v828 = vpop.f32.mrf.mxu0
      %v829 = vadd.f32 %v320, %v828
      %v830 = vpop.f32.mrf.mxu0
      %v831 = vadd.f32 %v320, %v830
      %832 = vmatmul.bf16.gmra.mxu0 %v592
      %v833 = vpop.f32.mrf.mxu0
      %v834 = vadd.f32 %v320, %v833
      %v835 = vpop.f32.mrf.mxu0
      %v836 = vadd.f32 %v320, %v835
      %837 = vmatmul.bf16.gmra.mxu0 %v593
      %v838 = vpop.f32.mrf.mxu0
      %v839 = vadd.f32 %v320, %v838
      %v840 = vpop.f32.mrf.mxu0
      %v841 = vadd.f32 %v320, %v840
      %842 = vmatmul.bf16.gmra.mxu0 %v594
      %v843 = vpop.f32.mrf.mxu0
      %v844 = vadd.f32 %v320, %v843
      %v845 = vpop.f32.mrf.mxu0
      %v846 = vadd.f32 %v320, %v845
      %847 = vmatmul.bf16.gmra.mxu0 %v595
      %v848 = vpop.f32.mrf.mxu0
      %v849 = vadd.f32 %v320, %v848
      %v850 = vpop.f32.mrf.mxu0
      %v851 = vadd.f32 %v320, %v850
      %852 = vmatmul.bf16.gmra.mxu0 %v596
      %v853 = vpop.f32.mrf.mxu0
      %v854 = vadd.f32 %v320, %v853
      %v855 = vpop.f32.mrf.mxu0
      %v856 = vadd.f32 %v320, %v855
      %857 = vmatmul.bf16.gmra.mxu0 %v597
      %v858 = vpop.f32.mrf.mxu0
      %v859 = vadd.f32 %v320, %v858
      %v860 = vpop.f32.mrf.mxu0
      %v861 = vadd.f32 %v320, %v860
      %862 = vmatmul.bf16.gmra.mxu0 %v598
      %v863 = vpop.f32.mrf.mxu0
      %v864 = vadd.f32 %v320, %v863
      %v865 = vpop.f32.mrf.mxu0
      %v866 = vadd.f32 %v320, %v865
      %867 = vmatmul.bf16.gmra.mxu0 %v599
      %v868 = vpop.f32.mrf.mxu0
      %v869 = vadd.f32 %v320, %v868
      %v870 = vpop.f32.mrf.mxu0
      %v871 = vadd.f32 %v320, %v870
      %872 = vmatmul.bf16.gmra.mxu0 %v600
      %v873 = vpop.f32.mrf.mxu0
      %v874 = vadd.f32 %v320, %v873
      %v875 = vpop.f32.mrf.mxu0
      %v876 = vadd.f32 %v320, %v875
      %877 = vmatmul.bf16.gmra.mxu0 %v601
      %v878 = vpop.f32.mrf.mxu0
      %v879 = vadd.f32 %v320, %v878
      %v880 = vpop.f32.mrf.mxu0
      %v881 = vadd.f32 %v320, %v880
      %882 = vmatmul.bf16.gmra.mxu0 %v602
      %v883 = vpop.f32.mrf.mxu0
      %v884 = vadd.f32 %v320, %v883
      %v885 = vpop.f32.mrf.mxu0
      %v886 = vadd.f32 %v320, %v885
      %887 = vmatmul.bf16.gmra.mxu0 %v603
      %v888 = vpop.f32.mrf.mxu0
      %v889 = vadd.f32 %v320, %v888
      %v890 = vpop.f32.mrf.mxu0
      %v891 = vadd.f32 %v320, %v890
      %892 = vmatmul.bf16.gmra.mxu0 %v604
      %v893 = vpop.f32.mrf.mxu0
      %v894 = vadd.f32 %v320, %v893
      %v895 = vpop.f32.mrf.mxu0
      %v896 = vadd.f32 %v320, %v895
      %897 = vmatmul.bf16.gmra.mxu0 %v605
      %v898 = vpop.f32.mrf.mxu0
      %v899 = vadd.f32 %v320, %v898
      %v900 = vpop.f32.mrf.mxu0
      %v901 = vadd.f32 %v320, %v900
      %902 = vmatmul.bf16.gmra.mxu0 %v606
      %v903 = vpop.f32.mrf.mxu0
      %v904 = vadd.f32 %v320, %v903
      %v905 = vpop.f32.mrf.mxu0
      %v906 = vadd.f32 %v320, %v905
      %907 = vmatmul.bf16.gmra.mxu0 %v607
      %v908 = vpop.f32.mrf.mxu0
      %v909 = vadd.f32 %v320, %v908
      %v910 = vpop.f32.mrf.mxu0
      %v911 = vadd.f32 %v320, %v910
      %912 = vmatmul.bf16.gmra.mxu0 %v608
      %v913 = vpop.f32.mrf.mxu0
      %v914 = vadd.f32 %v320, %v913
      %v915 = vpop.f32.mrf.mxu0
      %v916 = vadd.f32 %v320, %v915
      %917 = vmatmul.bf16.gmra.mxu0 %v609
      %v918 = vpop.f32.mrf.mxu0
      %v919 = vadd.f32 %v320, %v918
      %v920 = vpop.f32.mrf.mxu0
      %v921 = vadd.f32 %v320, %v920
      %922 = vmatmul.bf16.gmra.mxu0 %v610
      %v923 = vpop.f32.mrf.mxu0
      %v924 = vadd.f32 %v320, %v923
      %v925 = vpop.f32.mrf.mxu0
      %v926 = vadd.f32 %v320, %v925
      %927 = vmatmul.bf16.gmra.mxu0 %v611
      %v928 = vpop.f32.mrf.mxu0
      %v929 = vadd.f32 %v320, %v928
      %v930 = vpop.f32.mrf.mxu0
      %v931 = vadd.f32 %v320, %v930
      %932 = vmatmul.bf16.gmra.mxu0 %v612
      %v933 = vpop.f32.mrf.mxu0
      %v934 = vadd.f32 %v320, %v933
      %v935 = vpop.f32.mrf.mxu0
      %v936 = vadd.f32 %v320, %v935
      %937 = vmatmul.bf16.gmra.mxu0 %v613
      %v938 = vpop.f32.mrf.mxu0
      %v939 = vadd.f32 %v320, %v938
      %v940 = vpop.f32.mrf.mxu0
      %v941 = vadd.f32 %v320, %v940
      %942 = vmatmul.bf16.gmra.mxu0 %v614
      %v943 = vpop.f32.mrf.mxu0
      %v944 = vadd.f32 %v320, %v943
      %v945 = vpop.f32.mrf.mxu0
      %v946 = vadd.f32 %v320, %v945
      %947 = vmatmul.bf16.gmra.mxu0 %v615
      %v948 = vpop.f32.mrf.mxu0
      %v949 = vadd.f32 %v320, %v948
      %v950 = vpop.f32.mrf.mxu0
      %v951 = vadd.f32 %v320, %v950
      %952 = vmatmul.bf16.gmra.mxu0 %v616
      %v953 = vpop.f32.mrf.mxu0
      %v954 = vadd.f32 %v320, %v953
      %v955 = vpop.f32.mrf.mxu0
      %v956 = vadd.f32 %v320, %v955
      %957 = vmatmul.bf16.gmra.mxu0 %v617
      %v958 = vpop.f32.mrf.mxu0
      %v959 = vadd.f32 %v320, %v958
      %v960 = vpop.f32.mrf.mxu0
      %v961 = vadd.f32 %v320, %v960
      %962 = vmatmul.bf16.gmra.mxu0 %v618
      %v963 = vpop.f32.mrf.mxu0
      %v964 = vadd.f32 %v320, %v963
      %v965 = vpop.f32.mrf.mxu0
      %v966 = vadd.f32 %v320, %v965
      %967 = vmatmul.bf16.gmra.mxu0 %v619
      %v968 = vpop.f32.mrf.mxu0
      %v969 = vadd.f32 %v320, %v968
      %v970 = vpop.f32.mrf.mxu0
      %v971 = vadd.f32 %v320, %v970
      %972 = vmatmul.bf16.gmra.mxu0 %v620
      %v973 = vpop.f32.mrf.mxu0
      %v974 = vadd.f32 %v320, %v973
      %v975 = vpop.f32.mrf.mxu0
      %v976 = vadd.f32 %v320, %v975
      %977 = vmatmul.bf16.gmra.mxu0 %v621
      %v978 = vpop.f32.mrf.mxu0
      %v979 = vadd.f32 %v320, %v978
      %v980 = vpop.f32.mrf.mxu0
      %v981 = vadd.f32 %v320, %v980
      %982 = vmatmul.bf16.gmra.mxu0 %v622
      %v983 = vpop.f32.mrf.mxu0
      %v984 = vadd.f32 %v320, %v983
      %v985 = vpop.f32.mrf.mxu0
      %v986 = vadd.f32 %v320, %v985
      %987 = vmatmul.bf16.gmra.mxu0 %v623
      %v988 = vpop.f32.mrf.mxu0
      %v989 = vadd.f32 %v320, %v988
      %v990 = vpop.f32.mrf.mxu0
      %v991 = vadd.f32 %v320, %v990
      %992 = vmatmul.bf16.gmra.mxu0 %v624
      %v993 = vpop.f32.mrf.mxu0
      %v994 = vadd.f32 %v320, %v993
      %v995 = vpop.f32.mrf.mxu0
      %v996 = vadd.f32 %v320, %v995
      %997 = vmatmul.bf16.gmra.mxu0 %v625
      %v998 = vpop.f32.mrf.mxu0
      %v999 = vadd.f32 %v320, %v998
      %v1000 = vpop.f32.mrf.mxu0
      %v1001 = vadd.f32 %v320, %v1000
      %1002 = vmatmul.bf16.gmra.mxu0 %v626
      %v1003 = vpop.f32.mrf.mxu0
      %v1004 = vadd.f32 %v320, %v1003
      %v1005 = vpop.f32.mrf.mxu0
      %v1006 = vadd.f32 %v320, %v1005
      %1007 = vmatmul.bf16.gmra.mxu0 %v627
      %v1008 = vpop.f32.mrf.mxu0
      %v1009 = vadd.f32 %v320, %v1008
      %v1010 = vpop.f32.mrf.mxu0
      %v1011 = vadd.f32 %v320, %v1010
      %1012 = vmatmul.bf16.gmra.mxu0 %v628
      %v1013 = vpop.f32.mrf.mxu0
      %v1014 = vadd.f32 %v320, %v1013
      %v1015 = vpop.f32.mrf.mxu0
      %v1016 = vadd.f32 %v320, %v1015
      %1017 = vmatmul.bf16.gmra.mxu0 %v629
      %v1018 = vpop.f32.mrf.mxu0
      %v1019 = vadd.f32 %v320, %v1018
      %v1020 = vpop.f32.mrf.mxu0
      %v1021 = vadd.f32 %v320, %v1020
      %1022 = vmatmul.bf16.gmra.mxu0 %v630
      %v1023 = vpop.f32.mrf.mxu0
      %v1024 = vadd.f32 %v320, %v1023
      %v1025 = vpop.f32.mrf.mxu0
      %v1026 = vadd.f32 %v320, %v1025
      %1027 = vmatmul.bf16.gmra.mxu0 %v631
      %v1028 = vpop.f32.mrf.mxu0
      %v1029 = vadd.f32 %v320, %v1028
      %v1030 = vpop.f32.mrf.mxu0
      %v1031 = vadd.f32 %v320, %v1030
      %1032 = vmatmul.bf16.gmra.mxu0 %v632
      %v1033 = vpop.f32.mrf.mxu0
      %v1034 = vadd.f32 %v320, %v1033
      %v1035 = vpop.f32.mrf.mxu0
      %v1036 = vadd.f32 %v320, %v1035
      %1037 = vmatmul.bf16.gmra.mxu0 %v633
      %v1038 = vpop.f32.mrf.mxu0
      %v1039 = vadd.f32 %v320, %v1038
      %v1040 = vpop.f32.mrf.mxu0
      %v1041 = vadd.f32 %v320, %v1040
      %1042 = vmatmul.bf16.gmra.mxu0 %v634
      %v1043 = vpop.f32.mrf.mxu0
      %v1044 = vadd.f32 %v320, %v1043
      %v1045 = vpop.f32.mrf.mxu0
      %v1046 = vadd.f32 %v320, %v1045
      %1047 = vmatmul.bf16.gmra.mxu0 %v635
      %v1048 = vpop.f32.mrf.mxu0
      %v1049 = vadd.f32 %v320, %v1048
      %v1050 = vpop.f32.mrf.mxu0
      %v1051 = vadd.f32 %v320, %v1050
      %1052 = vmatmul.bf16.gmra.mxu0 %v636
      %v1053 = vpop.f32.mrf.mxu0
      %v1054 = vadd.f32 %v320, %v1053
      %v1055 = vpop.f32.mrf.mxu0
      %v1056 = vadd.f32 %v320, %v1055
      %1057 = vmatmul.bf16.gmra.mxu0 %v637
      %v1058 = vpop.f32.mrf.mxu0
      %v1059 = vadd.f32 %v320, %v1058
      %v1060 = vpop.f32.mrf.mxu0
      %v1061 = vadd.f32 %v320, %v1060
      %1062 = vmatmul.bf16.gmra.mxu0 %v638
      %v1063 = vpop.f32.mrf.mxu0
      %v1064 = vadd.f32 %v320, %v1063
      %v1065 = vpop.f32.mrf.mxu0
      %v1066 = vadd.f32 %v320, %v1065
      %1067 = vmatmul.bf16.gmra.mxu0 %v639
      %v1068 = vpop.f32.mrf.mxu0
      %v1069 = vadd.f32 %v320, %v1068
      %v1070 = vpop.f32.mrf.mxu0
      %v1071 = vadd.f32 %v320, %v1070
      %1072 = vmatmul.bf16.gmra.mxu0 %v640
      %v1073 = vpop.f32.mrf.mxu0
      %v1074 = vadd.f32 %v320, %v1073
      %v1075 = vpop.f32.mrf.mxu0
      %v1076 = vadd.f32 %v320, %v1075
      %1077 = vmatmul.bf16.gmra.mxu0 %v641
      %v1078 = vpop.f32.mrf.mxu0
      %v1079 = vadd.f32 %v320, %v1078
      %v1080 = vpop.f32.mrf.mxu0
      %v1081 = vadd.f32 %v320, %v1080
      %1082 = vdwg.mxu0
      %v1083 = vmax.f32 %v764, 0.0
      %v1084 = vmax.f32 %v766, 0.0
      %v1085 = vmax.f32 %v769, 0.0
      %v1086 = vmax.f32 %v771, 0.0
      %v1087 = vmax.f32 %v774, 0.0
      %v1088 = vmax.f32 %v776, 0.0
      %v1089 = vmax.f32 %v779, 0.0
      %v1090 = vmax.f32 %v781, 0.0
      %v1091 = vmax.f32 %v784, 0.0
      %v1092 = vmax.f32 %v786, 0.0
      %v1093 = vmax.f32 %v789, 0.0
      %v1094 = vmax.f32 %v791, 0.0
      %v1095 = vmax.f32 %v794, 0.0
      %v1096 = vmax.f32 %v796, 0.0
      %v1097 = vmax.f32 %v799, 0.0
      %v1098 = vmax.f32 %v801, 0.0
      %v1099 = vmax.f32 %v804, 0.0
      %v1100 = vmax.f32 %v806, 0.0
      %v1101 = vmax.f32 %v809, 0.0
      %v1102 = vmax.f32 %v811, 0.0
      %v1103 = vmax.f32 %v814, 0.0
      %v1104 = vmax.f32 %v816, 0.0
      %v1105 = vmax.f32 %v819, 0.0
      %v1106 = vmax.f32 %v821, 0.0
      %v1107 = vmax.f32 %v824, 0.0
      %v1108 = vmax.f32 %v826, 0.0
      %v1109 = vmax.f32 %v829, 0.0
      %v1110 = vmax.f32 %v831, 0.0
      %v1111 = vmax.f32 %v834, 0.0
      %v1112 = vmax.f32 %v836, 0.0
      %v1113 = vmax.f32 %v839, 0.0
      %v1114 = vmax.f32 %v841, 0.0
      %v1115 = vmax.f32 %v844, 0.0
      %v1116 = vmax.f32 %v846, 0.0
      %v1117 = vmax.f32 %v849, 0.0
      %v1118 = vmax.f32 %v851, 0.0
      %v1119 = vmax.f32 %v854, 0.0
      %v1120 = vmax.f32 %v856, 0.0
      %v1121 = vmax.f32 %v859, 0.0
      %v1122 = vmax.f32 %v861, 0.0
      %v1123 = vmax.f32 %v864, 0.0
      %v1124 = vmax.f32 %v866, 0.0
      %v1125 = vmax.f32 %v869, 0.0
      %v1126 = vmax.f32 %v871, 0.0
      %v1127 = vmax.f32 %v874, 0.0
      %v1128 = vmax.f32 %v876, 0.0
      %v1129 = vmax.f32 %v879, 0.0
      %v1130 = vmax.f32 %v881, 0.0
      %v1131 = vmax.f32 %v884, 0.0
      %v1132 = vmax.f32 %v886, 0.0
      %v1133 = vmax.f32 %v889, 0.0
      %v1134 = vmax.f32 %v891, 0.0
      %v1135 = vmax.f32 %v894, 0.0
      %v1136 = vmax.f32 %v896, 0.0
      %v1137 = vmax.f32 %v899, 0.0
      %v1138 = vmax.f32 %v901, 0.0
      %v1139 = vmax.f32 %v904, 0.0
      %v1140 = vmax.f32 %v906, 0.0
      %v1141 = vmax.f32 %v909, 0.0
      %v1142 = vmax.f32 %v911, 0.0
      %v1143 = vmax.f32 %v914, 0.0
      %v1144 = vmax.f32 %v916, 0.0
      %v1145 = vmax.f32 %v919, 0.0
      %v1146 = vmax.f32 %v921, 0.0
      %v1147 = vmax.f32 %v924, 0.0
      %v1148 = vmax.f32 %v926, 0.0
      %v1149 = vmax.f32 %v929, 0.0
      %v1150 = vmax.f32 %v931, 0.0
      %v1151 = vmax.f32 %v934, 0.0
      %v1152 = vmax.f32 %v936, 0.0
      %v1153 = vmax.f32 %v939, 0.0
      %v1154 = vmax.f32 %v941, 0.0
      %v1155 = vmax.f32 %v944, 0.0
      %v1156 = vmax.f32 %v946, 0.0
      %v1157 = vmax.f32 %v949, 0.0
      %v1158 = vmax.f32 %v951, 0.0
      %v1159 = vmax.f32 %v954, 0.0
      %v1160 = vmax.f32 %v956, 0.0
      %v1161 = vmax.f32 %v959, 0.0
      %v1162 = vmax.f32 %v961, 0.0
      %v1163 = vmax.f32 %v964, 0.0
      %v1164 = vmax.f32 %v966, 0.0
      %v1165 = vmax.f32 %v969, 0.0
      %v1166 = vmax.f32 %v971, 0.0
      %v1167 = vmax.f32 %v974, 0.0
      %v1168 = vmax.f32 %v976, 0.0
      %v1169 = vmax.f32 %v979, 0.0
      %v1170 = vmax.f32 %v981, 0.0
      %v1171 = vmax.f32 %v984, 0.0
      %v1172 = vmax.f32 %v986, 0.0
      %v1173 = vmax.f32 %v989, 0.0
      %v1174 = vmax.f32 %v991, 0.0
      %v1175 = vmax.f32 %v994, 0.0
      %v1176 = vmax.f32 %v996, 0.0
      %v1177 = vmax.f32 %v999, 0.0
      %v1178 = vmax.f32 %v1001, 0.0
      %v1179 = vmax.f32 %v1004, 0.0
      %v1180 = vmax.f32 %v1006, 0.0
      %v1181 = vmax.f32 %v1009, 0.0
      %v1182 = vmax.f32 %v1011, 0.0
      %v1183 = vmax.f32 %v1014, 0.0
      %v1184 = vmax.f32 %v1016, 0.0
      %v1185 = vmax.f32 %v1019, 0.0
      %v1186 = vmax.f32 %v1021, 0.0
      %v1187 = vmax.f32 %v1024, 0.0
      %v1188 = vmax.f32 %v1026, 0.0
      %v1189 = vmax.f32 %v1029, 0.0
      %v1190 = vmax.f32 %v1031, 0.0
      %v1191 = vmax.f32 %v1034, 0.0
      %v1192 = vmax.f32 %v1036, 0.0
      %v1193 = vmax.f32 %v1039, 0.0
      %v1194 = vmax.f32 %v1041, 0.0
      %v1195 = vmax.f32 %v1044, 0.0
      %v1196 = vmax.f32 %v1046, 0.0
      %v1197 = vmax.f32 %v1049, 0.0
      %v1198 = vmax.f32 %v1051, 0.0
      %v1199 = vmax.f32 %v1054, 0.0
      %v1200 = vmax.f32 %v1056, 0.0
      %v1201 = vmax.f32 %v1059, 0.0
      %v1202 = vmax.f32 %v1061, 0.0
      %v1203 = vmax.f32 %v1064, 0.0
      %v1204 = vmax.f32 %v1066, 0.0
      %v1205 = vmax.f32 %v1069, 0.0
      %v1206 = vmax.f32 %v1071, 0.0
      %v1207 = vmax.f32 %v1074, 0.0
      %v1208 = vmax.f32 %v1076, 0.0
      %v1209 = vmax.f32 %v1079, 0.0
      %v1210 = vmax.f32 %v1081, 0.0
      %v1211 = vpack.c.bf16 %v1083, %v1083
      %v1212 = vpack.c.bf16 %v1084, %v1084
      %v1213 = vpack.c.bf16 %v1085, %v1085
      %v1214 = vpack.c.bf16 %v1086, %v1086
      %v1215 = vpack.c.bf16 %v1087, %v1087
      %v1216 = vpack.c.bf16 %v1088, %v1088
      %v1217 = vpack.c.bf16 %v1089, %v1089
      %v1218 = vpack.c.bf16 %v1090, %v1090
      %v1219 = vpack.c.bf16 %v1091, %v1091
      %v1220 = vpack.c.bf16 %v1092, %v1092
      %v1221 = vpack.c.bf16 %v1093, %v1093
      %v1222 = vpack.c.bf16 %v1094, %v1094
      %v1223 = vpack.c.bf16 %v1095, %v1095
      %v1224 = vpack.c.bf16 %v1096, %v1096
      %v1225 = vpack.c.bf16 %v1097, %v1097
      %v1226 = vpack.c.bf16 %v1098, %v1098
      %v1227 = vpack.c.bf16 %v1099, %v1099
      %v1228 = vpack.c.bf16 %v1100, %v1100
      %v1229 = vpack.c.bf16 %v1101, %v1101
      %v1230 = vpack.c.bf16 %v1102, %v1102
      %v1231 = vpack.c.bf16 %v1103, %v1103
      %v1232 = vpack.c.bf16 %v1104, %v1104
      %v1233 = vpack.c.bf16 %v1105, %v1105
      %v1234 = vpack.c.bf16 %v1106, %v1106
      %v1235 = vpack.c.bf16 %v1107, %v1107
      %v1236 = vpack.c.bf16 %v1108, %v1108
      %v1237 = vpack.c.bf16 %v1109, %v1109
      %v1238 = vpack.c.bf16 %v1110, %v1110
      %v1239 = vpack.c.bf16 %v1111, %v1111
      %v1240 = vpack.c.bf16 %v1112, %v1112
      %v1241 = vpack.c.bf16 %v1113, %v1113
      %v1242 = vpack.c.bf16 %v1114, %v1114
      %v1243 = vpack.c.bf16 %v1115, %v1115
      %v1244 = vpack.c.bf16 %v1116, %v1116
      %v1245 = vpack.c.bf16 %v1117, %v1117
      %v1246 = vpack.c.bf16 %v1118, %v1118
      %v1247 = vpack.c.bf16 %v1119, %v1119
      %v1248 = vpack.c.bf16 %v1120, %v1120
      %v1249 = vpack.c.bf16 %v1121, %v1121
      %v1250 = vpack.c.bf16 %v1122, %v1122
      %v1251 = vpack.c.bf16 %v1123, %v1123
      %v1252 = vpack.c.bf16 %v1124, %v1124
      %v1253 = vpack.c.bf16 %v1125, %v1125
      %v1254 = vpack.c.bf16 %v1126, %v1126
      %v1255 = vpack.c.bf16 %v1127, %v1127
      %v1256 = vpack.c.bf16 %v1128, %v1128
      %v1257 = vpack.c.bf16 %v1129, %v1129
      %v1258 = vpack.c.bf16 %v1130, %v1130
      %v1259 = vpack.c.bf16 %v1131, %v1131
      %v1260 = vpack.c.bf16 %v1132, %v1132
      %v1261 = vpack.c.bf16 %v1133, %v1133
      %v1262 = vpack.c.bf16 %v1134, %v1134
      %v1263 = vpack.c.bf16 %v1135, %v1135
      %v1264 = vpack.c.bf16 %v1136, %v1136
      %v1265 = vpack.c.bf16 %v1137, %v1137
      %v1266 = vpack.c.bf16 %v1138, %v1138
      %v1267 = vpack.c.bf16 %v1139, %v1139
      %v1268 = vpack.c.bf16 %v1140, %v1140
      %v1269 = vpack.c.bf16 %v1141, %v1141
      %v1270 = vpack.c.bf16 %v1142, %v1142
      %v1271 = vpack.c.bf16 %v1143, %v1143
      %v1272 = vpack.c.bf16 %v1144, %v1144
      %v1273 = vpack.c.bf16 %v1145, %v1145
      %v1274 = vpack.c.bf16 %v1146, %v1146
      %v1275 = vpack.c.bf16 %v1147, %v1147
      %v1276 = vpack.c.bf16 %v1148, %v1148
      %v1277 = vpack.c.bf16 %v1149, %v1149
      %v1278 = vpack.c.bf16 %v1150, %v1150
      %v1279 = vpack.c.bf16 %v1151, %v1151
      %v1280 = vpack.c.bf16 %v1152, %v1152
      %v1281 = vpack.c.bf16 %v1153, %v1153
      %v1282 = vpack.c.bf16 %v1154, %v1154
      %v1283 = vpack.c.bf16 %v1155, %v1155
      %v1284 = vpack.c.bf16 %v1156, %v1156
      %v1285 = vpack.c.bf16 %v1157, %v1157
      %v1286 = vpack.c.bf16 %v1158, %v1158
      %v1287 = vpack.c.bf16 %v1159, %v1159
      %v1288 = vpack.c.bf16 %v1160, %v1160
      %v1289 = vpack.c.bf16 %v1161, %v1161
      %v1290 = vpack.c.bf16 %v1162, %v1162
      %v1291 = vpack.c.bf16 %v1163, %v1163
      %v1292 = vpack.c.bf16 %v1164, %v1164
      %v1293 = vpack.c.bf16 %v1165, %v1165
      %v1294 = vpack.c.bf16 %v1166, %v1166
      %v1295 = vpack.c.bf16 %v1167, %v1167
      %v1296 = vpack.c.bf16 %v1168, %v1168
      %v1297 = vpack.c.bf16 %v1169, %v1169
      %v1298 = vpack.c.bf16 %v1170, %v1170
      %v1299 = vpack.c.bf16 %v1171, %v1171
      %v1300 = vpack.c.bf16 %v1172, %v1172
      %v1301 = vpack.c.bf16 %v1173, %v1173
      %v1302 = vpack.c.bf16 %v1174, %v1174
      %v1303 = vpack.c.bf16 %v1175, %v1175
      %v1304 = vpack.c.bf16 %v1176, %v1176
      %v1305 = vpack.c.bf16 %v1177, %v1177
      %v1306 = vpack.c.bf16 %v1178, %v1178
      %v1307 = vpack.c.bf16 %v1179, %v1179
      %v1308 = vpack.c.bf16 %v1180, %v1180
      %v1309 = vpack.c.bf16 %v1181, %v1181
      %v1310 = vpack.c.bf16 %v1182, %v1182
      %v1311 = vpack.c.bf16 %v1183, %v1183
      %v1312 = vpack.c.bf16 %v1184, %v1184
      %v1313 = vpack.c.bf16 %v1185, %v1185
      %v1314 = vpack.c.bf16 %v1186, %v1186
      %v1315 = vpack.c.bf16 %v1187, %v1187
      %v1316 = vpack.c.bf16 %v1188, %v1188
      %v1317 = vpack.c.bf16 %v1189, %v1189
      %v1318 = vpack.c.bf16 %v1190, %v1190
      %v1319 = vpack.c.bf16 %v1191, %v1191
      %v1320 = vpack.c.bf16 %v1192, %v1192
      %v1321 = vpack.c.bf16 %v1193, %v1193
      %v1322 = vpack.c.bf16 %v1194, %v1194
      %v1323 = vpack.c.bf16 %v1195, %v1195
      %v1324 = vpack.c.bf16 %v1196, %v1196
      %v1325 = vpack.c.bf16 %v1197, %v1197
      %v1326 = vpack.c.bf16 %v1198, %v1198
      %v1327 = vpack.c.bf16 %v1199, %v1199
      %v1328 = vpack.c.bf16 %v1200, %v1200
      %v1329 = vpack.c.bf16 %v1201, %v1201
      %v1330 = vpack.c.bf16 %v1202, %v1202
      %v1331 = vpack.c.bf16 %v1203, %v1203
      %v1332 = vpack.c.bf16 %v1204, %v1204
      %v1333 = vpack.c.bf16 %v1205, %v1205
      %v1334 = vpack.c.bf16 %v1206, %v1206
      %v1335 = vpack.c.bf16 %v1207, %v1207
      %v1336 = vpack.c.bf16 %v1208, %v1208
      %v1337 = vpack.c.bf16 %v1209, %v1209
      %v1338 = vpack.c.bf16 %v1210, %v1210
      %1339 = vst [vmem:[%s172] sm:$0xf] %v1211
      %1340 = vst [vmem:[%s172 + $0x4] sm:$0xf] %v1212
      %1341 = vst [vmem:[%s172 + $0x8] sm:$0xf] %v1213
      %1342 = vst [vmem:[%s172 + $0xc] sm:$0xf] %v1214
      %1343 = vst [vmem:[%s172 + $0x10] sm:$0xf] %v1215
      %1344 = vst [vmem:[%s172 + $0x14] sm:$0xf] %v1216
      %1345 = vst [vmem:[%s172 + $0x18] sm:$0xf] %v1217
      %1346 = vst [vmem:[%s172 + $0x1c] sm:$0xf] %v1218
      %1347 = vst [vmem:[%s172 + $0x20] sm:$0xf] %v1219
      %1348 = vst [vmem:[%s172 + $0x24] sm:$0xf] %v1220
      %1349 = vst [vmem:[%s172 + $0x28] sm:$0xf] %v1221
      %1350 = vst [vmem:[%s172 + $0x2c] sm:$0xf] %v1222
      %1351 = vst [vmem:[%s172 + $0x30] sm:$0xf] %v1223
      %1352 = vst [vmem:[%s172 + $0x34] sm:$0xf] %v1224
      %1353 = vst [vmem:[%s172 + $0x38] sm:$0xf] %v1225
      %1354 = vst [vmem:[%s172 + $0x3c] sm:$0xf] %v1226
      %1355 = vst [vmem:[%s172 + $0x40] sm:$0xf] %v1227
      %1356 = vst [vmem:[%s172 + $0x44] sm:$0xf] %v1228
      %1357 = vst [vmem:[%s172 + $0x48] sm:$0xf] %v1229
      %1358 = vst [vmem:[%s172 + $0x4c] sm:$0xf] %v1230
      %1359 = vst [vmem:[%s172 + $0x50] sm:$0xf] %v1231
      %1360 = vst [vmem:[%s172 + $0x54] sm:$0xf] %v1232
      %1361 = vst [vmem:[%s172 + $0x58] sm:$0xf] %v1233
      %1362 = vst [vmem:[%s172 + $0x5c] sm:$0xf] %v1234
      %1363 = vst [vmem:[%s172 + $0x60] sm:$0xf] %v1235
      %1364 = vst [vmem:[%s172 + $0x64] sm:$0xf] %v1236
      %1365 = vst [vmem:[%s172 + $0x68] sm:$0xf] %v1237
      %1366 = vst [vmem:[%s172 + $0x6c] sm:$0xf] %v1238
      %1367 = vst [vmem:[%s172 + $0x70] sm:$0xf] %v1239
      %1368 = vst [vmem:[%s172 + $0x74] sm:$0xf] %v1240
      %1369 = vst [vmem:[%s172 + $0x78] sm:$0xf] %v1241
      %1370 = vst [vmem:[%s172 + $0x7c] sm:$0xf] %v1242
      %1371 = vst [vmem:[%s172 + $0x80] sm:$0xf] %v1243
      %1372 = vst [vmem:[%s172 + $0x84] sm:$0xf] %v1244
      %1373 = vst [vmem:[%s172 + $0x88] sm:$0xf] %v1245
      %1374 = vst [vmem:[%s172 + $0x8c] sm:$0xf] %v1246
      %1375 = vst [vmem:[%s172 + $0x90] sm:$0xf] %v1247
      %1376 = vst [vmem:[%s172 + $0x94] sm:$0xf] %v1248
      %1377 = vst [vmem:[%s172 + $0x98] sm:$0xf] %v1249
      %1378 = vst [vmem:[%s172 + $0x9c] sm:$0xf] %v1250
      %1379 = vst [vmem:[%s172 + $0xa0] sm:$0xf] %v1251
      %1380 = vst [vmem:[%s172 + $0xa4] sm:$0xf] %v1252
      %1381 = vst [vmem:[%s172 + $0xa8] sm:$0xf] %v1253
      %1382 = vst [vmem:[%s172 + $0xac] sm:$0xf] %v1254
      %1383 = vst [vmem:[%s172 + $0xb0] sm:$0xf] %v1255
      %1384 = vst [vmem:[%s172 + $0xb4] sm:$0xf] %v1256
      %1385 = vst [vmem:[%s172 + $0xb8] sm:$0xf] %v1257
      %1386 = vst [vmem:[%s172 + $0xbc] sm:$0xf] %v1258
      %1387 = vst [vmem:[%s172 + $0xc0] sm:$0xf] %v1259
      %1388 = vst [vmem:[%s172 + $0xc4] sm:$0xf] %v1260
      %1389 = vst [vmem:[%s172 + $0xc8] sm:$0xf] %v1261
      %1390 = vst [vmem:[%s172 + $0xcc] sm:$0xf] %v1262
      %1391 = vst [vmem:[%s172 + $0xd0] sm:$0xf] %v1263
      %1392 = vst [vmem:[%s172 + $0xd4] sm:$0xf] %v1264
      %1393 = vst [vmem:[%s172 + $0xd8] sm:$0xf] %v1265
      %1394 = vst [vmem:[%s172 + $0xdc] sm:$0xf] %v1266
      %1395 = vst [vmem:[%s172 + $0xe0] sm:$0xf] %v1267
      %1396 = vst [vmem:[%s172 + $0xe4] sm:$0xf] %v1268
      %1397 = vst [vmem:[%s172 + $0xe8] sm:$0xf] %v1269
      %1398 = vst [vmem:[%s172 + $0xec] sm:$0xf] %v1270
      %1399 = vst [vmem:[%s172 + $0xf0] sm:$0xf] %v1271
      %1400 = vst [vmem:[%s172 + $0xf4] sm:$0xf] %v1272
      %1401 = vst [vmem:[%s172 + $0xf8] sm:$0xf] %v1273
      %1402 = vst [vmem:[%s172 + $0xfc] sm:$0xf] %v1274
      %1403 = vst [vmem:[%s172 + $0x100] sm:$0xf] %v1275
      %1404 = vst [vmem:[%s172 + $0x104] sm:$0xf] %v1276
      %1405 = vst [vmem:[%s172 + $0x108] sm:$0xf] %v1277
      %1406 = vst [vmem:[%s172 + $0x10c] sm:$0xf] %v1278
      %1407 = vst [vmem:[%s172 + $0x110] sm:$0xf] %v1279
      %1408 = vst [vmem:[%s172 + $0x114] sm:$0xf] %v1280
      %1409 = vst [vmem:[%s172 + $0x118] sm:$0xf] %v1281
      %1410 = vst [vmem:[%s172 + $0x11c] sm:$0xf] %v1282
      %1411 = vst [vmem:[%s172 + $0x120] sm:$0xf] %v1283
      %1412 = vst [vmem:[%s172 + $0x124] sm:$0xf] %v1284
      %1413 = vst [vmem:[%s172 + $0x128] sm:$0xf] %v1285
      %1414 = vst [vmem:[%s172 + $0x12c] sm:$0xf] %v1286
      %1415 = vst [vmem:[%s172 + $0x130] sm:$0xf] %v1287
      %1416 = vst [vmem:[%s172 + $0x134] sm:$0xf] %v1288
      %1417 = vst [vmem:[%s172 + $0x138] sm:$0xf] %v1289
      %1418 = vst [vmem:[%s172 + $0x13c] sm:$0xf] %v1290
      %1419 = vst [vmem:[%s172 + $0x140] sm:$0xf] %v1291
      %1420 = vst [vmem:[%s172 + $0x144] sm:$0xf] %v1292
      %1421 = vst [vmem:[%s172 + $0x148] sm:$0xf] %v1293
      %1422 = vst [vmem:[%s172 + $0x14c] sm:$0xf] %v1294
      %1423 = vst [vmem:[%s172 + $0x150] sm:$0xf] %v1295
      %1424 = vst [vmem:[%s172 + $0x154] sm:$0xf] %v1296
      %1425 = vst [vmem:[%s172 + $0x158] sm:$0xf] %v1297
      %1426 = vst [vmem:[%s172 + $0x15c] sm:$0xf] %v1298
      %1427 = vst [vmem:[%s172 + $0x160] sm:$0xf] %v1299
      %1428 = vst [vmem:[%s172 + $0x164] sm:$0xf] %v1300
      %1429 = vst [vmem:[%s172 + $0x168] sm:$0xf] %v1301
      %1430 = vst [vmem:[%s172 + $0x16c] sm:$0xf] %v1302
      %1431 = vst [vmem:[%s172 + $0x170] sm:$0xf] %v1303
      %1432 = vst [vmem:[%s172 + $0x174] sm:$0xf] %v1304
      %1433 = vst [vmem:[%s172 + $0x178] sm:$0xf] %v1305
      %1434 = vst [vmem:[%s172 + $0x17c] sm:$0xf] %v1306
      %1435 = vst [vmem:[%s172 + $0x180] sm:$0xf] %v1307
      %1436 = vst [vmem:[%s172 + $0x184] sm:$0xf] %v1308
      %1437 = vst [vmem:[%s172 + $0x188] sm:$0xf] %v1309
      %1438 = vst [vmem:[%s172 + $0x18c] sm:$0xf] %v1310
      %1439 = vst [vmem:[%s172 + $0x190] sm:$0xf] %v1311
      %1440 = vst [vmem:[%s172 + $0x194] sm:$0xf] %v1312
      %1441 = vst [vmem:[%s172 + $0x198] sm:$0xf] %v1313
      %1442 = vst [vmem:[%s172 + $0x19c] sm:$0xf] %v1314
      %1443 = vst [vmem:[%s172 + $0x1a0] sm:$0xf] %v1315
      %1444 = vst [vmem:[%s172 + $0x1a4] sm:$0xf] %v1316
      %1445 = vst [vmem:[%s172 + $0x1a8] sm:$0xf] %v1317
      %1446 = vst [vmem:[%s172 + $0x1ac] sm:$0xf] %v1318
      %1447 = vst [vmem:[%s172 + $0x1b0] sm:$0xf] %v1319
      %1448 = vst [vmem:[%s172 + $0x1b4] sm:$0xf] %v1320
      %1449 = vst [vmem:[%s172 + $0x1b8] sm:$0xf] %v1321
      %1450 = vst [vmem:[%s172 + $0x1bc] sm:$0xf] %v1322
      %1451 = vst [vmem:[%s172 + $0x1c0] sm:$0xf] %v1323
      %1452 = vst [vmem:[%s172 + $0x1c4] sm:$0xf] %v1324
      %1453 = vst [vmem:[%s172 + $0x1c8] sm:$0xf] %v1325
      %1454 = vst [vmem:[%s172 + $0x1cc] sm:$0xf] %v1326
      %1455 = vst [vmem:[%s172 + $0x1d0] sm:$0xf] %v1327
      %1456 = vst [vmem:[%s172 + $0x1d4] sm:$0xf] %v1328
      %1457 = vst [vmem:[%s172 + $0x1d8] sm:$0xf] %v1329
      %1458 = vst [vmem:[%s172 + $0x1dc] sm:$0xf] %v1330
      %1459 = vst [vmem:[%s172 + $0x1e0] sm:$0xf] %v1331
      %1460 = vst [vmem:[%s172 + $0x1e4] sm:$0xf] %v1332
      %1461 = vst [vmem:[%s172 + $0x1e8] sm:$0xf] %v1333
      %1462 = vst [vmem:[%s172 + $0x1ec] sm:$0xf] %v1334
      %1463 = vst [vmem:[%s172 + $0x1f0] sm:$0xf] %v1335
      %1464 = vst [vmem:[%s172 + $0x1f4] sm:$0xf] %v1336
      %1465 = vst [vmem:[%s172 + $0x1f8] sm:$0xf] %v1337
      %1466 = vst [vmem:[%s172 + $0x1fc] sm:$0xf] %v1338
      %s1467 = smul.u32 128, %s14
      %p1468 = scmp.lt.s32.totalorder %s1467, 255
      %s1469 = scalar_select %p1468, %s1467, 255
      %s1470 = smul.addr %s1469, 4
      %s1471 = scalar_lea.vmem %s3, %s1470
      // Predicated region
      $region33: #{_lambda_.10} parent=31 // pred_check
        %p1472 = pneg %p100
      $region34: #{_lambda_.10} parent=31 // pred_check_branch
        %1474 = sbr.rel (%p1472) target = $region36
      $region35: #{_lambda_.10} parent=31 // pred_region
        %s1475 = smul.u32 128, %s14
      $region36: #{_lambda_.10} parent=31 // pred_fallthru
        _
    $region32: #{_lambda_.10} parent=5 // pred_fallthru
      _
    %p1476 = scmp.le.s32.totalorder 2, %s9
    // Predicated region
    $region37: #{_lambda_.10} parent=5 // pred_check
      %p1477 = pneg %p1476
    $region38: #{_lambda_.10} parent=5 // pred_check_branch
      %1479 = sbr.rel (%p1477) target = $region40
    $region39: #{_lambda_.10} parent=5 // pred_region
      %s1480 = ssub.s32 %s9, 2
      // Predicated region
      $region41: #{_lambda_.10} parent=39 // pred_check
        %p1481 = pneg %p106
      $region42: #{_lambda_.10} parent=39 // pred_check_branch
        %1483 = sbr.rel (%p1481) target = $region44
      $region43: #{_lambda_.10} parent=39 // pred_region
        %s1484 = smul.u32 128, %s15
        %p1485 = scmp.lt.s32.totalorder %s1484, 255
        %s1486 = scalar_select %p1485, %s1484, 255
        %s1487 = smul.addr %s1486, 4
        %s1488 = scalar_lea.vmem %s3, %s1487
      $region44: #{_lambda_.10} parent=39 // pred_fallthru
        _
    $region40: #{_lambda_.10} parent=5 // pred_fallthru
      _
  $region6: #{_lambda_.10} parent=0 // loop_footer
    %s13 = sadd.s32 1, %s9
  $region7: #{_lambda_.10} parent=0 // loop_footer_branch
    %8 = sbr.rel target = $region3
  $region8: #{_lambda_.10} parent=0 // loop_exit
    _

// kernel: _lambda_.11
$region0: #{_lambda_.11}
  #allocation0 [shape = 'u32[]', space=smem, size = 0x4, offset = 0x4, fixed_abs, tag = 'smem constant byte address 0x4 - core index']
  #allocation1 [shape = 'u32[72,128]{1,0:T(1,128)}', space=vmem, size = 0x9000, scoped, tag = 'internal scratch']
  %s0 = inlined_call_operand.vmem [shape: bf16[512,384], index: 0, kind: input, shape index: {}]
  %s1 = inlined_call_operand.vmem [shape: bf16[384,128], index: 1, kind: input, shape index: {}]
  %s2 = inlined_call_operand.vmem [shape: f32[1,128], index: 2, kind: input, shape index: {}]
  %s3 = inlined_call_operand.vmem [shape: bf16[512,128], index: 3, kind: output, shape index: {}]
  %s4 = sld [smem:[#allocation0]]
  $region22: #{_lambda_.11} parent=0
    _
  %s6 = ssub.s32 1, %s4
  %s7 = scalar_select 0, %s6, %s4
  // Predicated region
  $region2: #{_lambda_.11} parent=0 // pred_check
    _
  $region3: #{_lambda_.11} parent=0 // pred_check_branch
    %9 = sbr.rel (0) target = $region5
  $region4: #{_lambda_.11} parent=0 // pred_region
    _
  $region5: #{_lambda_.11} parent=0 // pred_fallthru
    _
  // Predicated region
  $region6: #{_lambda_.11} parent=0 // pred_check
    _
  $region7: #{_lambda_.11} parent=0 // pred_check_branch
    %11 = sbr.rel (0) target = $region9
  $region8: #{_lambda_.11} parent=0 // pred_region
    _
  $region9: #{_lambda_.11} parent=0 // pred_fallthru
    _
  // Predicated region
  $region10: #{_lambda_.11} parent=0 // pred_check
    _
  $region11: #{_lambda_.11} parent=0 // pred_check_branch
    %13 = sbr.rel (0) target = $region13
  $region12: #{_lambda_.11} parent=0 // pred_region
    _
  $region13: #{_lambda_.11} parent=0 // pred_fallthru
    _
  %v14 = vld [vmem:[%s0] sm:$0xff]
  %v15 = vld [vmem:[%s0 + $0x8] sm:$0xf]
  %v16 = vld [vmem:[%s0 + $0xc] sm:$0xff]
  %v17 = vld [vmem:[%s0 + $0x14] sm:$0xf]
  %v18 = vld [vmem:[%s0 + $0x18] sm:$0xff]
  %v19 = vld [vmem:[%s0 + $0x20] sm:$0xf]
  %v20 = vld [vmem:[%s0 + $0x24] sm:$0xff]
  %v21 = vld [vmem:[%s0 + $0x2c] sm:$0xf]
  %v22 = vld [vmem:[%s0 + $0x30] sm:$0xff]
  %v23 = vld [vmem:[%s0 + $0x38] sm:$0xf]
  %v24 = vld [vmem:[%s0 + $0x3c] sm:$0xff]
  %v25 = vld [vmem:[%s0 + $0x44] sm:$0xf]
  %v26 = vld [vmem:[%s0 + $0x48] sm:$0xff]
  %v27 = vld [vmem:[%s0 + $0x50] sm:$0xf]
  %v28 = vld [vmem:[%s0 + $0x54] sm:$0xff]
  %v29 = vld [vmem:[%s0 + $0x5c] sm:$0xf]
  %v30 = vld [vmem:[%s0 + $0x60] sm:$0xff]
  %v31 = vld [vmem:[%s0 + $0x68] sm:$0xf]
  %v32 = vld [vmem:[%s0 + $0x6c] sm:$0xff]
  %v33 = vld [vmem:[%s0 + $0x74] sm:$0xf]
  %v34 = vld [vmem:[%s0 + $0x78] sm:$0xff]
  %v35 = vld [vmem:[%s0 + $0x80] sm:$0xf]
  %v36 = vld [vmem:[%s0 + $0x84] sm:$0xff]
  %v37 = vld [vmem:[%s0 + $0x8c] sm:$0xf]
  %v38 = vld [vmem:[%s0 + $0x90] sm:$0xff]
  %v39 = vld [vmem:[%s0 + $0x98] sm:$0xf]
  %v40 = vld [vmem:[%s0 + $0x9c] sm:$0xff]
  %v41 = vld [vmem:[%s0 + $0xa4] sm:$0xf]
  %v42 = vld [vmem:[%s0 + $0xa8] sm:$0xff]
  %v43 = vld [vmem:[%s0 + $0xb0] sm:$0xf]
  %v44 = vld [vmem:[%s0 + $0xb4] sm:$0xff]
  %v45 = vld [vmem:[%s0 + $0xbc] sm:$0xf]
  %v46 = vld [vmem:[%s0 + $0xc0] sm:$0xff]
  %v47 = vld [vmem:[%s0 + $0xc8] sm:$0xf]
  %v48 = vld [vmem:[%s0 + $0xcc] sm:$0xff]
  %v49 = vld [vmem:[%s0 + $0xd4] sm:$0xf]
  %v50 = vld [vmem:[%s0 + $0xd8] sm:$0xff]
  %v51 = vld [vmem:[%s0 + $0xe0] sm:$0xf]
  %v52 = vld [vmem:[%s0 + $0xe4] sm:$0xff]
  %v53 = vld [vmem:[%s0 + $0xec] sm:$0xf]
  %v54 = vld [vmem:[%s0 + $0xf0] sm:$0xff]
  %v55 = vld [vmem:[%s0 + $0xf8] sm:$0xf]
  %v56 = vld [vmem:[%s0 + $0xfc] sm:$0xff]
  %v57 = vld [vmem:[%s0 + $0x104] sm:$0xf]
  %v58 = vld [vmem:[%s0 + $0x108] sm:$0xff]
  %v59 = vld [vmem:[%s0 + $0x110] sm:$0xf]
  %v60 = vld [vmem:[%s0 + $0x114] sm:$0xff]
  %v61 = vld [vmem:[%s0 + $0x11c] sm:$0xf]
  %v62 = vld [vmem:[%s0 + $0x120] sm:$0xff]
  %v63 = vld [vmem:[%s0 + $0x128] sm:$0xf]
  %v64 = vld [vmem:[%s0 + $0x12c] sm:$0xff]
  %v65 = vld [vmem:[%s0 + $0x134] sm:$0xf]
  %v66 = vld [vmem:[%s0 + $0x138] sm:$0xff]
  %v67 = vld [vmem:[%s0 + $0x140] sm:$0xf]
  %v68 = vld [vmem:[%s0 + $0x144] sm:$0xff]
  %v69 = vld [vmem:[%s0 + $0x14c] sm:$0xf]
  %v70 = vld [vmem:[%s0 + $0x150] sm:$0xff]
  %v71 = vld [vmem:[%s0 + $0x158] sm:$0xf]
  %v72 = vld [vmem:[%s0 + $0x15c] sm:$0xff]
  %v73 = vld [vmem:[%s0 + $0x164] sm:$0xf]
  %v74 = vld [vmem:[%s0 + $0x168] sm:$0xff]
  %v75 = vld [vmem:[%s0 + $0x170] sm:$0xf]
  %v76 = vld [vmem:[%s0 + $0x174] sm:$0xff]
  %v77 = vld [vmem:[%s0 + $0x17c] sm:$0xf]
  %v78 = vld [vmem:[%s0 + $0x180] sm:$0xff]
  %v79 = vld [vmem:[%s0 + $0x188] sm:$0xf]
  %v80 = vld [vmem:[%s0 + $0x18c] sm:$0xff]
  %v81 = vld [vmem:[%s0 + $0x194] sm:$0xf]
  %v82 = vld [vmem:[%s0 + $0x198] sm:$0xff]
  %v83 = vld [vmem:[%s0 + $0x1a0] sm:$0xf]
  %v84 = vld [vmem:[%s0 + $0x1a4] sm:$0xff]
  %v85 = vld [vmem:[%s0 + $0x1ac] sm:$0xf]
  %v86 = vld [vmem:[%s0 + $0x1b0] sm:$0xff]
  %v87 = vld [vmem:[%s0 + $0x1b8] sm:$0xf]
  %v88 = vld [vmem:[%s0 + $0x1bc] sm:$0xff]
  %v89 = vld [vmem:[%s0 + $0x1c4] sm:$0xf]
  %v90 = vld [vmem:[%s0 + $0x1c8] sm:$0xff]
  %v91 = vld [vmem:[%s0 + $0x1d0] sm:$0xf]
  %v92 = vld [vmem:[%s0 + $0x1d4] sm:$0xff]
  %v93 = vld [vmem:[%s0 + $0x1dc] sm:$0xf]
  %v94 = vld [vmem:[%s0 + $0x1e0] sm:$0xff]
  %v95 = vld [vmem:[%s0 + $0x1e8] sm:$0xf]
  %v96 = vld [vmem:[%s0 + $0x1ec] sm:$0xff]
  %v97 = vld [vmem:[%s0 + $0x1f4] sm:$0xf]
  %v98 = vld [vmem:[%s0 + $0x1f8] sm:$0xff]
  %v99 = vld [vmem:[%s0 + $0x200] sm:$0xf]
  %v100 = vld [vmem:[%s0 + $0x204] sm:$0xff]
  %v101 = vld [vmem:[%s0 + $0x20c] sm:$0xf]
  %v102 = vld [vmem:[%s0 + $0x210] sm:$0xff]
  %v103 = vld [vmem:[%s0 + $0x218] sm:$0xf]
  %v104 = vld [vmem:[%s0 + $0x21c] sm:$0xff]
  %v105 = vld [vmem:[%s0 + $0x224] sm:$0xf]
  %v106 = vld [vmem:[%s0 + $0x228] sm:$0xff]
  %v107 = vld [vmem:[%s0 + $0x230] sm:$0xf]
  %v108 = vld [vmem:[%s0 + $0x234] sm:$0xff]
  %v109 = vld [vmem:[%s0 + $0x23c] sm:$0xf]
  %v110 = vld [vmem:[%s0 + $0x240] sm:$0xff]
  %v111 = vld [vmem:[%s0 + $0x248] sm:$0xf]
  %v112 = vld [vmem:[%s0 + $0x24c] sm:$0xff]
  %v113 = vld [vmem:[%s0 + $0x254] sm:$0xf]
  %v114 = vld [vmem:[%s0 + $0x258] sm:$0xff]
  %v115 = vld [vmem:[%s0 + $0x260] sm:$0xf]
  %v116 = vld [vmem:[%s0 + $0x264] sm:$0xff]
  %v117 = vld [vmem:[%s0 + $0x26c] sm:$0xf]
  %v118 = vld [vmem:[%s0 + $0x270] sm:$0xff]
  %v119 = vld [vmem:[%s0 + $0x278] sm:$0xf]
  %v120 = vld [vmem:[%s0 + $0x27c] sm:$0xff]
  %v121 = vld [vmem:[%s0 + $0x284] sm:$0xf]
  %v122 = vld [vmem:[%s0 + $0x288] sm:$0xff]
  %v123 = vld [vmem:[%s0 + $0x290] sm:$0xf]
  %v124 = vld [vmem:[%s0 + $0x294] sm:$0xff]
  %v125 = vld [vmem:[%s0 + $0x29c] sm:$0xf]
  %v126 = vld [vmem:[%s0 + $0x2a0] sm:$0xff]
  %v127 = vld [vmem:[%s0 + $0x2a8] sm:$0xf]
  %v128 = vld [vmem:[%s0 + $0x2ac] sm:$0xff]
  %v129 = vld [vmem:[%s0 + $0x2b4] sm:$0xf]
  %v130 = vld [vmem:[%s0 + $0x2b8] sm:$0xff]
  %v131 = vld [vmem:[%s0 + $0x2c0] sm:$0xf]
  %v132 = vld [vmem:[%s0 + $0x2c4] sm:$0xff]
  %v133 = vld [vmem:[%s0 + $0x2cc] sm:$0xf]
  %v134 = vld [vmem:[%s0 + $0x2d0] sm:$0xff]
  %v135 = vld [vmem:[%s0 + $0x2d8] sm:$0xf]
  %v136 = vld [vmem:[%s0 + $0x2dc] sm:$0xff]
  %v137 = vld [vmem:[%s0 + $0x2e4] sm:$0xf]
  %v138 = vld [vmem:[%s0 + $0x2e8] sm:$0xff]
  %v139 = vld [vmem:[%s0 + $0x2f0] sm:$0xf]
  %v140 = vld [vmem:[%s0 + $0x2f4] sm:$0xff]
  %v141 = vld [vmem:[%s0 + $0x2fc] sm:$0xf]
  %v142 = vld [vmem:[%s1] sm:$0xf]
  %v143 = vld [vmem:[%s1 + $0x4] sm:$0xf]
  %v144 = vld [vmem:[%s1 + $0x8] sm:$0xf]
  %v145 = vld [vmem:[%s1 + $0xc] sm:$0xf]
  %v146 = vld [vmem:[%s1 + $0x10] sm:$0xf]
  %v147 = vld [vmem:[%s1 + $0x14] sm:$0xf]
  %v148 = vld [vmem:[%s1 + $0x18] sm:$0xf]
  %v149 = vld [vmem:[%s1 + $0x1c] sm:$0xf]
  %v150 = vld [vmem:[%s1 + $0x20] sm:$0xf]
  %v151 = vld [vmem:[%s1 + $0x24] sm:$0xf]
  %v152 = vld [vmem:[%s1 + $0x28] sm:$0xf]
  %v153 = vld [vmem:[%s1 + $0x2c] sm:$0xf]
  %v154 = vld [vmem:[%s1 + $0x30] sm:$0xf]
  %v155 = vld [vmem:[%s1 + $0x34] sm:$0xf]
  %v156 = vld [vmem:[%s1 + $0x38] sm:$0xf]
  %v157 = vld [vmem:[%s1 + $0x3c] sm:$0xf]
  %v158 = vld [vmem:[%s1 + $0x40] sm:$0xf]
  %v159 = vld [vmem:[%s1 + $0x44] sm:$0xf]
  %v160 = vld [vmem:[%s1 + $0x48] sm:$0xf]
  %v161 = vld [vmem:[%s1 + $0x4c] sm:$0xf]
  %v162 = vld [vmem:[%s1 + $0x50] sm:$0xf]
  %v163 = vld [vmem:[%s1 + $0x54] sm:$0xf]
  %v164 = vld [vmem:[%s1 + $0x58] sm:$0xf]
  %v165 = vld [vmem:[%s1 + $0x5c] sm:$0xf]
  %v166 = vld [vmem:[%s1 + $0x60] sm:$0xf]
  %v167 = vld [vmem:[%s1 + $0x64] sm:$0xf]
  %v168 = vld [vmem:[%s1 + $0x68] sm:$0xf]
  %v169 = vld [vmem:[%s1 + $0x6c] sm:$0xf]
  %v170 = vld [vmem:[%s1 + $0x70] sm:$0xf]
  %v171 = vld [vmem:[%s1 + $0x74] sm:$0xf]
  %v172 = vld [vmem:[%s1 + $0x78] sm:$0xf]
  %v173 = vld [vmem:[%s1 + $0x7c] sm:$0xf]
  %v174 = vld [vmem:[%s1 + $0x80] sm:$0xf]
  %v175 = vld [vmem:[%s1 + $0x84] sm:$0xf]
  %v176 = vld [vmem:[%s1 + $0x88] sm:$0xf]
  %v177 = vld [vmem:[%s1 + $0x8c] sm:$0xf]
  %v178 = vld [vmem:[%s1 + $0x90] sm:$0xf]
  %v179 = vld [vmem:[%s1 + $0x94] sm:$0xf]
  %v180 = vld [vmem:[%s1 + $0x98] sm:$0xf]
  %v181 = vld [vmem:[%s1 + $0x9c] sm:$0xf]
  %v182 = vld [vmem:[%s1 + $0xa0] sm:$0xf]
  %v183 = vld [vmem:[%s1 + $0xa4] sm:$0xf]
  %v184 = vld [vmem:[%s1 + $0xa8] sm:$0xf]
  %v185 = vld [vmem:[%s1 + $0xac] sm:$0xf]
  %v186 = vld [vmem:[%s1 + $0xb0] sm:$0xf]
  %v187 = vld [vmem:[%s1 + $0xb4] sm:$0xf]
  %v188 = vld [vmem:[%s1 + $0xb8] sm:$0xf]
  %v189 = vld [vmem:[%s1 + $0xbc] sm:$0xf]
  %v190 = vld [vmem:[%s2] sm:$0x1]
  %v192 = vperm.slane %v190, 0
  %v322 = vunpack.c.l.b16 %v14
  %v323 = vunpack.c.h.b16 %v14
  %v324 = vunpack.c.l.b16 %v15
  %v325 = vunpack.c.l.b16 %v16
  %v326 = vunpack.c.h.b16 %v16
  %v327 = vunpack.c.l.b16 %v17
  %v328 = vunpack.c.l.b16 %v18
  %v329 = vunpack.c.h.b16 %v18
  %v330 = vunpack.c.l.b16 %v19
  %v331 = vunpack.c.l.b16 %v20
  %v332 = vunpack.c.h.b16 %v20
  %v333 = vunpack.c.l.b16 %v21
  %v334 = vunpack.c.l.b16 %v22
  %v335 = vunpack.c.h.b16 %v22
  %v336 = vunpack.c.l.b16 %v23
  %v337 = vunpack.c.l.b16 %v24
  %v338 = vunpack.c.h.b16 %v24
  %v339 = vunpack.c.l.b16 %v25
  %v340 = vunpack.c.l.b16 %v26
  %v341 = vunpack.c.h.b16 %v26
  %v342 = vunpack.c.l.b16 %v27
  %v343 = vunpack.c.l.b16 %v28
  %v344 = vunpack.c.h.b16 %v28
  %v345 = vunpack.c.l.b16 %v29
  %v346 = vunpack.c.l.b16 %v30
  %v347 = vunpack.c.h.b16 %v30
  %v348 = vunpack.c.l.b16 %v31
  %v349 = vunpack.c.l.b16 %v32
  %v350 = vunpack.c.h.b16 %v32
  %v351 = vunpack.c.l.b16 %v33
  %v352 = vunpack.c.l.b16 %v34
  %v353 = vunpack.c.h.b16 %v34
  %v354 = vunpack.c.l.b16 %v35
  %v355 = vunpack.c.l.b16 %v36
  %v356 = vunpack.c.h.b16 %v36
  %v357 = vunpack.c.l.b16 %v37
  %v358 = vunpack.c.l.b16 %v38
  %v359 = vunpack.c.h.b16 %v38
  %v360 = vunpack.c.l.b16 %v39
  %v361 = vunpack.c.l.b16 %v40
  %v362 = vunpack.c.h.b16 %v40
  %v363 = vunpack.c.l.b16 %v41
  %v364 = vunpack.c.l.b16 %v42
  %v365 = vunpack.c.h.b16 %v42
  %v366 = vunpack.c.l.b16 %v43
  %v367 = vunpack.c.l.b16 %v44
  %v368 = vunpack.c.h.b16 %v44
  %v369 = vunpack.c.l.b16 %v45
  %v370 = vunpack.c.l.b16 %v46
  %v371 = vunpack.c.h.b16 %v46
  %v372 = vunpack.c.l.b16 %v47
  %v373 = vunpack.c.l.b16 %v48
  %v374 = vunpack.c.h.b16 %v48
  %v375 = vunpack.c.l.b16 %v49
  %v376 = vunpack.c.l.b16 %v50
  %v377 = vunpack.c.h.b16 %v50
  %v378 = vunpack.c.l.b16 %v51
  %v379 = vunpack.c.l.b16 %v52
  %v380 = vunpack.c.h.b16 %v52
  %v381 = vunpack.c.l.b16 %v53
  %v382 = vunpack.c.l.b16 %v54
  %v383 = vunpack.c.h.b16 %v54
  %v384 = vunpack.c.l.b16 %v55
  %v385 = vunpack.c.l.b16 %v56
  %v386 = vunpack.c.h.b16 %v56
  %v387 = vunpack.c.l.b16 %v57
  %v388 = vunpack.c.l.b16 %v58
  %v389 = vunpack.c.h.b16 %v58
  %v390 = vunpack.c.l.b16 %v59
  %v391 = vunpack.c.l.b16 %v60
  %v392 = vunpack.c.h.b16 %v60
  %v393 = vunpack.c.l.b16 %v61
  %v394 = vunpack.c.l.b16 %v62
  %v395 = vunpack.c.h.b16 %v62
  %v396 = vunpack.c.l.b16 %v63
  %v397 = vunpack.c.l.b16 %v64
  %v398 = vunpack.c.h.b16 %v64
  %v399 = vunpack.c.l.b16 %v65
  %v400 = vunpack.c.l.b16 %v66
  %v401 = vunpack.c.h.b16 %v66
  %v402 = vunpack.c.l.b16 %v67
  %v403 = vunpack.c.l.b16 %v68
  %v404 = vunpack.c.h.b16 %v68
  %v405 = vunpack.c.l.b16 %v69
  %v406 = vunpack.c.l.b16 %v70
  %v407 = vunpack.c.h.b16 %v70
  %v408 = vunpack.c.l.b16 %v71
  %v409 = vunpack.c.l.b16 %v72
  %v410 = vunpack.c.h.b16 %v72
  %v411 = vunpack.c.l.b16 %v73
  %v412 = vunpack.c.l.b16 %v74
  %v413 = vunpack.c.h.b16 %v74
  %v414 = vunpack.c.l.b16 %v75
  %v415 = vunpack.c.l.b16 %v76
  %v416 = vunpack.c.h.b16 %v76
  %v417 = vunpack.c.l.b16 %v77
  %v418 = vunpack.c.l.b16 %v78
  %v419 = vunpack.c.h.b16 %v78
  %v420 = vunpack.c.l.b16 %v79
  %v421 = vunpack.c.l.b16 %v80
  %v422 = vunpack.c.h.b16 %v80
  %v423 = vunpack.c.l.b16 %v81
  %v424 = vunpack.c.l.b16 %v82
  %v425 = vunpack.c.h.b16 %v82
  %v426 = vunpack.c.l.b16 %v83
  %v427 = vunpack.c.l.b16 %v84
  %v428 = vunpack.c.h.b16 %v84
  %v429 = vunpack.c.l.b16 %v85
  %v430 = vunpack.c.l.b16 %v86
  %v431 = vunpack.c.h.b16 %v86
  %v432 = vunpack.c.l.b16 %v87
  %v433 = vunpack.c.l.b16 %v88
  %v434 = vunpack.c.h.b16 %v88
  %v435 = vunpack.c.l.b16 %v89
  %v436 = vunpack.c.l.b16 %v90
  %v437 = vunpack.c.h.b16 %v90
  %v438 = vunpack.c.l.b16 %v91
  %v439 = vunpack.c.l.b16 %v92
  %v440 = vunpack.c.h.b16 %v92
  %v441 = vunpack.c.l.b16 %v93
  %v442 = vunpack.c.l.b16 %v94
  %v443 = vunpack.c.h.b16 %v94
  %v444 = vunpack.c.l.b16 %v95
  %v445 = vunpack.c.l.b16 %v96
  %v446 = vunpack.c.h.b16 %v96
  %v447 = vunpack.c.l.b16 %v97
  %v448 = vunpack.c.l.b16 %v98
  %v449 = vunpack.c.h.b16 %v98
  %v450 = vunpack.c.l.b16 %v99
  %v451 = vunpack.c.l.b16 %v100
  %v452 = vunpack.c.h.b16 %v100
  %v453 = vunpack.c.l.b16 %v101
  %v454 = vunpack.c.l.b16 %v102
  %v455 = vunpack.c.h.b16 %v102
  %v456 = vunpack.c.l.b16 %v103
  %v457 = vunpack.c.l.b16 %v104
  %v458 = vunpack.c.h.b16 %v104
  %v459 = vunpack.c.l.b16 %v105
  %v460 = vunpack.c.l.b16 %v106
  %v461 = vunpack.c.h.b16 %v106
  %v462 = vunpack.c.l.b16 %v107
  %v463 = vunpack.c.l.b16 %v108
  %v464 = vunpack.c.h.b16 %v108
  %v465 = vunpack.c.l.b16 %v109
  %v466 = vunpack.c.l.b16 %v110
  %v467 = vunpack.c.h.b16 %v110
  %v468 = vunpack.c.l.b16 %v111
  %v469 = vunpack.c.l.b16 %v112
  %v470 = vunpack.c.h.b16 %v112
  %v471 = vunpack.c.l.b16 %v113
  %v472 = vunpack.c.l.b16 %v114
  %v473 = vunpack.c.h.b16 %v114
  %v474 = vunpack.c.l.b16 %v115
  %v475 = vunpack.c.l.b16 %v116
  %v476 = vunpack.c.h.b16 %v116
  %v477 = vunpack.c.l.b16 %v117
  %v478 = vunpack.c.l.b16 %v118
  %v479 = vunpack.c.h.b16 %v118
  %v480 = vunpack.c.l.b16 %v119
  %v481 = vunpack.c.l.b16 %v120
  %v482 = vunpack.c.h.b16 %v120
  %v483 = vunpack.c.l.b16 %v121
  %v484 = vunpack.c.l.b16 %v122
  %v485 = vunpack.c.h.b16 %v122
  %v486 = vunpack.c.l.b16 %v123
  %v487 = vunpack.c.l.b16 %v124
  %v488 = vunpack.c.h.b16 %v124
  %v489 = vunpack.c.l.b16 %v125
  %v490 = vunpack.c.l.b16 %v126
  %v491 = vunpack.c.h.b16 %v126
  %v492 = vunpack.c.l.b16 %v127
  %v493 = vunpack.c.l.b16 %v128
  %v494 = vunpack.c.h.b16 %v128
  %v495 = vunpack.c.l.b16 %v129
  %v496 = vunpack.c.l.b16 %v130
  %v497 = vunpack.c.h.b16 %v130
  %v498 = vunpack.c.l.b16 %v131
  %v499 = vunpack.c.l.b16 %v132
  %v500 = vunpack.c.h.b16 %v132
  %v501 = vunpack.c.l.b16 %v133
  %v502 = vunpack.c.l.b16 %v134
  %v503 = vunpack.c.h.b16 %v134
  %v504 = vunpack.c.l.b16 %v135
  %v505 = vunpack.c.l.b16 %v136
  %v506 = vunpack.c.h.b16 %v136
  %v507 = vunpack.c.l.b16 %v137
  %v508 = vunpack.c.l.b16 %v138
  %v509 = vunpack.c.h.b16 %v138
  %v510 = vunpack.c.l.b16 %v139
  %v511 = vunpack.c.l.b16 %v140
  %v512 = vunpack.c.h.b16 %v140
  %v513 = vunpack.c.l.b16 %v141
  %v514 = vpack.c.b16 %v325, %v322
  %v515 = vpack.c.b16 %v326, %v323
  %v516 = vpack.c.b16 %v327, %v324
  %v517 = vpack.c.b16 %v331, %v328
  %v518 = vpack.c.b16 %v332, %v329
  %v519 = vpack.c.b16 %v333, %v330
  %v520 = vpack.c.b16 %v337, %v334
  %v521 = vpack.c.b16 %v338, %v335
  %v522 = vpack.c.b16 %v339, %v336
  %v523 = vpack.c.b16 %v343, %v340
  %v524 = vpack.c.b16 %v344, %v341
  %v525 = vpack.c.b16 %v345, %v342
  %v526 = vpack.c.b16 %v349, %v346
  %v527 = vpack.c.b16 %v350, %v347
  %v528 = vpack.c.b16 %v351, %v348
  %v529 = vpack.c.b16 %v355, %v352
  %v530 = vpack.c.b16 %v356, %v353
  %v531 = vpack.c.b16 %v357, %v354
  %v532 = vpack.c.b16 %v361, %v358
  %v533 = vpack.c.b16 %v362, %v359
  %v534 = vpack.c.b16 %v363, %v360
  %v535 = vpack.c.b16 %v367, %v364
  %v536 = vpack.c.b16 %v368, %v365
  %v537 = vpack.c.b16 %v369, %v366
  %v538 = vpack.c.b16 %v373, %v370
  %v539 = vpack.c.b16 %v374, %v371
  %v540 = vpack.c.b16 %v375, %v372
  %v541 = vpack.c.b16 %v379, %v376
  %v542 = vpack.c.b16 %v380, %v377
  %v543 = vpack.c.b16 %v381, %v378
  %v544 = vpack.c.b16 %v385, %v382
  %v545 = vpack.c.b16 %v386, %v383
  %v546 = vpack.c.b16 %v387, %v384
  %v547 = vpack.c.b16 %v391, %v388
  %v548 = vpack.c.b16 %v392, %v389
  %v549 = vpack.c.b16 %v393, %v390
  %v550 = vpack.c.b16 %v397, %v394
  %v551 = vpack.c.b16 %v398, %v395
  %v552 = vpack.c.b16 %v399, %v396
  %v553 = vpack.c.b16 %v403, %v400
  %v554 = vpack.c.b16 %v404, %v401
  %v555 = vpack.c.b16 %v405, %v402
  %v556 = vpack.c.b16 %v409, %v406
  %v557 = vpack.c.b16 %v410, %v407
  %v558 = vpack.c.b16 %v411, %v408
  %v559 = vpack.c.b16 %v415, %v412
  %v560 = vpack.c.b16 %v416, %v413
  %v561 = vpack.c.b16 %v417, %v414
  %v562 = vpack.c.b16 %v421, %v418
  %v563 = vpack.c.b16 %v422, %v419
  %v564 = vpack.c.b16 %v423, %v420
  %v565 = vpack.c.b16 %v427, %v424
  %v566 = vpack.c.b16 %v428, %v425
  %v567 = vpack.c.b16 %v429, %v426
  %v568 = vpack.c.b16 %v433, %v430
  %v569 = vpack.c.b16 %v434, %v431
  %v570 = vpack.c.b16 %v435, %v432
  %v571 = vpack.c.b16 %v439, %v436
  %v572 = vpack.c.b16 %v440, %v437
  %v573 = vpack.c.b16 %v441, %v438
  %v574 = vpack.c.b16 %v445, %v442
  %v575 = vpack.c.b16 %v446, %v443
  %v576 = vpack.c.b16 %v447, %v444
  %v577 = vpack.c.b16 %v451, %v448
  %v578 = vpack.c.b16 %v452, %v449
  %v579 = vpack.c.b16 %v453, %v450
  %v580 = vpack.c.b16 %v457, %v454
  %v581 = vpack.c.b16 %v458, %v455
  %v582 = vpack.c.b16 %v459, %v456
  %v583 = vpack.c.b16 %v463, %v460
  %v584 = vpack.c.b16 %v464, %v461
  %v585 = vpack.c.b16 %v465, %v462
  %v586 = vpack.c.b16 %v469, %v466
  %v587 = vpack.c.b16 %v470, %v467
  %v588 = vpack.c.b16 %v471, %v468
  %v589 = vpack.c.b16 %v475, %v472
  %v590 = vpack.c.b16 %v476, %v473
  %v591 = vpack.c.b16 %v477, %v474
  %v592 = vpack.c.b16 %v481, %v478
  %v593 = vpack.c.b16 %v482, %v479
  %v594 = vpack.c.b16 %v483, %v480
  %v595 = vpack.c.b16 %v487, %v484
  %v596 = vpack.c.b16 %v488, %v485
  %v597 = vpack.c.b16 %v489, %v486
  %v598 = vpack.c.b16 %v493, %v490
  %v599 = vpack.c.b16 %v494, %v491
  %v600 = vpack.c.b16 %v495, %v492
  %v601 = vpack.c.b16 %v499, %v496
  %v602 = vpack.c.b16 %v500, %v497
  %v603 = vpack.c.b16 %v501, %v498
  %v604 = vpack.c.b16 %v505, %v502
  %v605 = vpack.c.b16 %v506, %v503
  %v606 = vpack.c.b16 %v507, %v504
  %v607 = vpack.c.b16 %v511, %v508
  %v608 = vpack.c.b16 %v512, %v509
  %v609 = vpack.c.b16 %v513, %v510
  %v754 = vunpack.c.l.b16 %v142
  %v755 = vunpack.c.l.b16 %v143
  %v756 = vunpack.c.l.b16 %v144
  %v757 = vunpack.c.l.b16 %v145
  %v758 = vunpack.c.l.b16 %v146
  %v759 = vunpack.c.l.b16 %v147
  %v760 = vunpack.c.l.b16 %v148
  %v761 = vunpack.c.l.b16 %v149
  %v762 = vunpack.c.l.b16 %v150
  %v763 = vunpack.c.l.b16 %v151
  %v764 = vunpack.c.l.b16 %v152
  %v765 = vunpack.c.l.b16 %v153
  %v766 = vunpack.c.l.b16 %v154
  %v767 = vunpack.c.l.b16 %v155
  %v768 = vunpack.c.l.b16 %v156
  %v769 = vunpack.c.l.b16 %v157
  %v770 = vunpack.c.l.b16 %v158
  %v771 = vunpack.c.l.b16 %v159
  %v772 = vunpack.c.l.b16 %v160
  %v773 = vunpack.c.l.b16 %v161
  %v774 = vunpack.c.l.b16 %v162
  %v775 = vunpack.c.l.b16 %v163
  %v776 = vunpack.c.l.b16 %v164
  %v777 = vunpack.c.l.b16 %v165
  %v778 = vunpack.c.l.b16 %v166
  %v779 = vunpack.c.l.b16 %v167
  %v780 = vunpack.c.l.b16 %v168
  %v781 = vunpack.c.l.b16 %v169
  %v782 = vunpack.c.l.b16 %v170
  %v783 = vunpack.c.l.b16 %v171
  %v784 = vunpack.c.l.b16 %v172
  %v785 = vunpack.c.l.b16 %v173
  %v786 = vunpack.c.l.b16 %v174
  %v787 = vunpack.c.l.b16 %v175
  %v788 = vunpack.c.l.b16 %v176
  %v789 = vunpack.c.l.b16 %v177
  %v790 = vunpack.c.l.b16 %v178
  %v791 = vunpack.c.l.b16 %v179
  %v792 = vunpack.c.l.b16 %v180
  %v793 = vunpack.c.l.b16 %v181
  %v794 = vunpack.c.l.b16 %v182
  %v795 = vunpack.c.l.b16 %v183
  %v796 = vunpack.c.l.b16 %v184
  %v797 = vunpack.c.l.b16 %v185
  %v798 = vunpack.c.l.b16 %v186
  %v799 = vunpack.c.l.b16 %v187
  %v800 = vunpack.c.l.b16 %v188
  %v801 = vunpack.c.l.b16 %v189
  %v802 = vpack.c.b16 %v755, %v754
  %v803 = vpack.c.b16 %v757, %v756
  %v804 = vpack.c.b16 %v759, %v758
  %v805 = vpack.c.b16 %v761, %v760
  %v806 = vpack.c.b16 %v763, %v762
  %v807 = vpack.c.b16 %v765, %v764
  %v808 = vpack.c.b16 %v767, %v766
  %v809 = vpack.c.b16 %v769, %v768
  %v810 = vpack.c.b16 %v771, %v770
  %v811 = vpack.c.b16 %v773, %v772
  %v812 = vpack.c.b16 %v775, %v774
  %v813 = vpack.c.b16 %v777, %v776
  %v814 = vpack.c.b16 %v779, %v778
  %v815 = vpack.c.b16 %v781, %v780
  %v816 = vpack.c.b16 %v783, %v782
  %v817 = vpack.c.b16 %v785, %v784
  %v818 = vpack.c.b16 %v787, %v786
  %v819 = vpack.c.b16 %v789, %v788
  %v820 = vpack.c.b16 %v791, %v790
  %v821 = vpack.c.b16 %v793, %v792
  %v822 = vpack.c.b16 %v795, %v794
  %v823 = vpack.c.b16 %v797, %v796
  %v824 = vpack.c.b16 %v799, %v798
  %v825 = vpack.c.b16 %v801, %v800
  %850 = vmatpush.bf16.msra.mxu0 %v809
  %851 = vmatpush.bf16.msra.mxu0 %v808
  %852 = vmatpush.bf16.msra.mxu0 %v807
  %853 = vmatpush.bf16.msra.mxu0 %v806
  %854 = vmatpush.bf16.msra.mxu0 %v805
  %855 = vmatpush.bf16.msra.mxu0 %v804
  %856 = vmatpush.bf16.msra.mxu0 %v803
  %857 = vmatpush.bf16.msra.mxu0 %v802
  %858 = vmatmul.bf16.gmra.mxu0 %v514
  %v859 = vpop.f32.mrf.mxu0
  %v860 = vadd.f32 %v192, %v859
  %v861 = vpop.f32.mrf.mxu0
  %v862 = vadd.f32 %v192, %v861
  %863 = vmatmul.bf16.gmra.mxu0 %v517
  %v864 = vpop.f32.mrf.mxu0
  %v865 = vadd.f32 %v192, %v864
  %v866 = vpop.f32.mrf.mxu0
  %v867 = vadd.f32 %v192, %v866
  %868 = vmatmul.bf16.gmra.mxu0 %v520
  %v869 = vpop.f32.mrf.mxu0
  %v870 = vadd.f32 %v192, %v869
  %v871 = vpop.f32.mrf.mxu0
  %v872 = vadd.f32 %v192, %v871
  %873 = vmatmul.bf16.gmra.mxu0 %v523
  %v874 = vpop.f32.mrf.mxu0
  %v875 = vadd.f32 %v192, %v874
  %v876 = vpop.f32.mrf.mxu0
  %v877 = vadd.f32 %v192, %v876
  %878 = vmatmul.bf16.gmra.mxu0 %v526
  %v879 = vpop.f32.mrf.mxu0
  %v880 = vadd.f32 %v192, %v879
  %v881 = vpop.f32.mrf.mxu0
  %v882 = vadd.f32 %v192, %v881
  %883 = vmatmul.bf16.gmra.mxu0 %v529
  %v884 = vpop.f32.mrf.mxu0
  %v885 = vadd.f32 %v192, %v884
  %v886 = vpop.f32.mrf.mxu0
  %v887 = vadd.f32 %v192, %v886
  %888 = vmatmul.bf16.gmra.mxu0 %v532
  %v889 = vpop.f32.mrf.mxu0
  %v890 = vadd.f32 %v192, %v889
  %v891 = vpop.f32.mrf.mxu0
  %v892 = vadd.f32 %v192, %v891
  %893 = vmatmul.bf16.gmra.mxu0 %v535
  %v894 = vpop.f32.mrf.mxu0
  %v895 = vadd.f32 %v192, %v894
  %v896 = vpop.f32.mrf.mxu0
  %v897 = vadd.f32 %v192, %v896
  %898 = vmatmul.bf16.gmra.mxu0 %v538
  %v899 = vpop.f32.mrf.mxu0
  %v900 = vadd.f32 %v192, %v899
  %v901 = vpop.f32.mrf.mxu0
  %v902 = vadd.f32 %v192, %v901
  %903 = vmatmul.bf16.gmra.mxu0 %v541
  %v904 = vpop.f32.mrf.mxu0
  %v905 = vadd.f32 %v192, %v904
  %v906 = vpop.f32.mrf.mxu0
  %v907 = vadd.f32 %v192, %v906
  %908 = vmatmul.bf16.gmra.mxu0 %v544
  %v909 = vpop.f32.mrf.mxu0
  %v910 = vadd.f32 %v192, %v909
  %v911 = vpop.f32.mrf.mxu0
  %v912 = vadd.f32 %v192, %v911
  %913 = vmatmul.bf16.gmra.mxu0 %v547
  %v914 = vpop.f32.mrf.mxu0
  %v915 = vadd.f32 %v192, %v914
  %v916 = vpop.f32.mrf.mxu0
  %v917 = vadd.f32 %v192, %v916
  %918 = vmatmul.bf16.gmra.mxu0 %v550
  %v919 = vpop.f32.mrf.mxu0
  %v920 = vadd.f32 %v192, %v919
  %v921 = vpop.f32.mrf.mxu0
  %v922 = vadd.f32 %v192, %v921
  %923 = vmatmul.bf16.gmra.mxu0 %v553
  %v924 = vpop.f32.mrf.mxu0
  %v925 = vadd.f32 %v192, %v924
  %v926 = vpop.f32.mrf.mxu0
  %v927 = vadd.f32 %v192, %v926
  %928 = vmatmul.bf16.gmra.mxu0 %v556
  %v929 = vpop.f32.mrf.mxu0
  %v930 = vadd.f32 %v192, %v929
  %v931 = vpop.f32.mrf.mxu0
  %v932 = vadd.f32 %v192, %v931
  %933 = vmatmul.bf16.gmra.mxu0 %v559
  %v934 = vpop.f32.mrf.mxu0
  %v935 = vadd.f32 %v192, %v934
  %v936 = vpop.f32.mrf.mxu0
  %v937 = vadd.f32 %v192, %v936
  %938 = vmatmul.bf16.gmra.mxu0 %v562
  %v939 = vpop.f32.mrf.mxu0
  %v940 = vadd.f32 %v192, %v939
  %v941 = vpop.f32.mrf.mxu0
  %v942 = vadd.f32 %v192, %v941
  %943 = vmatmul.bf16.gmra.mxu0 %v565
  %v944 = vpop.f32.mrf.mxu0
  %v945 = vadd.f32 %v192, %v944
  %v946 = vpop.f32.mrf.mxu0
  %v947 = vadd.f32 %v192, %v946
  %948 = vmatmul.bf16.gmra.mxu0 %v568
  %v949 = vpop.f32.mrf.mxu0
  %v950 = vadd.f32 %v192, %v949
  %v951 = vpop.f32.mrf.mxu0
  %v952 = vadd.f32 %v192, %v951
  %953 = vmatmul.bf16.gmra.mxu0 %v571
  %v954 = vpop.f32.mrf.mxu0
  %v955 = vadd.f32 %v192, %v954
  %v956 = vpop.f32.mrf.mxu0
  %v957 = vadd.f32 %v192, %v956
  %958 = vmatmul.bf16.gmra.mxu0 %v574
  %v959 = vpop.f32.mrf.mxu0
  %v960 = vadd.f32 %v192, %v959
  %v961 = vpop.f32.mrf.mxu0
  %v962 = vadd.f32 %v192, %v961
  %963 = vmatmul.bf16.gmra.mxu0 %v577
  %v964 = vpop.f32.mrf.mxu0
  %v965 = vadd.f32 %v192, %v964
  %v966 = vpop.f32.mrf.mxu0
  %v967 = vadd.f32 %v192, %v966
  %968 = vmatmul.bf16.gmra.mxu0 %v580
  %v969 = vpop.f32.mrf.mxu0
  %v970 = vadd.f32 %v192, %v969
  %v971 = vpop.f32.mrf.mxu0
  %v972 = vadd.f32 %v192, %v971
  %973 = vmatmul.bf16.gmra.mxu0 %v583
  %v974 = vpop.f32.mrf.mxu0
  %v975 = vadd.f32 %v192, %v974
  %v976 = vpop.f32.mrf.mxu0
  %v977 = vadd.f32 %v192, %v976
  %978 = vmatmul.bf16.gmra.mxu0 %v586
  %v979 = vpop.f32.mrf.mxu0
  %v980 = vadd.f32 %v192, %v979
  %v981 = vpop.f32.mrf.mxu0
  %v982 = vadd.f32 %v192, %v981
  %983 = vmatmul.bf16.gmra.mxu0 %v589
  %v984 = vpop.f32.mrf.mxu0
  %v985 = vadd.f32 %v192, %v984
  %v986 = vpop.f32.mrf.mxu0
  %v987 = vadd.f32 %v192, %v986
  %988 = vmatmul.bf16.gmra.mxu0 %v592
  %v989 = vpop.f32.mrf.mxu0
  %v990 = vadd.f32 %v192, %v989
  %v991 = vpop.f32.mrf.mxu0
  %v992 = vadd.f32 %v192, %v991
  %993 = vmatmul.bf16.gmra.mxu0 %v595
  %v994 = vpop.f32.mrf.mxu0
  %v995 = vadd.f32 %v192, %v994
  %v996 = vpop.f32.mrf.mxu0
  %v997 = vadd.f32 %v192, %v996
  %998 = vmatmul.bf16.gmra.mxu0 %v598
  %v999 = vpop.f32.mrf.mxu0
  %v1000 = vadd.f32 %v192, %v999
  %v1001 = vpop.f32.mrf.mxu0
  %v1002 = vadd.f32 %v192, %v1001
  %1003 = vmatmul.bf16.gmra.mxu0 %v601
  %v1004 = vpop.f32.mrf.mxu0
  %v1005 = vadd.f32 %v192, %v1004
  %v1006 = vpop.f32.mrf.mxu0
  %v1007 = vadd.f32 %v192, %v1006
  %1008 = vmatmul.bf16.gmra.mxu0 %v604
  %v1009 = vpop.f32.mrf.mxu0
  %v1010 = vadd.f32 %v192, %v1009
  %v1011 = vpop.f32.mrf.mxu0
  %v1012 = vadd.f32 %v192, %v1011
  %1013 = vmatmul.bf16.gmra.mxu0 %v607
  %v1014 = vpop.f32.mrf.mxu0
  %v1015 = vadd.f32 %v192, %v1014
  %v1016 = vpop.f32.mrf.mxu0
  %v1017 = vadd.f32 %v192, %v1016
  %1018 = vdwg.mxu0
  %1019 = vmatpush.bf16.msra.mxu0 %v817
  %1020 = vmatpush.bf16.msra.mxu0 %v816
  %1021 = vmatpush.bf16.msra.mxu0 %v815
  %1022 = vmatpush.bf16.msra.mxu0 %v814
  %1023 = vmatpush.bf16.msra.mxu0 %v813
  %1024 = vmatpush.bf16.msra.mxu0 %v812
  %1025 = vmatpush.bf16.msra.mxu0 %v811
  %1026 = vmatpush.bf16.msra.mxu0 %v810
  %1027 = vmatmul.bf16.gmra.mxu0 %v515
  %v1028 = vpop.f32.mrf.mxu0
  %v1029 = vadd.f32 %v860, %v1028
  %v1030 = vpop.f32.mrf.mxu0
  %v1031 = vadd.f32 %v862, %v1030
  %1032 = vmatmul.bf16.gmra.mxu0 %v518
  %v1033 = vpop.f32.mrf.mxu0
  %v1034 = vadd.f32 %v865, %v1033
  %v1035 = vpop.f32.mrf.mxu0
  %v1036 = vadd.f32 %v867, %v1035
  %1037 = vmatmul.bf16.gmra.mxu0 %v521
  %v1038 = vpop.f32.mrf.mxu0
  %v1039 = vadd.f32 %v870, %v1038
  %v1040 = vpop.f32.mrf.mxu0
  %v1041 = vadd.f32 %v872, %v1040
  %1042 = vmatmul.bf16.gmra.mxu0 %v524
  %v1043 = vpop.f32.mrf.mxu0
  %v1044 = vadd.f32 %v875, %v1043
  %v1045 = vpop.f32.mrf.mxu0
  %v1046 = vadd.f32 %v877, %v1045
  %1047 = vmatmul.bf16.gmra.mxu0 %v527
  %v1048 = vpop.f32.mrf.mxu0
  %v1049 = vadd.f32 %v880, %v1048
  %v1050 = vpop.f32.mrf.mxu0
  %v1051 = vadd.f32 %v882, %v1050
  %1052 = vmatmul.bf16.gmra.mxu0 %v530
  %v1053 = vpop.f32.mrf.mxu0
  %v1054 = vadd.f32 %v885, %v1053
  %v1055 = vpop.f32.mrf.mxu0
  %v1056 = vadd.f32 %v887, %v1055
  %1057 = vmatmul.bf16.gmra.mxu0 %v533
  %v1058 = vpop.f32.mrf.mxu0
  %v1059 = vadd.f32 %v890, %v1058
  %v1060 = vpop.f32.mrf.mxu0
  %v1061 = vadd.f32 %v892, %v1060
  %1062 = vmatmul.bf16.gmra.mxu0 %v536
  %v1063 = vpop.f32.mrf.mxu0
  %v1064 = vadd.f32 %v895, %v1063
  %v1065 = vpop.f32.mrf.mxu0
  %v1066 = vadd.f32 %v897, %v1065
  %1067 = vmatmul.bf16.gmra.mxu0 %v539
  %v1068 = vpop.f32.mrf.mxu0
  %v1069 = vadd.f32 %v900, %v1068
  %v1070 = vpop.f32.mrf.mxu0
  %v1071 = vadd.f32 %v902, %v1070
  %1072 = vmatmul.bf16.gmra.mxu0 %v542
  %v1073 = vpop.f32.mrf.mxu0
  %v1074 = vadd.f32 %v905, %v1073
  %v1075 = vpop.f32.mrf.mxu0
  %v1076 = vadd.f32 %v907, %v1075
  %1077 = vmatmul.bf16.gmra.mxu0 %v545
  %v1078 = vpop.f32.mrf.mxu0
  %v1079 = vadd.f32 %v910, %v1078
  %v1080 = vpop.f32.mrf.mxu0
  %v1081 = vadd.f32 %v912, %v1080
  %1082 = vmatmul.bf16.gmra.mxu0 %v548
  %v1083 = vpop.f32.mrf.mxu0
  %v1084 = vadd.f32 %v915, %v1083
  %v1085 = vpop.f32.mrf.mxu0
  %v1086 = vadd.f32 %v917, %v1085
  %1087 = vmatmul.bf16.gmra.mxu0 %v551
  %v1088 = vpop.f32.mrf.mxu0
  %v1089 = vadd.f32 %v920, %v1088
  %v1090 = vpop.f32.mrf.mxu0
  %v1091 = vadd.f32 %v922, %v1090
  %1092 = vmatmul.bf16.gmra.mxu0 %v554
  %v1093 = vpop.f32.mrf.mxu0
  %v1094 = vadd.f32 %v925, %v1093
  %v1095 = vpop.f32.mrf.mxu0
  %v1096 = vadd.f32 %v927, %v1095
  %1097 = vmatmul.bf16.gmra.mxu0 %v557
  %v1098 = vpop.f32.mrf.mxu0
  %v1099 = vadd.f32 %v930, %v1098
  %v1100 = vpop.f32.mrf.mxu0
  %v1101 = vadd.f32 %v932, %v1100
  %1102 = vmatmul.bf16.gmra.mxu0 %v560
  %v1103 = vpop.f32.mrf.mxu0
  %v1104 = vadd.f32 %v935, %v1103
  %v1105 = vpop.f32.mrf.mxu0
  %v1106 = vadd.f32 %v937, %v1105
  %1107 = vmatmul.bf16.gmra.mxu0 %v563
  %v1108 = vpop.f32.mrf.mxu0
  %v1109 = vadd.f32 %v940, %v1108
  %v1110 = vpop.f32.mrf.mxu0
  %v1111 = vadd.f32 %v942, %v1110
  %1112 = vmatmul.bf16.gmra.mxu0 %v566
  %v1113 = vpop.f32.mrf.mxu0
  %v1114 = vadd.f32 %v945, %v1113
  %v1115 = vpop.f32.mrf.mxu0
  %v1116 = vadd.f32 %v947, %v1115
  %1117 = vmatmul.bf16.gmra.mxu0 %v569
  %v1118 = vpop.f32.mrf.mxu0
  %v1119 = vadd.f32 %v950, %v1118
  %v1120 = vpop.f32.mrf.mxu0
  %v1121 = vadd.f32 %v952, %v1120
  %1122 = vmatmul.bf16.gmra.mxu0 %v572
  %v1123 = vpop.f32.mrf.mxu0
  %v1124 = vadd.f32 %v955, %v1123
  %v1125 = vpop.f32.mrf.mxu0
  %v1126 = vadd.f32 %v957, %v1125
  %1127 = vmatmul.bf16.gmra.mxu0 %v575
  %v1128 = vpop.f32.mrf.mxu0
  %v1129 = vadd.f32 %v960, %v1128
  %v1130 = vpop.f32.mrf.mxu0
  %v1131 = vadd.f32 %v962, %v1130
  %1132 = vmatmul.bf16.gmra.mxu0 %v578
  %v1133 = vpop.f32.mrf.mxu0
  %v1134 = vadd.f32 %v965, %v1133
  %v1135 = vpop.f32.mrf.mxu0
  %v1136 = vadd.f32 %v967, %v1135
  %1137 = vmatmul.bf16.gmra.mxu0 %v581
  %v1138 = vpop.f32.mrf.mxu0
  %v1139 = vadd.f32 %v970, %v1138
  %v1140 = vpop.f32.mrf.mxu0
  %v1141 = vadd.f32 %v972, %v1140
  %1142 = vmatmul.bf16.gmra.mxu0 %v584
  %v1143 = vpop.f32.mrf.mxu0
  %v1144 = vadd.f32 %v975, %v1143
  %v1145 = vpop.f32.mrf.mxu0
  %v1146 = vadd.f32 %v977, %v1145
  %1147 = vmatmul.bf16.gmra.mxu0 %v587
  %v1148 = vpop.f32.mrf.mxu0
  %v1149 = vadd.f32 %v980, %v1148
  %v1150 = vpop.f32.mrf.mxu0
  %v1151 = vadd.f32 %v982, %v1150
  %1152 = vmatmul.bf16.gmra.mxu0 %v590
  %v1153 = vpop.f32.mrf.mxu0
  %v1154 = vadd.f32 %v985, %v1153
  %v1155 = vpop.f32.mrf.mxu0
  %v1156 = vadd.f32 %v987, %v1155
  %1157 = vmatmul.bf16.gmra.mxu0 %v593
  %v1158 = vpop.f32.mrf.mxu0
  %v1159 = vadd.f32 %v990, %v1158
  %v1160 = vpop.f32.mrf.mxu0
  %v1161 = vadd.f32 %v992, %v1160
  %1162 = vmatmul.bf16.gmra.mxu0 %v596
  %v1163 = vpop.f32.mrf.mxu0
  %v1164 = vadd.f32 %v995, %v1163
  %v1165 = vpop.f32.mrf.mxu0
  %v1166 = vadd.f32 %v997, %v1165
  %1167 = vmatmul.bf16.gmra.mxu0 %v599
  %v1168 = vpop.f32.mrf.mxu0
  %v1169 = vadd.f32 %v1000, %v1168
  %v1170 = vpop.f32.mrf.mxu0
  %v1171 = vadd.f32 %v1002, %v1170
  %1172 = vmatmul.bf16.gmra.mxu0 %v602
  %v1173 = vpop.f32.mrf.mxu0
  %v1174 = vadd.f32 %v1005, %v1173
  %v1175 = vpop.f32.mrf.mxu0
  %v1176 = vadd.f32 %v1007, %v1175
  %1177 = vmatmul.bf16.gmra.mxu0 %v605
  %v1178 = vpop.f32.mrf.mxu0
  %v1179 = vadd.f32 %v1010, %v1178
  %v1180 = vpop.f32.mrf.mxu0
  %v1181 = vadd.f32 %v1012, %v1180
  %1182 = vmatmul.bf16.gmra.mxu0 %v608
  %v1183 = vpop.f32.mrf.mxu0
  %v1184 = vadd.f32 %v1015, %v1183
  %v1185 = vpop.f32.mrf.mxu0
  %v1186 = vadd.f32 %v1017, %v1185
  %1187 = vdwg.mxu0
  %1188 = vmatpush.bf16.msra.mxu0 %v825
  %1189 = vmatpush.bf16.msra.mxu0 %v824
  %1190 = vmatpush.bf16.msra.mxu0 %v823
  %1191 = vmatpush.bf16.msra.mxu0 %v822
  %1192 = vmatpush.bf16.msra.mxu0 %v821
  %1193 = vmatpush.bf16.msra.mxu0 %v820
  %1194 = vmatpush.bf16.msra.mxu0 %v819
  %1195 = vmatpush.bf16.msra.mxu0 %v818
  %1196 = vmatmul.bf16.gmra.mxu0 %v516
  %v1197 = vpop.f32.mrf.mxu0
  %v1198 = vadd.f32 %v1029, %v1197
  %v1199 = vpop.f32.mrf.mxu0
  %v1200 = vadd.f32 %v1031, %v1199
  %1201 = vmatmul.bf16.gmra.mxu0 %v519
  %v1202 = vpop.f32.mrf.mxu0
  %v1203 = vadd.f32 %v1034, %v1202
  %v1204 = vpop.f32.mrf.mxu0
  %v1205 = vadd.f32 %v1036, %v1204
  %1206 = vmatmul.bf16.gmra.mxu0 %v522
  %v1207 = vpop.f32.mrf.mxu0
  %v1208 = vadd.f32 %v1039, %v1207
  %v1209 = vpop.f32.mrf.mxu0
  %v1210 = vadd.f32 %v1041, %v1209
  %1211 = vmatmul.bf16.gmra.mxu0 %v525
  %v1212 = vpop.f32.mrf.mxu0
  %v1213 = vadd.f32 %v1044, %v1212
  %v1214 = vpop.f32.mrf.mxu0
  %v1215 = vadd.f32 %v1046, %v1214
  %1216 = vmatmul.bf16.gmra.mxu0 %v528
  %v1217 = vpop.f32.mrf.mxu0
  %v1218 = vadd.f32 %v1049, %v1217
  %v1219 = vpop.f32.mrf.mxu0
  %v1220 = vadd.f32 %v1051, %v1219
  %1221 = vmatmul.bf16.gmra.mxu0 %v531
  %v1222 = vpop.f32.mrf.mxu0
  %v1223 = vadd.f32 %v1054, %v1222
  %v1224 = vpop.f32.mrf.mxu0
  %v1225 = vadd.f32 %v1056, %v1224
  %1226 = vmatmul.bf16.gmra.mxu0 %v534
  %v1227 = vpop.f32.mrf.mxu0
  %v1228 = vadd.f32 %v1059, %v1227
  %v1229 = vpop.f32.mrf.mxu0
  %v1230 = vadd.f32 %v1061, %v1229
  %1231 = vmatmul.bf16.gmra.mxu0 %v537
  %v1232 = vpop.f32.mrf.mxu0
  %v1233 = vadd.f32 %v1064, %v1232
  %v1234 = vpop.f32.mrf.mxu0
  %v1235 = vadd.f32 %v1066, %v1234
  %1236 = vmatmul.bf16.gmra.mxu0 %v540
  %v1237 = vpop.f32.mrf.mxu0
  %v1238 = vadd.f32 %v1069, %v1237
  %v1239 = vpop.f32.mrf.mxu0
  %v1240 = vadd.f32 %v1071, %v1239
  %1241 = vmatmul.bf16.gmra.mxu0 %v543
  %v1242 = vpop.f32.mrf.mxu0
  %v1243 = vadd.f32 %v1074, %v1242
  %v1244 = vpop.f32.mrf.mxu0
  %v1245 = vadd.f32 %v1076, %v1244
  %1246 = vmatmul.bf16.gmra.mxu0 %v546
  %v1247 = vpop.f32.mrf.mxu0
  %v1248 = vadd.f32 %v1079, %v1247
  %v1249 = vpop.f32.mrf.mxu0
  %v1250 = vadd.f32 %v1081, %v1249
  %1251 = vmatmul.bf16.gmra.mxu0 %v549
  %v1252 = vpop.f32.mrf.mxu0
  %v1253 = vadd.f32 %v1084, %v1252
  %v1254 = vpop.f32.mrf.mxu0
  %v1255 = vadd.f32 %v1086, %v1254
  %1256 = vmatmul.bf16.gmra.mxu0 %v552
  %v1257 = vpop.f32.mrf.mxu0
  %v1258 = vadd.f32 %v1089, %v1257
  %v1259 = vpop.f32.mrf.mxu0
  %v1260 = vadd.f32 %v1091, %v1259
  %1261 = vmatmul.bf16.gmra.mxu0 %v555
  %v1262 = vpop.f32.mrf.mxu0
  %v1263 = vadd.f32 %v1094, %v1262
  %v1264 = vpop.f32.mrf.mxu0
  %v1265 = vadd.f32 %v1096, %v1264
  %1266 = vmatmul.bf16.gmra.mxu0 %v558
  %v1267 = vpop.f32.mrf.mxu0
  %v1268 = vadd.f32 %v1099, %v1267
  %v1269 = vpop.f32.mrf.mxu0
  %v1270 = vadd.f32 %v1101, %v1269
  %1271 = vmatmul.bf16.gmra.mxu0 %v561
  %v1272 = vpop.f32.mrf.mxu0
  %v1273 = vadd.f32 %v1104, %v1272
  %v1274 = vpop.f32.mrf.mxu0
  %v1275 = vadd.f32 %v1106, %v1274
  %1276 = vmatmul.bf16.gmra.mxu0 %v564
  %v1277 = vpop.f32.mrf.mxu0
  %v1278 = vadd.f32 %v1109, %v1277
  %v1279 = vpop.f32.mrf.mxu0
  %v1280 = vadd.f32 %v1111, %v1279
  %1281 = vmatmul.bf16.gmra.mxu0 %v567
  %v1282 = vpop.f32.mrf.mxu0
  %v1283 = vadd.f32 %v1114, %v1282
  %v1284 = vpop.f32.mrf.mxu0
  %v1285 = vadd.f32 %v1116, %v1284
  %1286 = vmatmul.bf16.gmra.mxu0 %v570
  %v1287 = vpop.f32.mrf.mxu0
  %v1288 = vadd.f32 %v1119, %v1287
  %v1289 = vpop.f32.mrf.mxu0
  %v1290 = vadd.f32 %v1121, %v1289
  %1291 = vmatmul.bf16.gmra.mxu0 %v573
  %v1292 = vpop.f32.mrf.mxu0
  %v1293 = vadd.f32 %v1124, %v1292
  %v1294 = vpop.f32.mrf.mxu0
  %v1295 = vadd.f32 %v1126, %v1294
  %1296 = vmatmul.bf16.gmra.mxu0 %v576
  %v1297 = vpop.f32.mrf.mxu0
  %v1298 = vadd.f32 %v1129, %v1297
  %v1299 = vpop.f32.mrf.mxu0
  %v1300 = vadd.f32 %v1131, %v1299
  %1301 = vmatmul.bf16.gmra.mxu0 %v579
  %v1302 = vpop.f32.mrf.mxu0
  %v1303 = vadd.f32 %v1134, %v1302
  %v1304 = vpop.f32.mrf.mxu0
  %v1305 = vadd.f32 %v1136, %v1304
  %1306 = vmatmul.bf16.gmra.mxu0 %v582
  %v1307 = vpop.f32.mrf.mxu0
  %v1308 = vadd.f32 %v1139, %v1307
  %v1309 = vpop.f32.mrf.mxu0
  %v1310 = vadd.f32 %v1141, %v1309
  %1311 = vmatmul.bf16.gmra.mxu0 %v585
  %v1312 = vpop.f32.mrf.mxu0
  %v1313 = vadd.f32 %v1144, %v1312
  %v1314 = vpop.f32.mrf.mxu0
  %v1315 = vadd.f32 %v1146, %v1314
  %1316 = vmatmul.bf16.gmra.mxu0 %v588
  %v1317 = vpop.f32.mrf.mxu0
  %v1318 = vadd.f32 %v1149, %v1317
  %v1319 = vpop.f32.mrf.mxu0
  %v1320 = vadd.f32 %v1151, %v1319
  %1321 = vmatmul.bf16.gmra.mxu0 %v591
  %v1322 = vpop.f32.mrf.mxu0
  %v1323 = vadd.f32 %v1154, %v1322
  %v1324 = vpop.f32.mrf.mxu0
  %v1325 = vadd.f32 %v1156, %v1324
  %1326 = vmatmul.bf16.gmra.mxu0 %v594
  %v1327 = vpop.f32.mrf.mxu0
  %v1328 = vadd.f32 %v1159, %v1327
  %v1329 = vpop.f32.mrf.mxu0
  %v1330 = vadd.f32 %v1161, %v1329
  %1331 = vmatmul.bf16.gmra.mxu0 %v597
  %v1332 = vpop.f32.mrf.mxu0
  %v1333 = vadd.f32 %v1164, %v1332
  %v1334 = vpop.f32.mrf.mxu0
  %v1335 = vadd.f32 %v1166, %v1334
  %1336 = vmatmul.bf16.gmra.mxu0 %v600
  %v1337 = vpop.f32.mrf.mxu0
  %v1338 = vadd.f32 %v1169, %v1337
  %v1339 = vpop.f32.mrf.mxu0
  %v1340 = vadd.f32 %v1171, %v1339
  %1341 = vmatmul.bf16.gmra.mxu0 %v603
  %v1342 = vpop.f32.mrf.mxu0
  %v1343 = vadd.f32 %v1174, %v1342
  %v1344 = vpop.f32.mrf.mxu0
  %v1345 = vadd.f32 %v1176, %v1344
  %1346 = vmatmul.bf16.gmra.mxu0 %v606
  %v1347 = vpop.f32.mrf.mxu0
  %v1348 = vadd.f32 %v1179, %v1347
  %v1349 = vpop.f32.mrf.mxu0
  %v1350 = vadd.f32 %v1181, %v1349
  %1351 = vmatmul.bf16.gmra.mxu0 %v609
  %v1352 = vpop.f32.mrf.mxu0
  %v1353 = vadd.f32 %v1184, %v1352
  %v1354 = vpop.f32.mrf.mxu0
  %v1355 = vadd.f32 %v1186, %v1354
  %1356 = vdwg.mxu0
  %v1357 = vmax.f32 %v1198, 0.0
  %v1358 = vmax.f32 %v1200, 0.0
  %v1359 = vmax.f32 %v1203, 0.0
  %v1360 = vmax.f32 %v1205, 0.0
  %v1361 = vmax.f32 %v1208, 0.0
  %v1362 = vmax.f32 %v1210, 0.0
  %v1363 = vmax.f32 %v1213, 0.0
  %v1364 = vmax.f32 %v1215, 0.0
  %v1365 = vmax.f32 %v1218, 0.0
  %v1366 = vmax.f32 %v1220, 0.0
  %v1367 = vmax.f32 %v1223, 0.0
  %v1368 = vmax.f32 %v1225, 0.0
  %v1369 = vmax.f32 %v1228, 0.0
  %v1370 = vmax.f32 %v1230, 0.0
  %v1371 = vmax.f32 %v1233, 0.0
  %v1372 = vmax.f32 %v1235, 0.0
  %v1373 = vmax.f32 %v1238, 0.0
  %v1374 = vmax.f32 %v1240, 0.0
  %v1375 = vmax.f32 %v1243, 0.0
  %v1376 = vmax.f32 %v1245, 0.0
  %v1377 = vmax.f32 %v1248, 0.0
  %v1378 = vmax.f32 %v1250, 0.0
  %v1379 = vmax.f32 %v1253, 0.0
  %v1380 = vmax.f32 %v1255, 0.0
  %v1381 = vmax.f32 %v1258, 0.0
  %v1382 = vmax.f32 %v1260, 0.0
  %v1383 = vmax.f32 %v1263, 0.0
  %v1384 = vmax.f32 %v1265, 0.0
  %v1385 = vmax.f32 %v1268, 0.0
  %v1386 = vmax.f32 %v1270, 0.0
  %v1387 = vmax.f32 %v1273, 0.0
  %v1388 = vmax.f32 %v1275, 0.0
  %v1389 = vmax.f32 %v1278, 0.0
  %v1390 = vmax.f32 %v1280, 0.0
  %v1391 = vmax.f32 %v1283, 0.0
  %v1392 = vmax.f32 %v1285, 0.0
  %v1393 = vmax.f32 %v1288, 0.0
  %v1394 = vmax.f32 %v1290, 0.0
  %v1395 = vmax.f32 %v1293, 0.0
  %v1396 = vmax.f32 %v1295, 0.0
  %v1397 = vmax.f32 %v1298, 0.0
  %v1398 = vmax.f32 %v1300, 0.0
  %v1399 = vmax.f32 %v1303, 0.0
  %v1400 = vmax.f32 %v1305, 0.0
  %v1401 = vmax.f32 %v1308, 0.0
  %v1402 = vmax.f32 %v1310, 0.0
  %v1403 = vmax.f32 %v1313, 0.0
  %v1404 = vmax.f32 %v1315, 0.0
  %v1405 = vmax.f32 %v1318, 0.0
  %v1406 = vmax.f32 %v1320, 0.0
  %v1407 = vmax.f32 %v1323, 0.0
  %v1408 = vmax.f32 %v1325, 0.0
  %v1409 = vmax.f32 %v1328, 0.0
  %v1410 = vmax.f32 %v1330, 0.0
  %v1411 = vmax.f32 %v1333, 0.0
  %v1412 = vmax.f32 %v1335, 0.0
  %v1413 = vmax.f32 %v1338, 0.0
  %v1414 = vmax.f32 %v1340, 0.0
  %v1415 = vmax.f32 %v1343, 0.0
  %v1416 = vmax.f32 %v1345, 0.0
  %v1417 = vmax.f32 %v1348, 0.0
  %v1418 = vmax.f32 %v1350, 0.0
  %v1419 = vmax.f32 %v1353, 0.0
  %v1420 = vmax.f32 %v1355, 0.0
  %v1421 = vpack.c.bf16 %v1357, %v1357
  %v1422 = vpack.c.bf16 %v1358, %v1358
  %v1423 = vpack.c.bf16 %v1359, %v1359
  %v1424 = vpack.c.bf16 %v1360, %v1360
  %v1425 = vpack.c.bf16 %v1361, %v1361
  %v1426 = vpack.c.bf16 %v1362, %v1362
  %v1427 = vpack.c.bf16 %v1363, %v1363
  %v1428 = vpack.c.bf16 %v1364, %v1364
  %v1429 = vpack.c.bf16 %v1365, %v1365
  %v1430 = vpack.c.bf16 %v1366, %v1366
  %v1431 = vpack.c.bf16 %v1367, %v1367
  %v1432 = vpack.c.bf16 %v1368, %v1368
  %v1433 = vpack.c.bf16 %v1369, %v1369
  %v1434 = vpack.c.bf16 %v1370, %v1370
  %v1435 = vpack.c.bf16 %v1371, %v1371
  %v1436 = vpack.c.bf16 %v1372, %v1372
  %v1437 = vpack.c.bf16 %v1373, %v1373
  %v1438 = vpack.c.bf16 %v1374, %v1374
  %v1439 = vpack.c.bf16 %v1375, %v1375
  %v1440 = vpack.c.bf16 %v1376, %v1376
  %v1441 = vpack.c.bf16 %v1377, %v1377
  %v1442 = vpack.c.bf16 %v1378, %v1378
  %v1443 = vpack.c.bf16 %v1379, %v1379
  %v1444 = vpack.c.bf16 %v1380, %v1380
  %v1445 = vpack.c.bf16 %v1381, %v1381
  %v1446 = vpack.c.bf16 %v1382, %v1382
  %v1447 = vpack.c.bf16 %v1383, %v1383
  %v1448 = vpack.c.bf16 %v1384, %v1384
  %v1449 = vpack.c.bf16 %v1385, %v1385
  %v1450 = vpack.c.bf16 %v1386, %v1386
  %v1451 = vpack.c.bf16 %v1387, %v1387
  %v1452 = vpack.c.bf16 %v1388, %v1388
  %v1453 = vpack.c.bf16 %v1389, %v1389
  %v1454 = vpack.c.bf16 %v1390, %v1390
  %v1455 = vpack.c.bf16 %v1391, %v1391
  %v1456 = vpack.c.bf16 %v1392, %v1392
  %v1457 = vpack.c.bf16 %v1393, %v1393
  %v1458 = vpack.c.bf16 %v1394, %v1394
  %v1459 = vpack.c.bf16 %v1395, %v1395
  %v1460 = vpack.c.bf16 %v1396, %v1396
  %v1461 = vpack.c.bf16 %v1397, %v1397
  %v1462 = vpack.c.bf16 %v1398, %v1398
  %v1463 = vpack.c.bf16 %v1399, %v1399
  %v1464 = vpack.c.bf16 %v1400, %v1400
  %v1465 = vpack.c.bf16 %v1401, %v1401
  %v1466 = vpack.c.bf16 %v1402, %v1402
  %v1467 = vpack.c.bf16 %v1403, %v1403
  %v1468 = vpack.c.bf16 %v1404, %v1404
  %v1469 = vpack.c.bf16 %v1405, %v1405
  %v1470 = vpack.c.bf16 %v1406, %v1406
  %v1471 = vpack.c.bf16 %v1407, %v1407
  %v1472 = vpack.c.bf16 %v1408, %v1408
  %v1473 = vpack.c.bf16 %v1409, %v1409
  %v1474 = vpack.c.bf16 %v1410, %v1410
  %v1475 = vpack.c.bf16 %v1411, %v1411
  %v1476 = vpack.c.bf16 %v1412, %v1412
  %v1477 = vpack.c.bf16 %v1413, %v1413
  %v1478 = vpack.c.bf16 %v1414, %v1414
  %v1479 = vpack.c.bf16 %v1415, %v1415
  %v1480 = vpack.c.bf16 %v1416, %v1416
  %v1481 = vpack.c.bf16 %v1417, %v1417
  %v1482 = vpack.c.bf16 %v1418, %v1418
  %v1483 = vpack.c.bf16 %v1419, %v1419
  %v1484 = vpack.c.bf16 %v1420, %v1420
  %1485 = vst [vmem:[%s3] sm:$0xf] %v1421
  %1486 = vst [vmem:[%s3 + $0x4] sm:$0xf] %v1422
  %1487 = vst [vmem:[%s3 + $0x8] sm:$0xf] %v1423
  %1488 = vst [vmem:[%s3 + $0xc] sm:$0xf] %v1424
  %1489 = vst [vmem:[%s3 + $0x10] sm:$0xf] %v1425
  %1490 = vst [vmem:[%s3 + $0x14] sm:$0xf] %v1426
  %1491 = vst [vmem:[%s3 + $0x18] sm:$0xf] %v1427
  %1492 = vst [vmem:[%s3 + $0x1c] sm:$0xf] %v1428
  %1493 = vst [vmem:[%s3 + $0x20] sm:$0xf] %v1429
  %1494 = vst [vmem:[%s3 + $0x24] sm:$0xf] %v1430
  %1495 = vst [vmem:[%s3 + $0x28] sm:$0xf] %v1431
  %1496 = vst [vmem:[%s3 + $0x2c] sm:$0xf] %v1432
  %1497 = vst [vmem:[%s3 + $0x30] sm:$0xf] %v1433
  %1498 = vst [vmem:[%s3 + $0x34] sm:$0xf] %v1434
  %1499 = vst [vmem:[%s3 + $0x38] sm:$0xf] %v1435
  %1500 = vst [vmem:[%s3 + $0x3c] sm:$0xf] %v1436
  %1501 = vst [vmem:[%s3 + $0x40] sm:$0xf] %v1437
  %1502 = vst [vmem:[%s3 + $0x44] sm:$0xf] %v1438
  %1503 = vst [vmem:[%s3 + $0x48] sm:$0xf] %v1439
  %1504 = vst [vmem:[%s3 + $0x4c] sm:$0xf] %v1440
  %1505 = vst [vmem:[%s3 + $0x50] sm:$0xf] %v1441
  %1506 = vst [vmem:[%s3 + $0x54] sm:$0xf] %v1442
  %1507 = vst [vmem:[%s3 + $0x58] sm:$0xf] %v1443
  %1508 = vst [vmem:[%s3 + $0x5c] sm:$0xf] %v1444
  %1509 = vst [vmem:[%s3 + $0x60] sm:$0xf] %v1445
  %1510 = vst [vmem:[%s3 + $0x64] sm:$0xf] %v1446
  %1511 = vst [vmem:[%s3 + $0x68] sm:$0xf] %v1447
  %1512 = vst [vmem:[%s3 + $0x6c] sm:$0xf] %v1448
  %1513 = vst [vmem:[%s3 + $0x70] sm:$0xf] %v1449
  %1514 = vst [vmem:[%s3 + $0x74] sm:$0xf] %v1450
  %1515 = vst [vmem:[%s3 + $0x78] sm:$0xf] %v1451
  %1516 = vst [vmem:[%s3 + $0x7c] sm:$0xf] %v1452
  %1517 = vst [vmem:[%s3 + $0x80] sm:$0xf] %v1453
  %1518 = vst [vmem:[%s3 + $0x84] sm:$0xf] %v1454
  %1519 = vst [vmem:[%s3 + $0x88] sm:$0xf] %v1455
  %1520 = vst [vmem:[%s3 + $0x8c] sm:$0xf] %v1456
  %1521 = vst [vmem:[%s3 + $0x90] sm:$0xf] %v1457
  %1522 = vst [vmem:[%s3 + $0x94] sm:$0xf] %v1458
  %1523 = vst [vmem:[%s3 + $0x98] sm:$0xf] %v1459
  %1524 = vst [vmem:[%s3 + $0x9c] sm:$0xf] %v1460
  %1525 = vst [vmem:[%s3 + $0xa0] sm:$0xf] %v1461
  %1526 = vst [vmem:[%s3 + $0xa4] sm:$0xf] %v1462
  %1527 = vst [vmem:[%s3 + $0xa8] sm:$0xf] %v1463
  %1528 = vst [vmem:[%s3 + $0xac] sm:$0xf] %v1464
  %1529 = vst [vmem:[%s3 + $0xb0] sm:$0xf] %v1465
  %1530 = vst [vmem:[%s3 + $0xb4] sm:$0xf] %v1466
  %1531 = vst [vmem:[%s3 + $0xb8] sm:$0xf] %v1467
  %1532 = vst [vmem:[%s3 + $0xbc] sm:$0xf] %v1468
  %1533 = vst [vmem:[%s3 + $0xc0] sm:$0xf] %v1469
  %1534 = vst [vmem:[%s3 + $0xc4] sm:$0xf] %v1470
  %1535 = vst [vmem:[%s3 + $0xc8] sm:$0xf] %v1471
  %1536 = vst [vmem:[%s3 + $0xcc] sm:$0xf] %v1472
  %1537 = vst [vmem:[%s3 + $0xd0] sm:$0xf] %v1473
  %1538 = vst [vmem:[%s3 + $0xd4] sm:$0xf] %v1474
  %1539 = vst [vmem:[%s3 + $0xd8] sm:$0xf] %v1475
  %1540 = vst [vmem:[%s3 + $0xdc] sm:$0xf] %v1476
  %1541 = vst [vmem:[%s3 + $0xe0] sm:$0xf] %v1477
  %1542 = vst [vmem:[%s3 + $0xe4] sm:$0xf] %v1478
  %1543 = vst [vmem:[%s3 + $0xe8] sm:$0xf] %v1479
  %1544 = vst [vmem:[%s3 + $0xec] sm:$0xf] %v1480
  %1545 = vst [vmem:[%s3 + $0xf0] sm:$0xf] %v1481
  %1546 = vst [vmem:[%s3 + $0xf4] sm:$0xf] %v1482
  %1547 = vst [vmem:[%s3 + $0xf8] sm:$0xf] %v1483
  %1548 = vst [vmem:[%s3 + $0xfc] sm:$0xf] %v1484
  // Predicated region
  $region14: #{_lambda_.11} parent=0 // pred_check
    _
  $region15: #{_lambda_.11} parent=0 // pred_check_branch
    %1550 = sbr.rel (0) target = $region17
  $region16: #{_lambda_.11} parent=0 // pred_region
    _
  $region17: #{_lambda_.11} parent=0 // pred_fallthru
    _
  // Predicated region
  $region18: #{_lambda_.11} parent=0 // pred_check
    _
  $region19: #{_lambda_.11} parent=0 // pred_check_branch
    %1552 = sbr.rel (0) target = $region21
  $region20: #{_lambda_.11} parent=0 // pred_region
    _
  $region21: #{_lambda_.11} parent=0 // pred_fallthru
    _

// kernel: _lambda_.12
$region0: #{_lambda_.12}
  #allocation0 [shape = 'u32[]', space=smem, size = 0x4, offset = 0x4, fixed_abs, tag = 'smem constant byte address 0x4 - core index']
  #allocation1 [shape = 'u32[72,128]{1,0:T(1,128)}', space=vmem, size = 0x9000, scoped, tag = 'internal scratch']
  %s0 = inlined_call_operand.vmem [shape: bf16[128,640], index: 0, kind: input, shape index: {}]
  %s1 = inlined_call_operand.vmem [shape: bf16[640,128], index: 1, kind: input, shape index: {}]
  %s2 = inlined_call_operand.vmem [shape: f32[1,128], index: 2, kind: input, shape index: {}]
  %s3 = inlined_call_operand.vmem [shape: bf16[128,128], index: 3, kind: output, shape index: {}]
  %s4 = sld [smem:[#allocation0]]
  $region22: #{_lambda_.12} parent=0
    _
  %s6 = ssub.s32 1, %s4
  %s7 = scalar_select 0, %s6, %s4
  // Predicated region
  $region2: #{_lambda_.12} parent=0 // pred_check
    _
  $region3: #{_lambda_.12} parent=0 // pred_check_branch
    %9 = sbr.rel (0) target = $region5
  $region4: #{_lambda_.12} parent=0 // pred_region
    _
  $region5: #{_lambda_.12} parent=0 // pred_fallthru
    _
  // Predicated region
  $region6: #{_lambda_.12} parent=0 // pred_check
    _
  $region7: #{_lambda_.12} parent=0 // pred_check_branch
    %11 = sbr.rel (0) target = $region9
  $region8: #{_lambda_.12} parent=0 // pred_region
    _
  $region9: #{_lambda_.12} parent=0 // pred_fallthru
    _
  // Predicated region
  $region10: #{_lambda_.12} parent=0 // pred_check
    _
  $region11: #{_lambda_.12} parent=0 // pred_check_branch
    %13 = sbr.rel (0) target = $region13
  $region12: #{_lambda_.12} parent=0 // pred_region
    _
  $region13: #{_lambda_.12} parent=0 // pred_fallthru
    _
  %v14 = vld [vmem:[%s0] sm:$0xff]
  %v15 = vld [vmem:[%s0 + $0x8] sm:$0xff]
  %v16 = vld [vmem:[%s0 + $0x10] sm:$0xf]
  %v17 = vld [vmem:[%s0 + $0x14] sm:$0xff]
  %v18 = vld [vmem:[%s0 + $0x1c] sm:$0xff]
  %v19 = vld [vmem:[%s0 + $0x24] sm:$0xf]
  %v20 = vld [vmem:[%s0 + $0x28] sm:$0xff]
  %v21 = vld [vmem:[%s0 + $0x30] sm:$0xff]
  %v22 = vld [vmem:[%s0 + $0x38] sm:$0xf]
  %v23 = vld [vmem:[%s0 + $0x3c] sm:$0xff]
  %v24 = vld [vmem:[%s0 + $0x44] sm:$0xff]
  %v25 = vld [vmem:[%s0 + $0x4c] sm:$0xf]
  %v26 = vld [vmem:[%s0 + $0x50] sm:$0xff]
  %v27 = vld [vmem:[%s0 + $0x58] sm:$0xff]
  %v28 = vld [vmem:[%s0 + $0x60] sm:$0xf]
  %v29 = vld [vmem:[%s0 + $0x64] sm:$0xff]
  %v30 = vld [vmem:[%s0 + $0x6c] sm:$0xff]
  %v31 = vld [vmem:[%s0 + $0x74] sm:$0xf]
  %v32 = vld [vmem:[%s0 + $0x78] sm:$0xff]
  %v33 = vld [vmem:[%s0 + $0x80] sm:$0xff]
  %v34 = vld [vmem:[%s0 + $0x88] sm:$0xf]
  %v35 = vld [vmem:[%s0 + $0x8c] sm:$0xff]
  %v36 = vld [vmem:[%s0 + $0x94] sm:$0xff]
  %v37 = vld [vmem:[%s0 + $0x9c] sm:$0xf]
  %v38 = vld [vmem:[%s0 + $0xa0] sm:$0xff]
  %v39 = vld [vmem:[%s0 + $0xa8] sm:$0xff]
  %v40 = vld [vmem:[%s0 + $0xb0] sm:$0xf]
  %v41 = vld [vmem:[%s0 + $0xb4] sm:$0xff]
  %v42 = vld [vmem:[%s0 + $0xbc] sm:$0xff]
  %v43 = vld [vmem:[%s0 + $0xc4] sm:$0xf]
  %v44 = vld [vmem:[%s0 + $0xc8] sm:$0xff]
  %v45 = vld [vmem:[%s0 + $0xd0] sm:$0xff]
  %v46 = vld [vmem:[%s0 + $0xd8] sm:$0xf]
  %v47 = vld [vmem:[%s0 + $0xdc] sm:$0xff]
  %v48 = vld [vmem:[%s0 + $0xe4] sm:$0xff]
  %v49 = vld [vmem:[%s0 + $0xec] sm:$0xf]
  %v50 = vld [vmem:[%s0 + $0xf0] sm:$0xff]
  %v51 = vld [vmem:[%s0 + $0xf8] sm:$0xff]
  %v52 = vld [vmem:[%s0 + $0x100] sm:$0xf]
  %v53 = vld [vmem:[%s0 + $0x104] sm:$0xff]
  %v54 = vld [vmem:[%s0 + $0x10c] sm:$0xff]
  %v55 = vld [vmem:[%s0 + $0x114] sm:$0xf]
  %v56 = vld [vmem:[%s0 + $0x118] sm:$0xff]
  %v57 = vld [vmem:[%s0 + $0x120] sm:$0xff]
  %v58 = vld [vmem:[%s0 + $0x128] sm:$0xf]
  %v59 = vld [vmem:[%s0 + $0x12c] sm:$0xff]
  %v60 = vld [vmem:[%s0 + $0x134] sm:$0xff]
  %v61 = vld [vmem:[%s0 + $0x13c] sm:$0xf]
  %v62 = vld [vmem:[%s1] sm:$0xf]
  %v63 = vld [vmem:[%s1 + $0x4] sm:$0xf]
  %v64 = vld [vmem:[%s1 + $0x8] sm:$0xf]
  %v65 = vld [vmem:[%s1 + $0xc] sm:$0xf]
  %v66 = vld [vmem:[%s1 + $0x10] sm:$0xf]
  %v67 = vld [vmem:[%s1 + $0x14] sm:$0xf]
  %v68 = vld [vmem:[%s1 + $0x18] sm:$0xf]
  %v69 = vld [vmem:[%s1 + $0x1c] sm:$0xf]
  %v70 = vld [vmem:[%s1 + $0x20] sm:$0xf]
  %v71 = vld [vmem:[%s1 + $0x24] sm:$0xf]
  %v72 = vld [vmem:[%s1 + $0x28] sm:$0xf]
  %v73 = vld [vmem:[%s1 + $0x2c] sm:$0xf]
  %v74 = vld [vmem:[%s1 + $0x30] sm:$0xf]
  %v75 = vld [vmem:[%s1 + $0x34] sm:$0xf]
  %v76 = vld [vmem:[%s1 + $0x38] sm:$0xf]
  %v77 = vld [vmem:[%s1 + $0x3c] sm:$0xf]
  %v78 = vld [vmem:[%s1 + $0x40] sm:$0xf]
  %v79 = vld [vmem:[%s1 + $0x44] sm:$0xf]
  %v80 = vld [vmem:[%s1 + $0x48] sm:$0xf]
  %v81 = vld [vmem:[%s1 + $0x4c] sm:$0xf]
  %v82 = vld [vmem:[%s1 + $0x50] sm:$0xf]
  %v83 = vld [vmem:[%s1 + $0x54] sm:$0xf]
  %v84 = vld [vmem:[%s1 + $0x58] sm:$0xf]
  %v85 = vld [vmem:[%s1 + $0x5c] sm:$0xf]
  %v86 = vld [vmem:[%s1 + $0x60] sm:$0xf]
  %v87 = vld [vmem:[%s1 + $0x64] sm:$0xf]
  %v88 = vld [vmem:[%s1 + $0x68] sm:$0xf]
  %v89 = vld [vmem:[%s1 + $0x6c] sm:$0xf]
  %v90 = vld [vmem:[%s1 + $0x70] sm:$0xf]
  %v91 = vld [vmem:[%s1 + $0x74] sm:$0xf]
  %v92 = vld [vmem:[%s1 + $0x78] sm:$0xf]
  %v93 = vld [vmem:[%s1 + $0x7c] sm:$0xf]
  %v94 = vld [vmem:[%s1 + $0x80] sm:$0xf]
  %v95 = vld [vmem:[%s1 + $0x84] sm:$0xf]
  %v96 = vld [vmem:[%s1 + $0x88] sm:$0xf]
  %v97 = vld [vmem:[%s1 + $0x8c] sm:$0xf]
  %v98 = vld [vmem:[%s1 + $0x90] sm:$0xf]
  %v99 = vld [vmem:[%s1 + $0x94] sm:$0xf]
  %v100 = vld [vmem:[%s1 + $0x98] sm:$0xf]
  %v101 = vld [vmem:[%s1 + $0x9c] sm:$0xf]
  %v102 = vld [vmem:[%s1 + $0xa0] sm:$0xf]
  %v103 = vld [vmem:[%s1 + $0xa4] sm:$0xf]
  %v104 = vld [vmem:[%s1 + $0xa8] sm:$0xf]
  %v105 = vld [vmem:[%s1 + $0xac] sm:$0xf]
  %v106 = vld [vmem:[%s1 + $0xb0] sm:$0xf]
  %v107 = vld [vmem:[%s1 + $0xb4] sm:$0xf]
  %v108 = vld [vmem:[%s1 + $0xb8] sm:$0xf]
  %v109 = vld [vmem:[%s1 + $0xbc] sm:$0xf]
  %v110 = vld [vmem:[%s1 + $0xc0] sm:$0xf]
  %v111 = vld [vmem:[%s1 + $0xc4] sm:$0xf]
  %v112 = vld [vmem:[%s1 + $0xc8] sm:$0xf]
  %v113 = vld [vmem:[%s1 + $0xcc] sm:$0xf]
  %v114 = vld [vmem:[%s1 + $0xd0] sm:$0xf]
  %v115 = vld [vmem:[%s1 + $0xd4] sm:$0xf]
  %v116 = vld [vmem:[%s1 + $0xd8] sm:$0xf]
  %v117 = vld [vmem:[%s1 + $0xdc] sm:$0xf]
  %v118 = vld [vmem:[%s1 + $0xe0] sm:$0xf]
  %v119 = vld [vmem:[%s1 + $0xe4] sm:$0xf]
  %v120 = vld [vmem:[%s1 + $0xe8] sm:$0xf]
  %v121 = vld [vmem:[%s1 + $0xec] sm:$0xf]
  %v122 = vld [vmem:[%s1 + $0xf0] sm:$0xf]
  %v123 = vld [vmem:[%s1 + $0xf4] sm:$0xf]
  %v124 = vld [vmem:[%s1 + $0xf8] sm:$0xf]
  %v125 = vld [vmem:[%s1 + $0xfc] sm:$0xf]
  %v126 = vld [vmem:[%s1 + $0x100] sm:$0xf]
  %v127 = vld [vmem:[%s1 + $0x104] sm:$0xf]
  %v128 = vld [vmem:[%s1 + $0x108] sm:$0xf]
  %v129 = vld [vmem:[%s1 + $0x10c] sm:$0xf]
  %v130 = vld [vmem:[%s1 + $0x110] sm:$0xf]
  %v131 = vld [vmem:[%s1 + $0x114] sm:$0xf]
  %v132 = vld [vmem:[%s1 + $0x118] sm:$0xf]
  %v133 = vld [vmem:[%s1 + $0x11c] sm:$0xf]
  %v134 = vld [vmem:[%s1 + $0x120] sm:$0xf]
  %v135 = vld [vmem:[%s1 + $0x124] sm:$0xf]
  %v136 = vld [vmem:[%s1 + $0x128] sm:$0xf]
  %v137 = vld [vmem:[%s1 + $0x12c] sm:$0xf]
  %v138 = vld [vmem:[%s1 + $0x130] sm:$0xf]
  %v139 = vld [vmem:[%s1 + $0x134] sm:$0xf]
  %v140 = vld [vmem:[%s1 + $0x138] sm:$0xf]
  %v141 = vld [vmem:[%s1 + $0x13c] sm:$0xf]
  %v142 = vld [vmem:[%s2] sm:$0x1]
  %v144 = vperm.slane %v142, 0
  %v194 = vunpack.c.l.b16 %v14
  %v195 = vunpack.c.h.b16 %v14
  %v196 = vunpack.c.l.b16 %v15
  %v197 = vunpack.c.h.b16 %v15
  %v198 = vunpack.c.l.b16 %v16
  %v199 = vunpack.c.l.b16 %v17
  %v200 = vunpack.c.h.b16 %v17
  %v201 = vunpack.c.l.b16 %v18
  %v202 = vunpack.c.h.b16 %v18
  %v203 = vunpack.c.l.b16 %v19
  %v204 = vunpack.c.l.b16 %v20
  %v205 = vunpack.c.h.b16 %v20
  %v206 = vunpack.c.l.b16 %v21
  %v207 = vunpack.c.h.b16 %v21
  %v208 = vunpack.c.l.b16 %v22
  %v209 = vunpack.c.l.b16 %v23
  %v210 = vunpack.c.h.b16 %v23
  %v211 = vunpack.c.l.b16 %v24
  %v212 = vunpack.c.h.b16 %v24
  %v213 = vunpack.c.l.b16 %v25
  %v214 = vunpack.c.l.b16 %v26
  %v215 = vunpack.c.h.b16 %v26
  %v216 = vunpack.c.l.b16 %v27
  %v217 = vunpack.c.h.b16 %v27
  %v218 = vunpack.c.l.b16 %v28
  %v219 = vunpack.c.l.b16 %v29
  %v220 = vunpack.c.h.b16 %v29
  %v221 = vunpack.c.l.b16 %v30
  %v222 = vunpack.c.h.b16 %v30
  %v223 = vunpack.c.l.b16 %v31
  %v224 = vunpack.c.l.b16 %v32
  %v225 = vunpack.c.h.b16 %v32
  %v226 = vunpack.c.l.b16 %v33
  %v227 = vunpack.c.h.b16 %v33
  %v228 = vunpack.c.l.b16 %v34
  %v229 = vunpack.c.l.b16 %v35
  %v230 = vunpack.c.h.b16 %v35
  %v231 = vunpack.c.l.b16 %v36
  %v232 = vunpack.c.h.b16 %v36
  %v233 = vunpack.c.l.b16 %v37
  %v234 = vunpack.c.l.b16 %v38
  %v235 = vunpack.c.h.b16 %v38
  %v236 = vunpack.c.l.b16 %v39
  %v237 = vunpack.c.h.b16 %v39
  %v238 = vunpack.c.l.b16 %v40
  %v239 = vunpack.c.l.b16 %v41
  %v240 = vunpack.c.h.b16 %v41
  %v241 = vunpack.c.l.b16 %v42
  %v242 = vunpack.c.h.b16 %v42
  %v243 = vunpack.c.l.b16 %v43
  %v244 = vunpack.c.l.b16 %v44
  %v245 = vunpack.c.h.b16 %v44
  %v246 = vunpack.c.l.b16 %v45
  %v247 = vunpack.c.h.b16 %v45
  %v248 = vunpack.c.l.b16 %v46
  %v249 = vunpack.c.l.b16 %v47
  %v250 = vunpack.c.h.b16 %v47
  %v251 = vunpack.c.l.b16 %v48
  %v252 = vunpack.c.h.b16 %v48
  %v253 = vunpack.c.l.b16 %v49
  %v254 = vunpack.c.l.b16 %v50
  %v255 = vunpack.c.h.b16 %v50
  %v256 = vunpack.c.l.b16 %v51
  %v257 = vunpack.c.h.b16 %v51
  %v258 = vunpack.c.l.b16 %v52
  %v259 = vunpack.c.l.b16 %v53
  %v260 = vunpack.c.h.b16 %v53
  %v261 = vunpack.c.l.b16 %v54
  %v262 = vunpack.c.h.b16 %v54
  %v263 = vunpack.c.l.b16 %v55
  %v264 = vunpack.c.l.b16 %v56
  %v265 = vunpack.c.h.b16 %v56
  %v266 = vunpack.c.l.b16 %v57
  %v267 = vunpack.c.h.b16 %v57
  %v268 = vunpack.c.l.b16 %v58
  %v269 = vunpack.c.l.b16 %v59
  %v270 = vunpack.c.h.b16 %v59
  %v271 = vunpack.c.l.b16 %v60
  %v272 = vunpack.c.h.b16 %v60
  %v273 = vunpack.c.l.b16 %v61
  %v274 = vpack.c.b16 %v199, %v194
  %v275 = vpack.c.b16 %v200, %v195
  %v276 = vpack.c.b16 %v201, %v196
  %v277 = vpack.c.b16 %v202, %v197
  %v278 = vpack.c.b16 %v203, %v198
  %v279 = vpack.c.b16 %v209, %v204
  %v280 = vpack.c.b16 %v210, %v205
  %v281 = vpack.c.b16 %v211, %v206
  %v282 = vpack.c.b16 %v212, %v207
  %v283 = vpack.c.b16 %v213, %v208
  %v284 = vpack.c.b16 %v219, %v214
  %v285 = vpack.c.b16 %v220, %v215
  %v286 = vpack.c.b16 %v221, %v216
  %v287 = vpack.c.b16 %v222, %v217
  %v288 = vpack.c.b16 %v223, %v218
  %v289 = vpack.c.b16 %v229, %v224
  %v290 = vpack.c.b16 %v230, %v225
  %v291 = vpack.c.b16 %v231, %v226
  %v292 = vpack.c.b16 %v232, %v227
  %v293 = vpack.c.b16 %v233, %v228
  %v294 = vpack.c.b16 %v239, %v234
  %v295 = vpack.c.b16 %v240, %v235
  %v296 = vpack.c.b16 %v241, %v236
  %v297 = vpack.c.b16 %v242, %v237
  %v298 = vpack.c.b16 %v243, %v238
  %v299 = vpack.c.b16 %v249, %v244
  %v300 = vpack.c.b16 %v250, %v245
  %v301 = vpack.c.b16 %v251, %v246
  %v302 = vpack.c.b16 %v252, %v247
  %v303 = vpack.c.b16 %v253, %v248
  %v304 = vpack.c.b16 %v259, %v254
  %v305 = vpack.c.b16 %v260, %v255
  %v306 = vpack.c.b16 %v261, %v256
  %v307 = vpack.c.b16 %v262, %v257
  %v308 = vpack.c.b16 %v263, %v258
  %v309 = vpack.c.b16 %v269, %v264
  %v310 = vpack.c.b16 %v270, %v265
  %v311 = vpack.c.b16 %v271, %v266
  %v312 = vpack.c.b16 %v272, %v267
  %v313 = vpack.c.b16 %v273, %v268
  %v434 = vunpack.c.l.b16 %v62
  %v435 = vunpack.c.l.b16 %v63
  %v436 = vunpack.c.l.b16 %v64
  %v437 = vunpack.c.l.b16 %v65
  %v438 = vunpack.c.l.b16 %v66
  %v439 = vunpack.c.l.b16 %v67
  %v440 = vunpack.c.l.b16 %v68
  %v441 = vunpack.c.l.b16 %v69
  %v442 = vunpack.c.l.b16 %v70
  %v443 = vunpack.c.l.b16 %v71
  %v444 = vunpack.c.l.b16 %v72
  %v445 = vunpack.c.l.b16 %v73
  %v446 = vunpack.c.l.b16 %v74
  %v447 = vunpack.c.l.b16 %v75
  %v448 = vunpack.c.l.b16 %v76
  %v449 = vunpack.c.l.b16 %v77
  %v450 = vunpack.c.l.b16 %v78
  %v451 = vunpack.c.l.b16 %v79
  %v452 = vunpack.c.l.b16 %v80
  %v453 = vunpack.c.l.b16 %v81
  %v454 = vunpack.c.l.b16 %v82
  %v455 = vunpack.c.l.b16 %v83
  %v456 = vunpack.c.l.b16 %v84
  %v457 = vunpack.c.l.b16 %v85
  %v458 = vunpack.c.l.b16 %v86
  %v459 = vunpack.c.l.b16 %v87
  %v460 = vunpack.c.l.b16 %v88
  %v461 = vunpack.c.l.b16 %v89
  %v462 = vunpack.c.l.b16 %v90
  %v463 = vunpack.c.l.b16 %v91
  %v464 = vunpack.c.l.b16 %v92
  %v465 = vunpack.c.l.b16 %v93
  %v466 = vunpack.c.l.b16 %v94
  %v467 = vunpack.c.l.b16 %v95
  %v468 = vunpack.c.l.b16 %v96
  %v469 = vunpack.c.l.b16 %v97
  %v470 = vunpack.c.l.b16 %v98
  %v471 = vunpack.c.l.b16 %v99
  %v472 = vunpack.c.l.b16 %v100
  %v473 = vunpack.c.l.b16 %v101
  %v474 = vunpack.c.l.b16 %v102
  %v475 = vunpack.c.l.b16 %v103
  %v476 = vunpack.c.l.b16 %v104
  %v477 = vunpack.c.l.b16 %v105
  %v478 = vunpack.c.l.b16 %v106
  %v479 = vunpack.c.l.b16 %v107
  %v480 = vunpack.c.l.b16 %v108
  %v481 = vunpack.c.l.b16 %v109
  %v482 = vunpack.c.l.b16 %v110
  %v483 = vunpack.c.l.b16 %v111
  %v484 = vunpack.c.l.b16 %v112
  %v485 = vunpack.c.l.b16 %v113
  %v486 = vunpack.c.l.b16 %v114
  %v487 = vunpack.c.l.b16 %v115
  %v488 = vunpack.c.l.b16 %v116
  %v489 = vunpack.c.l.b16 %v117
  %v490 = vunpack.c.l.b16 %v118
  %v491 = vunpack.c.l.b16 %v119
  %v492 = vunpack.c.l.b16 %v120
  %v493 = vunpack.c.l.b16 %v121
  %v494 = vunpack.c.l.b16 %v122
  %v495 = vunpack.c.l.b16 %v123
  %v496 = vunpack.c.l.b16 %v124
  %v497 = vunpack.c.l.b16 %v125
  %v498 = vunpack.c.l.b16 %v126
  %v499 = vunpack.c.l.b16 %v127
  %v500 = vunpack.c.l.b16 %v128
  %v501 = vunpack.c.l.b16 %v129
  %v502 = vunpack.c.l.b16 %v130
  %v503 = vunpack.c.l.b16 %v131
  %v504 = vunpack.c.l.b16 %v132
  %v505 = vunpack.c.l.b16 %v133
  %v506 = vunpack.c.l.b16 %v134
  %v507 = vunpack.c.l.b16 %v135
  %v508 = vunpack.c.l.b16 %v136
  %v509 = vunpack.c.l.b16 %v137
  %v510 = vunpack.c.l.b16 %v138
  %v511 = vunpack.c.l.b16 %v139
  %v512 = vunpack.c.l.b16 %v140
  %v513 = vunpack.c.l.b16 %v141
  %v514 = vpack.c.b16 %v435, %v434
  %v515 = vpack.c.b16 %v437, %v436
  %v516 = vpack.c.b16 %v439, %v438
  %v517 = vpack.c.b16 %v441, %v440
  %v518 = vpack.c.b16 %v443, %v442
  %v519 = vpack.c.b16 %v445, %v444
  %v520 = vpack.c.b16 %v447, %v446
  %v521 = vpack.c.b16 %v449, %v448
  %v522 = vpack.c.b16 %v451, %v450
  %v523 = vpack.c.b16 %v453, %v452
  %v524 = vpack.c.b16 %v455, %v454
  %v525 = vpack.c.b16 %v457, %v456
  %v526 = vpack.c.b16 %v459, %v458
  %v527 = vpack.c.b16 %v461, %v460
  %v528 = vpack.c.b16 %v463, %v462
  %v529 = vpack.c.b16 %v465, %v464
  %v530 = vpack.c.b16 %v467, %v466
  %v531 = vpack.c.b16 %v469, %v468
  %v532 = vpack.c.b16 %v471, %v470
  %v533 = vpack.c.b16 %v473, %v472
  %v534 = vpack.c.b16 %v475, %v474
  %v535 = vpack.c.b16 %v477, %v476
  %v536 = vpack.c.b16 %v479, %v478
  %v537 = vpack.c.b16 %v481, %v480
  %v538 = vpack.c.b16 %v483, %v482
  %v539 = vpack.c.b16 %v485, %v484
  %v540 = vpack.c.b16 %v487, %v486
  %v541 = vpack.c.b16 %v489, %v488
  %v542 = vpack.c.b16 %v491, %v490
  %v543 = vpack.c.b16 %v493, %v492
  %v544 = vpack.c.b16 %v495, %v494
  %v545 = vpack.c.b16 %v497, %v496
  %v546 = vpack.c.b16 %v499, %v498
  %v547 = vpack.c.b16 %v501, %v500
  %v548 = vpack.c.b16 %v503, %v502
  %v549 = vpack.c.b16 %v505, %v504
  %v550 = vpack.c.b16 %v507, %v506
  %v551 = vpack.c.b16 %v509, %v508
  %v552 = vpack.c.b16 %v511, %v510
  %v553 = vpack.c.b16 %v513, %v512
  %594 = vmatpush.bf16.msra.mxu0 %v521
  %595 = vmatpush.bf16.msra.mxu0 %v520
  %596 = vmatpush.bf16.msra.mxu0 %v519
  %597 = vmatpush.bf16.msra.mxu0 %v518
  %598 = vmatpush.bf16.msra.mxu0 %v517
  %599 = vmatpush.bf16.msra.mxu0 %v516
  %600 = vmatpush.bf16.msra.mxu0 %v515
  %601 = vmatpush.bf16.msra.mxu0 %v514
  %602 = vmatmul.bf16.gmra.mxu0 %v274
  %v603 = vpop.f32.mrf.mxu0
  %v604 = vadd.f32 %v144, %v603
  %v605 = vpop.f32.mrf.mxu0
  %v606 = vadd.f32 %v144, %v605
  %607 = vmatmul.bf16.gmra.mxu0 %v279
  %v608 = vpop.f32.mrf.mxu0
  %v609 = vadd.f32 %v144, %v608
  %v610 = vpop.f32.mrf.mxu0
  %v611 = vadd.f32 %v144, %v610
  %612 = vmatmul.bf16.gmra.mxu0 %v284
  %v613 = vpop.f32.mrf.mxu0
  %v614 = vadd.f32 %v144, %v613
  %v615 = vpop.f32.mrf.mxu0
  %v616 = vadd.f32 %v144, %v615
  %617 = vmatmul.bf16.gmra.mxu0 %v289
  %v618 = vpop.f32.mrf.mxu0
  %v619 = vadd.f32 %v144, %v618
  %v620 = vpop.f32.mrf.mxu0
  %v621 = vadd.f32 %v144, %v620
  %622 = vmatmul.bf16.gmra.mxu0 %v294
  %v623 = vpop.f32.mrf.mxu0
  %v624 = vadd.f32 %v144, %v623
  %v625 = vpop.f32.mrf.mxu0
  %v626 = vadd.f32 %v144, %v625
  %627 = vmatmul.bf16.gmra.mxu0 %v299
  %v628 = vpop.f32.mrf.mxu0
  %v629 = vadd.f32 %v144, %v628
  %v630 = vpop.f32.mrf.mxu0
  %v631 = vadd.f32 %v144, %v630
  %632 = vmatmul.bf16.gmra.mxu0 %v304
  %v633 = vpop.f32.mrf.mxu0
  %v634 = vadd.f32 %v144, %v633
  %v635 = vpop.f32.mrf.mxu0
  %v636 = vadd.f32 %v144, %v635
  %637 = vmatmul.bf16.gmra.mxu0 %v309
  %v638 = vpop.f32.mrf.mxu0
  %v639 = vadd.f32 %v144, %v638
  %v640 = vpop.f32.mrf.mxu0
  %v641 = vadd.f32 %v144, %v640
  %642 = vdwg.mxu0
  %643 = vmatpush.bf16.msra.mxu0 %v529
  %644 = vmatpush.bf16.msra.mxu0 %v528
  %645 = vmatpush.bf16.msra.mxu0 %v527
  %646 = vmatpush.bf16.msra.mxu0 %v526
  %647 = vmatpush.bf16.msra.mxu0 %v525
  %648 = vmatpush.bf16.msra.mxu0 %v524
  %649 = vmatpush.bf16.msra.mxu0 %v523
  %650 = vmatpush.bf16.msra.mxu0 %v522
  %651 = vmatmul.bf16.gmra.mxu0 %v275
  %v652 = vpop.f32.mrf.mxu0
  %v653 = vadd.f32 %v604, %v652
  %v654 = vpop.f32.mrf.mxu0
  %v655 = vadd.f32 %v606, %v654
  %656 = vmatmul.bf16.gmra.mxu0 %v280
  %v657 = vpop.f32.mrf.mxu0
  %v658 = vadd.f32 %v609, %v657
  %v659 = vpop.f32.mrf.mxu0
  %v660 = vadd.f32 %v611, %v659
  %661 = vmatmul.bf16.gmra.mxu0 %v285
  %v662 = vpop.f32.mrf.mxu0
  %v663 = vadd.f32 %v614, %v662
  %v664 = vpop.f32.mrf.mxu0
  %v665 = vadd.f32 %v616, %v664
  %666 = vmatmul.bf16.gmra.mxu0 %v290
  %v667 = vpop.f32.mrf.mxu0
  %v668 = vadd.f32 %v619, %v667
  %v669 = vpop.f32.mrf.mxu0
  %v670 = vadd.f32 %v621, %v669
  %671 = vmatmul.bf16.gmra.mxu0 %v295
  %v672 = vpop.f32.mrf.mxu0
  %v673 = vadd.f32 %v624, %v672
  %v674 = vpop.f32.mrf.mxu0
  %v675 = vadd.f32 %v626, %v674
  %676 = vmatmul.bf16.gmra.mxu0 %v300
  %v677 = vpop.f32.mrf.mxu0
  %v678 = vadd.f32 %v629, %v677
  %v679 = vpop.f32.mrf.mxu0
  %v680 = vadd.f32 %v631, %v679
  %681 = vmatmul.bf16.gmra.mxu0 %v305
  %v682 = vpop.f32.mrf.mxu0
  %v683 = vadd.f32 %v634, %v682
  %v684 = vpop.f32.mrf.mxu0
  %v685 = vadd.f32 %v636, %v684
  %686 = vmatmul.bf16.gmra.mxu0 %v310
  %v687 = vpop.f32.mrf.mxu0
  %v688 = vadd.f32 %v639, %v687
  %v689 = vpop.f32.mrf.mxu0
  %v690 = vadd.f32 %v641, %v689
  %691 = vdwg.mxu0
  %692 = vmatpush.bf16.msra.mxu0 %v537
  %693 = vmatpush.bf16.msra.mxu0 %v536
  %694 = vmatpush.bf16.msra.mxu0 %v535
  %695 = vmatpush.bf16.msra.mxu0 %v534
  %696 = vmatpush.bf16.msra.mxu0 %v533
  %697 = vmatpush.bf16.msra.mxu0 %v532
  %698 = vmatpush.bf16.msra.mxu0 %v531
  %699 = vmatpush.bf16.msra.mxu0 %v530
  %700 = vmatmul.bf16.gmra.mxu0 %v276
  %v701 = vpop.f32.mrf.mxu0
  %v702 = vadd.f32 %v653, %v701
  %v703 = vpop.f32.mrf.mxu0
  %v704 = vadd.f32 %v655, %v703
  %705 = vmatmul.bf16.gmra.mxu0 %v281
  %v706 = vpop.f32.mrf.mxu0
  %v707 = vadd.f32 %v658, %v706
  %v708 = vpop.f32.mrf.mxu0
  %v709 = vadd.f32 %v660, %v708
  %710 = vmatmul.bf16.gmra.mxu0 %v286
  %v711 = vpop.f32.mrf.mxu0
  %v712 = vadd.f32 %v663, %v711
  %v713 = vpop.f32.mrf.mxu0
  %v714 = vadd.f32 %v665, %v713
  %715 = vmatmul.bf16.gmra.mxu0 %v291
  %v716 = vpop.f32.mrf.mxu0
  %v717 = vadd.f32 %v668, %v716
  %v718 = vpop.f32.mrf.mxu0
  %v719 = vadd.f32 %v670, %v718
  %720 = vmatmul.bf16.gmra.mxu0 %v296
  %v721 = vpop.f32.mrf.mxu0
  %v722 = vadd.f32 %v673, %v721
  %v723 = vpop.f32.mrf.mxu0
  %v724 = vadd.f32 %v675, %v723
  %725 = vmatmul.bf16.gmra.mxu0 %v301
  %v726 = vpop.f32.mrf.mxu0
  %v727 = vadd.f32 %v678, %v726
  %v728 = vpop.f32.mrf.mxu0
  %v729 = vadd.f32 %v680, %v728
  %730 = vmatmul.bf16.gmra.mxu0 %v306
  %v731 = vpop.f32.mrf.mxu0
  %v732 = vadd.f32 %v683, %v731
  %v733 = vpop.f32.mrf.mxu0
  %v734 = vadd.f32 %v685, %v733
  %735 = vmatmul.bf16.gmra.mxu0 %v311
  %v736 = vpop.f32.mrf.mxu0
  %v737 = vadd.f32 %v688, %v736
  %v738 = vpop.f32.mrf.mxu0
  %v739 = vadd.f32 %v690, %v738
  %740 = vdwg.mxu0
  %741 = vmatpush.bf16.msra.mxu0 %v545
  %742 = vmatpush.bf16.msra.mxu0 %v544
  %743 = vmatpush.bf16.msra.mxu0 %v543
  %744 = vmatpush.bf16.msra.mxu0 %v542
  %745 = vmatpush.bf16.msra.mxu0 %v541
  %746 = vmatpush.bf16.msra.mxu0 %v540
  %747 = vmatpush.bf16.msra.mxu0 %v539
  %748 = vmatpush.bf16.msra.mxu0 %v538
  %749 = vmatmul.bf16.gmra.mxu0 %v277
  %v750 = vpop.f32.mrf.mxu0
  %v751 = vadd.f32 %v702, %v750
  %v752 = vpop.f32.mrf.mxu0
  %v753 = vadd.f32 %v704, %v752
  %754 = vmatmul.bf16.gmra.mxu0 %v282
  %v755 = vpop.f32.mrf.mxu0
  %v756 = vadd.f32 %v707, %v755
  %v757 = vpop.f32.mrf.mxu0
  %v758 = vadd.f32 %v709, %v757
  %759 = vmatmul.bf16.gmra.mxu0 %v287
  %v760 = vpop.f32.mrf.mxu0
  %v761 = vadd.f32 %v712, %v760
  %v762 = vpop.f32.mrf.mxu0
  %v763 = vadd.f32 %v714, %v762
  %764 = vmatmul.bf16.gmra.mxu0 %v292
  %v765 = vpop.f32.mrf.mxu0
  %v766 = vadd.f32 %v717, %v765
  %v767 = vpop.f32.mrf.mxu0
  %v768 = vadd.f32 %v719, %v767
  %769 = vmatmul.bf16.gmra.mxu0 %v297
  %v770 = vpop.f32.mrf.mxu0
  %v771 = vadd.f32 %v722, %v770
  %v772 = vpop.f32.mrf.mxu0
  %v773 = vadd.f32 %v724, %v772
  %774 = vmatmul.bf16.gmra.mxu0 %v302
  %v775 = vpop.f32.mrf.mxu0
  %v776 = vadd.f32 %v727, %v775
  %v777 = vpop.f32.mrf.mxu0
  %v778 = vadd.f32 %v729, %v777
  %779 = vmatmul.bf16.gmra.mxu0 %v307
  %v780 = vpop.f32.mrf.mxu0
  %v781 = vadd.f32 %v732, %v780
  %v782 = vpop.f32.mrf.mxu0
  %v783 = vadd.f32 %v734, %v782
  %784 = vmatmul.bf16.gmra.mxu0 %v312
  %v785 = vpop.f32.mrf.mxu0
  %v786 = vadd.f32 %v737, %v785
  %v787 = vpop.f32.mrf.mxu0
  %v788 = vadd.f32 %v739, %v787
  %789 = vdwg.mxu0
  %790 = vmatpush.bf16.msra.mxu0 %v553
  %791 = vmatpush.bf16.msra.mxu0 %v552
  %792 = vmatpush.bf16.msra.mxu0 %v551
  %793 = vmatpush.bf16.msra.mxu0 %v550
  %794 = vmatpush.bf16.msra.mxu0 %v549
  %795 = vmatpush.bf16.msra.mxu0 %v548
  %796 = vmatpush.bf16.msra.mxu0 %v547
  %797 = vmatpush.bf16.msra.mxu0 %v546
  %798 = vmatmul.bf16.gmra.mxu0 %v278
  %v799 = vpop.f32.mrf.mxu0
  %v800 = vadd.f32 %v751, %v799
  %v801 = vpop.f32.mrf.mxu0
  %v802 = vadd.f32 %v753, %v801
  %803 = vmatmul.bf16.gmra.mxu0 %v283
  %v804 = vpop.f32.mrf.mxu0
  %v805 = vadd.f32 %v756, %v804
  %v806 = vpop.f32.mrf.mxu0
  %v807 = vadd.f32 %v758, %v806
  %808 = vmatmul.bf16.gmra.mxu0 %v288
  %v809 = vpop.f32.mrf.mxu0
  %v810 = vadd.f32 %v761, %v809
  %v811 = vpop.f32.mrf.mxu0
  %v812 = vadd.f32 %v763, %v811
  %813 = vmatmul.bf16.gmra.mxu0 %v293
  %v814 = vpop.f32.mrf.mxu0
  %v815 = vadd.f32 %v766, %v814
  %v816 = vpop.f32.mrf.mxu0
  %v817 = vadd.f32 %v768, %v816
  %818 = vmatmul.bf16.gmra.mxu0 %v298
  %v819 = vpop.f32.mrf.mxu0
  %v820 = vadd.f32 %v771, %v819
  %v821 = vpop.f32.mrf.mxu0
  %v822 = vadd.f32 %v773, %v821
  %823 = vmatmul.bf16.gmra.mxu0 %v303
  %v824 = vpop.f32.mrf.mxu0
  %v825 = vadd.f32 %v776, %v824
  %v826 = vpop.f32.mrf.mxu0
  %v827 = vadd.f32 %v778, %v826
  %828 = vmatmul.bf16.gmra.mxu0 %v308
  %v829 = vpop.f32.mrf.mxu0
  %v830 = vadd.f32 %v781, %v829
  %v831 = vpop.f32.mrf.mxu0
  %v832 = vadd.f32 %v783, %v831
  %833 = vmatmul.bf16.gmra.mxu0 %v313
  %v834 = vpop.f32.mrf.mxu0
  %v835 = vadd.f32 %v786, %v834
  %v836 = vpop.f32.mrf.mxu0
  %v837 = vadd.f32 %v788, %v836
  %838 = vdwg.mxu0
  %v839 = vmax.f32 %v800, 0.0
  %v840 = vmax.f32 %v802, 0.0
  %v841 = vmax.f32 %v805, 0.0
  %v842 = vmax.f32 %v807, 0.0
  %v843 = vmax.f32 %v810, 0.0
  %v844 = vmax.f32 %v812, 0.0
  %v845 = vmax.f32 %v815, 0.0
  %v846 = vmax.f32 %v817, 0.0
  %v847 = vmax.f32 %v820, 0.0
  %v848 = vmax.f32 %v822, 0.0
  %v849 = vmax.f32 %v825, 0.0
  %v850 = vmax.f32 %v827, 0.0
  %v851 = vmax.f32 %v830, 0.0
  %v852 = vmax.f32 %v832, 0.0
  %v853 = vmax.f32 %v835, 0.0
  %v854 = vmax.f32 %v837, 0.0
  %v855 = vpack.c.bf16 %v839, %v839
  %v856 = vpack.c.bf16 %v840, %v840
  %v857 = vpack.c.bf16 %v841, %v841
  %v858 = vpack.c.bf16 %v842, %v842
  %v859 = vpack.c.bf16 %v843, %v843
  %v860 = vpack.c.bf16 %v844, %v844
  %v861 = vpack.c.bf16 %v845, %v845
  %v862 = vpack.c.bf16 %v846, %v846
  %v863 = vpack.c.bf16 %v847, %v847
  %v864 = vpack.c.bf16 %v848, %v848
  %v865 = vpack.c.bf16 %v849, %v849
  %v866 = vpack.c.bf16 %v850, %v850
  %v867 = vpack.c.bf16 %v851, %v851
  %v868 = vpack.c.bf16 %v852, %v852
  %v869 = vpack.c.bf16 %v853, %v853
  %v870 = vpack.c.bf16 %v854, %v854
  %871 = vst [vmem:[%s3] sm:$0xf] %v855
  %872 = vst [vmem:[%s3 + $0x4] sm:$0xf] %v856
  %873 = vst [vmem:[%s3 + $0x8] sm:$0xf] %v857
  %874 = vst [vmem:[%s3 + $0xc] sm:$0xf] %v858
  %875 = vst [vmem:[%s3 + $0x10] sm:$0xf] %v859
  %876 = vst [vmem:[%s3 + $0x14] sm:$0xf] %v860
  %877 = vst [vmem:[%s3 + $0x18] sm:$0xf] %v861
  %878 = vst [vmem:[%s3 + $0x1c] sm:$0xf] %v862
  %879 = vst [vmem:[%s3 + $0x20] sm:$0xf] %v863
  %880 = vst [vmem:[%s3 + $0x24] sm:$0xf] %v864
  %881 = vst [vmem:[%s3 + $0x28] sm:$0xf] %v865
  %882 = vst [vmem:[%s3 + $0x2c] sm:$0xf] %v866
  %883 = vst [vmem:[%s3 + $0x30] sm:$0xf] %v867
  %884 = vst [vmem:[%s3 + $0x34] sm:$0xf] %v868
  %885 = vst [vmem:[%s3 + $0x38] sm:$0xf] %v869
  %886 = vst [vmem:[%s3 + $0x3c] sm:$0xf] %v870
  // Predicated region
  $region14: #{_lambda_.12} parent=0 // pred_check
    _
  $region15: #{_lambda_.12} parent=0 // pred_check_branch
    %888 = sbr.rel (0) target = $region17
  $region16: #{_lambda_.12} parent=0 // pred_region
    _
  $region17: #{_lambda_.12} parent=0 // pred_fallthru
    _
  // Predicated region
  $region18: #{_lambda_.12} parent=0 // pred_check
    _
  $region19: #{_lambda_.12} parent=0 // pred_check_branch
    %890 = sbr.rel (0) target = $region21
  $region20: #{_lambda_.12} parent=0 // pred_region
    _
  $region21: #{_lambda_.12} parent=0 // pred_fallthru
    _

// kernel: _lambda_.13
$region0: #{_lambda_.13}
  #allocation0 [shape = 'u32[]', space=smem, size = 0x4, offset = 0x4, fixed_abs, tag = 'smem constant byte address 0x4 - core index']
  #allocation1 [shape = 'u32[72,128]{1,0:T(1,128)}', space=vmem, size = 0x9000, scoped, tag = 'internal scratch']
  %s0 = inlined_call_operand.vmem [shape: bf16[32,1152], index: 0, kind: input, shape index: {}]
  %s1 = inlined_call_operand.vmem [shape: bf16[1152,256], index: 1, kind: input, shape index: {}]
  %s2 = inlined_call_operand.vmem [shape: f32[1,256], index: 2, kind: input, shape index: {}]
  %s3 = inlined_call_operand.vmem [shape: bf16[32,256], index: 3, kind: output, shape index: {}]
  %s4 = sld [smem:[#allocation0]]
  $region22: #{_lambda_.13} parent=0
    _
  %s6 = ssub.s32 1, %s4
  %s7 = scalar_select 0, %s6, %s4
  // Predicated region
  $region2: #{_lambda_.13} parent=0 // pred_check
    _
  $region3: #{_lambda_.13} parent=0 // pred_check_branch
    %9 = sbr.rel (0) target = $region5
  $region4: #{_lambda_.13} parent=0 // pred_region
    _
  $region5: #{_lambda_.13} parent=0 // pred_fallthru
    _
  // Predicated region
  $region6: #{_lambda_.13} parent=0 // pred_check
    _
  $region7: #{_lambda_.13} parent=0 // pred_check_branch
    %11 = sbr.rel (0) target = $region9
  $region8: #{_lambda_.13} parent=0 // pred_region
    _
  $region9: #{_lambda_.13} parent=0 // pred_fallthru
    _
  // Predicated region
  $region10: #{_lambda_.13} parent=0 // pred_check
    _
  $region11: #{_lambda_.13} parent=0 // pred_check_branch
    %13 = sbr.rel (0) target = $region13
  $region12: #{_lambda_.13} parent=0 // pred_region
    _
  $region13: #{_lambda_.13} parent=0 // pred_fallthru
    _
  %v14 = vld [vmem:[%s0] sm:$0xff]
  %v15 = vld [vmem:[%s0 + $0x8] sm:$0xff]
  %v16 = vld [vmem:[%s0 + $0x10] sm:$0xff]
  %v17 = vld [vmem:[%s0 + $0x18] sm:$0xff]
  %v18 = vld [vmem:[%s0 + $0x20] sm:$0xf]
  %v19 = vld [vmem:[%s0 + $0x24] sm:$0xff]
  %v20 = vld [vmem:[%s0 + $0x2c] sm:$0xff]
  %v21 = vld [vmem:[%s0 + $0x34] sm:$0xff]
  %v22 = vld [vmem:[%s0 + $0x3c] sm:$0xff]
  %v23 = vld [vmem:[%s0 + $0x44] sm:$0xf]
  %v24 = vld [vmem:[%s0 + $0x48] sm:$0xff]
  %v25 = vld [vmem:[%s0 + $0x50] sm:$0xff]
  %v26 = vld [vmem:[%s0 + $0x58] sm:$0xff]
  %v27 = vld [vmem:[%s0 + $0x60] sm:$0xff]
  %v28 = vld [vmem:[%s0 + $0x68] sm:$0xf]
  %v29 = vld [vmem:[%s0 + $0x6c] sm:$0xff]
  %v30 = vld [vmem:[%s0 + $0x74] sm:$0xff]
  %v31 = vld [vmem:[%s0 + $0x7c] sm:$0xff]
  %v32 = vld [vmem:[%s0 + $0x84] sm:$0xff]
  %v33 = vld [vmem:[%s0 + $0x8c] sm:$0xf]
  %v34 = vld [vmem:[%s1] sm:$0xff]
  %v35 = vld [vmem:[%s1 + $0x8] sm:$0xff]
  %v36 = vld [vmem:[%s1 + $0x10] sm:$0xff]
  %v37 = vld [vmem:[%s1 + $0x18] sm:$0xff]
  %v38 = vld [vmem:[%s1 + $0x20] sm:$0xff]
  %v39 = vld [vmem:[%s1 + $0x28] sm:$0xff]
  %v40 = vld [vmem:[%s1 + $0x30] sm:$0xff]
  %v41 = vld [vmem:[%s1 + $0x38] sm:$0xff]
  %v42 = vld [vmem:[%s1 + $0x40] sm:$0xff]
  %v43 = vld [vmem:[%s1 + $0x48] sm:$0xff]
  %v44 = vld [vmem:[%s1 + $0x50] sm:$0xff]
  %v45 = vld [vmem:[%s1 + $0x58] sm:$0xff]
  %v46 = vld [vmem:[%s1 + $0x60] sm:$0xff]
  %v47 = vld [vmem:[%s1 + $0x68] sm:$0xff]
  %v48 = vld [vmem:[%s1 + $0x70] sm:$0xff]
  %v49 = vld [vmem:[%s1 + $0x78] sm:$0xff]
  %v50 = vld [vmem:[%s1 + $0x80] sm:$0xff]
  %v51 = vld [vmem:[%s1 + $0x88] sm:$0xff]
  %v52 = vld [vmem:[%s1 + $0x90] sm:$0xff]
  %v53 = vld [vmem:[%s1 + $0x98] sm:$0xff]
  %v54 = vld [vmem:[%s1 + $0xa0] sm:$0xff]
  %v55 = vld [vmem:[%s1 + $0xa8] sm:$0xff]
  %v56 = vld [vmem:[%s1 + $0xb0] sm:$0xff]
  %v57 = vld [vmem:[%s1 + $0xb8] sm:$0xff]
  %v58 = vld [vmem:[%s1 + $0xc0] sm:$0xff]
  %v59 = vld [vmem:[%s1 + $0xc8] sm:$0xff]
  %v60 = vld [vmem:[%s1 + $0xd0] sm:$0xff]
  %v61 = vld [vmem:[%s1 + $0xd8] sm:$0xff]
  %v62 = vld [vmem:[%s1 + $0xe0] sm:$0xff]
  %v63 = vld [vmem:[%s1 + $0xe8] sm:$0xff]
  %v64 = vld [vmem:[%s1 + $0xf0] sm:$0xff]
  %v65 = vld [vmem:[%s1 + $0xf8] sm:$0xff]
  %v66 = vld [vmem:[%s1 + $0x100] sm:$0xff]
  %v67 = vld [vmem:[%s1 + $0x108] sm:$0xff]
  %v68 = vld [vmem:[%s1 + $0x110] sm:$0xff]
  %v69 = vld [vmem:[%s1 + $0x118] sm:$0xff]
  %v70 = vld [vmem:[%s1 + $0x120] sm:$0xff]
  %v71 = vld [vmem:[%s1 + $0x128] sm:$0xff]
  %v72 = vld [vmem:[%s1 + $0x130] sm:$0xff]
  %v73 = vld [vmem:[%s1 + $0x138] sm:$0xff]
  %v74 = vld [vmem:[%s1 + $0x140] sm:$0xff]
  %v75 = vld [vmem:[%s1 + $0x148] sm:$0xff]
  %v76 = vld [vmem:[%s1 + $0x150] sm:$0xff]
  %v77 = vld [vmem:[%s1 + $0x158] sm:$0xff]
  %v78 = vld [vmem:[%s1 + $0x160] sm:$0xff]
  %v79 = vld [vmem:[%s1 + $0x168] sm:$0xff]
  %v80 = vld [vmem:[%s1 + $0x170] sm:$0xff]
  %v81 = vld [vmem:[%s1 + $0x178] sm:$0xff]
  %v82 = vld [vmem:[%s1 + $0x180] sm:$0xff]
  %v83 = vld [vmem:[%s1 + $0x188] sm:$0xff]
  %v84 = vld [vmem:[%s1 + $0x190] sm:$0xff]
  %v85 = vld [vmem:[%s1 + $0x198] sm:$0xff]
  %v86 = vld [vmem:[%s1 + $0x1a0] sm:$0xff]
  %v87 = vld [vmem:[%s1 + $0x1a8] sm:$0xff]
  %v88 = vld [vmem:[%s1 + $0x1b0] sm:$0xff]
  %v89 = vld [vmem:[%s1 + $0x1b8] sm:$0xff]
  %v90 = vld [vmem:[%s1 + $0x1c0] sm:$0xff]
  %v91 = vld [vmem:[%s1 + $0x1c8] sm:$0xff]
  %v92 = vld [vmem:[%s1 + $0x1d0] sm:$0xff]
  %v93 = vld [vmem:[%s1 + $0x1d8] sm:$0xff]
  %v94 = vld [vmem:[%s1 + $0x1e0] sm:$0xff]
  %v95 = vld [vmem:[%s1 + $0x1e8] sm:$0xff]
  %v96 = vld [vmem:[%s1 + $0x1f0] sm:$0xff]
  %v97 = vld [vmem:[%s1 + $0x1f8] sm:$0xff]
  %v98 = vld [vmem:[%s1 + $0x200] sm:$0xff]
  %v99 = vld [vmem:[%s1 + $0x208] sm:$0xff]
  %v100 = vld [vmem:[%s1 + $0x210] sm:$0xff]
  %v101 = vld [vmem:[%s1 + $0x218] sm:$0xff]
  %v102 = vld [vmem:[%s1 + $0x220] sm:$0xff]
  %v103 = vld [vmem:[%s1 + $0x228] sm:$0xff]
  %v104 = vld [vmem:[%s1 + $0x230] sm:$0xff]
  %v105 = vld [vmem:[%s1 + $0x238] sm:$0xff]
  %v106 = vld [vmem:[%s1 + $0x240] sm:$0xff]
  %v107 = vld [vmem:[%s1 + $0x248] sm:$0xff]
  %v108 = vld [vmem:[%s1 + $0x250] sm:$0xff]
  %v109 = vld [vmem:[%s1 + $0x258] sm:$0xff]
  %v110 = vld [vmem:[%s1 + $0x260] sm:$0xff]
  %v111 = vld [vmem:[%s1 + $0x268] sm:$0xff]
  %v112 = vld [vmem:[%s1 + $0x270] sm:$0xff]
  %v113 = vld [vmem:[%s1 + $0x278] sm:$0xff]
  %v114 = vld [vmem:[%s1 + $0x280] sm:$0xff]
  %v115 = vld [vmem:[%s1 + $0x288] sm:$0xff]
  %v116 = vld [vmem:[%s1 + $0x290] sm:$0xff]
  %v117 = vld [vmem:[%s1 + $0x298] sm:$0xff]
  %v118 = vld [vmem:[%s1 + $0x2a0] sm:$0xff]
  %v119 = vld [vmem:[%s1 + $0x2a8] sm:$0xff]
  %v120 = vld [vmem:[%s1 + $0x2b0] sm:$0xff]
  %v121 = vld [vmem:[%s1 + $0x2b8] sm:$0xff]
  %v122 = vld [vmem:[%s1 + $0x2c0] sm:$0xff]
  %v123 = vld [vmem:[%s1 + $0x2c8] sm:$0xff]
  %v124 = vld [vmem:[%s1 + $0x2d0] sm:$0xff]
  %v125 = vld [vmem:[%s1 + $0x2d8] sm:$0xff]
  %v126 = vld [vmem:[%s1 + $0x2e0] sm:$0xff]
  %v127 = vld [vmem:[%s1 + $0x2e8] sm:$0xff]
  %v128 = vld [vmem:[%s1 + $0x2f0] sm:$0xff]
  %v129 = vld [vmem:[%s1 + $0x2f8] sm:$0xff]
  %v130 = vld [vmem:[%s1 + $0x300] sm:$0xff]
  %v131 = vld [vmem:[%s1 + $0x308] sm:$0xff]
  %v132 = vld [vmem:[%s1 + $0x310] sm:$0xff]
  %v133 = vld [vmem:[%s1 + $0x318] sm:$0xff]
  %v134 = vld [vmem:[%s1 + $0x320] sm:$0xff]
  %v135 = vld [vmem:[%s1 + $0x328] sm:$0xff]
  %v136 = vld [vmem:[%s1 + $0x330] sm:$0xff]
  %v137 = vld [vmem:[%s1 + $0x338] sm:$0xff]
  %v138 = vld [vmem:[%s1 + $0x340] sm:$0xff]
  %v139 = vld [vmem:[%s1 + $0x348] sm:$0xff]
  %v140 = vld [vmem:[%s1 + $0x350] sm:$0xff]
  %v141 = vld [vmem:[%s1 + $0x358] sm:$0xff]
  %v142 = vld [vmem:[%s1 + $0x360] sm:$0xff]
  %v143 = vld [vmem:[%s1 + $0x368] sm:$0xff]
  %v144 = vld [vmem:[%s1 + $0x370] sm:$0xff]
  %v145 = vld [vmem:[%s1 + $0x378] sm:$0xff]
  %v146 = vld [vmem:[%s1 + $0x380] sm:$0xff]
  %v147 = vld [vmem:[%s1 + $0x388] sm:$0xff]
  %v148 = vld [vmem:[%s1 + $0x390] sm:$0xff]
  %v149 = vld [vmem:[%s1 + $0x398] sm:$0xff]
  %v150 = vld [vmem:[%s1 + $0x3a0] sm:$0xff]
  %v151 = vld [vmem:[%s1 + $0x3a8] sm:$0xff]
  %v152 = vld [vmem:[%s1 + $0x3b0] sm:$0xff]
  %v153 = vld [vmem:[%s1 + $0x3b8] sm:$0xff]
  %v154 = vld [vmem:[%s1 + $0x3c0] sm:$0xff]
  %v155 = vld [vmem:[%s1 + $0x3c8] sm:$0xff]
  %v156 = vld [vmem:[%s1 + $0x3d0] sm:$0xff]
  %v157 = vld [vmem:[%s1 + $0x3d8] sm:$0xff]
  %v158 = vld [vmem:[%s1 + $0x3e0] sm:$0xff]
  %v159 = vld [vmem:[%s1 + $0x3e8] sm:$0xff]
  %v160 = vld [vmem:[%s1 + $0x3f0] sm:$0xff]
  %v161 = vld [vmem:[%s1 + $0x3f8] sm:$0xff]
  %v162 = vld [vmem:[%s1 + $0x400] sm:$0xff]
  %v163 = vld [vmem:[%s1 + $0x408] sm:$0xff]
  %v164 = vld [vmem:[%s1 + $0x410] sm:$0xff]
  %v165 = vld [vmem:[%s1 + $0x418] sm:$0xff]
  %v166 = vld [vmem:[%s1 + $0x420] sm:$0xff]
  %v167 = vld [vmem:[%s1 + $0x428] sm:$0xff]
  %v168 = vld [vmem:[%s1 + $0x430] sm:$0xff]
  %v169 = vld [vmem:[%s1 + $0x438] sm:$0xff]
  %v170 = vld [vmem:[%s1 + $0x440] sm:$0xff]
  %v171 = vld [vmem:[%s1 + $0x448] sm:$0xff]
  %v172 = vld [vmem:[%s1 + $0x450] sm:$0xff]
  %v173 = vld [vmem:[%s1 + $0x458] sm:$0xff]
  %v174 = vld [vmem:[%s1 + $0x460] sm:$0xff]
  %v175 = vld [vmem:[%s1 + $0x468] sm:$0xff]
  %v176 = vld [vmem:[%s1 + $0x470] sm:$0xff]
  %v177 = vld [vmem:[%s1 + $0x478] sm:$0xff]
  %v178 = vld [vmem:[%s2] sm:$0x3]
  %v180 = vperm.slane %v178, 0
  %v181 = vperm.slane %v178, 1
  %v204 = vunpack.c.l.b16 %v14
  %v205 = vunpack.c.h.b16 %v14
  %v206 = vunpack.c.l.b16 %v15
  %v207 = vunpack.c.h.b16 %v15
  %v208 = vunpack.c.l.b16 %v16
  %v209 = vunpack.c.h.b16 %v16
  %v210 = vunpack.c.l.b16 %v17
  %v211 = vunpack.c.h.b16 %v17
  %v212 = vunpack.c.l.b16 %v18
  %v213 = vunpack.c.l.b16 %v19
  %v214 = vunpack.c.h.b16 %v19
  %v215 = vunpack.c.l.b16 %v20
  %v216 = vunpack.c.h.b16 %v20
  %v217 = vunpack.c.l.b16 %v21
  %v218 = vunpack.c.h.b16 %v21
  %v219 = vunpack.c.l.b16 %v22
  %v220 = vunpack.c.h.b16 %v22
  %v221 = vunpack.c.l.b16 %v23
  %v222 = vunpack.c.l.b16 %v24
  %v223 = vunpack.c.h.b16 %v24
  %v224 = vunpack.c.l.b16 %v25
  %v225 = vunpack.c.h.b16 %v25
  %v226 = vunpack.c.l.b16 %v26
  %v227 = vunpack.c.h.b16 %v26
  %v228 = vunpack.c.l.b16 %v27
  %v229 = vunpack.c.h.b16 %v27
  %v230 = vunpack.c.l.b16 %v28
  %v231 = vunpack.c.l.b16 %v29
  %v232 = vunpack.c.h.b16 %v29
  %v233 = vunpack.c.l.b16 %v30
  %v234 = vunpack.c.h.b16 %v30
  %v235 = vunpack.c.l.b16 %v31
  %v236 = vunpack.c.h.b16 %v31
  %v237 = vunpack.c.l.b16 %v32
  %v238 = vunpack.c.h.b16 %v32
  %v239 = vunpack.c.l.b16 %v33
  %v240 = vpack.c.b16 %v213, %v204
  %v241 = vpack.c.b16 %v214, %v205
  %v242 = vpack.c.b16 %v215, %v206
  %v243 = vpack.c.b16 %v216, %v207
  %v244 = vpack.c.b16 %v217, %v208
  %v245 = vpack.c.b16 %v218, %v209
  %v246 = vpack.c.b16 %v219, %v210
  %v247 = vpack.c.b16 %v220, %v211
  %v248 = vpack.c.b16 %v221, %v212
  %v249 = vpack.c.b16 %v231, %v222
  %v250 = vpack.c.b16 %v232, %v223
  %v251 = vpack.c.b16 %v233, %v224
  %v252 = vpack.c.b16 %v234, %v225
  %v253 = vpack.c.b16 %v235, %v226
  %v254 = vpack.c.b16 %v236, %v227
  %v255 = vpack.c.b16 %v237, %v228
  %v256 = vpack.c.b16 %v238, %v229
  %v257 = vpack.c.b16 %v239, %v230
  %v420 = vunpack.c.l.b16 %v34
  %v421 = vunpack.c.h.b16 %v34
  %v422 = vunpack.c.l.b16 %v35
  %v423 = vunpack.c.h.b16 %v35
  %v424 = vunpack.c.l.b16 %v36
  %v425 = vunpack.c.h.b16 %v36
  %v426 = vunpack.c.l.b16 %v37
  %v427 = vunpack.c.h.b16 %v37
  %v428 = vunpack.c.l.b16 %v38
  %v429 = vunpack.c.h.b16 %v38
  %v430 = vunpack.c.l.b16 %v39
  %v431 = vunpack.c.h.b16 %v39
  %v432 = vunpack.c.l.b16 %v40
  %v433 = vunpack.c.h.b16 %v40
  %v434 = vunpack.c.l.b16 %v41
  %v435 = vunpack.c.h.b16 %v41
  %v436 = vunpack.c.l.b16 %v42
  %v437 = vunpack.c.h.b16 %v42
  %v438 = vunpack.c.l.b16 %v43
  %v439 = vunpack.c.h.b16 %v43
  %v440 = vunpack.c.l.b16 %v44
  %v441 = vunpack.c.h.b16 %v44
  %v442 = vunpack.c.l.b16 %v45
  %v443 = vunpack.c.h.b16 %v45
  %v444 = vunpack.c.l.b16 %v46
  %v445 = vunpack.c.h.b16 %v46
  %v446 = vunpack.c.l.b16 %v47
  %v447 = vunpack.c.h.b16 %v47
  %v448 = vunpack.c.l.b16 %v48
  %v449 = vunpack.c.h.b16 %v48
  %v450 = vunpack.c.l.b16 %v49
  %v451 = vunpack.c.h.b16 %v49
  %v452 = vunpack.c.l.b16 %v50
  %v453 = vunpack.c.h.b16 %v50
  %v454 = vunpack.c.l.b16 %v51
  %v455 = vunpack.c.h.b16 %v51
  %v456 = vunpack.c.l.b16 %v52
  %v457 = vunpack.c.h.b16 %v52
  %v458 = vunpack.c.l.b16 %v53
  %v459 = vunpack.c.h.b16 %v53
  %v460 = vunpack.c.l.b16 %v54
  %v461 = vunpack.c.h.b16 %v54
  %v462 = vunpack.c.l.b16 %v55
  %v463 = vunpack.c.h.b16 %v55
  %v464 = vunpack.c.l.b16 %v56
  %v465 = vunpack.c.h.b16 %v56
  %v466 = vunpack.c.l.b16 %v57
  %v467 = vunpack.c.h.b16 %v57
  %v468 = vunpack.c.l.b16 %v58
  %v469 = vunpack.c.h.b16 %v58
  %v470 = vunpack.c.l.b16 %v59
  %v471 = vunpack.c.h.b16 %v59
  %v472 = vunpack.c.l.b16 %v60
  %v473 = vunpack.c.h.b16 %v60
  %v474 = vunpack.c.l.b16 %v61
  %v475 = vunpack.c.h.b16 %v61
  %v476 = vunpack.c.l.b16 %v62
  %v477 = vunpack.c.h.b16 %v62
  %v478 = vunpack.c.l.b16 %v63
  %v479 = vunpack.c.h.b16 %v63
  %v480 = vunpack.c.l.b16 %v64
  %v481 = vunpack.c.h.b16 %v64
  %v482 = vunpack.c.l.b16 %v65
  %v483 = vunpack.c.h.b16 %v65
  %v484 = vunpack.c.l.b16 %v66
  %v485 = vunpack.c.h.b16 %v66
  %v486 = vunpack.c.l.b16 %v67
  %v487 = vunpack.c.h.b16 %v67
  %v488 = vunpack.c.l.b16 %v68
  %v489 = vunpack.c.h.b16 %v68
  %v490 = vunpack.c.l.b16 %v69
  %v491 = vunpack.c.h.b16 %v69
  %v492 = vunpack.c.l.b16 %v70
  %v493 = vunpack.c.h.b16 %v70
  %v494 = vunpack.c.l.b16 %v71
  %v495 = vunpack.c.h.b16 %v71
  %v496 = vunpack.c.l.b16 %v72
  %v497 = vunpack.c.h.b16 %v72
  %v498 = vunpack.c.l.b16 %v73
  %v499 = vunpack.c.h.b16 %v73
  %v500 = vunpack.c.l.b16 %v74
  %v501 = vunpack.c.h.b16 %v74
  %v502 = vunpack.c.l.b16 %v75
  %v503 = vunpack.c.h.b16 %v75
  %v504 = vunpack.c.l.b16 %v76
  %v505 = vunpack.c.h.b16 %v76
  %v506 = vunpack.c.l.b16 %v77
  %v507 = vunpack.c.h.b16 %v77
  %v508 = vunpack.c.l.b16 %v78
  %v509 = vunpack.c.h.b16 %v78
  %v510 = vunpack.c.l.b16 %v79
  %v511 = vunpack.c.h.b16 %v79
  %v512 = vunpack.c.l.b16 %v80
  %v513 = vunpack.c.h.b16 %v80
  %v514 = vunpack.c.l.b16 %v81
  %v515 = vunpack.c.h.b16 %v81
  %v516 = vunpack.c.l.b16 %v82
  %v517 = vunpack.c.h.b16 %v82
  %v518 = vunpack.c.l.b16 %v83
  %v519 = vunpack.c.h.b16 %v83
  %v520 = vunpack.c.l.b16 %v84
  %v521 = vunpack.c.h.b16 %v84
  %v522 = vunpack.c.l.b16 %v85
  %v523 = vunpack.c.h.b16 %v85
  %v524 = vunpack.c.l.b16 %v86
  %v525 = vunpack.c.h.b16 %v86
  %v526 = vunpack.c.l.b16 %v87
  %v527 = vunpack.c.h.b16 %v87
  %v528 = vunpack.c.l.b16 %v88
  %v529 = vunpack.c.h.b16 %v88
  %v530 = vunpack.c.l.b16 %v89
  %v531 = vunpack.c.h.b16 %v89
  %v532 = vunpack.c.l.b16 %v90
  %v533 = vunpack.c.h.b16 %v90
  %v534 = vunpack.c.l.b16 %v91
  %v535 = vunpack.c.h.b16 %v91
  %v536 = vunpack.c.l.b16 %v92
  %v537 = vunpack.c.h.b16 %v92
  %v538 = vunpack.c.l.b16 %v93
  %v539 = vunpack.c.h.b16 %v93
  %v540 = vunpack.c.l.b16 %v94
  %v541 = vunpack.c.h.b16 %v94
  %v542 = vunpack.c.l.b16 %v95
  %v543 = vunpack.c.h.b16 %v95
  %v544 = vunpack.c.l.b16 %v96
  %v545 = vunpack.c.h.b16 %v96
  %v546 = vunpack.c.l.b16 %v97
  %v547 = vunpack.c.h.b16 %v97
  %v548 = vunpack.c.l.b16 %v98
  %v549 = vunpack.c.h.b16 %v98
  %v550 = vunpack.c.l.b16 %v99
  %v551 = vunpack.c.h.b16 %v99
  %v552 = vunpack.c.l.b16 %v100
  %v553 = vunpack.c.h.b16 %v100
  %v554 = vunpack.c.l.b16 %v101
  %v555 = vunpack.c.h.b16 %v101
  %v556 = vunpack.c.l.b16 %v102
  %v557 = vunpack.c.h.b16 %v102
  %v558 = vunpack.c.l.b16 %v103
  %v559 = vunpack.c.h.b16 %v103
  %v560 = vunpack.c.l.b16 %v104
  %v561 = vunpack.c.h.b16 %v104
  %v562 = vunpack.c.l.b16 %v105
  %v563 = vunpack.c.h.b16 %v105
  %v564 = vunpack.c.l.b16 %v106
  %v565 = vunpack.c.h.b16 %v106
  %v566 = vunpack.c.l.b16 %v107
  %v567 = vunpack.c.h.b16 %v107
  %v568 = vunpack.c.l.b16 %v108
  %v569 = vunpack.c.h.b16 %v108
  %v570 = vunpack.c.l.b16 %v109
  %v571 = vunpack.c.h.b16 %v109
  %v572 = vunpack.c.l.b16 %v110
  %v573 = vunpack.c.h.b16 %v110
  %v574 = vunpack.c.l.b16 %v111
  %v575 = vunpack.c.h.b16 %v111
  %v576 = vunpack.c.l.b16 %v112
  %v577 = vunpack.c.h.b16 %v112
  %v578 = vunpack.c.l.b16 %v113
  %v579 = vunpack.c.h.b16 %v113
  %v580 = vunpack.c.l.b16 %v114
  %v581 = vunpack.c.h.b16 %v114
  %v582 = vunpack.c.l.b16 %v115
  %v583 = vunpack.c.h.b16 %v115
  %v584 = vunpack.c.l.b16 %v116
  %v585 = vunpack.c.h.b16 %v116
  %v586 = vunpack.c.l.b16 %v117
  %v587 = vunpack.c.h.b16 %v117
  %v588 = vunpack.c.l.b16 %v118
  %v589 = vunpack.c.h.b16 %v118
  %v590 = vunpack.c.l.b16 %v119
  %v591 = vunpack.c.h.b16 %v119
  %v592 = vunpack.c.l.b16 %v120
  %v593 = vunpack.c.h.b16 %v120
  %v594 = vunpack.c.l.b16 %v121
  %v595 = vunpack.c.h.b16 %v121
  %v596 = vunpack.c.l.b16 %v122
  %v597 = vunpack.c.h.b16 %v122
  %v598 = vunpack.c.l.b16 %v123
  %v599 = vunpack.c.h.b16 %v123
  %v600 = vunpack.c.l.b16 %v124
  %v601 = vunpack.c.h.b16 %v124
  %v602 = vunpack.c.l.b16 %v125
  %v603 = vunpack.c.h.b16 %v125
  %v604 = vunpack.c.l.b16 %v126
  %v605 = vunpack.c.h.b16 %v126
  %v606 = vunpack.c.l.b16 %v127
  %v607 = vunpack.c.h.b16 %v127
  %v608 = vunpack.c.l.b16 %v128
  %v609 = vunpack.c.h.b16 %v128
  %v610 = vunpack.c.l.b16 %v129
  %v611 = vunpack.c.h.b16 %v129
  %v612 = vunpack.c.l.b16 %v130
  %v613 = vunpack.c.h.b16 %v130
  %v614 = vunpack.c.l.b16 %v131
  %v615 = vunpack.c.h.b16 %v131
  %v616 = vunpack.c.l.b16 %v132
  %v617 = vunpack.c.h.b16 %v132
  %v618 = vunpack.c.l.b16 %v133
  %v619 = vunpack.c.h.b16 %v133
  %v620 = vunpack.c.l.b16 %v134
  %v621 = vunpack.c.h.b16 %v134
  %v622 = vunpack.c.l.b16 %v135
  %v623 = vunpack.c.h.b16 %v135
  %v624 = vunpack.c.l.b16 %v136
  %v625 = vunpack.c.h.b16 %v136
  %v626 = vunpack.c.l.b16 %v137
  %v627 = vunpack.c.h.b16 %v137
  %v628 = vunpack.c.l.b16 %v138
  %v629 = vunpack.c.h.b16 %v138
  %v630 = vunpack.c.l.b16 %v139
  %v631 = vunpack.c.h.b16 %v139
  %v632 = vunpack.c.l.b16 %v140
  %v633 = vunpack.c.h.b16 %v140
  %v634 = vunpack.c.l.b16 %v141
  %v635 = vunpack.c.h.b16 %v141
  %v636 = vunpack.c.l.b16 %v142
  %v637 = vunpack.c.h.b16 %v142
  %v638 = vunpack.c.l.b16 %v143
  %v639 = vunpack.c.h.b16 %v143
  %v640 = vunpack.c.l.b16 %v144
  %v641 = vunpack.c.h.b16 %v144
  %v642 = vunpack.c.l.b16 %v145
  %v643 = vunpack.c.h.b16 %v145
  %v644 = vunpack.c.l.b16 %v146
  %v645 = vunpack.c.h.b16 %v146
  %v646 = vunpack.c.l.b16 %v147
  %v647 = vunpack.c.h.b16 %v147
  %v648 = vunpack.c.l.b16 %v148
  %v649 = vunpack.c.h.b16 %v148
  %v650 = vunpack.c.l.b16 %v149
  %v651 = vunpack.c.h.b16 %v149
  %v652 = vunpack.c.l.b16 %v150
  %v653 = vunpack.c.h.b16 %v150
  %v654 = vunpack.c.l.b16 %v151
  %v655 = vunpack.c.h.b16 %v151
  %v656 = vunpack.c.l.b16 %v152
  %v657 = vunpack.c.h.b16 %v152
  %v658 = vunpack.c.l.b16 %v153
  %v659 = vunpack.c.h.b16 %v153
  %v660 = vunpack.c.l.b16 %v154
  %v661 = vunpack.c.h.b16 %v154
  %v662 = vunpack.c.l.b16 %v155
  %v663 = vunpack.c.h.b16 %v155
  %v664 = vunpack.c.l.b16 %v156
  %v665 = vunpack.c.h.b16 %v156
  %v666 = vunpack.c.l.b16 %v157
  %v667 = vunpack.c.h.b16 %v157
  %v668 = vunpack.c.l.b16 %v158
  %v669 = vunpack.c.h.b16 %v158
  %v670 = vunpack.c.l.b16 %v159
  %v671 = vunpack.c.h.b16 %v159
  %v672 = vunpack.c.l.b16 %v160
  %v673 = vunpack.c.h.b16 %v160
  %v674 = vunpack.c.l.b16 %v161
  %v675 = vunpack.c.h.b16 %v161
  %v676 = vunpack.c.l.b16 %v162
  %v677 = vunpack.c.h.b16 %v162
  %v678 = vunpack.c.l.b16 %v163
  %v679 = vunpack.c.h.b16 %v163
  %v680 = vunpack.c.l.b16 %v164
  %v681 = vunpack.c.h.b16 %v164
  %v682 = vunpack.c.l.b16 %v165
  %v683 = vunpack.c.h.b16 %v165
  %v684 = vunpack.c.l.b16 %v166
  %v685 = vunpack.c.h.b16 %v166
  %v686 = vunpack.c.l.b16 %v167
  %v687 = vunpack.c.h.b16 %v167
  %v688 = vunpack.c.l.b16 %v168
  %v689 = vunpack.c.h.b16 %v168
  %v690 = vunpack.c.l.b16 %v169
  %v691 = vunpack.c.h.b16 %v169
  %v692 = vunpack.c.l.b16 %v170
  %v693 = vunpack.c.h.b16 %v170
  %v694 = vunpack.c.l.b16 %v171
  %v695 = vunpack.c.h.b16 %v171
  %v696 = vunpack.c.l.b16 %v172
  %v697 = vunpack.c.h.b16 %v172
  %v698 = vunpack.c.l.b16 %v173
  %v699 = vunpack.c.h.b16 %v173
  %v700 = vunpack.c.l.b16 %v174
  %v701 = vunpack.c.h.b16 %v174
  %v702 = vunpack.c.l.b16 %v175
  %v703 = vunpack.c.h.b16 %v175
  %v704 = vunpack.c.l.b16 %v176
  %v705 = vunpack.c.h.b16 %v176
  %v706 = vunpack.c.l.b16 %v177
  %v707 = vunpack.c.h.b16 %v177
  %v708 = vpack.c.b16 %v422, %v420
  %v709 = vpack.c.b16 %v423, %v421
  %v710 = vpack.c.b16 %v426, %v424
  %v711 = vpack.c.b16 %v427, %v425
  %v712 = vpack.c.b16 %v430, %v428
  %v713 = vpack.c.b16 %v431, %v429
  %v714 = vpack.c.b16 %v434, %v432
  %v715 = vpack.c.b16 %v435, %v433
  %v716 = vpack.c.b16 %v438, %v436
  %v717 = vpack.c.b16 %v439, %v437
  %v718 = vpack.c.b16 %v442, %v440
  %v719 = vpack.c.b16 %v443, %v441
  %v720 = vpack.c.b16 %v446, %v444
  %v721 = vpack.c.b16 %v447, %v445
  %v722 = vpack.c.b16 %v450, %v448
  %v723 = vpack.c.b16 %v451, %v449
  %v724 = vpack.c.b16 %v454, %v452
  %v725 = vpack.c.b16 %v455, %v453
  %v726 = vpack.c.b16 %v458, %v456
  %v727 = vpack.c.b16 %v459, %v457
  %v728 = vpack.c.b16 %v462, %v460
  %v729 = vpack.c.b16 %v463, %v461
  %v730 = vpack.c.b16 %v466, %v464
  %v731 = vpack.c.b16 %v467, %v465
  %v732 = vpack.c.b16 %v470, %v468
  %v733 = vpack.c.b16 %v471, %v469
  %v734 = vpack.c.b16 %v474, %v472
  %v735 = vpack.c.b16 %v475, %v473
  %v736 = vpack.c.b16 %v478, %v476
  %v737 = vpack.c.b16 %v479, %v477
  %v738 = vpack.c.b16 %v482, %v480
  %v739 = vpack.c.b16 %v483, %v481
  %v740 = vpack.c.b16 %v486, %v484
  %v741 = vpack.c.b16 %v487, %v485
  %v742 = vpack.c.b16 %v490, %v488
  %v743 = vpack.c.b16 %v491, %v489
  %v744 = vpack.c.b16 %v494, %v492
  %v745 = vpack.c.b16 %v495, %v493
  %v746 = vpack.c.b16 %v498, %v496
  %v747 = vpack.c.b16 %v499, %v497
  %v748 = vpack.c.b16 %v502, %v500
  %v749 = vpack.c.b16 %v503, %v501
  %v750 = vpack.c.b16 %v506, %v504
  %v751 = vpack.c.b16 %v507, %v505
  %v752 = vpack.c.b16 %v510, %v508
  %v753 = vpack.c.b16 %v511, %v509
  %v754 = vpack.c.b16 %v514, %v512
  %v755 = vpack.c.b16 %v515, %v513
  %v756 = vpack.c.b16 %v518, %v516
  %v757 = vpack.c.b16 %v519, %v517
  %v758 = vpack.c.b16 %v522, %v520
  %v759 = vpack.c.b16 %v523, %v521
  %v760 = vpack.c.b16 %v526, %v524
  %v761 = vpack.c.b16 %v527, %v525
  %v762 = vpack.c.b16 %v530, %v528
  %v763 = vpack.c.b16 %v531, %v529
  %v764 = vpack.c.b16 %v534, %v532
  %v765 = vpack.c.b16 %v535, %v533
  %v766 = vpack.c.b16 %v538, %v536
  %v767 = vpack.c.b16 %v539, %v537
  %v768 = vpack.c.b16 %v542, %v540
  %v769 = vpack.c.b16 %v543, %v541
  %v770 = vpack.c.b16 %v546, %v544
  %v771 = vpack.c.b16 %v547, %v545
  %v772 = vpack.c.b16 %v550, %v548
  %v773 = vpack.c.b16 %v551, %v549
  %v774 = vpack.c.b16 %v554, %v552
  %v775 = vpack.c.b16 %v555, %v553
  %v776 = vpack.c.b16 %v558, %v556
  %v777 = vpack.c.b16 %v559, %v557
  %v778 = vpack.c.b16 %v562, %v560
  %v779 = vpack.c.b16 %v563, %v561
  %v780 = vpack.c.b16 %v566, %v564
  %v781 = vpack.c.b16 %v567, %v565
  %v782 = vpack.c.b16 %v570, %v568
  %v783 = vpack.c.b16 %v571, %v569
  %v784 = vpack.c.b16 %v574, %v572
  %v785 = vpack.c.b16 %v575, %v573
  %v786 = vpack.c.b16 %v578, %v576
  %v787 = vpack.c.b16 %v579, %v577
  %v788 = vpack.c.b16 %v582, %v580
  %v789 = vpack.c.b16 %v583, %v581
  %v790 = vpack.c.b16 %v586, %v584
  %v791 = vpack.c.b16 %v587, %v585
  %v792 = vpack.c.b16 %v590, %v588
  %v793 = vpack.c.b16 %v591, %v589
  %v794 = vpack.c.b16 %v594, %v592
  %v795 = vpack.c.b16 %v595, %v593
  %v796 = vpack.c.b16 %v598, %v596
  %v797 = vpack.c.b16 %v599, %v597
  %v798 = vpack.c.b16 %v602, %v600
  %v799 = vpack.c.b16 %v603, %v601
  %v800 = vpack.c.b16 %v606, %v604
  %v801 = vpack.c.b16 %v607, %v605
  %v802 = vpack.c.b16 %v610, %v608
  %v803 = vpack.c.b16 %v611, %v609
  %v804 = vpack.c.b16 %v614, %v612
  %v805 = vpack.c.b16 %v615, %v613
  %v806 = vpack.c.b16 %v618, %v616
  %v807 = vpack.c.b16 %v619, %v617
  %v808 = vpack.c.b16 %v622, %v620
  %v809 = vpack.c.b16 %v623, %v621
  %v810 = vpack.c.b16 %v626, %v624
  %v811 = vpack.c.b16 %v627, %v625
  %v812 = vpack.c.b16 %v630, %v628
  %v813 = vpack.c.b16 %v631, %v629
  %v814 = vpack.c.b16 %v634, %v632
  %v815 = vpack.c.b16 %v635, %v633
  %v816 = vpack.c.b16 %v638, %v636
  %v817 = vpack.c.b16 %v639, %v637
  %v818 = vpack.c.b16 %v642, %v640
  %v819 = vpack.c.b16 %v643, %v641
  %v820 = vpack.c.b16 %v646, %v644
  %v821 = vpack.c.b16 %v647, %v645
  %v822 = vpack.c.b16 %v650, %v648
  %v823 = vpack.c.b16 %v651, %v649
  %v824 = vpack.c.b16 %v654, %v652
  %v825 = vpack.c.b16 %v655, %v653
  %v826 = vpack.c.b16 %v658, %v656
  %v827 = vpack.c.b16 %v659, %v657
  %v828 = vpack.c.b16 %v662, %v660
  %v829 = vpack.c.b16 %v663, %v661
  %v830 = vpack.c.b16 %v666, %v664
  %v831 = vpack.c.b16 %v667, %v665
  %v832 = vpack.c.b16 %v670, %v668
  %v833 = vpack.c.b16 %v671, %v669
  %v834 = vpack.c.b16 %v674, %v672
  %v835 = vpack.c.b16 %v675, %v673
  %v836 = vpack.c.b16 %v678, %v676
  %v837 = vpack.c.b16 %v679, %v677
  %v838 = vpack.c.b16 %v682, %v680
  %v839 = vpack.c.b16 %v683, %v681
  %v840 = vpack.c.b16 %v686, %v684
  %v841 = vpack.c.b16 %v687, %v685
  %v842 = vpack.c.b16 %v690, %v688
  %v843 = vpack.c.b16 %v691, %v689
  %v844 = vpack.c.b16 %v694, %v692
  %v845 = vpack.c.b16 %v695, %v693
  %v846 = vpack.c.b16 %v698, %v696
  %v847 = vpack.c.b16 %v699, %v697
  %v848 = vpack.c.b16 %v702, %v700
  %v849 = vpack.c.b16 %v703, %v701
  %v850 = vpack.c.b16 %v706, %v704
  %v851 = vpack.c.b16 %v707, %v705
  %996 = vmatpush.bf16.msra.mxu0 %v722
  %997 = vmatpush.bf16.msra.mxu0 %v720
  %998 = vmatpush.bf16.msra.mxu0 %v718
  %999 = vmatpush.bf16.msra.mxu0 %v716
  %1000 = vmatpush.bf16.msra.mxu0 %v714
  %1001 = vmatpush.bf16.msra.mxu0 %v712
  %1002 = vmatpush.bf16.msra.mxu0 %v710
  %1003 = vmatpush.bf16.msra.mxu0 %v708
  %1004 = vmatmul.bf16.gmra.mxu0 %v240
  %v1005 = vpop.f32.mrf.mxu0
  %v1006 = vadd.f32 %v180, %v1005
  %v1007 = vpop.f32.mrf.mxu0
  %v1008 = vadd.f32 %v180, %v1007
  %1009 = vmatmul.bf16.gmra.mxu0 %v249
  %v1010 = vpop.f32.mrf.mxu0
  %v1011 = vadd.f32 %v180, %v1010
  %v1012 = vpop.f32.mrf.mxu0
  %v1013 = vadd.f32 %v180, %v1012
  %1014 = vdwg.mxu0
  %1015 = vmatpush.bf16.msra.mxu0 %v738
  %1016 = vmatpush.bf16.msra.mxu0 %v736
  %1017 = vmatpush.bf16.msra.mxu0 %v734
  %1018 = vmatpush.bf16.msra.mxu0 %v732
  %1019 = vmatpush.bf16.msra.mxu0 %v730
  %1020 = vmatpush.bf16.msra.mxu0 %v728
  %1021 = vmatpush.bf16.msra.mxu0 %v726
  %1022 = vmatpush.bf16.msra.mxu0 %v724
  %1023 = vmatmul.bf16.gmra.mxu0 %v241
  %v1024 = vpop.f32.mrf.mxu0
  %v1025 = vadd.f32 %v1006, %v1024
  %v1026 = vpop.f32.mrf.mxu0
  %v1027 = vadd.f32 %v1008, %v1026
  %1028 = vmatmul.bf16.gmra.mxu0 %v250
  %v1029 = vpop.f32.mrf.mxu0
  %v1030 = vadd.f32 %v1011, %v1029
  %v1031 = vpop.f32.mrf.mxu0
  %v1032 = vadd.f32 %v1013, %v1031
  %1033 = vdwg.mxu0
  %1034 = vmatpush.bf16.msra.mxu0 %v754
  %1035 = vmatpush.bf16.msra.mxu0 %v752
  %1036 = vmatpush.bf16.msra.mxu0 %v750
  %1037 = vmatpush.bf16.msra.mxu0 %v748
  %1038 = vmatpush.bf16.msra.mxu0 %v746
  %1039 = vmatpush.bf16.msra.mxu0 %v744
  %1040 = vmatpush.bf16.msra.mxu0 %v742
  %1041 = vmatpush.bf16.msra.mxu0 %v740
  %1042 = vmatmul.bf16.gmra.mxu0 %v242
  %v1043 = vpop.f32.mrf.mxu0
  %v1044 = vadd.f32 %v1025, %v1043
  %v1045 = vpop.f32.mrf.mxu0
  %v1046 = vadd.f32 %v1027, %v1045
  %1047 = vmatmul.bf16.gmra.mxu0 %v251
  %v1048 = vpop.f32.mrf.mxu0
  %v1049 = vadd.f32 %v1030, %v1048
  %v1050 = vpop.f32.mrf.mxu0
  %v1051 = vadd.f32 %v1032, %v1050
  %1052 = vdwg.mxu0
  %1053 = vmatpush.bf16.msra.mxu0 %v770
  %1054 = vmatpush.bf16.msra.mxu0 %v768
  %1055 = vmatpush.bf16.msra.mxu0 %v766
  %1056 = vmatpush.bf16.msra.mxu0 %v764
  %1057 = vmatpush.bf16.msra.mxu0 %v762
  %1058 = vmatpush.bf16.msra.mxu0 %v760
  %1059 = vmatpush.bf16.msra.mxu0 %v758
  %1060 = vmatpush.bf16.msra.mxu0 %v756
  %1061 = vmatmul.bf16.gmra.mxu0 %v243
  %v1062 = vpop.f32.mrf.mxu0
  %v1063 = vadd.f32 %v1044, %v1062
  %v1064 = vpop.f32.mrf.mxu0
  %v1065 = vadd.f32 %v1046, %v1064
  %1066 = vmatmul.bf16.gmra.mxu0 %v252
  %v1067 = vpop.f32.mrf.mxu0
  %v1068 = vadd.f32 %v1049, %v1067
  %v1069 = vpop.f32.mrf.mxu0
  %v1070 = vadd.f32 %v1051, %v1069
  %1071 = vdwg.mxu0
  %1072 = vmatpush.bf16.msra.mxu0 %v786
  %1073 = vmatpush.bf16.msra.mxu0 %v784
  %1074 = vmatpush.bf16.msra.mxu0 %v782
  %1075 = vmatpush.bf16.msra.mxu0 %v780
  %1076 = vmatpush.bf16.msra.mxu0 %v778
  %1077 = vmatpush.bf16.msra.mxu0 %v776
  %1078 = vmatpush.bf16.msra.mxu0 %v774
  %1079 = vmatpush.bf16.msra.mxu0 %v772
  %1080 = vmatmul.bf16.gmra.mxu0 %v244
  %v1081 = vpop.f32.mrf.mxu0
  %v1082 = vadd.f32 %v1063, %v1081
  %v1083 = vpop.f32.mrf.mxu0
  %v1084 = vadd.f32 %v1065, %v1083
  %1085 = vmatmul.bf16.gmra.mxu0 %v253
  %v1086 = vpop.f32.mrf.mxu0
  %v1087 = vadd.f32 %v1068, %v1086
  %v1088 = vpop.f32.mrf.mxu0
  %v1089 = vadd.f32 %v1070, %v1088
  %1090 = vdwg.mxu0
  %1091 = vmatpush.bf16.msra.mxu0 %v802
  %1092 = vmatpush.bf16.msra.mxu0 %v800
  %1093 = vmatpush.bf16.msra.mxu0 %v798
  %1094 = vmatpush.bf16.msra.mxu0 %v796
  %1095 = vmatpush.bf16.msra.mxu0 %v794
  %1096 = vmatpush.bf16.msra.mxu0 %v792
  %1097 = vmatpush.bf16.msra.mxu0 %v790
  %1098 = vmatpush.bf16.msra.mxu0 %v788
  %1099 = vmatmul.bf16.gmra.mxu0 %v245
  %v1100 = vpop.f32.mrf.mxu0
  %v1101 = vadd.f32 %v1082, %v1100
  %v1102 = vpop.f32.mrf.mxu0
  %v1103 = vadd.f32 %v1084, %v1102
  %1104 = vmatmul.bf16.gmra.mxu0 %v254
  %v1105 = vpop.f32.mrf.mxu0
  %v1106 = vadd.f32 %v1087, %v1105
  %v1107 = vpop.f32.mrf.mxu0
  %v1108 = vadd.f32 %v1089, %v1107
  %1109 = vdwg.mxu0
  %1110 = vmatpush.bf16.msra.mxu0 %v818
  %1111 = vmatpush.bf16.msra.mxu0 %v816
  %1112 = vmatpush.bf16.msra.mxu0 %v814
  %1113 = vmatpush.bf16.msra.mxu0 %v812
  %1114 = vmatpush.bf16.msra.mxu0 %v810
  %1115 = vmatpush.bf16.msra.mxu0 %v808
  %1116 = vmatpush.bf16.msra.mxu0 %v806
  %1117 = vmatpush.bf16.msra.mxu0 %v804
  %1118 = vmatmul.bf16.gmra.mxu0 %v246
  %v1119 = vpop.f32.mrf.mxu0
  %v1120 = vadd.f32 %v1101, %v1119
  %v1121 = vpop.f32.mrf.mxu0
  %v1122 = vadd.f32 %v1103, %v1121
  %1123 = vmatmul.bf16.gmra.mxu0 %v255
  %v1124 = vpop.f32.mrf.mxu0
  %v1125 = vadd.f32 %v1106, %v1124
  %v1126 = vpop.f32.mrf.mxu0
  %v1127 = vadd.f32 %v1108, %v1126
  %1128 = vdwg.mxu0
  %1129 = vmatpush.bf16.msra.mxu0 %v834
  %1130 = vmatpush.bf16.msra.mxu0 %v832
  %1131 = vmatpush.bf16.msra.mxu0 %v830
  %1132 = vmatpush.bf16.msra.mxu0 %v828
  %1133 = vmatpush.bf16.msra.mxu0 %v826
  %1134 = vmatpush.bf16.msra.mxu0 %v824
  %1135 = vmatpush.bf16.msra.mxu0 %v822
  %1136 = vmatpush.bf16.msra.mxu0 %v820
  %1137 = vmatmul.bf16.gmra.mxu0 %v247
  %v1138 = vpop.f32.mrf.mxu0
  %v1139 = vadd.f32 %v1120, %v1138
  %v1140 = vpop.f32.mrf.mxu0
  %v1141 = vadd.f32 %v1122, %v1140
  %1142 = vmatmul.bf16.gmra.mxu0 %v256
  %v1143 = vpop.f32.mrf.mxu0
  %v1144 = vadd.f32 %v1125, %v1143
  %v1145 = vpop.f32.mrf.mxu0
  %v1146 = vadd.f32 %v1127, %v1145
  %1147 = vdwg.mxu0
  %1148 = vmatpush.bf16.msra.mxu0 %v850
  %1149 = vmatpush.bf16.msra.mxu0 %v848
  %1150 = vmatpush.bf16.msra.mxu0 %v846
  %1151 = vmatpush.bf16.msra.mxu0 %v844
  %1152 = vmatpush.bf16.msra.mxu0 %v842
  %1153 = vmatpush.bf16.msra.mxu0 %v840
  %1154 = vmatpush.bf16.msra.mxu0 %v838
  %1155 = vmatpush.bf16.msra.mxu0 %v836
  %1156 = vmatmul.bf16.gmra.mxu0 %v248
  %v1157 = vpop.f32.mrf.mxu0
  %v1158 = vadd.f32 %v1139, %v1157
  %v1159 = vpop.f32.mrf.mxu0
  %v1160 = vadd.f32 %v1141, %v1159
  %1161 = vmatmul.bf16.gmra.mxu0 %v257
  %v1162 = vpop.f32.mrf.mxu0
  %v1163 = vadd.f32 %v1144, %v1162
  %v1164 = vpop.f32.mrf.mxu0
  %v1165 = vadd.f32 %v1146, %v1164
  %1166 = vdwg.mxu0
  %1167 = vmatpush.bf16.msra.mxu0 %v723
  %1168 = vmatpush.bf16.msra.mxu0 %v721
  %1169 = vmatpush.bf16.msra.mxu0 %v719
  %1170 = vmatpush.bf16.msra.mxu0 %v717
  %1171 = vmatpush.bf16.msra.mxu0 %v715
  %1172 = vmatpush.bf16.msra.mxu0 %v713
  %1173 = vmatpush.bf16.msra.mxu0 %v711
  %1174 = vmatpush.bf16.msra.mxu0 %v709
  %1175 = vmatmul.bf16.gmra.mxu0 %v240
  %v1176 = vpop.f32.mrf.mxu0
  %v1177 = vadd.f32 %v181, %v1176
  %v1178 = vpop.f32.mrf.mxu0
  %v1179 = vadd.f32 %v181, %v1178
  %1180 = vmatmul.bf16.gmra.mxu0 %v249
  %v1181 = vpop.f32.mrf.mxu0
  %v1182 = vadd.f32 %v181, %v1181
  %v1183 = vpop.f32.mrf.mxu0
  %v1184 = vadd.f32 %v181, %v1183
  %1185 = vdwg.mxu0
  %1186 = vmatpush.bf16.msra.mxu0 %v739
  %1187 = vmatpush.bf16.msra.mxu0 %v737
  %1188 = vmatpush.bf16.msra.mxu0 %v735
  %1189 = vmatpush.bf16.msra.mxu0 %v733
  %1190 = vmatpush.bf16.msra.mxu0 %v731
  %1191 = vmatpush.bf16.msra.mxu0 %v729
  %1192 = vmatpush.bf16.msra.mxu0 %v727
  %1193 = vmatpush.bf16.msra.mxu0 %v725
  %1194 = vmatmul.bf16.gmra.mxu0 %v241
  %v1195 = vpop.f32.mrf.mxu0
  %v1196 = vadd.f32 %v1177, %v1195
  %v1197 = vpop.f32.mrf.mxu0
  %v1198 = vadd.f32 %v1179, %v1197
  %1199 = vmatmul.bf16.gmra.mxu0 %v250
  %v1200 = vpop.f32.mrf.mxu0
  %v1201 = vadd.f32 %v1182, %v1200
  %v1202 = vpop.f32.mrf.mxu0
  %v1203 = vadd.f32 %v1184, %v1202
  %1204 = vdwg.mxu0
  %1205 = vmatpush.bf16.msra.mxu0 %v755
  %1206 = vmatpush.bf16.msra.mxu0 %v753
  %1207 = vmatpush.bf16.msra.mxu0 %v751
  %1208 = vmatpush.bf16.msra.mxu0 %v749
  %1209 = vmatpush.bf16.msra.mxu0 %v747
  %1210 = vmatpush.bf16.msra.mxu0 %v745
  %1211 = vmatpush.bf16.msra.mxu0 %v743
  %1212 = vmatpush.bf16.msra.mxu0 %v741
  %1213 = vmatmul.bf16.gmra.mxu0 %v242
  %v1214 = vpop.f32.mrf.mxu0
  %v1215 = vadd.f32 %v1196, %v1214
  %v1216 = vpop.f32.mrf.mxu0
  %v1217 = vadd.f32 %v1198, %v1216
  %1218 = vmatmul.bf16.gmra.mxu0 %v251
  %v1219 = vpop.f32.mrf.mxu0
  %v1220 = vadd.f32 %v1201, %v1219
  %v1221 = vpop.f32.mrf.mxu0
  %v1222 = vadd.f32 %v1203, %v1221
  %1223 = vdwg.mxu0
  %1224 = vmatpush.bf16.msra.mxu0 %v771
  %1225 = vmatpush.bf16.msra.mxu0 %v769
  %1226 = vmatpush.bf16.msra.mxu0 %v767
  %1227 = vmatpush.bf16.msra.mxu0 %v765
  %1228 = vmatpush.bf16.msra.mxu0 %v763
  %1229 = vmatpush.bf16.msra.mxu0 %v761
  %1230 = vmatpush.bf16.msra.mxu0 %v759
  %1231 = vmatpush.bf16.msra.mxu0 %v757
  %1232 = vmatmul.bf16.gmra.mxu0 %v243
  %v1233 = vpop.f32.mrf.mxu0
  %v1234 = vadd.f32 %v1215, %v1233
  %v1235 = vpop.f32.mrf.mxu0
  %v1236 = vadd.f32 %v1217, %v1235
  %1237 = vmatmul.bf16.gmra.mxu0 %v252
  %v1238 = vpop.f32.mrf.mxu0
  %v1239 = vadd.f32 %v1220, %v1238
  %v1240 = vpop.f32.mrf.mxu0
  %v1241 = vadd.f32 %v1222, %v1240
  %1242 = vdwg.mxu0
  %1243 = vmatpush.bf16.msra.mxu0 %v787
  %1244 = vmatpush.bf16.msra.mxu0 %v785
  %1245 = vmatpush.bf16.msra.mxu0 %v783
  %1246 = vmatpush.bf16.msra.mxu0 %v781
  %1247 = vmatpush.bf16.msra.mxu0 %v779
  %1248 = vmatpush.bf16.msra.mxu0 %v777
  %1249 = vmatpush.bf16.msra.mxu0 %v775
  %1250 = vmatpush.bf16.msra.mxu0 %v773
  %1251 = vmatmul.bf16.gmra.mxu0 %v244
  %v1252 = vpop.f32.mrf.mxu0
  %v1253 = vadd.f32 %v1234, %v1252
  %v1254 = vpop.f32.mrf.mxu0
  %v1255 = vadd.f32 %v1236, %v1254
  %1256 = vmatmul.bf16.gmra.mxu0 %v253
  %v1257 = vpop.f32.mrf.mxu0
  %v1258 = vadd.f32 %v1239, %v1257
  %v1259 = vpop.f32.mrf.mxu0
  %v1260 = vadd.f32 %v1241, %v1259
  %1261 = vdwg.mxu0
  %1262 = vmatpush.bf16.msra.mxu0 %v803
  %1263 = vmatpush.bf16.msra.mxu0 %v801
  %1264 = vmatpush.bf16.msra.mxu0 %v799
  %1265 = vmatpush.bf16.msra.mxu0 %v797
  %1266 = vmatpush.bf16.msra.mxu0 %v795
  %1267 = vmatpush.bf16.msra.mxu0 %v793
  %1268 = vmatpush.bf16.msra.mxu0 %v791
  %1269 = vmatpush.bf16.msra.mxu0 %v789
  %1270 = vmatmul.bf16.gmra.mxu0 %v245
  %v1271 = vpop.f32.mrf.mxu0
  %v1272 = vadd.f32 %v1253, %v1271
  %v1273 = vpop.f32.mrf.mxu0
  %v1274 = vadd.f32 %v1255, %v1273
  %1275 = vmatmul.bf16.gmra.mxu0 %v254
  %v1276 = vpop.f32.mrf.mxu0
  %v1277 = vadd.f32 %v1258, %v1276
  %v1278 = vpop.f32.mrf.mxu0
  %v1279 = vadd.f32 %v1260, %v1278
  %1280 = vdwg.mxu0
  %1281 = vmatpush.bf16.msra.mxu0 %v819
  %1282 = vmatpush.bf16.msra.mxu0 %v817
  %1283 = vmatpush.bf16.msra.mxu0 %v815
  %1284 = vmatpush.bf16.msra.mxu0 %v813
  %1285 = vmatpush.bf16.msra.mxu0 %v811
  %1286 = vmatpush.bf16.msra.mxu0 %v809
  %1287 = vmatpush.bf16.msra.mxu0 %v807
  %1288 = vmatpush.bf16.msra.mxu0 %v805
  %1289 = vmatmul.bf16.gmra.mxu0 %v246
  %v1290 = vpop.f32.mrf.mxu0
  %v1291 = vadd.f32 %v1272, %v1290
  %v1292 = vpop.f32.mrf.mxu0
  %v1293 = vadd.f32 %v1274, %v1292
  %1294 = vmatmul.bf16.gmra.mxu0 %v255
  %v1295 = vpop.f32.mrf.mxu0
  %v1296 = vadd.f32 %v1277, %v1295
  %v1297 = vpop.f32.mrf.mxu0
  %v1298 = vadd.f32 %v1279, %v1297
  %1299 = vdwg.mxu0
  %1300 = vmatpush.bf16.msra.mxu0 %v835
  %1301 = vmatpush.bf16.msra.mxu0 %v833
  %1302 = vmatpush.bf16.msra.mxu0 %v831
  %1303 = vmatpush.bf16.msra.mxu0 %v829
  %1304 = vmatpush.bf16.msra.mxu0 %v827
  %1305 = vmatpush.bf16.msra.mxu0 %v825
  %1306 = vmatpush.bf16.msra.mxu0 %v823
  %1307 = vmatpush.bf16.msra.mxu0 %v821
  %1308 = vmatmul.bf16.gmra.mxu0 %v247
  %v1309 = vpop.f32.mrf.mxu0
  %v1310 = vadd.f32 %v1291, %v1309
  %v1311 = vpop.f32.mrf.mxu0
  %v1312 = vadd.f32 %v1293, %v1311
  %1313 = vmatmul.bf16.gmra.mxu0 %v256
  %v1314 = vpop.f32.mrf.mxu0
  %v1315 = vadd.f32 %v1296, %v1314
  %v1316 = vpop.f32.mrf.mxu0
  %v1317 = vadd.f32 %v1298, %v1316
  %1318 = vdwg.mxu0
  %1319 = vmatpush.bf16.msra.mxu0 %v851
  %1320 = vmatpush.bf16.msra.mxu0 %v849
  %1321 = vmatpush.bf16.msra.mxu0 %v847
  %1322 = vmatpush.bf16.msra.mxu0 %v845
  %1323 = vmatpush.bf16.msra.mxu0 %v843
  %1324 = vmatpush.bf16.msra.mxu0 %v841
  %1325 = vmatpush.bf16.msra.mxu0 %v839
  %1326 = vmatpush.bf16.msra.mxu0 %v837
  %1327 = vmatmul.bf16.gmra.mxu0 %v248
  %v1328 = vpop.f32.mrf.mxu0
  %v1329 = vadd.f32 %v1310, %v1328
  %v1330 = vpop.f32.mrf.mxu0
  %v1331 = vadd.f32 %v1312, %v1330
  %1332 = vmatmul.bf16.gmra.mxu0 %v257
  %v1333 = vpop.f32.mrf.mxu0
  %v1334 = vadd.f32 %v1315, %v1333
  %v1335 = vpop.f32.mrf.mxu0
  %v1336 = vadd.f32 %v1317, %v1335
  %1337 = vdwg.mxu0
  %v1338 = vmax.f32 %v1158, 0.0
  %v1339 = vmax.f32 %v1329, 0.0
  %v1340 = vmax.f32 %v1160, 0.0
  %v1341 = vmax.f32 %v1331, 0.0
  %v1342 = vmax.f32 %v1163, 0.0
  %v1343 = vmax.f32 %v1334, 0.0
  %v1344 = vmax.f32 %v1165, 0.0
  %v1345 = vmax.f32 %v1336, 0.0
  %v1346 = vpack.c.bf16 %v1339, %v1338
  %v1347 = vpack.c.bf16 %v1341, %v1340
  %v1348 = vpack.c.bf16 %v1343, %v1342
  %v1349 = vpack.c.bf16 %v1345, %v1344
  %1350 = vst [vmem:[%s3] sm:$0xff] %v1346
  %1351 = vst [vmem:[%s3 + $0x8] sm:$0xff] %v1347
  %1352 = vst [vmem:[%s3 + $0x10] sm:$0xff] %v1348
  %1353 = vst [vmem:[%s3 + $0x18] sm:$0xff] %v1349
  // Predicated region
  $region14: #{_lambda_.13} parent=0 // pred_check
    _
  $region15: #{_lambda_.13} parent=0 // pred_check_branch
    %1355 = sbr.rel (0) target = $region17
  $region16: #{_lambda_.13} parent=0 // pred_region
    _
  $region17: #{_lambda_.13} parent=0 // pred_fallthru
    _
  // Predicated region
  $region18: #{_lambda_.13} parent=0 // pred_check
    _
  $region19: #{_lambda_.13} parent=0 // pred_check_branch
    %1357 = sbr.rel (0) target = $region21
  $region20: #{_lambda_.13} parent=0 // pred_region
    _
  $region21: #{_lambda_.13} parent=0 // pred_fallthru
    _

// kernel: _lambda_.17
$region0: #{_lambda_.17}
  #allocation0 [shape = 'u32[]', space=smem, size = 0x4, offset = 0x4, fixed_abs, tag = 'smem constant byte address 0x4 - core index']
  #allocation1 [shape = 'u32[72,128]{1,0:T(1,128)}', space=vmem, size = 0x9000, scoped, tag = 'internal scratch']
  %s0 = inlined_call_operand.vmem [shape: bf16[128,512], index: 0, kind: input, shape index: {}]
  %s1 = inlined_call_operand.vmem [shape: bf16[512,256], index: 1, kind: input, shape index: {}]
  %s2 = inlined_call_operand.vmem [shape: f32[1,256], index: 2, kind: input, shape index: {}]
  %s3 = inlined_call_operand.vmem [shape: bf16[128,256], index: 3, kind: output, shape index: {}]
  %s4 = sld [smem:[#allocation0]]
  $region22: #{_lambda_.17} parent=0
    _
  %s6 = ssub.s32 1, %s4
  %s7 = scalar_select 0, %s6, %s4
  // Predicated region
  $region2: #{_lambda_.17} parent=0 // pred_check
    _
  $region3: #{_lambda_.17} parent=0 // pred_check_branch
    %9 = sbr.rel (0) target = $region5
  $region4: #{_lambda_.17} parent=0 // pred_region
    _
  $region5: #{_lambda_.17} parent=0 // pred_fallthru
    _
  // Predicated region
  $region6: #{_lambda_.17} parent=0 // pred_check
    _
  $region7: #{_lambda_.17} parent=0 // pred_check_branch
    %11 = sbr.rel (0) target = $region9
  $region8: #{_lambda_.17} parent=0 // pred_region
    _
  $region9: #{_lambda_.17} parent=0 // pred_fallthru
    _
  // Predicated region
  $region10: #{_lambda_.17} parent=0 // pred_check
    _
  $region11: #{_lambda_.17} parent=0 // pred_check_branch
    %13 = sbr.rel (0) target = $region13
  $region12: #{_lambda_.17} parent=0 // pred_region
    _
  $region13: #{_lambda_.17} parent=0 // pred_fallthru
    _
  %v14 = vld [vmem:[%s0] sm:$0xff]
  %v15 = vld [vmem:[%s0 + $0x8] sm:$0xff]
  %v16 = vld [vmem:[%s0 + $0x10] sm:$0xff]
  %v17 = vld [vmem:[%s0 + $0x18] sm:$0xff]
  %v18 = vld [vmem:[%s0 + $0x20] sm:$0xff]
  %v19 = vld [vmem:[%s0 + $0x28] sm:$0xff]
  %v20 = vld [vmem:[%s0 + $0x30] sm:$0xff]
  %v21 = vld [vmem:[%s0 + $0x38] sm:$0xff]
  %v22 = vld [vmem:[%s0 + $0x40] sm:$0xff]
  %v23 = vld [vmem:[%s0 + $0x48] sm:$0xff]
  %v24 = vld [vmem:[%s0 + $0x50] sm:$0xff]
  %v25 = vld [vmem:[%s0 + $0x58] sm:$0xff]
  %v26 = vld [vmem:[%s0 + $0x60] sm:$0xff]
  %v27 = vld [vmem:[%s0 + $0x68] sm:$0xff]
  %v28 = vld [vmem:[%s0 + $0x70] sm:$0xff]
  %v29 = vld [vmem:[%s0 + $0x78] sm:$0xff]
  %v30 = vld [vmem:[%s0 + $0x80] sm:$0xff]
  %v31 = vld [vmem:[%s0 + $0x88] sm:$0xff]
  %v32 = vld [vmem:[%s0 + $0x90] sm:$0xff]
  %v33 = vld [vmem:[%s0 + $0x98] sm:$0xff]
  %v34 = vld [vmem:[%s0 + $0xa0] sm:$0xff]
  %v35 = vld [vmem:[%s0 + $0xa8] sm:$0xff]
  %v36 = vld [vmem:[%s0 + $0xb0] sm:$0xff]
  %v37 = vld [vmem:[%s0 + $0xb8] sm:$0xff]
  %v38 = vld [vmem:[%s0 + $0xc0] sm:$0xff]
  %v39 = vld [vmem:[%s0 + $0xc8] sm:$0xff]
  %v40 = vld [vmem:[%s0 + $0xd0] sm:$0xff]
  %v41 = vld [vmem:[%s0 + $0xd8] sm:$0xff]
  %v42 = vld [vmem:[%s0 + $0xe0] sm:$0xff]
  %v43 = vld [vmem:[%s0 + $0xe8] sm:$0xff]
  %v44 = vld [vmem:[%s0 + $0xf0] sm:$0xff]
  %v45 = vld [vmem:[%s0 + $0xf8] sm:$0xff]
  %v46 = vld [vmem:[%s1] sm:$0xff]
  %v47 = vld [vmem:[%s1 + $0x8] sm:$0xff]
  %v48 = vld [vmem:[%s1 + $0x10] sm:$0xff]
  %v49 = vld [vmem:[%s1 + $0x18] sm:$0xff]
  %v50 = vld [vmem:[%s1 + $0x20] sm:$0xff]
  %v51 = vld [vmem:[%s1 + $0x28] sm:$0xff]
  %v52 = vld [vmem:[%s1 + $0x30] sm:$0xff]
  %v53 = vld [vmem:[%s1 + $0x38] sm:$0xff]
  %v54 = vld [vmem:[%s1 + $0x40] sm:$0xff]
  %v55 = vld [vmem:[%s1 + $0x48] sm:$0xff]
  %v56 = vld [vmem:[%s1 + $0x50] sm:$0xff]
  %v57 = vld [vmem:[%s1 + $0x58] sm:$0xff]
  %v58 = vld [vmem:[%s1 + $0x60] sm:$0xff]
  %v59 = vld [vmem:[%s1 + $0x68] sm:$0xff]
  %v60 = vld [vmem:[%s1 + $0x70] sm:$0xff]
  %v61 = vld [vmem:[%s1 + $0x78] sm:$0xff]
  %v62 = vld [vmem:[%s1 + $0x80] sm:$0xff]
  %v63 = vld [vmem:[%s1 + $0x88] sm:$0xff]
  %v64 = vld [vmem:[%s1 + $0x90] sm:$0xff]
  %v65 = vld [vmem:[%s1 + $0x98] sm:$0xff]
  %v66 = vld [vmem:[%s1 + $0xa0] sm:$0xff]
  %v67 = vld [vmem:[%s1 + $0xa8] sm:$0xff]
  %v68 = vld [vmem:[%s1 + $0xb0] sm:$0xff]
  %v69 = vld [vmem:[%s1 + $0xb8] sm:$0xff]
  %v70 = vld [vmem:[%s1 + $0xc0] sm:$0xff]
  %v71 = vld [vmem:[%s1 + $0xc8] sm:$0xff]
  %v72 = vld [vmem:[%s1 + $0xd0] sm:$0xff]
  %v73 = vld [vmem:[%s1 + $0xd8] sm:$0xff]
  %v74 = vld [vmem:[%s1 + $0xe0] sm:$0xff]
  %v75 = vld [vmem:[%s1 + $0xe8] sm:$0xff]
  %v76 = vld [vmem:[%s1 + $0xf0] sm:$0xff]
  %v77 = vld [vmem:[%s1 + $0xf8] sm:$0xff]
  %v78 = vld [vmem:[%s1 + $0x100] sm:$0xff]
  %v79 = vld [vmem:[%s1 + $0x108] sm:$0xff]
  %v80 = vld [vmem:[%s1 + $0x110] sm:$0xff]
  %v81 = vld [vmem:[%s1 + $0x118] sm:$0xff]
  %v82 = vld [vmem:[%s1 + $0x120] sm:$0xff]
  %v83 = vld [vmem:[%s1 + $0x128] sm:$0xff]
  %v84 = vld [vmem:[%s1 + $0x130] sm:$0xff]
  %v85 = vld [vmem:[%s1 + $0x138] sm:$0xff]
  %v86 = vld [vmem:[%s1 + $0x140] sm:$0xff]
  %v87 = vld [vmem:[%s1 + $0x148] sm:$0xff]
  %v88 = vld [vmem:[%s1 + $0x150] sm:$0xff]
  %v89 = vld [vmem:[%s1 + $0x158] sm:$0xff]
  %v90 = vld [vmem:[%s1 + $0x160] sm:$0xff]
  %v91 = vld [vmem:[%s1 + $0x168] sm:$0xff]
  %v92 = vld [vmem:[%s1 + $0x170] sm:$0xff]
  %v93 = vld [vmem:[%s1 + $0x178] sm:$0xff]
  %v94 = vld [vmem:[%s1 + $0x180] sm:$0xff]
  %v95 = vld [vmem:[%s1 + $0x188] sm:$0xff]
  %v96 = vld [vmem:[%s1 + $0x190] sm:$0xff]
  %v97 = vld [vmem:[%s1 + $0x198] sm:$0xff]
  %v98 = vld [vmem:[%s1 + $0x1a0] sm:$0xff]
  %v99 = vld [vmem:[%s1 + $0x1a8] sm:$0xff]
  %v100 = vld [vmem:[%s1 + $0x1b0] sm:$0xff]
  %v101 = vld [vmem:[%s1 + $0x1b8] sm:$0xff]
  %v102 = vld [vmem:[%s1 + $0x1c0] sm:$0xff]
  %v103 = vld [vmem:[%s1 + $0x1c8] sm:$0xff]
  %v104 = vld [vmem:[%s1 + $0x1d0] sm:$0xff]
  %v105 = vld [vmem:[%s1 + $0x1d8] sm:$0xff]
  %v106 = vld [vmem:[%s1 + $0x1e0] sm:$0xff]
  %v107 = vld [vmem:[%s1 + $0x1e8] sm:$0xff]
  %v108 = vld [vmem:[%s1 + $0x1f0] sm:$0xff]
  %v109 = vld [vmem:[%s1 + $0x1f8] sm:$0xff]
  %v110 = vld [vmem:[%s2] sm:$0x3]
  %v112 = vperm.slane %v110, 0
  %v113 = vperm.slane %v110, 1
  %v148 = vunpack.c.l.b16 %v14
  %v149 = vunpack.c.h.b16 %v14
  %v150 = vunpack.c.l.b16 %v15
  %v151 = vunpack.c.h.b16 %v15
  %v152 = vunpack.c.l.b16 %v16
  %v153 = vunpack.c.h.b16 %v16
  %v154 = vunpack.c.l.b16 %v17
  %v155 = vunpack.c.h.b16 %v17
  %v156 = vunpack.c.l.b16 %v18
  %v157 = vunpack.c.h.b16 %v18
  %v158 = vunpack.c.l.b16 %v19
  %v159 = vunpack.c.h.b16 %v19
  %v160 = vunpack.c.l.b16 %v20
  %v161 = vunpack.c.h.b16 %v20
  %v162 = vunpack.c.l.b16 %v21
  %v163 = vunpack.c.h.b16 %v21
  %v164 = vunpack.c.l.b16 %v22
  %v165 = vunpack.c.h.b16 %v22
  %v166 = vunpack.c.l.b16 %v23
  %v167 = vunpack.c.h.b16 %v23
  %v168 = vunpack.c.l.b16 %v24
  %v169 = vunpack.c.h.b16 %v24
  %v170 = vunpack.c.l.b16 %v25
  %v171 = vunpack.c.h.b16 %v25
  %v172 = vunpack.c.l.b16 %v26
  %v173 = vunpack.c.h.b16 %v26
  %v174 = vunpack.c.l.b16 %v27
  %v175 = vunpack.c.h.b16 %v27
  %v176 = vunpack.c.l.b16 %v28
  %v177 = vunpack.c.h.b16 %v28
  %v178 = vunpack.c.l.b16 %v29
  %v179 = vunpack.c.h.b16 %v29
  %v180 = vunpack.c.l.b16 %v30
  %v181 = vunpack.c.h.b16 %v30
  %v182 = vunpack.c.l.b16 %v31
  %v183 = vunpack.c.h.b16 %v31
  %v184 = vunpack.c.l.b16 %v32
  %v185 = vunpack.c.h.b16 %v32
  %v186 = vunpack.c.l.b16 %v33
  %v187 = vunpack.c.h.b16 %v33
  %v188 = vunpack.c.l.b16 %v34
  %v189 = vunpack.c.h.b16 %v34
  %v190 = vunpack.c.l.b16 %v35
  %v191 = vunpack.c.h.b16 %v35
  %v192 = vunpack.c.l.b16 %v36
  %v193 = vunpack.c.h.b16 %v36
  %v194 = vunpack.c.l.b16 %v37
  %v195 = vunpack.c.h.b16 %v37
  %v196 = vunpack.c.l.b16 %v38
  %v197 = vunpack.c.h.b16 %v38
  %v198 = vunpack.c.l.b16 %v39
  %v199 = vunpack.c.h.b16 %v39
  %v200 = vunpack.c.l.b16 %v40
  %v201 = vunpack.c.h.b16 %v40
  %v202 = vunpack.c.l.b16 %v41
  %v203 = vunpack.c.h.b16 %v41
  %v204 = vunpack.c.l.b16 %v42
  %v205 = vunpack.c.h.b16 %v42
  %v206 = vunpack.c.l.b16 %v43
  %v207 = vunpack.c.h.b16 %v43
  %v208 = vunpack.c.l.b16 %v44
  %v209 = vunpack.c.h.b16 %v44
  %v210 = vunpack.c.l.b16 %v45
  %v211 = vunpack.c.h.b16 %v45
  %v212 = vpack.c.b16 %v152, %v148
  %v213 = vpack.c.b16 %v153, %v149
  %v214 = vpack.c.b16 %v154, %v150
  %v215 = vpack.c.b16 %v155, %v151
  %v216 = vpack.c.b16 %v160, %v156
  %v217 = vpack.c.b16 %v161, %v157
  %v218 = vpack.c.b16 %v162, %v158
  %v219 = vpack.c.b16 %v163, %v159
  %v220 = vpack.c.b16 %v168, %v164
  %v221 = vpack.c.b16 %v169, %v165
  %v222 = vpack.c.b16 %v170, %v166
  %v223 = vpack.c.b16 %v171, %v167
  %v224 = vpack.c.b16 %v176, %v172
  %v225 = vpack.c.b16 %v177, %v173
  %v226 = vpack.c.b16 %v178, %v174
  %v227 = vpack.c.b16 %v179, %v175
  %v228 = vpack.c.b16 %v184, %v180
  %v229 = vpack.c.b16 %v185, %v181
  %v230 = vpack.c.b16 %v186, %v182
  %v231 = vpack.c.b16 %v187, %v183
  %v232 = vpack.c.b16 %v192, %v188
  %v233 = vpack.c.b16 %v193, %v189
  %v234 = vpack.c.b16 %v194, %v190
  %v235 = vpack.c.b16 %v195, %v191
  %v236 = vpack.c.b16 %v200, %v196
  %v237 = vpack.c.b16 %v201, %v197
  %v238 = vpack.c.b16 %v202, %v198
  %v239 = vpack.c.b16 %v203, %v199
  %v240 = vpack.c.b16 %v208, %v204
  %v241 = vpack.c.b16 %v209, %v205
  %v242 = vpack.c.b16 %v210, %v206
  %v243 = vpack.c.b16 %v211, %v207
  %v340 = vunpack.c.l.b16 %v46
  %v341 = vunpack.c.h.b16 %v46
  %v342 = vunpack.c.l.b16 %v47
  %v343 = vunpack.c.h.b16 %v47
  %v344 = vunpack.c.l.b16 %v48
  %v345 = vunpack.c.h.b16 %v48
  %v346 = vunpack.c.l.b16 %v49
  %v347 = vunpack.c.h.b16 %v49
  %v348 = vunpack.c.l.b16 %v50
  %v349 = vunpack.c.h.b16 %v50
  %v350 = vunpack.c.l.b16 %v51
  %v351 = vunpack.c.h.b16 %v51
  %v352 = vunpack.c.l.b16 %v52
  %v353 = vunpack.c.h.b16 %v52
  %v354 = vunpack.c.l.b16 %v53
  %v355 = vunpack.c.h.b16 %v53
  %v356 = vunpack.c.l.b16 %v54
  %v357 = vunpack.c.h.b16 %v54
  %v358 = vunpack.c.l.b16 %v55
  %v359 = vunpack.c.h.b16 %v55
  %v360 = vunpack.c.l.b16 %v56
  %v361 = vunpack.c.h.b16 %v56
  %v362 = vunpack.c.l.b16 %v57
  %v363 = vunpack.c.h.b16 %v57
  %v364 = vunpack.c.l.b16 %v58
  %v365 = vunpack.c.h.b16 %v58
  %v366 = vunpack.c.l.b16 %v59
  %v367 = vunpack.c.h.b16 %v59
  %v368 = vunpack.c.l.b16 %v60
  %v369 = vunpack.c.h.b16 %v60
  %v370 = vunpack.c.l.b16 %v61
  %v371 = vunpack.c.h.b16 %v61
  %v372 = vunpack.c.l.b16 %v62
  %v373 = vunpack.c.h.b16 %v62
  %v374 = vunpack.c.l.b16 %v63
  %v375 = vunpack.c.h.b16 %v63
  %v376 = vunpack.c.l.b16 %v64
  %v377 = vunpack.c.h.b16 %v64
  %v378 = vunpack.c.l.b16 %v65
  %v379 = vunpack.c.h.b16 %v65
  %v380 = vunpack.c.l.b16 %v66
  %v381 = vunpack.c.h.b16 %v66
  %v382 = vunpack.c.l.b16 %v67
  %v383 = vunpack.c.h.b16 %v67
  %v384 = vunpack.c.l.b16 %v68
  %v385 = vunpack.c.h.b16 %v68
  %v386 = vunpack.c.l.b16 %v69
  %v387 = vunpack.c.h.b16 %v69
  %v388 = vunpack.c.l.b16 %v70
  %v389 = vunpack.c.h.b16 %v70
  %v390 = vunpack.c.l.b16 %v71
  %v391 = vunpack.c.h.b16 %v71
  %v392 = vunpack.c.l.b16 %v72
  %v393 = vunpack.c.h.b16 %v72
  %v394 = vunpack.c.l.b16 %v73
  %v395 = vunpack.c.h.b16 %v73
  %v396 = vunpack.c.l.b16 %v74
  %v397 = vunpack.c.h.b16 %v74
  %v398 = vunpack.c.l.b16 %v75
  %v399 = vunpack.c.h.b16 %v75
  %v400 = vunpack.c.l.b16 %v76
  %v401 = vunpack.c.h.b16 %v76
  %v402 = vunpack.c.l.b16 %v77
  %v403 = vunpack.c.h.b16 %v77
  %v404 = vunpack.c.l.b16 %v78
  %v405 = vunpack.c.h.b16 %v78
  %v406 = vunpack.c.l.b16 %v79
  %v407 = vunpack.c.h.b16 %v79
  %v408 = vunpack.c.l.b16 %v80
  %v409 = vunpack.c.h.b16 %v80
  %v410 = vunpack.c.l.b16 %v81
  %v411 = vunpack.c.h.b16 %v81
  %v412 = vunpack.c.l.b16 %v82
  %v413 = vunpack.c.h.b16 %v82
  %v414 = vunpack.c.l.b16 %v83
  %v415 = vunpack.c.h.b16 %v83
  %v416 = vunpack.c.l.b16 %v84
  %v417 = vunpack.c.h.b16 %v84
  %v418 = vunpack.c.l.b16 %v85
  %v419 = vunpack.c.h.b16 %v85
  %v420 = vunpack.c.l.b16 %v86
  %v421 = vunpack.c.h.b16 %v86
  %v422 = vunpack.c.l.b16 %v87
  %v423 = vunpack.c.h.b16 %v87
  %v424 = vunpack.c.l.b16 %v88
  %v425 = vunpack.c.h.b16 %v88
  %v426 = vunpack.c.l.b16 %v89
  %v427 = vunpack.c.h.b16 %v89
  %v428 = vunpack.c.l.b16 %v90
  %v429 = vunpack.c.h.b16 %v90
  %v430 = vunpack.c.l.b16 %v91
  %v431 = vunpack.c.h.b16 %v91
  %v432 = vunpack.c.l.b16 %v92
  %v433 = vunpack.c.h.b16 %v92
  %v434 = vunpack.c.l.b16 %v93
  %v435 = vunpack.c.h.b16 %v93
  %v436 = vunpack.c.l.b16 %v94
  %v437 = vunpack.c.h.b16 %v94
  %v438 = vunpack.c.l.b16 %v95
  %v439 = vunpack.c.h.b16 %v95
  %v440 = vunpack.c.l.b16 %v96
  %v441 = vunpack.c.h.b16 %v96
  %v442 = vunpack.c.l.b16 %v97
  %v443 = vunpack.c.h.b16 %v97
  %v444 = vunpack.c.l.b16 %v98
  %v445 = vunpack.c.h.b16 %v98
  %v446 = vunpack.c.l.b16 %v99
  %v447 = vunpack.c.h.b16 %v99
  %v448 = vunpack.c.l.b16 %v100
  %v449 = vunpack.c.h.b16 %v100
  %v450 = vunpack.c.l.b16 %v101
  %v451 = vunpack.c.h.b16 %v101
  %v452 = vunpack.c.l.b16 %v102
  %v453 = vunpack.c.h.b16 %v102
  %v454 = vunpack.c.l.b16 %v103
  %v455 = vunpack.c.h.b16 %v103
  %v456 = vunpack.c.l.b16 %v104
  %v457 = vunpack.c.h.b16 %v104
  %v458 = vunpack.c.l.b16 %v105
  %v459 = vunpack.c.h.b16 %v105
  %v460 = vunpack.c.l.b16 %v106
  %v461 = vunpack.c.h.b16 %v106
  %v462 = vunpack.c.l.b16 %v107
  %v463 = vunpack.c.h.b16 %v107
  %v464 = vunpack.c.l.b16 %v108
  %v465 = vunpack.c.h.b16 %v108
  %v466 = vunpack.c.l.b16 %v109
  %v467 = vunpack.c.h.b16 %v109
  %v468 = vpack.c.b16 %v342, %v340
  %v469 = vpack.c.b16 %v343, %v341
  %v470 = vpack.c.b16 %v346, %v344
  %v471 = vpack.c.b16 %v347, %v345
  %v472 = vpack.c.b16 %v350, %v348
  %v473 = vpack.c.b16 %v351, %v349
  %v474 = vpack.c.b16 %v354, %v352
  %v475 = vpack.c.b16 %v355, %v353
  %v476 = vpack.c.b16 %v358, %v356
  %v477 = vpack.c.b16 %v359, %v357
  %v478 = vpack.c.b16 %v362, %v360
  %v479 = vpack.c.b16 %v363, %v361
  %v480 = vpack.c.b16 %v366, %v364
  %v481 = vpack.c.b16 %v367, %v365
  %v482 = vpack.c.b16 %v370, %v368
  %v483 = vpack.c.b16 %v371, %v369
  %v484 = vpack.c.b16 %v374, %v372
  %v485 = vpack.c.b16 %v375, %v373
  %v486 = vpack.c.b16 %v378, %v376
  %v487 = vpack.c.b16 %v379, %v377
  %v488 = vpack.c.b16 %v382, %v380
  %v489 = vpack.c.b16 %v383, %v381
  %v490 = vpack.c.b16 %v386, %v384
  %v491 = vpack.c.b16 %v387, %v385
  %v492 = vpack.c.b16 %v390, %v388
  %v493 = vpack.c.b16 %v391, %v389
  %v494 = vpack.c.b16 %v394, %v392
  %v495 = vpack.c.b16 %v395, %v393
  %v496 = vpack.c.b16 %v398, %v396
  %v497 = vpack.c.b16 %v399, %v397
  %v498 = vpack.c.b16 %v402, %v400
  %v499 = vpack.c.b16 %v403, %v401
  %v500 = vpack.c.b16 %v406, %v404
  %v501 = vpack.c.b16 %v407, %v405
  %v502 = vpack.c.b16 %v410, %v408
  %v503 = vpack.c.b16 %v411, %v409
  %v504 = vpack.c.b16 %v414, %v412
  %v505 = vpack.c.b16 %v415, %v413
  %v506 = vpack.c.b16 %v418, %v416
  %v507 = vpack.c.b16 %v419, %v417
  %v508 = vpack.c.b16 %v422, %v420
  %v509 = vpack.c.b16 %v423, %v421
  %v510 = vpack.c.b16 %v426, %v424
  %v511 = vpack.c.b16 %v427, %v425
  %v512 = vpack.c.b16 %v430, %v428
  %v513 = vpack.c.b16 %v431, %v429
  %v514 = vpack.c.b16 %v434, %v432
  %v515 = vpack.c.b16 %v435, %v433
  %v516 = vpack.c.b16 %v438, %v436
  %v517 = vpack.c.b16 %v439, %v437
  %v518 = vpack.c.b16 %v442, %v440
  %v519 = vpack.c.b16 %v443, %v441
  %v520 = vpack.c.b16 %v446, %v444
  %v521 = vpack.c.b16 %v447, %v445
  %v522 = vpack.c.b16 %v450, %v448
  %v523 = vpack.c.b16 %v451, %v449
  %v524 = vpack.c.b16 %v454, %v452
  %v525 = vpack.c.b16 %v455, %v453
  %v526 = vpack.c.b16 %v458, %v456
  %v527 = vpack.c.b16 %v459, %v457
  %v528 = vpack.c.b16 %v462, %v460
  %v529 = vpack.c.b16 %v463, %v461
  %v530 = vpack.c.b16 %v466, %v464
  %v531 = vpack.c.b16 %v467, %v465
  %596 = vmatpush.bf16.msra.mxu0 %v482
  %597 = vmatpush.bf16.msra.mxu0 %v480
  %598 = vmatpush.bf16.msra.mxu0 %v478
  %599 = vmatpush.bf16.msra.mxu0 %v476
  %600 = vmatpush.bf16.msra.mxu0 %v474
  %601 = vmatpush.bf16.msra.mxu0 %v472
  %602 = vmatpush.bf16.msra.mxu0 %v470
  %603 = vmatpush.bf16.msra.mxu0 %v468
  %604 = vmatmul.bf16.gmra.mxu0 %v212
  %v605 = vpop.f32.mrf.mxu0
  %v606 = vadd.f32 %v112, %v605
  %v607 = vpop.f32.mrf.mxu0
  %v608 = vadd.f32 %v112, %v607
  %609 = vmatmul.bf16.gmra.mxu0 %v216
  %v610 = vpop.f32.mrf.mxu0
  %v611 = vadd.f32 %v112, %v610
  %v612 = vpop.f32.mrf.mxu0
  %v613 = vadd.f32 %v112, %v612
  %614 = vmatmul.bf16.gmra.mxu0 %v220
  %v615 = vpop.f32.mrf.mxu0
  %v616 = vadd.f32 %v112, %v615
  %v617 = vpop.f32.mrf.mxu0
  %v618 = vadd.f32 %v112, %v617
  %619 = vmatmul.bf16.gmra.mxu0 %v224
  %v620 = vpop.f32.mrf.mxu0
  %v621 = vadd.f32 %v112, %v620
  %v622 = vpop.f32.mrf.mxu0
  %v623 = vadd.f32 %v112, %v622
  %624 = vmatmul.bf16.gmra.mxu0 %v228
  %v625 = vpop.f32.mrf.mxu0
  %v626 = vadd.f32 %v112, %v625
  %v627 = vpop.f32.mrf.mxu0
  %v628 = vadd.f32 %v112, %v627
  %629 = vmatmul.bf16.gmra.mxu0 %v232
  %v630 = vpop.f32.mrf.mxu0
  %v631 = vadd.f32 %v112, %v630
  %v632 = vpop.f32.mrf.mxu0
  %v633 = vadd.f32 %v112, %v632
  %634 = vmatmul.bf16.gmra.mxu0 %v236
  %v635 = vpop.f32.mrf.mxu0
  %v636 = vadd.f32 %v112, %v635
  %v637 = vpop.f32.mrf.mxu0
  %v638 = vadd.f32 %v112, %v637
  %639 = vmatmul.bf16.gmra.mxu0 %v240
  %v640 = vpop.f32.mrf.mxu0
  %v641 = vadd.f32 %v112, %v640
  %v642 = vpop.f32.mrf.mxu0
  %v643 = vadd.f32 %v112, %v642
  %644 = vdwg.mxu0
  %645 = vmatpush.bf16.msra.mxu0 %v498
  %646 = vmatpush.bf16.msra.mxu0 %v496
  %647 = vmatpush.bf16.msra.mxu0 %v494
  %648 = vmatpush.bf16.msra.mxu0 %v492
  %649 = vmatpush.bf16.msra.mxu0 %v490
  %650 = vmatpush.bf16.msra.mxu0 %v488
  %651 = vmatpush.bf16.msra.mxu0 %v486
  %652 = vmatpush.bf16.msra.mxu0 %v484
  %653 = vmatmul.bf16.gmra.mxu0 %v213
  %v654 = vpop.f32.mrf.mxu0
  %v655 = vadd.f32 %v606, %v654
  %v656 = vpop.f32.mrf.mxu0
  %v657 = vadd.f32 %v608, %v656
  %658 = vmatmul.bf16.gmra.mxu0 %v217
  %v659 = vpop.f32.mrf.mxu0
  %v660 = vadd.f32 %v611, %v659
  %v661 = vpop.f32.mrf.mxu0
  %v662 = vadd.f32 %v613, %v661
  %663 = vmatmul.bf16.gmra.mxu0 %v221
  %v664 = vpop.f32.mrf.mxu0
  %v665 = vadd.f32 %v616, %v664
  %v666 = vpop.f32.mrf.mxu0
  %v667 = vadd.f32 %v618, %v666
  %668 = vmatmul.bf16.gmra.mxu0 %v225
  %v669 = vpop.f32.mrf.mxu0
  %v670 = vadd.f32 %v621, %v669
  %v671 = vpop.f32.mrf.mxu0
  %v672 = vadd.f32 %v623, %v671
  %673 = vmatmul.bf16.gmra.mxu0 %v229
  %v674 = vpop.f32.mrf.mxu0
  %v675 = vadd.f32 %v626, %v674
  %v676 = vpop.f32.mrf.mxu0
  %v677 = vadd.f32 %v628, %v676
  %678 = vmatmul.bf16.gmra.mxu0 %v233
  %v679 = vpop.f32.mrf.mxu0
  %v680 = vadd.f32 %v631, %v679
  %v681 = vpop.f32.mrf.mxu0
  %v682 = vadd.f32 %v633, %v681
  %683 = vmatmul.bf16.gmra.mxu0 %v237
  %v684 = vpop.f32.mrf.mxu0
  %v685 = vadd.f32 %v636, %v684
  %v686 = vpop.f32.mrf.mxu0
  %v687 = vadd.f32 %v638, %v686
  %688 = vmatmul.bf16.gmra.mxu0 %v241
  %v689 = vpop.f32.mrf.mxu0
  %v690 = vadd.f32 %v641, %v689
  %v691 = vpop.f32.mrf.mxu0
  %v692 = vadd.f32 %v643, %v691
  %693 = vdwg.mxu0
  %694 = vmatpush.bf16.msra.mxu0 %v514
  %695 = vmatpush.bf16.msra.mxu0 %v512
  %696 = vmatpush.bf16.msra.mxu0 %v510
  %697 = vmatpush.bf16.msra.mxu0 %v508
  %698 = vmatpush.bf16.msra.mxu0 %v506
  %699 = vmatpush.bf16.msra.mxu0 %v504
  %700 = vmatpush.bf16.msra.mxu0 %v502
  %701 = vmatpush.bf16.msra.mxu0 %v500
  %702 = vmatmul.bf16.gmra.mxu0 %v214
  %v703 = vpop.f32.mrf.mxu0
  %v704 = vadd.f32 %v655, %v703
  %v705 = vpop.f32.mrf.mxu0
  %v706 = vadd.f32 %v657, %v705
  %707 = vmatmul.bf16.gmra.mxu0 %v218
  %v708 = vpop.f32.mrf.mxu0
  %v709 = vadd.f32 %v660, %v708
  %v710 = vpop.f32.mrf.mxu0
  %v711 = vadd.f32 %v662, %v710
  %712 = vmatmul.bf16.gmra.mxu0 %v222
  %v713 = vpop.f32.mrf.mxu0
  %v714 = vadd.f32 %v665, %v713
  %v715 = vpop.f32.mrf.mxu0
  %v716 = vadd.f32 %v667, %v715
  %717 = vmatmul.bf16.gmra.mxu0 %v226
  %v718 = vpop.f32.mrf.mxu0
  %v719 = vadd.f32 %v670, %v718
  %v720 = vpop.f32.mrf.mxu0
  %v721 = vadd.f32 %v672, %v720
  %722 = vmatmul.bf16.gmra.mxu0 %v230
  %v723 = vpop.f32.mrf.mxu0
  %v724 = vadd.f32 %v675, %v723
  %v725 = vpop.f32.mrf.mxu0
  %v726 = vadd.f32 %v677, %v725
  %727 = vmatmul.bf16.gmra.mxu0 %v234
  %v728 = vpop.f32.mrf.mxu0
  %v729 = vadd.f32 %v680, %v728
  %v730 = vpop.f32.mrf.mxu0
  %v731 = vadd.f32 %v682, %v730
  %732 = vmatmul.bf16.gmra.mxu0 %v238
  %v733 = vpop.f32.mrf.mxu0
  %v734 = vadd.f32 %v685, %v733
  %v735 = vpop.f32.mrf.mxu0
  %v736 = vadd.f32 %v687, %v735
  %737 = vmatmul.bf16.gmra.mxu0 %v242
  %v738 = vpop.f32.mrf.mxu0
  %v739 = vadd.f32 %v690, %v738
  %v740 = vpop.f32.mrf.mxu0
  %v741 = vadd.f32 %v692, %v740
  %742 = vdwg.mxu0
  %743 = vmatpush.bf16.msra.mxu0 %v530
  %744 = vmatpush.bf16.msra.mxu0 %v528
  %745 = vmatpush.bf16.msra.mxu0 %v526
  %746 = vmatpush.bf16.msra.mxu0 %v524
  %747 = vmatpush.bf16.msra.mxu0 %v522
  %748 = vmatpush.bf16.msra.mxu0 %v520
  %749 = vmatpush.bf16.msra.mxu0 %v518
  %750 = vmatpush.bf16.msra.mxu0 %v516
  %751 = vmatmul.bf16.gmra.mxu0 %v215
  %v752 = vpop.f32.mrf.mxu0
  %v753 = vadd.f32 %v704, %v752
  %v754 = vpop.f32.mrf.mxu0
  %v755 = vadd.f32 %v706, %v754
  %756 = vmatmul.bf16.gmra.mxu0 %v219
  %v757 = vpop.f32.mrf.mxu0
  %v758 = vadd.f32 %v709, %v757
  %v759 = vpop.f32.mrf.mxu0
  %v760 = vadd.f32 %v711, %v759
  %761 = vmatmul.bf16.gmra.mxu0 %v223
  %v762 = vpop.f32.mrf.mxu0
  %v763 = vadd.f32 %v714, %v762
  %v764 = vpop.f32.mrf.mxu0
  %v765 = vadd.f32 %v716, %v764
  %766 = vmatmul.bf16.gmra.mxu0 %v227
  %v767 = vpop.f32.mrf.mxu0
  %v768 = vadd.f32 %v719, %v767
  %v769 = vpop.f32.mrf.mxu0
  %v770 = vadd.f32 %v721, %v769
  %771 = vmatmul.bf16.gmra.mxu0 %v231
  %v772 = vpop.f32.mrf.mxu0
  %v773 = vadd.f32 %v724, %v772
  %v774 = vpop.f32.mrf.mxu0
  %v775 = vadd.f32 %v726, %v774
  %776 = vmatmul.bf16.gmra.mxu0 %v235
  %v777 = vpop.f32.mrf.mxu0
  %v778 = vadd.f32 %v729, %v777
  %v779 = vpop.f32.mrf.mxu0
  %v780 = vadd.f32 %v731, %v779
  %781 = vmatmul.bf16.gmra.mxu0 %v239
  %v782 = vpop.f32.mrf.mxu0
  %v783 = vadd.f32 %v734, %v782
  %v784 = vpop.f32.mrf.mxu0
  %v785 = vadd.f32 %v736, %v784
  %786 = vmatmul.bf16.gmra.mxu0 %v243
  %v787 = vpop.f32.mrf.mxu0
  %v788 = vadd.f32 %v739, %v787
  %v789 = vpop.f32.mrf.mxu0
  %v790 = vadd.f32 %v741, %v789
  %791 = vdwg.mxu0
  %792 = vmatpush.bf16.msra.mxu0 %v483
  %793 = vmatpush.bf16.msra.mxu0 %v481
  %794 = vmatpush.bf16.msra.mxu0 %v479
  %795 = vmatpush.bf16.msra.mxu0 %v477
  %796 = vmatpush.bf16.msra.mxu0 %v475
  %797 = vmatpush.bf16.msra.mxu0 %v473
  %798 = vmatpush.bf16.msra.mxu0 %v471
  %799 = vmatpush.bf16.msra.mxu0 %v469
  %800 = vmatmul.bf16.gmra.mxu0 %v212
  %v801 = vpop.f32.mrf.mxu0
  %v802 = vadd.f32 %v113, %v801
  %v803 = vpop.f32.mrf.mxu0
  %v804 = vadd.f32 %v113, %v803
  %805 = vmatmul.bf16.gmra.mxu0 %v216
  %v806 = vpop.f32.mrf.mxu0
  %v807 = vadd.f32 %v113, %v806
  %v808 = vpop.f32.mrf.mxu0
  %v809 = vadd.f32 %v113, %v808
  %810 = vmatmul.bf16.gmra.mxu0 %v220
  %v811 = vpop.f32.mrf.mxu0
  %v812 = vadd.f32 %v113, %v811
  %v813 = vpop.f32.mrf.mxu0
  %v814 = vadd.f32 %v113, %v813
  %815 = vmatmul.bf16.gmra.mxu0 %v224
  %v816 = vpop.f32.mrf.mxu0
  %v817 = vadd.f32 %v113, %v816
  %v818 = vpop.f32.mrf.mxu0
  %v819 = vadd.f32 %v113, %v818
  %820 = vmatmul.bf16.gmra.mxu0 %v228
  %v821 = vpop.f32.mrf.mxu0
  %v822 = vadd.f32 %v113, %v821
  %v823 = vpop.f32.mrf.mxu0
  %v824 = vadd.f32 %v113, %v823
  %825 = vmatmul.bf16.gmra.mxu0 %v232
  %v826 = vpop.f32.mrf.mxu0
  %v827 = vadd.f32 %v113, %v826
  %v828 = vpop.f32.mrf.mxu0
  %v829 = vadd.f32 %v113, %v828
  %830 = vmatmul.bf16.gmra.mxu0 %v236
  %v831 = vpop.f32.mrf.mxu0
  %v832 = vadd.f32 %v113, %v831
  %v833 = vpop.f32.mrf.mxu0
  %v834 = vadd.f32 %v113, %v833
  %835 = vmatmul.bf16.gmra.mxu0 %v240
  %v836 = vpop.f32.mrf.mxu0
  %v837 = vadd.f32 %v113, %v836
  %v838 = vpop.f32.mrf.mxu0
  %v839 = vadd.f32 %v113, %v838
  %840 = vdwg.mxu0
  %841 = vmatpush.bf16.msra.mxu0 %v499
  %842 = vmatpush.bf16.msra.mxu0 %v497
  %843 = vmatpush.bf16.msra.mxu0 %v495
  %844 = vmatpush.bf16.msra.mxu0 %v493
  %845 = vmatpush.bf16.msra.mxu0 %v491
  %846 = vmatpush.bf16.msra.mxu0 %v489
  %847 = vmatpush.bf16.msra.mxu0 %v487
  %848 = vmatpush.bf16.msra.mxu0 %v485
  %849 = vmatmul.bf16.gmra.mxu0 %v213
  %v850 = vpop.f32.mrf.mxu0
  %v851 = vadd.f32 %v802, %v850
  %v852 = vpop.f32.mrf.mxu0
  %v853 = vadd.f32 %v804, %v852
  %854 = vmatmul.bf16.gmra.mxu0 %v217
  %v855 = vpop.f32.mrf.mxu0
  %v856 = vadd.f32 %v807, %v855
  %v857 = vpop.f32.mrf.mxu0
  %v858 = vadd.f32 %v809, %v857
  %859 = vmatmul.bf16.gmra.mxu0 %v221
  %v860 = vpop.f32.mrf.mxu0
  %v861 = vadd.f32 %v812, %v860
  %v862 = vpop.f32.mrf.mxu0
  %v863 = vadd.f32 %v814, %v862
  %864 = vmatmul.bf16.gmra.mxu0 %v225
  %v865 = vpop.f32.mrf.mxu0
  %v866 = vadd.f32 %v817, %v865
  %v867 = vpop.f32.mrf.mxu0
  %v868 = vadd.f32 %v819, %v867
  %869 = vmatmul.bf16.gmra.mxu0 %v229
  %v870 = vpop.f32.mrf.mxu0
  %v871 = vadd.f32 %v822, %v870
  %v872 = vpop.f32.mrf.mxu0
  %v873 = vadd.f32 %v824, %v872
  %874 = vmatmul.bf16.gmra.mxu0 %v233
  %v875 = vpop.f32.mrf.mxu0
  %v876 = vadd.f32 %v827, %v875
  %v877 = vpop.f32.mrf.mxu0
  %v878 = vadd.f32 %v829, %v877
  %879 = vmatmul.bf16.gmra.mxu0 %v237
  %v880 = vpop.f32.mrf.mxu0
  %v881 = vadd.f32 %v832, %v880
  %v882 = vpop.f32.mrf.mxu0
  %v883 = vadd.f32 %v834, %v882
  %884 = vmatmul.bf16.gmra.mxu0 %v241
  %v885 = vpop.f32.mrf.mxu0
  %v886 = vadd.f32 %v837, %v885
  %v887 = vpop.f32.mrf.mxu0
  %v888 = vadd.f32 %v839, %v887
  %889 = vdwg.mxu0
  %890 = vmatpush.bf16.msra.mxu0 %v515
  %891 = vmatpush.bf16.msra.mxu0 %v513
  %892 = vmatpush.bf16.msra.mxu0 %v511
  %893 = vmatpush.bf16.msra.mxu0 %v509
  %894 = vmatpush.bf16.msra.mxu0 %v507
  %895 = vmatpush.bf16.msra.mxu0 %v505
  %896 = vmatpush.bf16.msra.mxu0 %v503
  %897 = vmatpush.bf16.msra.mxu0 %v501
  %898 = vmatmul.bf16.gmra.mxu0 %v214
  %v899 = vpop.f32.mrf.mxu0
  %v900 = vadd.f32 %v851, %v899
  %v901 = vpop.f32.mrf.mxu0
  %v902 = vadd.f32 %v853, %v901
  %903 = vmatmul.bf16.gmra.mxu0 %v218
  %v904 = vpop.f32.mrf.mxu0
  %v905 = vadd.f32 %v856, %v904
  %v906 = vpop.f32.mrf.mxu0
  %v907 = vadd.f32 %v858, %v906
  %908 = vmatmul.bf16.gmra.mxu0 %v222
  %v909 = vpop.f32.mrf.mxu0
  %v910 = vadd.f32 %v861, %v909
  %v911 = vpop.f32.mrf.mxu0
  %v912 = vadd.f32 %v863, %v911
  %913 = vmatmul.bf16.gmra.mxu0 %v226
  %v914 = vpop.f32.mrf.mxu0
  %v915 = vadd.f32 %v866, %v914
  %v916 = vpop.f32.mrf.mxu0
  %v917 = vadd.f32 %v868, %v916
  %918 = vmatmul.bf16.gmra.mxu0 %v230
  %v919 = vpop.f32.mrf.mxu0
  %v920 = vadd.f32 %v871, %v919
  %v921 = vpop.f32.mrf.mxu0
  %v922 = vadd.f32 %v873, %v921
  %923 = vmatmul.bf16.gmra.mxu0 %v234
  %v924 = vpop.f32.mrf.mxu0
  %v925 = vadd.f32 %v876, %v924
  %v926 = vpop.f32.mrf.mxu0
  %v927 = vadd.f32 %v878, %v926
  %928 = vmatmul.bf16.gmra.mxu0 %v238
  %v929 = vpop.f32.mrf.mxu0
  %v930 = vadd.f32 %v881, %v929
  %v931 = vpop.f32.mrf.mxu0
  %v932 = vadd.f32 %v883, %v931
  %933 = vmatmul.bf16.gmra.mxu0 %v242
  %v934 = vpop.f32.mrf.mxu0
  %v935 = vadd.f32 %v886, %v934
  %v936 = vpop.f32.mrf.mxu0
  %v937 = vadd.f32 %v888, %v936
  %938 = vdwg.mxu0
  %939 = vmatpush.bf16.msra.mxu0 %v531
  %940 = vmatpush.bf16.msra.mxu0 %v529
  %941 = vmatpush.bf16.msra.mxu0 %v527
  %942 = vmatpush.bf16.msra.mxu0 %v525
  %943 = vmatpush.bf16.msra.mxu0 %v523
  %944 = vmatpush.bf16.msra.mxu0 %v521
  %945 = vmatpush.bf16.msra.mxu0 %v519
  %946 = vmatpush.bf16.msra.mxu0 %v517
  %947 = vmatmul.bf16.gmra.mxu0 %v215
  %v948 = vpop.f32.mrf.mxu0
  %v949 = vadd.f32 %v900, %v948
  %v950 = vpop.f32.mrf.mxu0
  %v951 = vadd.f32 %v902, %v950
  %952 = vmatmul.bf16.gmra.mxu0 %v219
  %v953 = vpop.f32.mrf.mxu0
  %v954 = vadd.f32 %v905, %v953
  %v955 = vpop.f32.mrf.mxu0
  %v956 = vadd.f32 %v907, %v955
  %957 = vmatmul.bf16.gmra.mxu0 %v223
  %v958 = vpop.f32.mrf.mxu0
  %v959 = vadd.f32 %v910, %v958
  %v960 = vpop.f32.mrf.mxu0
  %v961 = vadd.f32 %v912, %v960
  %962 = vmatmul.bf16.gmra.mxu0 %v227
  %v963 = vpop.f32.mrf.mxu0
  %v964 = vadd.f32 %v915, %v963
  %v965 = vpop.f32.mrf.mxu0
  %v966 = vadd.f32 %v917, %v965
  %967 = vmatmul.bf16.gmra.mxu0 %v231
  %v968 = vpop.f32.mrf.mxu0
  %v969 = vadd.f32 %v920, %v968
  %v970 = vpop.f32.mrf.mxu0
  %v971 = vadd.f32 %v922, %v970
  %972 = vmatmul.bf16.gmra.mxu0 %v235
  %v973 = vpop.f32.mrf.mxu0
  %v974 = vadd.f32 %v925, %v973
  %v975 = vpop.f32.mrf.mxu0
  %v976 = vadd.f32 %v927, %v975
  %977 = vmatmul.bf16.gmra.mxu0 %v239
  %v978 = vpop.f32.mrf.mxu0
  %v979 = vadd.f32 %v930, %v978
  %v980 = vpop.f32.mrf.mxu0
  %v981 = vadd.f32 %v932, %v980
  %982 = vmatmul.bf16.gmra.mxu0 %v243
  %v983 = vpop.f32.mrf.mxu0
  %v984 = vadd.f32 %v935, %v983
  %v985 = vpop.f32.mrf.mxu0
  %v986 = vadd.f32 %v937, %v985
  %987 = vdwg.mxu0
  %v988 = vmax.f32 %v753, 0.0
  %v989 = vmax.f32 %v949, 0.0
  %v990 = vmax.f32 %v755, 0.0
  %v991 = vmax.f32 %v951, 0.0
  %v992 = vmax.f32 %v758, 0.0
  %v993 = vmax.f32 %v954, 0.0
  %v994 = vmax.f32 %v760, 0.0
  %v995 = vmax.f32 %v956, 0.0
  %v996 = vmax.f32 %v763, 0.0
  %v997 = vmax.f32 %v959, 0.0
  %v998 = vmax.f32 %v765, 0.0
  %v999 = vmax.f32 %v961, 0.0
  %v1000 = vmax.f32 %v768, 0.0
  %v1001 = vmax.f32 %v964, 0.0
  %v1002 = vmax.f32 %v770, 0.0
  %v1003 = vmax.f32 %v966, 0.0
  %v1004 = vmax.f32 %v773, 0.0
  %v1005 = vmax.f32 %v969, 0.0
  %v1006 = vmax.f32 %v775, 0.0
  %v1007 = vmax.f32 %v971, 0.0
  %v1008 = vmax.f32 %v778, 0.0
  %v1009 = vmax.f32 %v974, 0.0
  %v1010 = vmax.f32 %v780, 0.0
  %v1011 = vmax.f32 %v976, 0.0
  %v1012 = vmax.f32 %v783, 0.0
  %v1013 = vmax.f32 %v979, 0.0
  %v1014 = vmax.f32 %v785, 0.0
  %v1015 = vmax.f32 %v981, 0.0
  %v1016 = vmax.f32 %v788, 0.0
  %v1017 = vmax.f32 %v984, 0.0
  %v1018 = vmax.f32 %v790, 0.0
  %v1019 = vmax.f32 %v986, 0.0
  %v1020 = vpack.c.bf16 %v989, %v988
  %v1021 = vpack.c.bf16 %v991, %v990
  %v1022 = vpack.c.bf16 %v993, %v992
  %v1023 = vpack.c.bf16 %v995, %v994
  %v1024 = vpack.c.bf16 %v997, %v996
  %v1025 = vpack.c.bf16 %v999, %v998
  %v1026 = vpack.c.bf16 %v1001, %v1000
  %v1027 = vpack.c.bf16 %v1003, %v1002
  %v1028 = vpack.c.bf16 %v1005, %v1004
  %v1029 = vpack.c.bf16 %v1007, %v1006
  %v1030 = vpack.c.bf16 %v1009, %v1008
  %v1031 = vpack.c.bf16 %v1011, %v1010
  %v1032 = vpack.c.bf16 %v1013, %v1012
  %v1033 = vpack.c.bf16 %v1015, %v1014
  %v1034 = vpack.c.bf16 %v1017, %v1016
  %v1035 = vpack.c.bf16 %v1019, %v1018
  %1036 = vst [vmem:[%s3] sm:$0xff] %v1020
  %1037 = vst [vmem:[%s3 + $0x8] sm:$0xff] %v1021
  %1038 = vst [vmem:[%s3 + $0x10] sm:$0xff] %v1022
  %1039 = vst [vmem:[%s3 + $0x18] sm:$0xff] %v1023
  %1040 = vst [vmem:[%s3 + $0x20] sm:$0xff] %v1024
  %1041 = vst [vmem:[%s3 + $0x28] sm:$0xff] %v1025
  %1042 = vst [vmem:[%s3 + $0x30] sm:$0xff] %v1026
  %1043 = vst [vmem:[%s3 + $0x38] sm:$0xff] %v1027
  %1044 = vst [vmem:[%s3 + $0x40] sm:$0xff] %v1028
  %1045 = vst [vmem:[%s3 + $0x48] sm:$0xff] %v1029
  %1046 = vst [vmem:[%s3 + $0x50] sm:$0xff] %v1030
  %1047 = vst [vmem:[%s3 + $0x58] sm:$0xff] %v1031
  %1048 = vst [vmem:[%s3 + $0x60] sm:$0xff] %v1032
  %1049 = vst [vmem:[%s3 + $0x68] sm:$0xff] %v1033
  %1050 = vst [vmem:[%s3 + $0x70] sm:$0xff] %v1034
  %1051 = vst [vmem:[%s3 + $0x78] sm:$0xff] %v1035
  // Predicated region
  $region14: #{_lambda_.17} parent=0 // pred_check
    _
  $region15: #{_lambda_.17} parent=0 // pred_check_branch
    %1053 = sbr.rel (0) target = $region17
  $region16: #{_lambda_.17} parent=0 // pred_region
    _
  $region17: #{_lambda_.17} parent=0 // pred_fallthru
    _
  // Predicated region
  $region18: #{_lambda_.17} parent=0 // pred_check
    _
  $region19: #{_lambda_.17} parent=0 // pred_check_branch
    %1055 = sbr.rel (0) target = $region21
  $region20: #{_lambda_.17} parent=0 // pred_region
    _
  $region21: #{_lambda_.17} parent=0 // pred_fallthru
    _

// kernel: _lambda_.16
$region0: #{_lambda_.16}
  #allocation0 [shape = 'u32[]', space=smem, size = 0x4, offset = 0x4, fixed_abs, tag = 'smem constant byte address 0x4 - core index']
  #allocation1 [shape = 'u32[72,128]{1,0:T(1,128)}', space=vmem, size = 0x9000, scoped, tag = 'internal scratch']
  %s0 = inlined_call_operand.vmem [shape: bf16[32,1024], index: 0, kind: input, shape index: {}]
  %s1 = inlined_call_operand.vmem [shape: bf16[1024,512], index: 1, kind: input, shape index: {}]
  %s2 = inlined_call_operand.vmem [shape: f32[1,512], index: 2, kind: input, shape index: {}]
  %s3 = inlined_call_operand.vmem [shape: bf16[32,512], index: 3, kind: output, shape index: {}]
  %s4 = sld [smem:[#allocation0]]
  $region22: #{_lambda_.16} parent=0
    _
  %s6 = ssub.s32 1, %s4
  %s7 = scalar_select 0, %s6, %s4
  // Predicated region
  $region2: #{_lambda_.16} parent=0 // pred_check
    _
  $region3: #{_lambda_.16} parent=0 // pred_check_branch
    %9 = sbr.rel (0) target = $region5
  $region4: #{_lambda_.16} parent=0 // pred_region
    _
  $region5: #{_lambda_.16} parent=0 // pred_fallthru
    _
  // Predicated region
  $region6: #{_lambda_.16} parent=0 // pred_check
    _
  $region7: #{_lambda_.16} parent=0 // pred_check_branch
    %11 = sbr.rel (0) target = $region9
  $region8: #{_lambda_.16} parent=0 // pred_region
    _
  $region9: #{_lambda_.16} parent=0 // pred_fallthru
    _
  // Predicated region
  $region10: #{_lambda_.16} parent=0 // pred_check
    _
  $region11: #{_lambda_.16} parent=0 // pred_check_branch
    %13 = sbr.rel (0) target = $region13
  $region12: #{_lambda_.16} parent=0 // pred_region
    _
  $region13: #{_lambda_.16} parent=0 // pred_fallthru
    _
  %v14 = vld [vmem:[%s0] sm:$0xff]
  %v15 = vld [vmem:[%s0 + $0x8] sm:$0xff]
  %v16 = vld [vmem:[%s0 + $0x10] sm:$0xff]
  %v17 = vld [vmem:[%s0 + $0x18] sm:$0xff]
  %v18 = vld [vmem:[%s0 + $0x20] sm:$0xff]
  %v19 = vld [vmem:[%s0 + $0x28] sm:$0xff]
  %v20 = vld [vmem:[%s0 + $0x30] sm:$0xff]
  %v21 = vld [vmem:[%s0 + $0x38] sm:$0xff]
  %v22 = vld [vmem:[%s0 + $0x40] sm:$0xff]
  %v23 = vld [vmem:[%s0 + $0x48] sm:$0xff]
  %v24 = vld [vmem:[%s0 + $0x50] sm:$0xff]
  %v25 = vld [vmem:[%s0 + $0x58] sm:$0xff]
  %v26 = vld [vmem:[%s0 + $0x60] sm:$0xff]
  %v27 = vld [vmem:[%s0 + $0x68] sm:$0xff]
  %v28 = vld [vmem:[%s0 + $0x70] sm:$0xff]
  %v29 = vld [vmem:[%s0 + $0x78] sm:$0xff]
  %v30 = vld [vmem:[%s1] sm:$0xff]
  %v31 = vld [vmem:[%s1 + $0x8] sm:$0xff]
  %v32 = vld [vmem:[%s1 + $0x10] sm:$0xff]
  %v33 = vld [vmem:[%s1 + $0x18] sm:$0xff]
  %v34 = vld [vmem:[%s1 + $0x20] sm:$0xff]
  %v35 = vld [vmem:[%s1 + $0x28] sm:$0xff]
  %v36 = vld [vmem:[%s1 + $0x30] sm:$0xff]
  %v37 = vld [vmem:[%s1 + $0x38] sm:$0xff]
  %v38 = vld [vmem:[%s1 + $0x40] sm:$0xff]
  %v39 = vld [vmem:[%s1 + $0x48] sm:$0xff]
  %v40 = vld [vmem:[%s1 + $0x50] sm:$0xff]
  %v41 = vld [vmem:[%s1 + $0x58] sm:$0xff]
  %v42 = vld [vmem:[%s1 + $0x60] sm:$0xff]
  %v43 = vld [vmem:[%s1 + $0x68] sm:$0xff]
  %v44 = vld [vmem:[%s1 + $0x70] sm:$0xff]
  %v45 = vld [vmem:[%s1 + $0x78] sm:$0xff]
  %v46 = vld [vmem:[%s1 + $0x80] sm:$0xff]
  %v47 = vld [vmem:[%s1 + $0x88] sm:$0xff]
  %v48 = vld [vmem:[%s1 + $0x90] sm:$0xff]
  %v49 = vld [vmem:[%s1 + $0x98] sm:$0xff]
  %v50 = vld [vmem:[%s1 + $0xa0] sm:$0xff]
  %v51 = vld [vmem:[%s1 + $0xa8] sm:$0xff]
  %v52 = vld [vmem:[%s1 + $0xb0] sm:$0xff]
  %v53 = vld [vmem:[%s1 + $0xb8] sm:$0xff]
  %v54 = vld [vmem:[%s1 + $0xc0] sm:$0xff]
  %v55 = vld [vmem:[%s1 + $0xc8] sm:$0xff]
  %v56 = vld [vmem:[%s1 + $0xd0] sm:$0xff]
  %v57 = vld [vmem:[%s1 + $0xd8] sm:$0xff]
  %v58 = vld [vmem:[%s1 + $0xe0] sm:$0xff]
  %v59 = vld [vmem:[%s1 + $0xe8] sm:$0xff]
  %v60 = vld [vmem:[%s1 + $0xf0] sm:$0xff]
  %v61 = vld [vmem:[%s1 + $0xf8] sm:$0xff]
  %v62 = vld [vmem:[%s1 + $0x100] sm:$0xff]
  %v63 = vld [vmem:[%s1 + $0x108] sm:$0xff]
  %v64 = vld [vmem:[%s1 + $0x110] sm:$0xff]
  %v65 = vld [vmem:[%s1 + $0x118] sm:$0xff]
  %v66 = vld [vmem:[%s1 + $0x120] sm:$0xff]
  %v67 = vld [vmem:[%s1 + $0x128] sm:$0xff]
  %v68 = vld [vmem:[%s1 + $0x130] sm:$0xff]
  %v69 = vld [vmem:[%s1 + $0x138] sm:$0xff]
  %v70 = vld [vmem:[%s1 + $0x140] sm:$0xff]
  %v71 = vld [vmem:[%s1 + $0x148] sm:$0xff]
  %v72 = vld [vmem:[%s1 + $0x150] sm:$0xff]
  %v73 = vld [vmem:[%s1 + $0x158] sm:$0xff]
  %v74 = vld [vmem:[%s1 + $0x160] sm:$0xff]
  %v75 = vld [vmem:[%s1 + $0x168] sm:$0xff]
  %v76 = vld [vmem:[%s1 + $0x170] sm:$0xff]
  %v77 = vld [vmem:[%s1 + $0x178] sm:$0xff]
  %v78 = vld [vmem:[%s1 + $0x180] sm:$0xff]
  %v79 = vld [vmem:[%s1 + $0x188] sm:$0xff]
  %v80 = vld [vmem:[%s1 + $0x190] sm:$0xff]
  %v81 = vld [vmem:[%s1 + $0x198] sm:$0xff]
  %v82 = vld [vmem:[%s1 + $0x1a0] sm:$0xff]
  %v83 = vld [vmem:[%s1 + $0x1a8] sm:$0xff]
  %v84 = vld [vmem:[%s1 + $0x1b0] sm:$0xff]
  %v85 = vld [vmem:[%s1 + $0x1b8] sm:$0xff]
  %v86 = vld [vmem:[%s1 + $0x1c0] sm:$0xff]
  %v87 = vld [vmem:[%s1 + $0x1c8] sm:$0xff]
  %v88 = vld [vmem:[%s1 + $0x1d0] sm:$0xff]
  %v89 = vld [vmem:[%s1 + $0x1d8] sm:$0xff]
  %v90 = vld [vmem:[%s1 + $0x1e0] sm:$0xff]
  %v91 = vld [vmem:[%s1 + $0x1e8] sm:$0xff]
  %v92 = vld [vmem:[%s1 + $0x1f0] sm:$0xff]
  %v93 = vld [vmem:[%s1 + $0x1f8] sm:$0xff]
  %v94 = vld [vmem:[%s1 + $0x200] sm:$0xff]
  %v95 = vld [vmem:[%s1 + $0x208] sm:$0xff]
  %v96 = vld [vmem:[%s1 + $0x210] sm:$0xff]
  %v97 = vld [vmem:[%s1 + $0x218] sm:$0xff]
  %v98 = vld [vmem:[%s1 + $0x220] sm:$0xff]
  %v99 = vld [vmem:[%s1 + $0x228] sm:$0xff]
  %v100 = vld [vmem:[%s1 + $0x230] sm:$0xff]
  %v101 = vld [vmem:[%s1 + $0x238] sm:$0xff]
  %v102 = vld [vmem:[%s1 + $0x240] sm:$0xff]
  %v103 = vld [vmem:[%s1 + $0x248] sm:$0xff]
  %v104 = vld [vmem:[%s1 + $0x250] sm:$0xff]
  %v105 = vld [vmem:[%s1 + $0x258] sm:$0xff]
  %v106 = vld [vmem:[%s1 + $0x260] sm:$0xff]
  %v107 = vld [vmem:[%s1 + $0x268] sm:$0xff]
  %v108 = vld [vmem:[%s1 + $0x270] sm:$0xff]
  %v109 = vld [vmem:[%s1 + $0x278] sm:$0xff]
  %v110 = vld [vmem:[%s1 + $0x280] sm:$0xff]
  %v111 = vld [vmem:[%s1 + $0x288] sm:$0xff]
  %v112 = vld [vmem:[%s1 + $0x290] sm:$0xff]
  %v113 = vld [vmem:[%s1 + $0x298] sm:$0xff]
  %v114 = vld [vmem:[%s1 + $0x2a0] sm:$0xff]
  %v115 = vld [vmem:[%s1 + $0x2a8] sm:$0xff]
  %v116 = vld [vmem:[%s1 + $0x2b0] sm:$0xff]
  %v117 = vld [vmem:[%s1 + $0x2b8] sm:$0xff]
  %v118 = vld [vmem:[%s1 + $0x2c0] sm:$0xff]
  %v119 = vld [vmem:[%s1 + $0x2c8] sm:$0xff]
  %v120 = vld [vmem:[%s1 + $0x2d0] sm:$0xff]
  %v121 = vld [vmem:[%s1 + $0x2d8] sm:$0xff]
  %v122 = vld [vmem:[%s1 + $0x2e0] sm:$0xff]
  %v123 = vld [vmem:[%s1 + $0x2e8] sm:$0xff]
  %v124 = vld [vmem:[%s1 + $0x2f0] sm:$0xff]
  %v125 = vld [vmem:[%s1 + $0x2f8] sm:$0xff]
  %v126 = vld [vmem:[%s1 + $0x300] sm:$0xff]
  %v127 = vld [vmem:[%s1 + $0x308] sm:$0xff]
  %v128 = vld [vmem:[%s1 + $0x310] sm:$0xff]
  %v129 = vld [vmem:[%s1 + $0x318] sm:$0xff]
  %v130 = vld [vmem:[%s1 + $0x320] sm:$0xff]
  %v131 = vld [vmem:[%s1 + $0x328] sm:$0xff]
  %v132 = vld [vmem:[%s1 + $0x330] sm:$0xff]
  %v133 = vld [vmem:[%s1 + $0x338] sm:$0xff]
  %v134 = vld [vmem:[%s1 + $0x340] sm:$0xff]
  %v135 = vld [vmem:[%s1 + $0x348] sm:$0xff]
  %v136 = vld [vmem:[%s1 + $0x350] sm:$0xff]
  %v137 = vld [vmem:[%s1 + $0x358] sm:$0xff]
  %v138 = vld [vmem:[%s1 + $0x360] sm:$0xff]
  %v139 = vld [vmem:[%s1 + $0x368] sm:$0xff]
  %v140 = vld [vmem:[%s1 + $0x370] sm:$0xff]
  %v141 = vld [vmem:[%s1 + $0x378] sm:$0xff]
  %v142 = vld [vmem:[%s1 + $0x380] sm:$0xff]
  %v143 = vld [vmem:[%s1 + $0x388] sm:$0xff]
  %v144 = vld [vmem:[%s1 + $0x390] sm:$0xff]
  %v145 = vld [vmem:[%s1 + $0x398] sm:$0xff]
  %v146 = vld [vmem:[%s1 + $0x3a0] sm:$0xff]
  %v147 = vld [vmem:[%s1 + $0x3a8] sm:$0xff]
  %v148 = vld [vmem:[%s1 + $0x3b0] sm:$0xff]
  %v149 = vld [vmem:[%s1 + $0x3b8] sm:$0xff]
  %v150 = vld [vmem:[%s1 + $0x3c0] sm:$0xff]
  %v151 = vld [vmem:[%s1 + $0x3c8] sm:$0xff]
  %v152 = vld [vmem:[%s1 + $0x3d0] sm:$0xff]
  %v153 = vld [vmem:[%s1 + $0x3d8] sm:$0xff]
  %v154 = vld [vmem:[%s1 + $0x3e0] sm:$0xff]
  %v155 = vld [vmem:[%s1 + $0x3e8] sm:$0xff]
  %v156 = vld [vmem:[%s1 + $0x3f0] sm:$0xff]
  %v157 = vld [vmem:[%s1 + $0x3f8] sm:$0xff]
  %v158 = vld [vmem:[%s1 + $0x400] sm:$0xff]
  %v159 = vld [vmem:[%s1 + $0x408] sm:$0xff]
  %v160 = vld [vmem:[%s1 + $0x410] sm:$0xff]
  %v161 = vld [vmem:[%s1 + $0x418] sm:$0xff]
  %v162 = vld [vmem:[%s1 + $0x420] sm:$0xff]
  %v163 = vld [vmem:[%s1 + $0x428] sm:$0xff]
  %v164 = vld [vmem:[%s1 + $0x430] sm:$0xff]
  %v165 = vld [vmem:[%s1 + $0x438] sm:$0xff]
  %v166 = vld [vmem:[%s1 + $0x440] sm:$0xff]
  %v167 = vld [vmem:[%s1 + $0x448] sm:$0xff]
  %v168 = vld [vmem:[%s1 + $0x450] sm:$0xff]
  %v169 = vld [vmem:[%s1 + $0x458] sm:$0xff]
  %v170 = vld [vmem:[%s1 + $0x460] sm:$0xff]
  %v171 = vld [vmem:[%s1 + $0x468] sm:$0xff]
  %v172 = vld [vmem:[%s1 + $0x470] sm:$0xff]
  %v173 = vld [vmem:[%s1 + $0x478] sm:$0xff]
  %v174 = vld [vmem:[%s1 + $0x480] sm:$0xff]
  %v175 = vld [vmem:[%s1 + $0x488] sm:$0xff]
  %v176 = vld [vmem:[%s1 + $0x490] sm:$0xff]
  %v177 = vld [vmem:[%s1 + $0x498] sm:$0xff]
  %v178 = vld [vmem:[%s1 + $0x4a0] sm:$0xff]
  %v179 = vld [vmem:[%s1 + $0x4a8] sm:$0xff]
  %v180 = vld [vmem:[%s1 + $0x4b0] sm:$0xff]
  %v181 = vld [vmem:[%s1 + $0x4b8] sm:$0xff]
  %v182 = vld [vmem:[%s1 + $0x4c0] sm:$0xff]
  %v183 = vld [vmem:[%s1 + $0x4c8] sm:$0xff]
  %v184 = vld [vmem:[%s1 + $0x4d0] sm:$0xff]
  %v185 = vld [vmem:[%s1 + $0x4d8] sm:$0xff]
  %v186 = vld [vmem:[%s1 + $0x4e0] sm:$0xff]
  %v187 = vld [vmem:[%s1 + $0x4e8] sm:$0xff]
  %v188 = vld [vmem:[%s1 + $0x4f0] sm:$0xff]
  %v189 = vld [vmem:[%s1 + $0x4f8] sm:$0xff]
  %v190 = vld [vmem:[%s1 + $0x500] sm:$0xff]
  %v191 = vld [vmem:[%s1 + $0x508] sm:$0xff]
  %v192 = vld [vmem:[%s1 + $0x510] sm:$0xff]
  %v193 = vld [vmem:[%s1 + $0x518] sm:$0xff]
  %v194 = vld [vmem:[%s1 + $0x520] sm:$0xff]
  %v195 = vld [vmem:[%s1 + $0x528] sm:$0xff]
  %v196 = vld [vmem:[%s1 + $0x530] sm:$0xff]
  %v197 = vld [vmem:[%s1 + $0x538] sm:$0xff]
  %v198 = vld [vmem:[%s1 + $0x540] sm:$0xff]
  %v199 = vld [vmem:[%s1 + $0x548] sm:$0xff]
  %v200 = vld [vmem:[%s1 + $0x550] sm:$0xff]
  %v201 = vld [vmem:[%s1 + $0x558] sm:$0xff]
  %v202 = vld [vmem:[%s1 + $0x560] sm:$0xff]
  %v203 = vld [vmem:[%s1 + $0x568] sm:$0xff]
  %v204 = vld [vmem:[%s1 + $0x570] sm:$0xff]
  %v205 = vld [vmem:[%s1 + $0x578] sm:$0xff]
  %v206 = vld [vmem:[%s1 + $0x580] sm:$0xff]
  %v207 = vld [vmem:[%s1 + $0x588] sm:$0xff]
  %v208 = vld [vmem:[%s1 + $0x590] sm:$0xff]
  %v209 = vld [vmem:[%s1 + $0x598] sm:$0xff]
  %v210 = vld [vmem:[%s1 + $0x5a0] sm:$0xff]
  %v211 = vld [vmem:[%s1 + $0x5a8] sm:$0xff]
  %v212 = vld [vmem:[%s1 + $0x5b0] sm:$0xff]
  %v213 = vld [vmem:[%s1 + $0x5b8] sm:$0xff]
  %v214 = vld [vmem:[%s1 + $0x5c0] sm:$0xff]
  %v215 = vld [vmem:[%s1 + $0x5c8] sm:$0xff]
  %v216 = vld [vmem:[%s1 + $0x5d0] sm:$0xff]
  %v217 = vld [vmem:[%s1 + $0x5d8] sm:$0xff]
  %v218 = vld [vmem:[%s1 + $0x5e0] sm:$0xff]
  %v219 = vld [vmem:[%s1 + $0x5e8] sm:$0xff]
  %v220 = vld [vmem:[%s1 + $0x5f0] sm:$0xff]
  %v221 = vld [vmem:[%s1 + $0x5f8] sm:$0xff]
  %v222 = vld [vmem:[%s1 + $0x600] sm:$0xff]
  %v223 = vld [vmem:[%s1 + $0x608] sm:$0xff]
  %v224 = vld [vmem:[%s1 + $0x610] sm:$0xff]
  %v225 = vld [vmem:[%s1 + $0x618] sm:$0xff]
  %v226 = vld [vmem:[%s1 + $0x620] sm:$0xff]
  %v227 = vld [vmem:[%s1 + $0x628] sm:$0xff]
  %v228 = vld [vmem:[%s1 + $0x630] sm:$0xff]
  %v229 = vld [vmem:[%s1 + $0x638] sm:$0xff]
  %v230 = vld [vmem:[%s1 + $0x640] sm:$0xff]
  %v231 = vld [vmem:[%s1 + $0x648] sm:$0xff]
  %v232 = vld [vmem:[%s1 + $0x650] sm:$0xff]
  %v233 = vld [vmem:[%s1 + $0x658] sm:$0xff]
  %v234 = vld [vmem:[%s1 + $0x660] sm:$0xff]
  %v235 = vld [vmem:[%s1 + $0x668] sm:$0xff]
  %v236 = vld [vmem:[%s1 + $0x670] sm:$0xff]
  %v237 = vld [vmem:[%s1 + $0x678] sm:$0xff]
  %v238 = vld [vmem:[%s1 + $0x680] sm:$0xff]
  %v239 = vld [vmem:[%s1 + $0x688] sm:$0xff]
  %v240 = vld [vmem:[%s1 + $0x690] sm:$0xff]
  %v241 = vld [vmem:[%s1 + $0x698] sm:$0xff]
  %v242 = vld [vmem:[%s1 + $0x6a0] sm:$0xff]
  %v243 = vld [vmem:[%s1 + $0x6a8] sm:$0xff]
  %v244 = vld [vmem:[%s1 + $0x6b0] sm:$0xff]
  %v245 = vld [vmem:[%s1 + $0x6b8] sm:$0xff]
  %v246 = vld [vmem:[%s1 + $0x6c0] sm:$0xff]
  %v247 = vld [vmem:[%s1 + $0x6c8] sm:$0xff]
  %v248 = vld [vmem:[%s1 + $0x6d0] sm:$0xff]
  %v249 = vld [vmem:[%s1 + $0x6d8] sm:$0xff]
  %v250 = vld [vmem:[%s1 + $0x6e0] sm:$0xff]
  %v251 = vld [vmem:[%s1 + $0x6e8] sm:$0xff]
  %v252 = vld [vmem:[%s1 + $0x6f0] sm:$0xff]
  %v253 = vld [vmem:[%s1 + $0x6f8] sm:$0xff]
  %v254 = vld [vmem:[%s1 + $0x700] sm:$0xff]
  %v255 = vld [vmem:[%s1 + $0x708] sm:$0xff]
  %v256 = vld [vmem:[%s1 + $0x710] sm:$0xff]
  %v257 = vld [vmem:[%s1 + $0x718] sm:$0xff]
  %v258 = vld [vmem:[%s1 + $0x720] sm:$0xff]
  %v259 = vld [vmem:[%s1 + $0x728] sm:$0xff]
  %v260 = vld [vmem:[%s1 + $0x730] sm:$0xff]
  %v261 = vld [vmem:[%s1 + $0x738] sm:$0xff]
  %v262 = vld [vmem:[%s1 + $0x740] sm:$0xff]
  %v263 = vld [vmem:[%s1 + $0x748] sm:$0xff]
  %v264 = vld [vmem:[%s1 + $0x750] sm:$0xff]
  %v265 = vld [vmem:[%s1 + $0x758] sm:$0xff]
  %v266 = vld [vmem:[%s1 + $0x760] sm:$0xff]
  %v267 = vld [vmem:[%s1 + $0x768] sm:$0xff]
  %v268 = vld [vmem:[%s1 + $0x770] sm:$0xff]
  %v269 = vld [vmem:[%s1 + $0x778] sm:$0xff]
  %v270 = vld [vmem:[%s1 + $0x780] sm:$0xff]
  %v271 = vld [vmem:[%s1 + $0x788] sm:$0xff]
  %v272 = vld [vmem:[%s1 + $0x790] sm:$0xff]
  %v273 = vld [vmem:[%s1 + $0x798] sm:$0xff]
  %v274 = vld [vmem:[%s1 + $0x7a0] sm:$0xff]
  %v275 = vld [vmem:[%s1 + $0x7a8] sm:$0xff]
  %v276 = vld [vmem:[%s1 + $0x7b0] sm:$0xff]
  %v277 = vld [vmem:[%s1 + $0x7b8] sm:$0xff]
  %v278 = vld [vmem:[%s1 + $0x7c0] sm:$0xff]
  %v279 = vld [vmem:[%s1 + $0x7c8] sm:$0xff]
  %v280 = vld [vmem:[%s1 + $0x7d0] sm:$0xff]
  %v281 = vld [vmem:[%s1 + $0x7d8] sm:$0xff]
  %v282 = vld [vmem:[%s1 + $0x7e0] sm:$0xff]
  %v283 = vld [vmem:[%s1 + $0x7e8] sm:$0xff]
  %v284 = vld [vmem:[%s1 + $0x7f0] sm:$0xff]
  %v285 = vld [vmem:[%s1 + $0x7f8] sm:$0xff]
  %v286 = vld [vmem:[%s2] sm:$0xf]
  %v288 = vperm.slane %v286, 0
  %v289 = vperm.slane %v286, 1
  %v290 = vperm.slane %v286, 2
  %v291 = vperm.slane %v286, 3
  %v312 = vunpack.c.l.b16 %v14
  %v313 = vunpack.c.h.b16 %v14
  %v314 = vunpack.c.l.b16 %v15
  %v315 = vunpack.c.h.b16 %v15
  %v316 = vunpack.c.l.b16 %v16
  %v317 = vunpack.c.h.b16 %v16
  %v318 = vunpack.c.l.b16 %v17
  %v319 = vunpack.c.h.b16 %v17
  %v320 = vunpack.c.l.b16 %v18
  %v321 = vunpack.c.h.b16 %v18
  %v322 = vunpack.c.l.b16 %v19
  %v323 = vunpack.c.h.b16 %v19
  %v324 = vunpack.c.l.b16 %v20
  %v325 = vunpack.c.h.b16 %v20
  %v326 = vunpack.c.l.b16 %v21
  %v327 = vunpack.c.h.b16 %v21
  %v328 = vunpack.c.l.b16 %v22
  %v329 = vunpack.c.h.b16 %v22
  %v330 = vunpack.c.l.b16 %v23
  %v331 = vunpack.c.h.b16 %v23
  %v332 = vunpack.c.l.b16 %v24
  %v333 = vunpack.c.h.b16 %v24
  %v334 = vunpack.c.l.b16 %v25
  %v335 = vunpack.c.h.b16 %v25
  %v336 = vunpack.c.l.b16 %v26
  %v337 = vunpack.c.h.b16 %v26
  %v338 = vunpack.c.l.b16 %v27
  %v339 = vunpack.c.h.b16 %v27
  %v340 = vunpack.c.l.b16 %v28
  %v341 = vunpack.c.h.b16 %v28
  %v342 = vunpack.c.l.b16 %v29
  %v343 = vunpack.c.h.b16 %v29
  %v344 = vpack.c.b16 %v320, %v312
  %v345 = vpack.c.b16 %v321, %v313
  %v346 = vpack.c.b16 %v322, %v314
  %v347 = vpack.c.b16 %v323, %v315
  %v348 = vpack.c.b16 %v324, %v316
  %v349 = vpack.c.b16 %v325, %v317
  %v350 = vpack.c.b16 %v326, %v318
  %v351 = vpack.c.b16 %v327, %v319
  %v352 = vpack.c.b16 %v336, %v328
  %v353 = vpack.c.b16 %v337, %v329
  %v354 = vpack.c.b16 %v338, %v330
  %v355 = vpack.c.b16 %v339, %v331
  %v356 = vpack.c.b16 %v340, %v332
  %v357 = vpack.c.b16 %v341, %v333
  %v358 = vpack.c.b16 %v342, %v334
  %v359 = vpack.c.b16 %v343, %v335
  %v632 = vunpack.c.l.b16 %v30
  %v633 = vunpack.c.h.b16 %v30
  %v634 = vunpack.c.l.b16 %v31
  %v635 = vunpack.c.h.b16 %v31
  %v636 = vunpack.c.l.b16 %v32
  %v637 = vunpack.c.h.b16 %v32
  %v638 = vunpack.c.l.b16 %v33
  %v639 = vunpack.c.h.b16 %v33
  %v640 = vunpack.c.l.b16 %v34
  %v641 = vunpack.c.h.b16 %v34
  %v642 = vunpack.c.l.b16 %v35
  %v643 = vunpack.c.h.b16 %v35
  %v644 = vunpack.c.l.b16 %v36
  %v645 = vunpack.c.h.b16 %v36
  %v646 = vunpack.c.l.b16 %v37
  %v647 = vunpack.c.h.b16 %v37
  %v648 = vunpack.c.l.b16 %v38
  %v649 = vunpack.c.h.b16 %v38
  %v650 = vunpack.c.l.b16 %v39
  %v651 = vunpack.c.h.b16 %v39
  %v652 = vunpack.c.l.b16 %v40
  %v653 = vunpack.c.h.b16 %v40
  %v654 = vunpack.c.l.b16 %v41
  %v655 = vunpack.c.h.b16 %v41
  %v656 = vunpack.c.l.b16 %v42
  %v657 = vunpack.c.h.b16 %v42
  %v658 = vunpack.c.l.b16 %v43
  %v659 = vunpack.c.h.b16 %v43
  %v660 = vunpack.c.l.b16 %v44
  %v661 = vunpack.c.h.b16 %v44
  %v662 = vunpack.c.l.b16 %v45
  %v663 = vunpack.c.h.b16 %v45
  %v664 = vunpack.c.l.b16 %v46
  %v665 = vunpack.c.h.b16 %v46
  %v666 = vunpack.c.l.b16 %v47
  %v667 = vunpack.c.h.b16 %v47
  %v668 = vunpack.c.l.b16 %v48
  %v669 = vunpack.c.h.b16 %v48
  %v670 = vunpack.c.l.b16 %v49
  %v671 = vunpack.c.h.b16 %v49
  %v672 = vunpack.c.l.b16 %v50
  %v673 = vunpack.c.h.b16 %v50
  %v674 = vunpack.c.l.b16 %v51
  %v675 = vunpack.c.h.b16 %v51
  %v676 = vunpack.c.l.b16 %v52
  %v677 = vunpack.c.h.b16 %v52
  %v678 = vunpack.c.l.b16 %v53
  %v679 = vunpack.c.h.b16 %v53
  %v680 = vunpack.c.l.b16 %v54
  %v681 = vunpack.c.h.b16 %v54
  %v682 = vunpack.c.l.b16 %v55
  %v683 = vunpack.c.h.b16 %v55
  %v684 = vunpack.c.l.b16 %v56
  %v685 = vunpack.c.h.b16 %v56
  %v686 = vunpack.c.l.b16 %v57
  %v687 = vunpack.c.h.b16 %v57
  %v688 = vunpack.c.l.b16 %v58
  %v689 = vunpack.c.h.b16 %v58
  %v690 = vunpack.c.l.b16 %v59
  %v691 = vunpack.c.h.b16 %v59
  %v692 = vunpack.c.l.b16 %v60
  %v693 = vunpack.c.h.b16 %v60
  %v694 = vunpack.c.l.b16 %v61
  %v695 = vunpack.c.h.b16 %v61
  %v696 = vunpack.c.l.b16 %v62
  %v697 = vunpack.c.h.b16 %v62
  %v698 = vunpack.c.l.b16 %v63
  %v699 = vunpack.c.h.b16 %v63
  %v700 = vunpack.c.l.b16 %v64
  %v701 = vunpack.c.h.b16 %v64
  %v702 = vunpack.c.l.b16 %v65
  %v703 = vunpack.c.h.b16 %v65
  %v704 = vunpack.c.l.b16 %v66
  %v705 = vunpack.c.h.b16 %v66
  %v706 = vunpack.c.l.b16 %v67
  %v707 = vunpack.c.h.b16 %v67
  %v708 = vunpack.c.l.b16 %v68
  %v709 = vunpack.c.h.b16 %v68
  %v710 = vunpack.c.l.b16 %v69
  %v711 = vunpack.c.h.b16 %v69
  %v712 = vunpack.c.l.b16 %v70
  %v713 = vunpack.c.h.b16 %v70
  %v714 = vunpack.c.l.b16 %v71
  %v715 = vunpack.c.h.b16 %v71
  %v716 = vunpack.c.l.b16 %v72
  %v717 = vunpack.c.h.b16 %v72
  %v718 = vunpack.c.l.b16 %v73
  %v719 = vunpack.c.h.b16 %v73
  %v720 = vunpack.c.l.b16 %v74
  %v721 = vunpack.c.h.b16 %v74
  %v722 = vunpack.c.l.b16 %v75
  %v723 = vunpack.c.h.b16 %v75
  %v724 = vunpack.c.l.b16 %v76
  %v725 = vunpack.c.h.b16 %v76
  %v726 = vunpack.c.l.b16 %v77
  %v727 = vunpack.c.h.b16 %v77
  %v728 = vunpack.c.l.b16 %v78
  %v729 = vunpack.c.h.b16 %v78
  %v730 = vunpack.c.l.b16 %v79
  %v731 = vunpack.c.h.b16 %v79
  %v732 = vunpack.c.l.b16 %v80
  %v733 = vunpack.c.h.b16 %v80
  %v734 = vunpack.c.l.b16 %v81
  %v735 = vunpack.c.h.b16 %v81
  %v736 = vunpack.c.l.b16 %v82
  %v737 = vunpack.c.h.b16 %v82
  %v738 = vunpack.c.l.b16 %v83
  %v739 = vunpack.c.h.b16 %v83
  %v740 = vunpack.c.l.b16 %v84
  %v741 = vunpack.c.h.b16 %v84
  %v742 = vunpack.c.l.b16 %v85
  %v743 = vunpack.c.h.b16 %v85
  %v744 = vunpack.c.l.b16 %v86
  %v745 = vunpack.c.h.b16 %v86
  %v746 = vunpack.c.l.b16 %v87
  %v747 = vunpack.c.h.b16 %v87
  %v748 = vunpack.c.l.b16 %v88
  %v749 = vunpack.c.h.b16 %v88
  %v750 = vunpack.c.l.b16 %v89
  %v751 = vunpack.c.h.b16 %v89
  %v752 = vunpack.c.l.b16 %v90
  %v753 = vunpack.c.h.b16 %v90
  %v754 = vunpack.c.l.b16 %v91
  %v755 = vunpack.c.h.b16 %v91
  %v756 = vunpack.c.l.b16 %v92
  %v757 = vunpack.c.h.b16 %v92
  %v758 = vunpack.c.l.b16 %v93
  %v759 = vunpack.c.h.b16 %v93
  %v760 = vunpack.c.l.b16 %v94
  %v761 = vunpack.c.h.b16 %v94
  %v762 = vunpack.c.l.b16 %v95
  %v763 = vunpack.c.h.b16 %v95
  %v764 = vunpack.c.l.b16 %v96
  %v765 = vunpack.c.h.b16 %v96
  %v766 = vunpack.c.l.b16 %v97
  %v767 = vunpack.c.h.b16 %v97
  %v768 = vunpack.c.l.b16 %v98
  %v769 = vunpack.c.h.b16 %v98
  %v770 = vunpack.c.l.b16 %v99
  %v771 = vunpack.c.h.b16 %v99
  %v772 = vunpack.c.l.b16 %v100
  %v773 = vunpack.c.h.b16 %v100
  %v774 = vunpack.c.l.b16 %v101
  %v775 = vunpack.c.h.b16 %v101
  %v776 = vunpack.c.l.b16 %v102
  %v777 = vunpack.c.h.b16 %v102
  %v778 = vunpack.c.l.b16 %v103
  %v779 = vunpack.c.h.b16 %v103
  %v780 = vunpack.c.l.b16 %v104
  %v781 = vunpack.c.h.b16 %v104
  %v782 = vunpack.c.l.b16 %v105
  %v783 = vunpack.c.h.b16 %v105
  %v784 = vunpack.c.l.b16 %v106
  %v785 = vunpack.c.h.b16 %v106
  %v786 = vunpack.c.l.b16 %v107
  %v787 = vunpack.c.h.b16 %v107
  %v788 = vunpack.c.l.b16 %v108
  %v789 = vunpack.c.h.b16 %v108
  %v790 = vunpack.c.l.b16 %v109
  %v791 = vunpack.c.h.b16 %v109
  %v792 = vunpack.c.l.b16 %v110
  %v793 = vunpack.c.h.b16 %v110
  %v794 = vunpack.c.l.b16 %v111
  %v795 = vunpack.c.h.b16 %v111
  %v796 = vunpack.c.l.b16 %v112
  %v797 = vunpack.c.h.b16 %v112
  %v798 = vunpack.c.l.b16 %v113
  %v799 = vunpack.c.h.b16 %v113
  %v800 = vunpack.c.l.b16 %v114
  %v801 = vunpack.c.h.b16 %v114
  %v802 = vunpack.c.l.b16 %v115
  %v803 = vunpack.c.h.b16 %v115
  %v804 = vunpack.c.l.b16 %v116
  %v805 = vunpack.c.h.b16 %v116
  %v806 = vunpack.c.l.b16 %v117
  %v807 = vunpack.c.h.b16 %v117
  %v808 = vunpack.c.l.b16 %v118
  %v809 = vunpack.c.h.b16 %v118
  %v810 = vunpack.c.l.b16 %v119
  %v811 = vunpack.c.h.b16 %v119
  %v812 = vunpack.c.l.b16 %v120
  %v813 = vunpack.c.h.b16 %v120
  %v814 = vunpack.c.l.b16 %v121
  %v815 = vunpack.c.h.b16 %v121
  %v816 = vunpack.c.l.b16 %v122
  %v817 = vunpack.c.h.b16 %v122
  %v818 = vunpack.c.l.b16 %v123
  %v819 = vunpack.c.h.b16 %v123
  %v820 = vunpack.c.l.b16 %v124
  %v821 = vunpack.c.h.b16 %v124
  %v822 = vunpack.c.l.b16 %v125
  %v823 = vunpack.c.h.b16 %v125
  %v824 = vunpack.c.l.b16 %v126
  %v825 = vunpack.c.h.b16 %v126
  %v826 = vunpack.c.l.b16 %v127
  %v827 = vunpack.c.h.b16 %v127
  %v828 = vunpack.c.l.b16 %v128
  %v829 = vunpack.c.h.b16 %v128
  %v830 = vunpack.c.l.b16 %v129
  %v831 = vunpack.c.h.b16 %v129
  %v832 = vunpack.c.l.b16 %v130
  %v833 = vunpack.c.h.b16 %v130
  %v834 = vunpack.c.l.b16 %v131
  %v835 = vunpack.c.h.b16 %v131
  %v836 = vunpack.c.l.b16 %v132
  %v837 = vunpack.c.h.b16 %v132
  %v838 = vunpack.c.l.b16 %v133
  %v839 = vunpack.c.h.b16 %v133
  %v840 = vunpack.c.l.b16 %v134
  %v841 = vunpack.c.h.b16 %v134
  %v842 = vunpack.c.l.b16 %v135
  %v843 = vunpack.c.h.b16 %v135
  %v844 = vunpack.c.l.b16 %v136
  %v845 = vunpack.c.h.b16 %v136
  %v846 = vunpack.c.l.b16 %v137
  %v847 = vunpack.c.h.b16 %v137
  %v848 = vunpack.c.l.b16 %v138
  %v849 = vunpack.c.h.b16 %v138
  %v850 = vunpack.c.l.b16 %v139
  %v851 = vunpack.c.h.b16 %v139
  %v852 = vunpack.c.l.b16 %v140
  %v853 = vunpack.c.h.b16 %v140
  %v854 = vunpack.c.l.b16 %v141
  %v855 = vunpack.c.h.b16 %v141
  %v856 = vunpack.c.l.b16 %v142
  %v857 = vunpack.c.h.b16 %v142
  %v858 = vunpack.c.l.b16 %v143
  %v859 = vunpack.c.h.b16 %v143
  %v860 = vunpack.c.l.b16 %v144
  %v861 = vunpack.c.h.b16 %v144
  %v862 = vunpack.c.l.b16 %v145
  %v863 = vunpack.c.h.b16 %v145
  %v864 = vunpack.c.l.b16 %v146
  %v865 = vunpack.c.h.b16 %v146
  %v866 = vunpack.c.l.b16 %v147
  %v867 = vunpack.c.h.b16 %v147
  %v868 = vunpack.c.l.b16 %v148
  %v869 = vunpack.c.h.b16 %v148
  %v870 = vunpack.c.l.b16 %v149
  %v871 = vunpack.c.h.b16 %v149
  %v872 = vunpack.c.l.b16 %v150
  %v873 = vunpack.c.h.b16 %v150
  %v874 = vunpack.c.l.b16 %v151
  %v875 = vunpack.c.h.b16 %v151
  %v876 = vunpack.c.l.b16 %v152
  %v877 = vunpack.c.h.b16 %v152
  %v878 = vunpack.c.l.b16 %v153
  %v879 = vunpack.c.h.b16 %v153
  %v880 = vunpack.c.l.b16 %v154
  %v881 = vunpack.c.h.b16 %v154
  %v882 = vunpack.c.l.b16 %v155
  %v883 = vunpack.c.h.b16 %v155
  %v884 = vunpack.c.l.b16 %v156
  %v885 = vunpack.c.h.b16 %v156
  %v886 = vunpack.c.l.b16 %v157
  %v887 = vunpack.c.h.b16 %v157
  %v888 = vunpack.c.l.b16 %v158
  %v889 = vunpack.c.h.b16 %v158
  %v890 = vunpack.c.l.b16 %v159
  %v891 = vunpack.c.h.b16 %v159
  %v892 = vunpack.c.l.b16 %v160
  %v893 = vunpack.c.h.b16 %v160
  %v894 = vunpack.c.l.b16 %v161
  %v895 = vunpack.c.h.b16 %v161
  %v896 = vunpack.c.l.b16 %v162
  %v897 = vunpack.c.h.b16 %v162
  %v898 = vunpack.c.l.b16 %v163
  %v899 = vunpack.c.h.b16 %v163
  %v900 = vunpack.c.l.b16 %v164
  %v901 = vunpack.c.h.b16 %v164
  %v902 = vunpack.c.l.b16 %v165
  %v903 = vunpack.c.h.b16 %v165
  %v904 = vunpack.c.l.b16 %v166
  %v905 = vunpack.c.h.b16 %v166
  %v906 = vunpack.c.l.b16 %v167
  %v907 = vunpack.c.h.b16 %v167
  %v908 = vunpack.c.l.b16 %v168
  %v909 = vunpack.c.h.b16 %v168
  %v910 = vunpack.c.l.b16 %v169
  %v911 = vunpack.c.h.b16 %v169
  %v912 = vunpack.c.l.b16 %v170
  %v913 = vunpack.c.h.b16 %v170
  %v914 = vunpack.c.l.b16 %v171
  %v915 = vunpack.c.h.b16 %v171
  %v916 = vunpack.c.l.b16 %v172
  %v917 = vunpack.c.h.b16 %v172
  %v918 = vunpack.c.l.b16 %v173
  %v919 = vunpack.c.h.b16 %v173
  %v920 = vunpack.c.l.b16 %v174
  %v921 = vunpack.c.h.b16 %v174
  %v922 = vunpack.c.l.b16 %v175
  %v923 = vunpack.c.h.b16 %v175
  %v924 = vunpack.c.l.b16 %v176
  %v925 = vunpack.c.h.b16 %v176
  %v926 = vunpack.c.l.b16 %v177
  %v927 = vunpack.c.h.b16 %v177
  %v928 = vunpack.c.l.b16 %v178
  %v929 = vunpack.c.h.b16 %v178
  %v930 = vunpack.c.l.b16 %v179
  %v931 = vunpack.c.h.b16 %v179
  %v932 = vunpack.c.l.b16 %v180
  %v933 = vunpack.c.h.b16 %v180
  %v934 = vunpack.c.l.b16 %v181
  %v935 = vunpack.c.h.b16 %v181
  %v936 = vunpack.c.l.b16 %v182
  %v937 = vunpack.c.h.b16 %v182
  %v938 = vunpack.c.l.b16 %v183
  %v939 = vunpack.c.h.b16 %v183
  %v940 = vunpack.c.l.b16 %v184
  %v941 = vunpack.c.h.b16 %v184
  %v942 = vunpack.c.l.b16 %v185
  %v943 = vunpack.c.h.b16 %v185
  %v944 = vunpack.c.l.b16 %v186
  %v945 = vunpack.c.h.b16 %v186
  %v946 = vunpack.c.l.b16 %v187
  %v947 = vunpack.c.h.b16 %v187
  %v948 = vunpack.c.l.b16 %v188
  %v949 = vunpack.c.h.b16 %v188
  %v950 = vunpack.c.l.b16 %v189
  %v951 = vunpack.c.h.b16 %v189
  %v952 = vunpack.c.l.b16 %v190
  %v953 = vunpack.c.h.b16 %v190
  %v954 = vunpack.c.l.b16 %v191
  %v955 = vunpack.c.h.b16 %v191
  %v956 = vunpack.c.l.b16 %v192
  %v957 = vunpack.c.h.b16 %v192
  %v958 = vunpack.c.l.b16 %v193
  %v959 = vunpack.c.h.b16 %v193
  %v960 = vunpack.c.l.b16 %v194
  %v961 = vunpack.c.h.b16 %v194
  %v962 = vunpack.c.l.b16 %v195
  %v963 = vunpack.c.h.b16 %v195
  %v964 = vunpack.c.l.b16 %v196
  %v965 = vunpack.c.h.b16 %v196
  %v966 = vunpack.c.l.b16 %v197
  %v967 = vunpack.c.h.b16 %v197
  %v968 = vunpack.c.l.b16 %v198
  %v969 = vunpack.c.h.b16 %v198
  %v970 = vunpack.c.l.b16 %v199
  %v971 = vunpack.c.h.b16 %v199
  %v972 = vunpack.c.l.b16 %v200
  %v973 = vunpack.c.h.b16 %v200
  %v974 = vunpack.c.l.b16 %v201
  %v975 = vunpack.c.h.b16 %v201
  %v976 = vunpack.c.l.b16 %v202
  %v977 = vunpack.c.h.b16 %v202
  %v978 = vunpack.c.l.b16 %v203
  %v979 = vunpack.c.h.b16 %v203
  %v980 = vunpack.c.l.b16 %v204
  %v981 = vunpack.c.h.b16 %v204
  %v982 = vunpack.c.l.b16 %v205
  %v983 = vunpack.c.h.b16 %v205
  %v984 = vunpack.c.l.b16 %v206
  %v985 = vunpack.c.h.b16 %v206
  %v986 = vunpack.c.l.b16 %v207
  %v987 = vunpack.c.h.b16 %v207
  %v988 = vunpack.c.l.b16 %v208
  %v989 = vunpack.c.h.b16 %v208
  %v990 = vunpack.c.l.b16 %v209
  %v991 = vunpack.c.h.b16 %v209
  %v992 = vunpack.c.l.b16 %v210
  %v993 = vunpack.c.h.b16 %v210
  %v994 = vunpack.c.l.b16 %v211
  %v995 = vunpack.c.h.b16 %v211
  %v996 = vunpack.c.l.b16 %v212
  %v997 = vunpack.c.h.b16 %v212
  %v998 = vunpack.c.l.b16 %v213
  %v999 = vunpack.c.h.b16 %v213
  %v1000 = vunpack.c.l.b16 %v214
  %v1001 = vunpack.c.h.b16 %v214
  %v1002 = vunpack.c.l.b16 %v215
  %v1003 = vunpack.c.h.b16 %v215
  %v1004 = vunpack.c.l.b16 %v216
  %v1005 = vunpack.c.h.b16 %v216
  %v1006 = vunpack.c.l.b16 %v217
  %v1007 = vunpack.c.h.b16 %v217
  %v1008 = vunpack.c.l.b16 %v218
  %v1009 = vunpack.c.h.b16 %v218
  %v1010 = vunpack.c.l.b16 %v219
  %v1011 = vunpack.c.h.b16 %v219
  %v1012 = vunpack.c.l.b16 %v220
  %v1013 = vunpack.c.h.b16 %v220
  %v1014 = vunpack.c.l.b16 %v221
  %v1015 = vunpack.c.h.b16 %v221
  %v1016 = vunpack.c.l.b16 %v222
  %v1017 = vunpack.c.h.b16 %v222
  %v1018 = vunpack.c.l.b16 %v223
  %v1019 = vunpack.c.h.b16 %v223
  %v1020 = vunpack.c.l.b16 %v224
  %v1021 = vunpack.c.h.b16 %v224
  %v1022 = vunpack.c.l.b16 %v225
  %v1023 = vunpack.c.h.b16 %v225
  %v1024 = vunpack.c.l.b16 %v226
  %v1025 = vunpack.c.h.b16 %v226
  %v1026 = vunpack.c.l.b16 %v227
  %v1027 = vunpack.c.h.b16 %v227
  %v1028 = vunpack.c.l.b16 %v228
  %v1029 = vunpack.c.h.b16 %v228
  %v1030 = vunpack.c.l.b16 %v229
  %v1031 = vunpack.c.h.b16 %v229
  %v1032 = vunpack.c.l.b16 %v230
  %v1033 = vunpack.c.h.b16 %v230
  %v1034 = vunpack.c.l.b16 %v231
  %v1035 = vunpack.c.h.b16 %v231
  %v1036 = vunpack.c.l.b16 %v232
  %v1037 = vunpack.c.h.b16 %v232
  %v1038 = vunpack.c.l.b16 %v233
  %v1039 = vunpack.c.h.b16 %v233
  %v1040 = vunpack.c.l.b16 %v234
  %v1041 = vunpack.c.h.b16 %v234
  %v1042 = vunpack.c.l.b16 %v235
  %v1043 = vunpack.c.h.b16 %v235
  %v1044 = vunpack.c.l.b16 %v236
  %v1045 = vunpack.c.h.b16 %v236
  %v1046 = vunpack.c.l.b16 %v237
  %v1047 = vunpack.c.h.b16 %v237
  %v1048 = vunpack.c.l.b16 %v238
  %v1049 = vunpack.c.h.b16 %v238
  %v1050 = vunpack.c.l.b16 %v239
  %v1051 = vunpack.c.h.b16 %v239
  %v1052 = vunpack.c.l.b16 %v240
  %v1053 = vunpack.c.h.b16 %v240
  %v1054 = vunpack.c.l.b16 %v241
  %v1055 = vunpack.c.h.b16 %v241
  %v1056 = vunpack.c.l.b16 %v242
  %v1057 = vunpack.c.h.b16 %v242
  %v1058 = vunpack.c.l.b16 %v243
  %v1059 = vunpack.c.h.b16 %v243
  %v1060 = vunpack.c.l.b16 %v244
  %v1061 = vunpack.c.h.b16 %v244
  %v1062 = vunpack.c.l.b16 %v245
  %v1063 = vunpack.c.h.b16 %v245
  %v1064 = vunpack.c.l.b16 %v246
  %v1065 = vunpack.c.h.b16 %v246
  %v1066 = vunpack.c.l.b16 %v247
  %v1067 = vunpack.c.h.b16 %v247
  %v1068 = vunpack.c.l.b16 %v248
  %v1069 = vunpack.c.h.b16 %v248
  %v1070 = vunpack.c.l.b16 %v249
  %v1071 = vunpack.c.h.b16 %v249
  %v1072 = vunpack.c.l.b16 %v250
  %v1073 = vunpack.c.h.b16 %v250
  %v1074 = vunpack.c.l.b16 %v251
  %v1075 = vunpack.c.h.b16 %v251
  %v1076 = vunpack.c.l.b16 %v252
  %v1077 = vunpack.c.h.b16 %v252
  %v1078 = vunpack.c.l.b16 %v253
  %v1079 = vunpack.c.h.b16 %v253
  %v1080 = vunpack.c.l.b16 %v254
  %v1081 = vunpack.c.h.b16 %v254
  %v1082 = vunpack.c.l.b16 %v255
  %v1083 = vunpack.c.h.b16 %v255
  %v1084 = vunpack.c.l.b16 %v256
  %v1085 = vunpack.c.h.b16 %v256
  %v1086 = vunpack.c.l.b16 %v257
  %v1087 = vunpack.c.h.b16 %v257
  %v1088 = vunpack.c.l.b16 %v258
  %v1089 = vunpack.c.h.b16 %v258
  %v1090 = vunpack.c.l.b16 %v259
  %v1091 = vunpack.c.h.b16 %v259
  %v1092 = vunpack.c.l.b16 %v260
  %v1093 = vunpack.c.h.b16 %v260
  %v1094 = vunpack.c.l.b16 %v261
  %v1095 = vunpack.c.h.b16 %v261
  %v1096 = vunpack.c.l.b16 %v262
  %v1097 = vunpack.c.h.b16 %v262
  %v1098 = vunpack.c.l.b16 %v263
  %v1099 = vunpack.c.h.b16 %v263
  %v1100 = vunpack.c.l.b16 %v264
  %v1101 = vunpack.c.h.b16 %v264
  %v1102 = vunpack.c.l.b16 %v265
  %v1103 = vunpack.c.h.b16 %v265
  %v1104 = vunpack.c.l.b16 %v266
  %v1105 = vunpack.c.h.b16 %v266
  %v1106 = vunpack.c.l.b16 %v267
  %v1107 = vunpack.c.h.b16 %v267
  %v1108 = vunpack.c.l.b16 %v268
  %v1109 = vunpack.c.h.b16 %v268
  %v1110 = vunpack.c.l.b16 %v269
  %v1111 = vunpack.c.h.b16 %v269
  %v1112 = vunpack.c.l.b16 %v270
  %v1113 = vunpack.c.h.b16 %v270
  %v1114 = vunpack.c.l.b16 %v271
  %v1115 = vunpack.c.h.b16 %v271
  %v1116 = vunpack.c.l.b16 %v272
  %v1117 = vunpack.c.h.b16 %v272
  %v1118 = vunpack.c.l.b16 %v273
  %v1119 = vunpack.c.h.b16 %v273
  %v1120 = vunpack.c.l.b16 %v274
  %v1121 = vunpack.c.h.b16 %v274
  %v1122 = vunpack.c.l.b16 %v275
  %v1123 = vunpack.c.h.b16 %v275
  %v1124 = vunpack.c.l.b16 %v276
  %v1125 = vunpack.c.h.b16 %v276
  %v1126 = vunpack.c.l.b16 %v277
  %v1127 = vunpack.c.h.b16 %v277
  %v1128 = vunpack.c.l.b16 %v278
  %v1129 = vunpack.c.h.b16 %v278
  %v1130 = vunpack.c.l.b16 %v279
  %v1131 = vunpack.c.h.b16 %v279
  %v1132 = vunpack.c.l.b16 %v280
  %v1133 = vunpack.c.h.b16 %v280
  %v1134 = vunpack.c.l.b16 %v281
  %v1135 = vunpack.c.h.b16 %v281
  %v1136 = vunpack.c.l.b16 %v282
  %v1137 = vunpack.c.h.b16 %v282
  %v1138 = vunpack.c.l.b16 %v283
  %v1139 = vunpack.c.h.b16 %v283
  %v1140 = vunpack.c.l.b16 %v284
  %v1141 = vunpack.c.h.b16 %v284
  %v1142 = vunpack.c.l.b16 %v285
  %v1143 = vunpack.c.h.b16 %v285
  %v1144 = vpack.c.b16 %v636, %v632
  %v1145 = vpack.c.b16 %v637, %v633
  %v1146 = vpack.c.b16 %v638, %v634
  %v1147 = vpack.c.b16 %v639, %v635
  %v1148 = vpack.c.b16 %v644, %v640
  %v1149 = vpack.c.b16 %v645, %v641
  %v1150 = vpack.c.b16 %v646, %v642
  %v1151 = vpack.c.b16 %v647, %v643
  %v1152 = vpack.c.b16 %v652, %v648
  %v1153 = vpack.c.b16 %v653, %v649
  %v1154 = vpack.c.b16 %v654, %v650
  %v1155 = vpack.c.b16 %v655, %v651
  %v1156 = vpack.c.b16 %v660, %v656
  %v1157 = vpack.c.b16 %v661, %v657
  %v1158 = vpack.c.b16 %v662, %v658
  %v1159 = vpack.c.b16 %v663, %v659
  %v1160 = vpack.c.b16 %v668, %v664
  %v1161 = vpack.c.b16 %v669, %v665
  %v1162 = vpack.c.b16 %v670, %v666
  %v1163 = vpack.c.b16 %v671, %v667
  %v1164 = vpack.c.b16 %v676, %v672
  %v1165 = vpack.c.b16 %v677, %v673
  %v1166 = vpack.c.b16 %v678, %v674
  %v1167 = vpack.c.b16 %v679, %v675
  %v1168 = vpack.c.b16 %v684, %v680
  %v1169 = vpack.c.b16 %v685, %v681
  %v1170 = vpack.c.b16 %v686, %v682
  %v1171 = vpack.c.b16 %v687, %v683
  %v1172 = vpack.c.b16 %v692, %v688
  %v1173 = vpack.c.b16 %v693, %v689
  %v1174 = vpack.c.b16 %v694, %v690
  %v1175 = vpack.c.b16 %v695, %v691
  %v1176 = vpack.c.b16 %v700, %v696
  %v1177 = vpack.c.b16 %v701, %v697
  %v1178 = vpack.c.b16 %v702, %v698
  %v1179 = vpack.c.b16 %v703, %v699
  %v1180 = vpack.c.b16 %v708, %v704
  %v1181 = vpack.c.b16 %v709, %v705
  %v1182 = vpack.c.b16 %v710, %v706
  %v1183 = vpack.c.b16 %v711, %v707
  %v1184 = vpack.c.b16 %v716, %v712
  %v1185 = vpack.c.b16 %v717, %v713
  %v1186 = vpack.c.b16 %v718, %v714
  %v1187 = vpack.c.b16 %v719, %v715
  %v1188 = vpack.c.b16 %v724, %v720
  %v1189 = vpack.c.b16 %v725, %v721
  %v1190 = vpack.c.b16 %v726, %v722
  %v1191 = vpack.c.b16 %v727, %v723
  %v1192 = vpack.c.b16 %v732, %v728
  %v1193 = vpack.c.b16 %v733, %v729
  %v1194 = vpack.c.b16 %v734, %v730
  %v1195 = vpack.c.b16 %v735, %v731
  %v1196 = vpack.c.b16 %v740, %v736
  %v1197 = vpack.c.b16 %v741, %v737
  %v1198 = vpack.c.b16 %v742, %v738
  %v1199 = vpack.c.b16 %v743, %v739
  %v1200 = vpack.c.b16 %v748, %v744
  %v1201 = vpack.c.b16 %v749, %v745
  %v1202 = vpack.c.b16 %v750, %v746
  %v1203 = vpack.c.b16 %v751, %v747
  %v1204 = vpack.c.b16 %v756, %v752
  %v1205 = vpack.c.b16 %v757, %v753
  %v1206 = vpack.c.b16 %v758, %v754
  %v1207 = vpack.c.b16 %v759, %v755
  %v1208 = vpack.c.b16 %v764, %v760
  %v1209 = vpack.c.b16 %v765, %v761
  %v1210 = vpack.c.b16 %v766, %v762
  %v1211 = vpack.c.b16 %v767, %v763
  %v1212 = vpack.c.b16 %v772, %v768
  %v1213 = vpack.c.b16 %v773, %v769
  %v1214 = vpack.c.b16 %v774, %v770
  %v1215 = vpack.c.b16 %v775, %v771
  %v1216 = vpack.c.b16 %v780, %v776
  %v1217 = vpack.c.b16 %v781, %v777
  %v1218 = vpack.c.b16 %v782, %v778
  %v1219 = vpack.c.b16 %v783, %v779
  %v1220 = vpack.c.b16 %v788, %v784
  %v1221 = vpack.c.b16 %v789, %v785
  %v1222 = vpack.c.b16 %v790, %v786
  %v1223 = vpack.c.b16 %v791, %v787
  %v1224 = vpack.c.b16 %v796, %v792
  %v1225 = vpack.c.b16 %v797, %v793
  %v1226 = vpack.c.b16 %v798, %v794
  %v1227 = vpack.c.b16 %v799, %v795
  %v1228 = vpack.c.b16 %v804, %v800
  %v1229 = vpack.c.b16 %v805, %v801
  %v1230 = vpack.c.b16 %v806, %v802
  %v1231 = vpack.c.b16 %v807, %v803
  %v1232 = vpack.c.b16 %v812, %v808
  %v1233 = vpack.c.b16 %v813, %v809
  %v1234 = vpack.c.b16 %v814, %v810
  %v1235 = vpack.c.b16 %v815, %v811
  %v1236 = vpack.c.b16 %v820, %v816
  %v1237 = vpack.c.b16 %v821, %v817
  %v1238 = vpack.c.b16 %v822, %v818
  %v1239 = vpack.c.b16 %v823, %v819
  %v1240 = vpack.c.b16 %v828, %v824
  %v1241 = vpack.c.b16 %v829, %v825
  %v1242 = vpack.c.b16 %v830, %v826
  %v1243 = vpack.c.b16 %v831, %v827
  %v1244 = vpack.c.b16 %v836, %v832
  %v1245 = vpack.c.b16 %v837, %v833
  %v1246 = vpack.c.b16 %v838, %v834
  %v1247 = vpack.c.b16 %v839, %v835
  %v1248 = vpack.c.b16 %v844, %v840
  %v1249 = vpack.c.b16 %v845, %v841
  %v1250 = vpack.c.b16 %v846, %v842
  %v1251 = vpack.c.b16 %v847, %v843
  %v1252 = vpack.c.b16 %v852, %v848
  %v1253 = vpack.c.b16 %v853, %v849
  %v1254 = vpack.c.b16 %v854, %v850
  %v1255 = vpack.c.b16 %v855, %v851
  %v1256 = vpack.c.b16 %v860, %v856
  %v1257 = vpack.c.b16 %v861, %v857
  %v1258 = vpack.c.b16 %v862, %v858
  %v1259 = vpack.c.b16 %v863, %v859
  %v1260 = vpack.c.b16 %v868, %v864
  %v1261 = vpack.c.b16 %v869, %v865
  %v1262 = vpack.c.b16 %v870, %v866
  %v1263 = vpack.c.b16 %v871, %v867
  %v1264 = vpack.c.b16 %v876, %v872
  %v1265 = vpack.c.b16 %v877, %v873
  %v1266 = vpack.c.b16 %v878, %v874
  %v1267 = vpack.c.b16 %v879, %v875
  %v1268 = vpack.c.b16 %v884, %v880
  %v1269 = vpack.c.b16 %v885, %v881
  %v1270 = vpack.c.b16 %v886, %v882
  %v1271 = vpack.c.b16 %v887, %v883
  %v1272 = vpack.c.b16 %v892, %v888
  %v1273 = vpack.c.b16 %v893, %v889
  %v1274 = vpack.c.b16 %v894, %v890
  %v1275 = vpack.c.b16 %v895, %v891
  %v1276 = vpack.c.b16 %v900, %v896
  %v1277 = vpack.c.b16 %v901, %v897
  %v1278 = vpack.c.b16 %v902, %v898
  %v1279 = vpack.c.b16 %v903, %v899
  %v1280 = vpack.c.b16 %v908, %v904
  %v1281 = vpack.c.b16 %v909, %v905
  %v1282 = vpack.c.b16 %v910, %v906
  %v1283 = vpack.c.b16 %v911, %v907
  %v1284 = vpack.c.b16 %v916, %v912
  %v1285 = vpack.c.b16 %v917, %v913
  %v1286 = vpack.c.b16 %v918, %v914
  %v1287 = vpack.c.b16 %v919, %v915
  %v1288 = vpack.c.b16 %v924, %v920
  %v1289 = vpack.c.b16 %v925, %v921
  %v1290 = vpack.c.b16 %v926, %v922
  %v1291 = vpack.c.b16 %v927, %v923
  %v1292 = vpack.c.b16 %v932, %v928
  %v1293 = vpack.c.b16 %v933, %v929
  %v1294 = vpack.c.b16 %v934, %v930
  %v1295 = vpack.c.b16 %v935, %v931
  %v1296 = vpack.c.b16 %v940, %v936
  %v1297 = vpack.c.b16 %v941, %v937
  %v1298 = vpack.c.b16 %v942, %v938
  %v1299 = vpack.c.b16 %v943, %v939
  %v1300 = vpack.c.b16 %v948, %v944
  %v1301 = vpack.c.b16 %v949, %v945
  %v1302 = vpack.c.b16 %v950, %v946
  %v1303 = vpack.c.b16 %v951, %v947
  %v1304 = vpack.c.b16 %v956, %v952
  %v1305 = vpack.c.b16 %v957, %v953
  %v1306 = vpack.c.b16 %v958, %v954
  %v1307 = vpack.c.b16 %v959, %v955
  %v1308 = vpack.c.b16 %v964, %v960
  %v1309 = vpack.c.b16 %v965, %v961
  %v1310 = vpack.c.b16 %v966, %v962
  %v1311 = vpack.c.b16 %v967, %v963
  %v1312 = vpack.c.b16 %v972, %v968
  %v1313 = vpack.c.b16 %v973, %v969
  %v1314 = vpack.c.b16 %v974, %v970
  %v1315 = vpack.c.b16 %v975, %v971
  %v1316 = vpack.c.b16 %v980, %v976
  %v1317 = vpack.c.b16 %v981, %v977
  %v1318 = vpack.c.b16 %v982, %v978
  %v1319 = vpack.c.b16 %v983, %v979
  %v1320 = vpack.c.b16 %v988, %v984
  %v1321 = vpack.c.b16 %v989, %v985
  %v1322 = vpack.c.b16 %v990, %v986
  %v1323 = vpack.c.b16 %v991, %v987
  %v1324 = vpack.c.b16 %v996, %v992
  %v1325 = vpack.c.b16 %v997, %v993
  %v1326 = vpack.c.b16 %v998, %v994
  %v1327 = vpack.c.b16 %v999, %v995
  %v1328 = vpack.c.b16 %v1004, %v1000
  %v1329 = vpack.c.b16 %v1005, %v1001
  %v1330 = vpack.c.b16 %v1006, %v1002
  %v1331 = vpack.c.b16 %v1007, %v1003
  %v1332 = vpack.c.b16 %v1012, %v1008
  %v1333 = vpack.c.b16 %v1013, %v1009
  %v1334 = vpack.c.b16 %v1014, %v1010
  %v1335 = vpack.c.b16 %v1015, %v1011
  %v1336 = vpack.c.b16 %v1020, %v1016
  %v1337 = vpack.c.b16 %v1021, %v1017
  %v1338 = vpack.c.b16 %v1022, %v1018
  %v1339 = vpack.c.b16 %v1023, %v1019
  %v1340 = vpack.c.b16 %v1028, %v1024
  %v1341 = vpack.c.b16 %v1029, %v1025
  %v1342 = vpack.c.b16 %v1030, %v1026
  %v1343 = vpack.c.b16 %v1031, %v1027
  %v1344 = vpack.c.b16 %v1036, %v1032
  %v1345 = vpack.c.b16 %v1037, %v1033
  %v1346 = vpack.c.b16 %v1038, %v1034
  %v1347 = vpack.c.b16 %v1039, %v1035
  %v1348 = vpack.c.b16 %v1044, %v1040
  %v1349 = vpack.c.b16 %v1045, %v1041
  %v1350 = vpack.c.b16 %v1046, %v1042
  %v1351 = vpack.c.b16 %v1047, %v1043
  %v1352 = vpack.c.b16 %v1052, %v1048
  %v1353 = vpack.c.b16 %v1053, %v1049
  %v1354 = vpack.c.b16 %v1054, %v1050
  %v1355 = vpack.c.b16 %v1055, %v1051
  %v1356 = vpack.c.b16 %v1060, %v1056
  %v1357 = vpack.c.b16 %v1061, %v1057
  %v1358 = vpack.c.b16 %v1062, %v1058
  %v1359 = vpack.c.b16 %v1063, %v1059
  %v1360 = vpack.c.b16 %v1068, %v1064
  %v1361 = vpack.c.b16 %v1069, %v1065
  %v1362 = vpack.c.b16 %v1070, %v1066
  %v1363 = vpack.c.b16 %v1071, %v1067
  %v1364 = vpack.c.b16 %v1076, %v1072
  %v1365 = vpack.c.b16 %v1077, %v1073
  %v1366 = vpack.c.b16 %v1078, %v1074
  %v1367 = vpack.c.b16 %v1079, %v1075
  %v1368 = vpack.c.b16 %v1084, %v1080
  %v1369 = vpack.c.b16 %v1085, %v1081
  %v1370 = vpack.c.b16 %v1086, %v1082
  %v1371 = vpack.c.b16 %v1087, %v1083
  %v1372 = vpack.c.b16 %v1092, %v1088
  %v1373 = vpack.c.b16 %v1093, %v1089
  %v1374 = vpack.c.b16 %v1094, %v1090
  %v1375 = vpack.c.b16 %v1095, %v1091
  %v1376 = vpack.c.b16 %v1100, %v1096
  %v1377 = vpack.c.b16 %v1101, %v1097
  %v1378 = vpack.c.b16 %v1102, %v1098
  %v1379 = vpack.c.b16 %v1103, %v1099
  %v1380 = vpack.c.b16 %v1108, %v1104
  %v1381 = vpack.c.b16 %v1109, %v1105
  %v1382 = vpack.c.b16 %v1110, %v1106
  %v1383 = vpack.c.b16 %v1111, %v1107
  %v1384 = vpack.c.b16 %v1116, %v1112
  %v1385 = vpack.c.b16 %v1117, %v1113
  %v1386 = vpack.c.b16 %v1118, %v1114
  %v1387 = vpack.c.b16 %v1119, %v1115
  %v1388 = vpack.c.b16 %v1124, %v1120
  %v1389 = vpack.c.b16 %v1125, %v1121
  %v1390 = vpack.c.b16 %v1126, %v1122
  %v1391 = vpack.c.b16 %v1127, %v1123
  %v1392 = vpack.c.b16 %v1132, %v1128
  %v1393 = vpack.c.b16 %v1133, %v1129
  %v1394 = vpack.c.b16 %v1134, %v1130
  %v1395 = vpack.c.b16 %v1135, %v1131
  %v1396 = vpack.c.b16 %v1140, %v1136
  %v1397 = vpack.c.b16 %v1141, %v1137
  %v1398 = vpack.c.b16 %v1142, %v1138
  %v1399 = vpack.c.b16 %v1143, %v1139
  %1656 = vmatpush.bf16.msra.mxu0 %v1172
  %1657 = vmatpush.bf16.msra.mxu0 %v1168
  %1658 = vmatpush.bf16.msra.mxu0 %v1164
  %1659 = vmatpush.bf16.msra.mxu0 %v1160
  %1660 = vmatpush.bf16.msra.mxu0 %v1156
  %1661 = vmatpush.bf16.msra.mxu0 %v1152
  %1662 = vmatpush.bf16.msra.mxu0 %v1148
  %1663 = vmatpush.bf16.msra.mxu0 %v1144
  %1664 = vmatmul.bf16.gmra.mxu0 %v344
  %v1665 = vpop.f32.mrf.mxu0
  %v1666 = vadd.f32 %v288, %v1665
  %v1667 = vpop.f32.mrf.mxu0
  %v1668 = vadd.f32 %v288, %v1667
  %1669 = vmatmul.bf16.gmra.mxu0 %v352
  %v1670 = vpop.f32.mrf.mxu0
  %v1671 = vadd.f32 %v288, %v1670
  %v1672 = vpop.f32.mrf.mxu0
  %v1673 = vadd.f32 %v288, %v1672
  %1674 = vdwg.mxu0
  %1675 = vmatpush.bf16.msra.mxu0 %v1204
  %1676 = vmatpush.bf16.msra.mxu0 %v1200
  %1677 = vmatpush.bf16.msra.mxu0 %v1196
  %1678 = vmatpush.bf16.msra.mxu0 %v1192
  %1679 = vmatpush.bf16.msra.mxu0 %v1188
  %1680 = vmatpush.bf16.msra.mxu0 %v1184
  %1681 = vmatpush.bf16.msra.mxu0 %v1180
  %1682 = vmatpush.bf16.msra.mxu0 %v1176
  %1683 = vmatmul.bf16.gmra.mxu0 %v345
  %v1684 = vpop.f32.mrf.mxu0
  %v1685 = vadd.f32 %v1666, %v1684
  %v1686 = vpop.f32.mrf.mxu0
  %v1687 = vadd.f32 %v1668, %v1686
  %1688 = vmatmul.bf16.gmra.mxu0 %v353
  %v1689 = vpop.f32.mrf.mxu0
  %v1690 = vadd.f32 %v1671, %v1689
  %v1691 = vpop.f32.mrf.mxu0
  %v1692 = vadd.f32 %v1673, %v1691
  %1693 = vdwg.mxu0
  %1694 = vmatpush.bf16.msra.mxu0 %v1236
  %1695 = vmatpush.bf16.msra.mxu0 %v1232
  %1696 = vmatpush.bf16.msra.mxu0 %v1228
  %1697 = vmatpush.bf16.msra.mxu0 %v1224
  %1698 = vmatpush.bf16.msra.mxu0 %v1220
  %1699 = vmatpush.bf16.msra.mxu0 %v1216
  %1700 = vmatpush.bf16.msra.mxu0 %v1212
  %1701 = vmatpush.bf16.msra.mxu0 %v1208
  %1702 = vmatmul.bf16.gmra.mxu0 %v346
  %v1703 = vpop.f32.mrf.mxu0
  %v1704 = vadd.f32 %v1685, %v1703
  %v1705 = vpop.f32.mrf.mxu0
  %v1706 = vadd.f32 %v1687, %v1705
  %1707 = vmatmul.bf16.gmra.mxu0 %v354
  %v1708 = vpop.f32.mrf.mxu0
  %v1709 = vadd.f32 %v1690, %v1708
  %v1710 = vpop.f32.mrf.mxu0
  %v1711 = vadd.f32 %v1692, %v1710
  %1712 = vdwg.mxu0
  %1713 = vmatpush.bf16.msra.mxu0 %v1268
  %1714 = vmatpush.bf16.msra.mxu0 %v1264
  %1715 = vmatpush.bf16.msra.mxu0 %v1260
  %1716 = vmatpush.bf16.msra.mxu0 %v1256
  %1717 = vmatpush.bf16.msra.mxu0 %v1252
  %1718 = vmatpush.bf16.msra.mxu0 %v1248
  %1719 = vmatpush.bf16.msra.mxu0 %v1244
  %1720 = vmatpush.bf16.msra.mxu0 %v1240
  %1721 = vmatmul.bf16.gmra.mxu0 %v347
  %v1722 = vpop.f32.mrf.mxu0
  %v1723 = vadd.f32 %v1704, %v1722
  %v1724 = vpop.f32.mrf.mxu0
  %v1725 = vadd.f32 %v1706, %v1724
  %1726 = vmatmul.bf16.gmra.mxu0 %v355
  %v1727 = vpop.f32.mrf.mxu0
  %v1728 = vadd.f32 %v1709, %v1727
  %v1729 = vpop.f32.mrf.mxu0
  %v1730 = vadd.f32 %v1711, %v1729
  %1731 = vdwg.mxu0
  %1732 = vmatpush.bf16.msra.mxu0 %v1300
  %1733 = vmatpush.bf16.msra.mxu0 %v1296
  %1734 = vmatpush.bf16.msra.mxu0 %v1292
  %1735 = vmatpush.bf16.msra.mxu0 %v1288
  %1736 = vmatpush.bf16.msra.mxu0 %v1284
  %1737 = vmatpush.bf16.msra.mxu0 %v1280
  %1738 = vmatpush.bf16.msra.mxu0 %v1276
  %1739 = vmatpush.bf16.msra.mxu0 %v1272
  %1740 = vmatmul.bf16.gmra.mxu0 %v348
  %v1741 = vpop.f32.mrf.mxu0
  %v1742 = vadd.f32 %v1723, %v1741
  %v1743 = vpop.f32.mrf.mxu0
  %v1744 = vadd.f32 %v1725, %v1743
  %1745 = vmatmul.bf16.gmra.mxu0 %v356
  %v1746 = vpop.f32.mrf.mxu0
  %v1747 = vadd.f32 %v1728, %v1746
  %v1748 = vpop.f32.mrf.mxu0
  %v1749 = vadd.f32 %v1730, %v1748
  %1750 = vdwg.mxu0
  %1751 = vmatpush.bf16.msra.mxu0 %v1332
  %1752 = vmatpush.bf16.msra.mxu0 %v1328
  %1753 = vmatpush.bf16.msra.mxu0 %v1324
  %1754 = vmatpush.bf16.msra.mxu0 %v1320
  %1755 = vmatpush.bf16.msra.mxu0 %v1316
  %1756 = vmatpush.bf16.msra.mxu0 %v1312
  %1757 = vmatpush.bf16.msra.mxu0 %v1308
  %1758 = vmatpush.bf16.msra.mxu0 %v1304
  %1759 = vmatmul.bf16.gmra.mxu0 %v349
  %v1760 = vpop.f32.mrf.mxu0
  %v1761 = vadd.f32 %v1742, %v1760
  %v1762 = vpop.f32.mrf.mxu0
  %v1763 = vadd.f32 %v1744, %v1762
  %1764 = vmatmul.bf16.gmra.mxu0 %v357
  %v1765 = vpop.f32.mrf.mxu0
  %v1766 = vadd.f32 %v1747, %v1765
  %v1767 = vpop.f32.mrf.mxu0
  %v1768 = vadd.f32 %v1749, %v1767
  %1769 = vdwg.mxu0
  %1770 = vmatpush.bf16.msra.mxu0 %v1364
  %1771 = vmatpush.bf16.msra.mxu0 %v1360
  %1772 = vmatpush.bf16.msra.mxu0 %v1356
  %1773 = vmatpush.bf16.msra.mxu0 %v1352
  %1774 = vmatpush.bf16.msra.mxu0 %v1348
  %1775 = vmatpush.bf16.msra.mxu0 %v1344
  %1776 = vmatpush.bf16.msra.mxu0 %v1340
  %1777 = vmatpush.bf16.msra.mxu0 %v1336
  %1778 = vmatmul.bf16.gmra.mxu0 %v350
  %v1779 = vpop.f32.mrf.mxu0
  %v1780 = vadd.f32 %v1761, %v1779
  %v1781 = vpop.f32.mrf.mxu0
  %v1782 = vadd.f32 %v1763, %v1781
  %1783 = vmatmul.bf16.gmra.mxu0 %v358
  %v1784 = vpop.f32.mrf.mxu0
  %v1785 = vadd.f32 %v1766, %v1784
  %v1786 = vpop.f32.mrf.mxu0
  %v1787 = vadd.f32 %v1768, %v1786
  %1788 = vdwg.mxu0
  %1789 = vmatpush.bf16.msra.mxu0 %v1396
  %1790 = vmatpush.bf16.msra.mxu0 %v1392
  %1791 = vmatpush.bf16.msra.mxu0 %v1388
  %1792 = vmatpush.bf16.msra.mxu0 %v1384
  %1793 = vmatpush.bf16.msra.mxu0 %v1380
  %1794 = vmatpush.bf16.msra.mxu0 %v1376
  %1795 = vmatpush.bf16.msra.mxu0 %v1372
  %1796 = vmatpush.bf16.msra.mxu0 %v1368
  %1797 = vmatmul.bf16.gmra.mxu0 %v351
  %v1798 = vpop.f32.mrf.mxu0
  %v1799 = vadd.f32 %v1780, %v1798
  %v1800 = vpop.f32.mrf.mxu0
  %v1801 = vadd.f32 %v1782, %v1800
  %1802 = vmatmul.bf16.gmra.mxu0 %v359
  %v1803 = vpop.f32.mrf.mxu0
  %v1804 = vadd.f32 %v1785, %v1803
  %v1805 = vpop.f32.mrf.mxu0
  %v1806 = vadd.f32 %v1787, %v1805
  %1807 = vdwg.mxu0
  %1808 = vmatpush.bf16.msra.mxu0 %v1173
  %1809 = vmatpush.bf16.msra.mxu0 %v1169
  %1810 = vmatpush.bf16.msra.mxu0 %v1165
  %1811 = vmatpush.bf16.msra.mxu0 %v1161
  %1812 = vmatpush.bf16.msra.mxu0 %v1157
  %1813 = vmatpush.bf16.msra.mxu0 %v1153
  %1814 = vmatpush.bf16.msra.mxu0 %v1149
  %1815 = vmatpush.bf16.msra.mxu0 %v1145
  %1816 = vmatmul.bf16.gmra.mxu0 %v344
  %v1817 = vpop.f32.mrf.mxu0
  %v1818 = vadd.f32 %v289, %v1817
  %v1819 = vpop.f32.mrf.mxu0
  %v1820 = vadd.f32 %v289, %v1819
  %1821 = vmatmul.bf16.gmra.mxu0 %v352
  %v1822 = vpop.f32.mrf.mxu0
  %v1823 = vadd.f32 %v289, %v1822
  %v1824 = vpop.f32.mrf.mxu0
  %v1825 = vadd.f32 %v289, %v1824
  %1826 = vdwg.mxu0
  %1827 = vmatpush.bf16.msra.mxu0 %v1205
  %1828 = vmatpush.bf16.msra.mxu0 %v1201
  %1829 = vmatpush.bf16.msra.mxu0 %v1197
  %1830 = vmatpush.bf16.msra.mxu0 %v1193
  %1831 = vmatpush.bf16.msra.mxu0 %v1189
  %1832 = vmatpush.bf16.msra.mxu0 %v1185
  %1833 = vmatpush.bf16.msra.mxu0 %v1181
  %1834 = vmatpush.bf16.msra.mxu0 %v1177
  %1835 = vmatmul.bf16.gmra.mxu0 %v345
  %v1836 = vpop.f32.mrf.mxu0
  %v1837 = vadd.f32 %v1818, %v1836
  %v1838 = vpop.f32.mrf.mxu0
  %v1839 = vadd.f32 %v1820, %v1838
  %1840 = vmatmul.bf16.gmra.mxu0 %v353
  %v1841 = vpop.f32.mrf.mxu0
  %v1842 = vadd.f32 %v1823, %v1841
  %v1843 = vpop.f32.mrf.mxu0
  %v1844 = vadd.f32 %v1825, %v1843
  %1845 = vdwg.mxu0
  %1846 = vmatpush.bf16.msra.mxu0 %v1237
  %1847 = vmatpush.bf16.msra.mxu0 %v1233
  %1848 = vmatpush.bf16.msra.mxu0 %v1229
  %1849 = vmatpush.bf16.msra.mxu0 %v1225
  %1850 = vmatpush.bf16.msra.mxu0 %v1221
  %1851 = vmatpush.bf16.msra.mxu0 %v1217
  %1852 = vmatpush.bf16.msra.mxu0 %v1213
  %1853 = vmatpush.bf16.msra.mxu0 %v1209
  %1854 = vmatmul.bf16.gmra.mxu0 %v346
  %v1855 = vpop.f32.mrf.mxu0
  %v1856 = vadd.f32 %v1837, %v1855
  %v1857 = vpop.f32.mrf.mxu0
  %v1858 = vadd.f32 %v1839, %v1857
  %1859 = vmatmul.bf16.gmra.mxu0 %v354
  %v1860 = vpop.f32.mrf.mxu0
  %v1861 = vadd.f32 %v1842, %v1860
  %v1862 = vpop.f32.mrf.mxu0
  %v1863 = vadd.f32 %v1844, %v1862
  %1864 = vdwg.mxu0
  %1865 = vmatpush.bf16.msra.mxu0 %v1269
  %1866 = vmatpush.bf16.msra.mxu0 %v1265
  %1867 = vmatpush.bf16.msra.mxu0 %v1261
  %1868 = vmatpush.bf16.msra.mxu0 %v1257
  %1869 = vmatpush.bf16.msra.mxu0 %v1253
  %1870 = vmatpush.bf16.msra.mxu0 %v1249
  %1871 = vmatpush.bf16.msra.mxu0 %v1245
  %1872 = vmatpush.bf16.msra.mxu0 %v1241
  %1873 = vmatmul.bf16.gmra.mxu0 %v347
  %v1874 = vpop.f32.mrf.mxu0
  %v1875 = vadd.f32 %v1856, %v1874
  %v1876 = vpop.f32.mrf.mxu0
  %v1877 = vadd.f32 %v1858, %v1876
  %1878 = vmatmul.bf16.gmra.mxu0 %v355
  %v1879 = vpop.f32.mrf.mxu0
  %v1880 = vadd.f32 %v1861, %v1879
  %v1881 = vpop.f32.mrf.mxu0
  %v1882 = vadd.f32 %v1863, %v1881
  %1883 = vdwg.mxu0
  %1884 = vmatpush.bf16.msra.mxu0 %v1301
  %1885 = vmatpush.bf16.msra.mxu0 %v1297
  %1886 = vmatpush.bf16.msra.mxu0 %v1293
  %1887 = vmatpush.bf16.msra.mxu0 %v1289
  %1888 = vmatpush.bf16.msra.mxu0 %v1285
  %1889 = vmatpush.bf16.msra.mxu0 %v1281
  %1890 = vmatpush.bf16.msra.mxu0 %v1277
  %1891 = vmatpush.bf16.msra.mxu0 %v1273
  %1892 = vmatmul.bf16.gmra.mxu0 %v348
  %v1893 = vpop.f32.mrf.mxu0
  %v1894 = vadd.f32 %v1875, %v1893
  %v1895 = vpop.f32.mrf.mxu0
  %v1896 = vadd.f32 %v1877, %v1895
  %1897 = vmatmul.bf16.gmra.mxu0 %v356
  %v1898 = vpop.f32.mrf.mxu0
  %v1899 = vadd.f32 %v1880, %v1898
  %v1900 = vpop.f32.mrf.mxu0
  %v1901 = vadd.f32 %v1882, %v1900
  %1902 = vdwg.mxu0
  %1903 = vmatpush.bf16.msra.mxu0 %v1333
  %1904 = vmatpush.bf16.msra.mxu0 %v1329
  %1905 = vmatpush.bf16.msra.mxu0 %v1325
  %1906 = vmatpush.bf16.msra.mxu0 %v1321
  %1907 = vmatpush.bf16.msra.mxu0 %v1317
  %1908 = vmatpush.bf16.msra.mxu0 %v1313
  %1909 = vmatpush.bf16.msra.mxu0 %v1309
  %1910 = vmatpush.bf16.msra.mxu0 %v1305
  %1911 = vmatmul.bf16.gmra.mxu0 %v349
  %v1912 = vpop.f32.mrf.mxu0
  %v1913 = vadd.f32 %v1894, %v1912
  %v1914 = vpop.f32.mrf.mxu0
  %v1915 = vadd.f32 %v1896, %v1914
  %1916 = vmatmul.bf16.gmra.mxu0 %v357
  %v1917 = vpop.f32.mrf.mxu0
  %v1918 = vadd.f32 %v1899, %v1917
  %v1919 = vpop.f32.mrf.mxu0
  %v1920 = vadd.f32 %v1901, %v1919
  %1921 = vdwg.mxu0
  %1922 = vmatpush.bf16.msra.mxu0 %v1365
  %1923 = vmatpush.bf16.msra.mxu0 %v1361
  %1924 = vmatpush.bf16.msra.mxu0 %v1357
  %1925 = vmatpush.bf16.msra.mxu0 %v1353
  %1926 = vmatpush.bf16.msra.mxu0 %v1349
  %1927 = vmatpush.bf16.msra.mxu0 %v1345
  %1928 = vmatpush.bf16.msra.mxu0 %v1341
  %1929 = vmatpush.bf16.msra.mxu0 %v1337
  %1930 = vmatmul.bf16.gmra.mxu0 %v350
  %v1931 = vpop.f32.mrf.mxu0
  %v1932 = vadd.f32 %v1913, %v1931
  %v1933 = vpop.f32.mrf.mxu0
  %v1934 = vadd.f32 %v1915, %v1933
  %1935 = vmatmul.bf16.gmra.mxu0 %v358
  %v1936 = vpop.f32.mrf.mxu0
  %v1937 = vadd.f32 %v1918, %v1936
  %v1938 = vpop.f32.mrf.mxu0
  %v1939 = vadd.f32 %v1920, %v1938
  %1940 = vdwg.mxu0
  %1941 = vmatpush.bf16.msra.mxu0 %v1397
  %1942 = vmatpush.bf16.msra.mxu0 %v1393
  %1943 = vmatpush.bf16.msra.mxu0 %v1389
  %1944 = vmatpush.bf16.msra.mxu0 %v1385
  %1945 = vmatpush.bf16.msra.mxu0 %v1381
  %1946 = vmatpush.bf16.msra.mxu0 %v1377
  %1947 = vmatpush.bf16.msra.mxu0 %v1373
  %1948 = vmatpush.bf16.msra.mxu0 %v1369
  %1949 = vmatmul.bf16.gmra.mxu0 %v351
  %v1950 = vpop.f32.mrf.mxu0
  %v1951 = vadd.f32 %v1932, %v1950
  %v1952 = vpop.f32.mrf.mxu0
  %v1953 = vadd.f32 %v1934, %v1952
  %1954 = vmatmul.bf16.gmra.mxu0 %v359
  %v1955 = vpop.f32.mrf.mxu0
  %v1956 = vadd.f32 %v1937, %v1955
  %v1957 = vpop.f32.mrf.mxu0
  %v1958 = vadd.f32 %v1939, %v1957
  %1959 = vdwg.mxu0
  %1960 = vmatpush.bf16.msra.mxu0 %v1174
  %1961 = vmatpush.bf16.msra.mxu0 %v1170
  %1962 = vmatpush.bf16.msra.mxu0 %v1166
  %1963 = vmatpush.bf16.msra.mxu0 %v1162
  %1964 = vmatpush.bf16.msra.mxu0 %v1158
  %1965 = vmatpush.bf16.msra.mxu0 %v1154
  %1966 = vmatpush.bf16.msra.mxu0 %v1150
  %1967 = vmatpush.bf16.msra.mxu0 %v1146
  %1968 = vmatmul.bf16.gmra.mxu0 %v344
  %v1969 = vpop.f32.mrf.mxu0
  %v1970 = vadd.f32 %v290, %v1969
  %v1971 = vpop.f32.mrf.mxu0
  %v1972 = vadd.f32 %v290, %v1971
  %1973 = vmatmul.bf16.gmra.mxu0 %v352
  %v1974 = vpop.f32.mrf.mxu0
  %v1975 = vadd.f32 %v290, %v1974
  %v1976 = vpop.f32.mrf.mxu0
  %v1977 = vadd.f32 %v290, %v1976
  %1978 = vdwg.mxu0
  %1979 = vmatpush.bf16.msra.mxu0 %v1206
  %1980 = vmatpush.bf16.msra.mxu0 %v1202
  %1981 = vmatpush.bf16.msra.mxu0 %v1198
  %1982 = vmatpush.bf16.msra.mxu0 %v1194
  %1983 = vmatpush.bf16.msra.mxu0 %v1190
  %1984 = vmatpush.bf16.msra.mxu0 %v1186
  %1985 = vmatpush.bf16.msra.mxu0 %v1182
  %1986 = vmatpush.bf16.msra.mxu0 %v1178
  %1987 = vmatmul.bf16.gmra.mxu0 %v345
  %v1988 = vpop.f32.mrf.mxu0
  %v1989 = vadd.f32 %v1970, %v1988
  %v1990 = vpop.f32.mrf.mxu0
  %v1991 = vadd.f32 %v1972, %v1990
  %1992 = vmatmul.bf16.gmra.mxu0 %v353
  %v1993 = vpop.f32.mrf.mxu0
  %v1994 = vadd.f32 %v1975, %v1993
  %v1995 = vpop.f32.mrf.mxu0
  %v1996 = vadd.f32 %v1977, %v1995
  %1997 = vdwg.mxu0
  %1998 = vmatpush.bf16.msra.mxu0 %v1238
  %1999 = vmatpush.bf16.msra.mxu0 %v1234
  %2000 = vmatpush.bf16.msra.mxu0 %v1230
  %2001 = vmatpush.bf16.msra.mxu0 %v1226
  %2002 = vmatpush.bf16.msra.mxu0 %v1222
  %2003 = vmatpush.bf16.msra.mxu0 %v1218
  %2004 = vmatpush.bf16.msra.mxu0 %v1214
  %2005 = vmatpush.bf16.msra.mxu0 %v1210
  %2006 = vmatmul.bf16.gmra.mxu0 %v346
  %v2007 = vpop.f32.mrf.mxu0
  %v2008 = vadd.f32 %v1989, %v2007
  %v2009 = vpop.f32.mrf.mxu0
  %v2010 = vadd.f32 %v1991, %v2009
  %2011 = vmatmul.bf16.gmra.mxu0 %v354
  %v2012 = vpop.f32.mrf.mxu0
  %v2013 = vadd.f32 %v1994, %v2012
  %v2014 = vpop.f32.mrf.mxu0
  %v2015 = vadd.f32 %v1996, %v2014
  %2016 = vdwg.mxu0
  %2017 = vmatpush.bf16.msra.mxu0 %v1270
  %2018 = vmatpush.bf16.msra.mxu0 %v1266
  %2019 = vmatpush.bf16.msra.mxu0 %v1262
  %2020 = vmatpush.bf16.msra.mxu0 %v1258
  %2021 = vmatpush.bf16.msra.mxu0 %v1254
  %2022 = vmatpush.bf16.msra.mxu0 %v1250
  %2023 = vmatpush.bf16.msra.mxu0 %v1246
  %2024 = vmatpush.bf16.msra.mxu0 %v1242
  %2025 = vmatmul.bf16.gmra.mxu0 %v347
  %v2026 = vpop.f32.mrf.mxu0
  %v2027 = vadd.f32 %v2008, %v2026
  %v2028 = vpop.f32.mrf.mxu0
  %v2029 = vadd.f32 %v2010, %v2028
  %2030 = vmatmul.bf16.gmra.mxu0 %v355
  %v2031 = vpop.f32.mrf.mxu0
  %v2032 = vadd.f32 %v2013, %v2031
  %v2033 = vpop.f32.mrf.mxu0
  %v2034 = vadd.f32 %v2015, %v2033
  %2035 = vdwg.mxu0
  %2036 = vmatpush.bf16.msra.mxu0 %v1302
  %2037 = vmatpush.bf16.msra.mxu0 %v1298
  %2038 = vmatpush.bf16.msra.mxu0 %v1294
  %2039 = vmatpush.bf16.msra.mxu0 %v1290
  %2040 = vmatpush.bf16.msra.mxu0 %v1286
  %2041 = vmatpush.bf16.msra.mxu0 %v1282
  %2042 = vmatpush.bf16.msra.mxu0 %v1278
  %2043 = vmatpush.bf16.msra.mxu0 %v1274
  %2044 = vmatmul.bf16.gmra.mxu0 %v348
  %v2045 = vpop.f32.mrf.mxu0
  %v2046 = vadd.f32 %v2027, %v2045
  %v2047 = vpop.f32.mrf.mxu0
  %v2048 = vadd.f32 %v2029, %v2047
  %2049 = vmatmul.bf16.gmra.mxu0 %v356
  %v2050 = vpop.f32.mrf.mxu0
  %v2051 = vadd.f32 %v2032, %v2050
  %v2052 = vpop.f32.mrf.mxu0
  %v2053 = vadd.f32 %v2034, %v2052
  %2054 = vdwg.mxu0
  %2055 = vmatpush.bf16.msra.mxu0 %v1334
  %2056 = vmatpush.bf16.msra.mxu0 %v1330
  %2057 = vmatpush.bf16.msra.mxu0 %v1326
  %2058 = vmatpush.bf16.msra.mxu0 %v1322
  %2059 = vmatpush.bf16.msra.mxu0 %v1318
  %2060 = vmatpush.bf16.msra.mxu0 %v1314
  %2061 = vmatpush.bf16.msra.mxu0 %v1310
  %2062 = vmatpush.bf16.msra.mxu0 %v1306
  %2063 = vmatmul.bf16.gmra.mxu0 %v349
  %v2064 = vpop.f32.mrf.mxu0
  %v2065 = vadd.f32 %v2046, %v2064
  %v2066 = vpop.f32.mrf.mxu0
  %v2067 = vadd.f32 %v2048, %v2066
  %2068 = vmatmul.bf16.gmra.mxu0 %v357
  %v2069 = vpop.f32.mrf.mxu0
  %v2070 = vadd.f32 %v2051, %v2069
  %v2071 = vpop.f32.mrf.mxu0
  %v2072 = vadd.f32 %v2053, %v2071
  %2073 = vdwg.mxu0
  %2074 = vmatpush.bf16.msra.mxu0 %v1366
  %2075 = vmatpush.bf16.msra.mxu0 %v1362
  %2076 = vmatpush.bf16.msra.mxu0 %v1358
  %2077 = vmatpush.bf16.msra.mxu0 %v1354
  %2078 = vmatpush.bf16.msra.mxu0 %v1350
  %2079 = vmatpush.bf16.msra.mxu0 %v1346
  %2080 = vmatpush.bf16.msra.mxu0 %v1342
  %2081 = vmatpush.bf16.msra.mxu0 %v1338
  %2082 = vmatmul.bf16.gmra.mxu0 %v350
  %v2083 = vpop.f32.mrf.mxu0
  %v2084 = vadd.f32 %v2065, %v2083
  %v2085 = vpop.f32.mrf.mxu0
  %v2086 = vadd.f32 %v2067, %v2085
  %2087 = vmatmul.bf16.gmra.mxu0 %v358
  %v2088 = vpop.f32.mrf.mxu0
  %v2089 = vadd.f32 %v2070, %v2088
  %v2090 = vpop.f32.mrf.mxu0
  %v2091 = vadd.f32 %v2072, %v2090
  %2092 = vdwg.mxu0
  %2093 = vmatpush.bf16.msra.mxu0 %v1398
  %2094 = vmatpush.bf16.msra.mxu0 %v1394
  %2095 = vmatpush.bf16.msra.mxu0 %v1390
  %2096 = vmatpush.bf16.msra.mxu0 %v1386
  %2097 = vmatpush.bf16.msra.mxu0 %v1382
  %2098 = vmatpush.bf16.msra.mxu0 %v1378
  %2099 = vmatpush.bf16.msra.mxu0 %v1374
  %2100 = vmatpush.bf16.msra.mxu0 %v1370
  %2101 = vmatmul.bf16.gmra.mxu0 %v351
  %v2102 = vpop.f32.mrf.mxu0
  %v2103 = vadd.f32 %v2084, %v2102
  %v2104 = vpop.f32.mrf.mxu0
  %v2105 = vadd.f32 %v2086, %v2104
  %2106 = vmatmul.bf16.gmra.mxu0 %v359
  %v2107 = vpop.f32.mrf.mxu0
  %v2108 = vadd.f32 %v2089, %v2107
  %v2109 = vpop.f32.mrf.mxu0
  %v2110 = vadd.f32 %v2091, %v2109
  %2111 = vdwg.mxu0
  %2112 = vmatpush.bf16.msra.mxu0 %v1175
  %2113 = vmatpush.bf16.msra.mxu0 %v1171
  %2114 = vmatpush.bf16.msra.mxu0 %v1167
  %2115 = vmatpush.bf16.msra.mxu0 %v1163
  %2116 = vmatpush.bf16.msra.mxu0 %v1159
  %2117 = vmatpush.bf16.msra.mxu0 %v1155
  %2118 = vmatpush.bf16.msra.mxu0 %v1151
  %2119 = vmatpush.bf16.msra.mxu0 %v1147
  %2120 = vmatmul.bf16.gmra.mxu0 %v344
  %v2121 = vpop.f32.mrf.mxu0
  %v2122 = vadd.f32 %v291, %v2121
  %v2123 = vpop.f32.mrf.mxu0
  %v2124 = vadd.f32 %v291, %v2123
  %2125 = vmatmul.bf16.gmra.mxu0 %v352
  %v2126 = vpop.f32.mrf.mxu0
  %v2127 = vadd.f32 %v291, %v2126
  %v2128 = vpop.f32.mrf.mxu0
  %v2129 = vadd.f32 %v291, %v2128
  %2130 = vdwg.mxu0
  %2131 = vmatpush.bf16.msra.mxu0 %v1207
  %2132 = vmatpush.bf16.msra.mxu0 %v1203
  %2133 = vmatpush.bf16.msra.mxu0 %v1199
  %2134 = vmatpush.bf16.msra.mxu0 %v1195
  %2135 = vmatpush.bf16.msra.mxu0 %v1191
  %2136 = vmatpush.bf16.msra.mxu0 %v1187
  %2137 = vmatpush.bf16.msra.mxu0 %v1183
  %2138 = vmatpush.bf16.msra.mxu0 %v1179
  %2139 = vmatmul.bf16.gmra.mxu0 %v345
  %v2140 = vpop.f32.mrf.mxu0
  %v2141 = vadd.f32 %v2122, %v2140
  %v2142 = vpop.f32.mrf.mxu0
  %v2143 = vadd.f32 %v2124, %v2142
  %2144 = vmatmul.bf16.gmra.mxu0 %v353
  %v2145 = vpop.f32.mrf.mxu0
  %v2146 = vadd.f32 %v2127, %v2145
  %v2147 = vpop.f32.mrf.mxu0
  %v2148 = vadd.f32 %v2129, %v2147
  %2149 = vdwg.mxu0
  %2150 = vmatpush.bf16.msra.mxu0 %v1239
  %2151 = vmatpush.bf16.msra.mxu0 %v1235
  %2152 = vmatpush.bf16.msra.mxu0 %v1231
  %2153 = vmatpush.bf16.msra.mxu0 %v1227
  %2154 = vmatpush.bf16.msra.mxu0 %v1223
  %2155 = vmatpush.bf16.msra.mxu0 %v1219
  %2156 = vmatpush.bf16.msra.mxu0 %v1215
  %2157 = vmatpush.bf16.msra.mxu0 %v1211
  %2158 = vmatmul.bf16.gmra.mxu0 %v346
  %v2159 = vpop.f32.mrf.mxu0
  %v2160 = vadd.f32 %v2141, %v2159
  %v2161 = vpop.f32.mrf.mxu0
  %v2162 = vadd.f32 %v2143, %v2161
  %2163 = vmatmul.bf16.gmra.mxu0 %v354
  %v2164 = vpop.f32.mrf.mxu0
  %v2165 = vadd.f32 %v2146, %v2164
  %v2166 = vpop.f32.mrf.mxu0
  %v2167 = vadd.f32 %v2148, %v2166
  %2168 = vdwg.mxu0
  %2169 = vmatpush.bf16.msra.mxu0 %v1271
  %2170 = vmatpush.bf16.msra.mxu0 %v1267
  %2171 = vmatpush.bf16.msra.mxu0 %v1263
  %2172 = vmatpush.bf16.msra.mxu0 %v1259
  %2173 = vmatpush.bf16.msra.mxu0 %v1255
  %2174 = vmatpush.bf16.msra.mxu0 %v1251
  %2175 = vmatpush.bf16.msra.mxu0 %v1247
  %2176 = vmatpush.bf16.msra.mxu0 %v1243
  %2177 = vmatmul.bf16.gmra.mxu0 %v347
  %v2178 = vpop.f32.mrf.mxu0
  %v2179 = vadd.f32 %v2160, %v2178
  %v2180 = vpop.f32.mrf.mxu0
  %v2181 = vadd.f32 %v2162, %v2180
  %2182 = vmatmul.bf16.gmra.mxu0 %v355
  %v2183 = vpop.f32.mrf.mxu0
  %v2184 = vadd.f32 %v2165, %v2183
  %v2185 = vpop.f32.mrf.mxu0
  %v2186 = vadd.f32 %v2167, %v2185
  %2187 = vdwg.mxu0
  %2188 = vmatpush.bf16.msra.mxu0 %v1303
  %2189 = vmatpush.bf16.msra.mxu0 %v1299
  %2190 = vmatpush.bf16.msra.mxu0 %v1295
  %2191 = vmatpush.bf16.msra.mxu0 %v1291
  %2192 = vmatpush.bf16.msra.mxu0 %v1287
  %2193 = vmatpush.bf16.msra.mxu0 %v1283
  %2194 = vmatpush.bf16.msra.mxu0 %v1279
  %2195 = vmatpush.bf16.msra.mxu0 %v1275
  %2196 = vmatmul.bf16.gmra.mxu0 %v348
  %v2197 = vpop.f32.mrf.mxu0
  %v2198 = vadd.f32 %v2179, %v2197
  %v2199 = vpop.f32.mrf.mxu0
  %v2200 = vadd.f32 %v2181, %v2199
  %2201 = vmatmul.bf16.gmra.mxu0 %v356
  %v2202 = vpop.f32.mrf.mxu0
  %v2203 = vadd.f32 %v2184, %v2202
  %v2204 = vpop.f32.mrf.mxu0
  %v2205 = vadd.f32 %v2186, %v2204
  %2206 = vdwg.mxu0
  %2207 = vmatpush.bf16.msra.mxu0 %v1335
  %2208 = vmatpush.bf16.msra.mxu0 %v1331
  %2209 = vmatpush.bf16.msra.mxu0 %v1327
  %2210 = vmatpush.bf16.msra.mxu0 %v1323
  %2211 = vmatpush.bf16.msra.mxu0 %v1319
  %2212 = vmatpush.bf16.msra.mxu0 %v1315
  %2213 = vmatpush.bf16.msra.mxu0 %v1311
  %2214 = vmatpush.bf16.msra.mxu0 %v1307
  %2215 = vmatmul.bf16.gmra.mxu0 %v349
  %v2216 = vpop.f32.mrf.mxu0
  %v2217 = vadd.f32 %v2198, %v2216
  %v2218 = vpop.f32.mrf.mxu0
  %v2219 = vadd.f32 %v2200, %v2218
  %2220 = vmatmul.bf16.gmra.mxu0 %v357
  %v2221 = vpop.f32.mrf.mxu0
  %v2222 = vadd.f32 %v2203, %v2221
  %v2223 = vpop.f32.mrf.mxu0
  %v2224 = vadd.f32 %v2205, %v2223
  %2225 = vdwg.mxu0
  %2226 = vmatpush.bf16.msra.mxu0 %v1367
  %2227 = vmatpush.bf16.msra.mxu0 %v1363
  %2228 = vmatpush.bf16.msra.mxu0 %v1359
  %2229 = vmatpush.bf16.msra.mxu0 %v1355
  %2230 = vmatpush.bf16.msra.mxu0 %v1351
  %2231 = vmatpush.bf16.msra.mxu0 %v1347
  %2232 = vmatpush.bf16.msra.mxu0 %v1343
  %2233 = vmatpush.bf16.msra.mxu0 %v1339
  %2234 = vmatmul.bf16.gmra.mxu0 %v350
  %v2235 = vpop.f32.mrf.mxu0
  %v2236 = vadd.f32 %v2217, %v2235
  %v2237 = vpop.f32.mrf.mxu0
  %v2238 = vadd.f32 %v2219, %v2237
  %2239 = vmatmul.bf16.gmra.mxu0 %v358
  %v2240 = vpop.f32.mrf.mxu0
  %v2241 = vadd.f32 %v2222, %v2240
  %v2242 = vpop.f32.mrf.mxu0
  %v2243 = vadd.f32 %v2224, %v2242
  %2244 = vdwg.mxu0
  %2245 = vmatpush.bf16.msra.mxu0 %v1399
  %2246 = vmatpush.bf16.msra.mxu0 %v1395
  %2247 = vmatpush.bf16.msra.mxu0 %v1391
  %2248 = vmatpush.bf16.msra.mxu0 %v1387
  %2249 = vmatpush.bf16.msra.mxu0 %v1383
  %2250 = vmatpush.bf16.msra.mxu0 %v1379
  %2251 = vmatpush.bf16.msra.mxu0 %v1375
  %2252 = vmatpush.bf16.msra.mxu0 %v1371
  %2253 = vmatmul.bf16.gmra.mxu0 %v351
  %v2254 = vpop.f32.mrf.mxu0
  %v2255 = vadd.f32 %v2236, %v2254
  %v2256 = vpop.f32.mrf.mxu0
  %v2257 = vadd.f32 %v2238, %v2256
  %2258 = vmatmul.bf16.gmra.mxu0 %v359
  %v2259 = vpop.f32.mrf.mxu0
  %v2260 = vadd.f32 %v2241, %v2259
  %v2261 = vpop.f32.mrf.mxu0
  %v2262 = vadd.f32 %v2243, %v2261
  %2263 = vdwg.mxu0
  %v2264 = vmax.f32 %v1799, 0.0
  %v2265 = vmax.f32 %v1951, 0.0
  %v2266 = vmax.f32 %v2103, 0.0
  %v2267 = vmax.f32 %v2255, 0.0
  %v2268 = vmax.f32 %v1801, 0.0
  %v2269 = vmax.f32 %v1953, 0.0
  %v2270 = vmax.f32 %v2105, 0.0
  %v2271 = vmax.f32 %v2257, 0.0
  %v2272 = vmax.f32 %v1804, 0.0
  %v2273 = vmax.f32 %v1956, 0.0
  %v2274 = vmax.f32 %v2108, 0.0
  %v2275 = vmax.f32 %v2260, 0.0
  %v2276 = vmax.f32 %v1806, 0.0
  %v2277 = vmax.f32 %v1958, 0.0
  %v2278 = vmax.f32 %v2110, 0.0
  %v2279 = vmax.f32 %v2262, 0.0
  %v2280 = vpack.c.bf16 %v2265, %v2264
  %v2281 = vpack.c.bf16 %v2267, %v2266
  %v2282 = vpack.c.bf16 %v2269, %v2268
  %v2283 = vpack.c.bf16 %v2271, %v2270
  %v2284 = vpack.c.bf16 %v2273, %v2272
  %v2285 = vpack.c.bf16 %v2275, %v2274
  %v2286 = vpack.c.bf16 %v2277, %v2276
  %v2287 = vpack.c.bf16 %v2279, %v2278
  %2288 = vst [vmem:[%s3] sm:$0xff] %v2280
  %2289 = vst [vmem:[%s3 + $0x8] sm:$0xff] %v2281
  %2290 = vst [vmem:[%s3 + $0x10] sm:$0xff] %v2282
  %2291 = vst [vmem:[%s3 + $0x18] sm:$0xff] %v2283
  %2292 = vst [vmem:[%s3 + $0x20] sm:$0xff] %v2284
  %2293 = vst [vmem:[%s3 + $0x28] sm:$0xff] %v2285
  %2294 = vst [vmem:[%s3 + $0x30] sm:$0xff] %v2286
  %2295 = vst [vmem:[%s3 + $0x38] sm:$0xff] %v2287
  // Predicated region
  $region14: #{_lambda_.16} parent=0 // pred_check
    _
  $region15: #{_lambda_.16} parent=0 // pred_check_branch
    %2297 = sbr.rel (0) target = $region17
  $region16: #{_lambda_.16} parent=0 // pred_region
    _
  $region17: #{_lambda_.16} parent=0 // pred_fallthru
    _
  // Predicated region
  $region18: #{_lambda_.16} parent=0 // pred_check
    _
  $region19: #{_lambda_.16} parent=0 // pred_check_branch
    %2299 = sbr.rel (0) target = $region21
  $region20: #{_lambda_.16} parent=0 // pred_region
    _
  $region21: #{_lambda_.16} parent=0 // pred_fallthru
    _

// kernel: _lambda_.14
$region0: #{_lambda_.14}
  #allocation0 [shape = 'u32[]', space=smem, size = 0x4, offset = 0x4, fixed_abs, tag = 'smem constant byte address 0x4 - core index']
  #allocation1 [shape = 'u32[72,128]{1,0:T(1,128)}', space=vmem, size = 0x9000, scoped, tag = 'internal scratch']
  %s0 = inlined_call_operand.vmem [shape: bf16[2,4096], index: 0, kind: input, shape index: {}]
  %s1 = inlined_call_operand.vmem [shape: bf16[4096,64], index: 1, kind: input, shape index: {}]
  %s2 = inlined_call_operand.vmem [shape: f32[1,64], index: 2, kind: input, shape index: {}]
  %s3 = inlined_call_operand.vmem [shape: f32[2,32], index: 3, kind: input, shape index: {}]
  %s4 = inlined_call_operand.vmem [shape: bf16[32,2048], index: 4, kind: input, shape index: {}]
  %s5 = inlined_call_operand.vmem [shape: f32[1,2048], index: 5, kind: input, shape index: {}]
  %s6 = inlined_call_operand.hbm [shape: f32[2,32], index: 6, kind: output, shape index: {0}]
  %s7 = inlined_call_operand.hbm [shape: f32[2,32], index: 7, kind: output, shape index: {1}]
  %s8 = inlined_call_operand.vmem [shape: bf16[2,2048], index: 8, kind: output, shape index: {2}]
  %9 = xla_tuple %s6, %s7, %s8
  %s10 = sld [smem:[#allocation0]]
  $region50: #{_lambda_.14} parent=0
    _
  %s12 = ssub.s32 1, %s10
  %s13 = scalar_select 0, %s12, %s10
  $region1: #{_lambda_.14} parent=0
    #allocation2 [shape = 'u8[1024]{0}', space=vmem, size = 0x400, scoped, tag = 'output window, operand 0, single buffered']
    #allocation3 [shape = 's32[1]{0}', space=sflag, size = 0x4, scoped, tag = 'scoped memory for _lambda_.14']
    #allocation4 [shape = 'u8[1024]{0}', space=vmem, size = 0x400, scoped, tag = 'output window, operand 1, single buffered']
    #allocation5 [shape = 's32[1]{0}', space=sflag, size = 0x4, scoped, tag = 'scoped memory for _lambda_.14']
    %14 = vsyncpa [#allocation3], 0
    %15 = vsyncpa [#allocation5], 0
    // Predicated region
    $region2: #{_lambda_.14} parent=1 // pred_check
      _
    $region3: #{_lambda_.14} parent=1 // pred_check_branch
      %17 = sbr.rel (0) target = $region5
    $region4: #{_lambda_.14} parent=1 // pred_region
      _
    $region5: #{_lambda_.14} parent=1 // pred_fallthru
      _
    // Predicated region
    $region6: #{_lambda_.14} parent=1 // pred_check
      _
    $region7: #{_lambda_.14} parent=1 // pred_check_branch
      %19 = sbr.rel (0) target = $region9
    $region8: #{_lambda_.14} parent=1 // pred_region
      _
    $region9: #{_lambda_.14} parent=1 // pred_fallthru
      _
    // Predicated region
    $region10: #{_lambda_.14} parent=1 // pred_check
      _
    $region11: #{_lambda_.14} parent=1 // pred_check_branch
      %21 = sbr.rel (0) target = $region13
    $region12: #{_lambda_.14} parent=1 // pred_region
      _
    $region13: #{_lambda_.14} parent=1 // pred_fallthru
      _
    // Predicated region
    $region14: #{_lambda_.14} parent=1 // pred_check
      _
    $region15: #{_lambda_.14} parent=1 // pred_check_branch
      %23 = sbr.rel (0) target = $region17
    $region16: #{_lambda_.14} parent=1 // pred_region
      _
    $region17: #{_lambda_.14} parent=1 // pred_fallthru
      _
    // Predicated region
    $region18: #{_lambda_.14} parent=1 // pred_check
      _
    $region19: #{_lambda_.14} parent=1 // pred_check_branch
      %25 = sbr.rel (0) target = $region21
    $region20: #{_lambda_.14} parent=1 // pred_region
      _
    $region21: #{_lambda_.14} parent=1 // pred_fallthru
      _
    // Predicated region
    $region22: #{_lambda_.14} parent=1 // pred_check
      _
    $region23: #{_lambda_.14} parent=1 // pred_check_branch
      %27 = sbr.rel (0) target = $region25
    $region24: #{_lambda_.14} parent=1 // pred_region
      _
    $region25: #{_lambda_.14} parent=1 // pred_fallthru
      _
    %v29 = vld [vmem:[%s0] sm:$0xff]
    %v30 = vld [vmem:[%s0 + $0x8] sm:$0xff]
    %v31 = vld [vmem:[%s0 + $0x10] sm:$0xff]
    %v32 = vld [vmem:[%s0 + $0x18] sm:$0xff]
    %v33 = vld [vmem:[%s1] sm:$0xf]
    %v34 = vld [vmem:[%s1 + $0x4] sm:$0xf]
    %v35 = vld [vmem:[%s1 + $0x8] sm:$0xf]
    %v36 = vld [vmem:[%s1 + $0xc] sm:$0xf]
    %v37 = vld [vmem:[%s1 + $0x10] sm:$0xf]
    %v38 = vld [vmem:[%s1 + $0x14] sm:$0xf]
    %v39 = vld [vmem:[%s1 + $0x18] sm:$0xf]
    %v40 = vld [vmem:[%s1 + $0x1c] sm:$0xf]
    %v41 = vld [vmem:[%s1 + $0x20] sm:$0xf]
    %v42 = vld [vmem:[%s1 + $0x24] sm:$0xf]
    %v43 = vld [vmem:[%s1 + $0x28] sm:$0xf]
    %v44 = vld [vmem:[%s1 + $0x2c] sm:$0xf]
    %v45 = vld [vmem:[%s1 + $0x30] sm:$0xf]
    %v46 = vld [vmem:[%s1 + $0x34] sm:$0xf]
    %v47 = vld [vmem:[%s1 + $0x38] sm:$0xf]
    %v48 = vld [vmem:[%s1 + $0x3c] sm:$0xf]
    %v49 = vld [vmem:[%s1 + $0x40] sm:$0xf]
    %v50 = vld [vmem:[%s1 + $0x44] sm:$0xf]
    %v51 = vld [vmem:[%s1 + $0x48] sm:$0xf]
    %v52 = vld [vmem:[%s1 + $0x4c] sm:$0xf]
    %v53 = vld [vmem:[%s1 + $0x50] sm:$0xf]
    %v54 = vld [vmem:[%s1 + $0x54] sm:$0xf]
    %v55 = vld [vmem:[%s1 + $0x58] sm:$0xf]
    %v56 = vld [vmem:[%s1 + $0x5c] sm:$0xf]
    %v57 = vld [vmem:[%s1 + $0x60] sm:$0xf]
    %v58 = vld [vmem:[%s1 + $0x64] sm:$0xf]
    %v59 = vld [vmem:[%s1 + $0x68] sm:$0xf]
    %v60 = vld [vmem:[%s1 + $0x6c] sm:$0xf]
    %v61 = vld [vmem:[%s1 + $0x70] sm:$0xf]
    %v62 = vld [vmem:[%s1 + $0x74] sm:$0xf]
    %v63 = vld [vmem:[%s1 + $0x78] sm:$0xf]
    %v64 = vld [vmem:[%s1 + $0x7c] sm:$0xf]
    %v65 = vld [vmem:[%s1 + $0x80] sm:$0xf]
    %v66 = vld [vmem:[%s1 + $0x84] sm:$0xf]
    %v67 = vld [vmem:[%s1 + $0x88] sm:$0xf]
    %v68 = vld [vmem:[%s1 + $0x8c] sm:$0xf]
    %v69 = vld [vmem:[%s1 + $0x90] sm:$0xf]
    %v70 = vld [vmem:[%s1 + $0x94] sm:$0xf]
    %v71 = vld [vmem:[%s1 + $0x98] sm:$0xf]
    %v72 = vld [vmem:[%s1 + $0x9c] sm:$0xf]
    %v73 = vld [vmem:[%s1 + $0xa0] sm:$0xf]
    %v74 = vld [vmem:[%s1 + $0xa4] sm:$0xf]
    %v75 = vld [vmem:[%s1 + $0xa8] sm:$0xf]
    %v76 = vld [vmem:[%s1 + $0xac] sm:$0xf]
    %v77 = vld [vmem:[%s1 + $0xb0] sm:$0xf]
    %v78 = vld [vmem:[%s1 + $0xb4] sm:$0xf]
    %v79 = vld [vmem:[%s1 + $0xb8] sm:$0xf]
    %v80 = vld [vmem:[%s1 + $0xbc] sm:$0xf]
    %v81 = vld [vmem:[%s1 + $0xc0] sm:$0xf]
    %v82 = vld [vmem:[%s1 + $0xc4] sm:$0xf]
    %v83 = vld [vmem:[%s1 + $0xc8] sm:$0xf]
    %v84 = vld [vmem:[%s1 + $0xcc] sm:$0xf]
    %v85 = vld [vmem:[%s1 + $0xd0] sm:$0xf]
    %v86 = vld [vmem:[%s1 + $0xd4] sm:$0xf]
    %v87 = vld [vmem:[%s1 + $0xd8] sm:$0xf]
    %v88 = vld [vmem:[%s1 + $0xdc] sm:$0xf]
    %v89 = vld [vmem:[%s1 + $0xe0] sm:$0xf]
    %v90 = vld [vmem:[%s1 + $0xe4] sm:$0xf]
    %v91 = vld [vmem:[%s1 + $0xe8] sm:$0xf]
    %v92 = vld [vmem:[%s1 + $0xec] sm:$0xf]
    %v93 = vld [vmem:[%s1 + $0xf0] sm:$0xf]
    %v94 = vld [vmem:[%s1 + $0xf4] sm:$0xf]
    %v95 = vld [vmem:[%s1 + $0xf8] sm:$0xf]
    %v96 = vld [vmem:[%s1 + $0xfc] sm:$0xf]
    %v97 = vld [vmem:[%s1 + $0x100] sm:$0xf]
    %v98 = vld [vmem:[%s1 + $0x104] sm:$0xf]
    %v99 = vld [vmem:[%s1 + $0x108] sm:$0xf]
    %v100 = vld [vmem:[%s1 + $0x10c] sm:$0xf]
    %v101 = vld [vmem:[%s1 + $0x110] sm:$0xf]
    %v102 = vld [vmem:[%s1 + $0x114] sm:$0xf]
    %v103 = vld [vmem:[%s1 + $0x118] sm:$0xf]
    %v104 = vld [vmem:[%s1 + $0x11c] sm:$0xf]
    %v105 = vld [vmem:[%s1 + $0x120] sm:$0xf]
    %v106 = vld [vmem:[%s1 + $0x124] sm:$0xf]
    %v107 = vld [vmem:[%s1 + $0x128] sm:$0xf]
    %v108 = vld [vmem:[%s1 + $0x12c] sm:$0xf]
    %v109 = vld [vmem:[%s1 + $0x130] sm:$0xf]
    %v110 = vld [vmem:[%s1 + $0x134] sm:$0xf]
    %v111 = vld [vmem:[%s1 + $0x138] sm:$0xf]
    %v112 = vld [vmem:[%s1 + $0x13c] sm:$0xf]
    %v113 = vld [vmem:[%s1 + $0x140] sm:$0xf]
    %v114 = vld [vmem:[%s1 + $0x144] sm:$0xf]
    %v115 = vld [vmem:[%s1 + $0x148] sm:$0xf]
    %v116 = vld [vmem:[%s1 + $0x14c] sm:$0xf]
    %v117 = vld [vmem:[%s1 + $0x150] sm:$0xf]
    %v118 = vld [vmem:[%s1 + $0x154] sm:$0xf]
    %v119 = vld [vmem:[%s1 + $0x158] sm:$0xf]
    %v120 = vld [vmem:[%s1 + $0x15c] sm:$0xf]
    %v121 = vld [vmem:[%s1 + $0x160] sm:$0xf]
    %v122 = vld [vmem:[%s1 + $0x164] sm:$0xf]
    %v123 = vld [vmem:[%s1 + $0x168] sm:$0xf]
    %v124 = vld [vmem:[%s1 + $0x16c] sm:$0xf]
    %v125 = vld [vmem:[%s1 + $0x170] sm:$0xf]
    %v126 = vld [vmem:[%s1 + $0x174] sm:$0xf]
    %v127 = vld [vmem:[%s1 + $0x178] sm:$0xf]
    %v128 = vld [vmem:[%s1 + $0x17c] sm:$0xf]
    %v129 = vld [vmem:[%s1 + $0x180] sm:$0xf]
    %v130 = vld [vmem:[%s1 + $0x184] sm:$0xf]
    %v131 = vld [vmem:[%s1 + $0x188] sm:$0xf]
    %v132 = vld [vmem:[%s1 + $0x18c] sm:$0xf]
    %v133 = vld [vmem:[%s1 + $0x190] sm:$0xf]
    %v134 = vld [vmem:[%s1 + $0x194] sm:$0xf]
    %v135 = vld [vmem:[%s1 + $0x198] sm:$0xf]
    %v136 = vld [vmem:[%s1 + $0x19c] sm:$0xf]
    %v137 = vld [vmem:[%s1 + $0x1a0] sm:$0xf]
    %v138 = vld [vmem:[%s1 + $0x1a4] sm:$0xf]
    %v139 = vld [vmem:[%s1 + $0x1a8] sm:$0xf]
    %v140 = vld [vmem:[%s1 + $0x1ac] sm:$0xf]
    %v141 = vld [vmem:[%s1 + $0x1b0] sm:$0xf]
    %v142 = vld [vmem:[%s1 + $0x1b4] sm:$0xf]
    %v143 = vld [vmem:[%s1 + $0x1b8] sm:$0xf]
    %v144 = vld [vmem:[%s1 + $0x1bc] sm:$0xf]
    %v145 = vld [vmem:[%s1 + $0x1c0] sm:$0xf]
    %v146 = vld [vmem:[%s1 + $0x1c4] sm:$0xf]
    %v147 = vld [vmem:[%s1 + $0x1c8] sm:$0xf]
    %v148 = vld [vmem:[%s1 + $0x1cc] sm:$0xf]
    %v149 = vld [vmem:[%s1 + $0x1d0] sm:$0xf]
    %v150 = vld [vmem:[%s1 + $0x1d4] sm:$0xf]
    %v151 = vld [vmem:[%s1 + $0x1d8] sm:$0xf]
    %v152 = vld [vmem:[%s1 + $0x1dc] sm:$0xf]
    %v153 = vld [vmem:[%s1 + $0x1e0] sm:$0xf]
    %v154 = vld [vmem:[%s1 + $0x1e4] sm:$0xf]
    %v155 = vld [vmem:[%s1 + $0x1e8] sm:$0xf]
    %v156 = vld [vmem:[%s1 + $0x1ec] sm:$0xf]
    %v157 = vld [vmem:[%s1 + $0x1f0] sm:$0xf]
    %v158 = vld [vmem:[%s1 + $0x1f4] sm:$0xf]
    %v159 = vld [vmem:[%s1 + $0x1f8] sm:$0xf]
    %v160 = vld [vmem:[%s1 + $0x1fc] sm:$0xf]
    %v161 = vld [vmem:[%s1 + $0x200] sm:$0xf]
    %v162 = vld [vmem:[%s1 + $0x204] sm:$0xf]
    %v163 = vld [vmem:[%s1 + $0x208] sm:$0xf]
    %v164 = vld [vmem:[%s1 + $0x20c] sm:$0xf]
    %v165 = vld [vmem:[%s1 + $0x210] sm:$0xf]
    %v166 = vld [vmem:[%s1 + $0x214] sm:$0xf]
    %v167 = vld [vmem:[%s1 + $0x218] sm:$0xf]
    %v168 = vld [vmem:[%s1 + $0x21c] sm:$0xf]
    %v169 = vld [vmem:[%s1 + $0x220] sm:$0xf]
    %v170 = vld [vmem:[%s1 + $0x224] sm:$0xf]
    %v171 = vld [vmem:[%s1 + $0x228] sm:$0xf]
    %v172 = vld [vmem:[%s1 + $0x22c] sm:$0xf]
    %v173 = vld [vmem:[%s1 + $0x230] sm:$0xf]
    %v174 = vld [vmem:[%s1 + $0x234] sm:$0xf]
    %v175 = vld [vmem:[%s1 + $0x238] sm:$0xf]
    %v176 = vld [vmem:[%s1 + $0x23c] sm:$0xf]
    %v177 = vld [vmem:[%s1 + $0x240] sm:$0xf]
    %v178 = vld [vmem:[%s1 + $0x244] sm:$0xf]
    %v179 = vld [vmem:[%s1 + $0x248] sm:$0xf]
    %v180 = vld [vmem:[%s1 + $0x24c] sm:$0xf]
    %v181 = vld [vmem:[%s1 + $0x250] sm:$0xf]
    %v182 = vld [vmem:[%s1 + $0x254] sm:$0xf]
    %v183 = vld [vmem:[%s1 + $0x258] sm:$0xf]
    %v184 = vld [vmem:[%s1 + $0x25c] sm:$0xf]
    %v185 = vld [vmem:[%s1 + $0x260] sm:$0xf]
    %v186 = vld [vmem:[%s1 + $0x264] sm:$0xf]
    %v187 = vld [vmem:[%s1 + $0x268] sm:$0xf]
    %v188 = vld [vmem:[%s1 + $0x26c] sm:$0xf]
    %v189 = vld [vmem:[%s1 + $0x270] sm:$0xf]
    %v190 = vld [vmem:[%s1 + $0x274] sm:$0xf]
    %v191 = vld [vmem:[%s1 + $0x278] sm:$0xf]
    %v192 = vld [vmem:[%s1 + $0x27c] sm:$0xf]
    %v193 = vld [vmem:[%s1 + $0x280] sm:$0xf]
    %v194 = vld [vmem:[%s1 + $0x284] sm:$0xf]
    %v195 = vld [vmem:[%s1 + $0x288] sm:$0xf]
    %v196 = vld [vmem:[%s1 + $0x28c] sm:$0xf]
    %v197 = vld [vmem:[%s1 + $0x290] sm:$0xf]
    %v198 = vld [vmem:[%s1 + $0x294] sm:$0xf]
    %v199 = vld [vmem:[%s1 + $0x298] sm:$0xf]
    %v200 = vld [vmem:[%s1 + $0x29c] sm:$0xf]
    %v201 = vld [vmem:[%s1 + $0x2a0] sm:$0xf]
    %v202 = vld [vmem:[%s1 + $0x2a4] sm:$0xf]
    %v203 = vld [vmem:[%s1 + $0x2a8] sm:$0xf]
    %v204 = vld [vmem:[%s1 + $0x2ac] sm:$0xf]
    %v205 = vld [vmem:[%s1 + $0x2b0] sm:$0xf]
    %v206 = vld [vmem:[%s1 + $0x2b4] sm:$0xf]
    %v207 = vld [vmem:[%s1 + $0x2b8] sm:$0xf]
    %v208 = vld [vmem:[%s1 + $0x2bc] sm:$0xf]
    %v209 = vld [vmem:[%s1 + $0x2c0] sm:$0xf]
    %v210 = vld [vmem:[%s1 + $0x2c4] sm:$0xf]
    %v211 = vld [vmem:[%s1 + $0x2c8] sm:$0xf]
    %v212 = vld [vmem:[%s1 + $0x2cc] sm:$0xf]
    %v213 = vld [vmem:[%s1 + $0x2d0] sm:$0xf]
    %v214 = vld [vmem:[%s1 + $0x2d4] sm:$0xf]
    %v215 = vld [vmem:[%s1 + $0x2d8] sm:$0xf]
    %v216 = vld [vmem:[%s1 + $0x2dc] sm:$0xf]
    %v217 = vld [vmem:[%s1 + $0x2e0] sm:$0xf]
    %v218 = vld [vmem:[%s1 + $0x2e4] sm:$0xf]
    %v219 = vld [vmem:[%s1 + $0x2e8] sm:$0xf]
    %v220 = vld [vmem:[%s1 + $0x2ec] sm:$0xf]
    %v221 = vld [vmem:[%s1 + $0x2f0] sm:$0xf]
    %v222 = vld [vmem:[%s1 + $0x2f4] sm:$0xf]
    %v223 = vld [vmem:[%s1 + $0x2f8] sm:$0xf]
    %v224 = vld [vmem:[%s1 + $0x2fc] sm:$0xf]
    %v225 = vld [vmem:[%s1 + $0x300] sm:$0xf]
    %v226 = vld [vmem:[%s1 + $0x304] sm:$0xf]
    %v227 = vld [vmem:[%s1 + $0x308] sm:$0xf]
    %v228 = vld [vmem:[%s1 + $0x30c] sm:$0xf]
    %v229 = vld [vmem:[%s1 + $0x310] sm:$0xf]
    %v230 = vld [vmem:[%s1 + $0x314] sm:$0xf]
    %v231 = vld [vmem:[%s1 + $0x318] sm:$0xf]
    %v232 = vld [vmem:[%s1 + $0x31c] sm:$0xf]
    %v233 = vld [vmem:[%s1 + $0x320] sm:$0xf]
    %v234 = vld [vmem:[%s1 + $0x324] sm:$0xf]
    %v235 = vld [vmem:[%s1 + $0x328] sm:$0xf]
    %v236 = vld [vmem:[%s1 + $0x32c] sm:$0xf]
    %v237 = vld [vmem:[%s1 + $0x330] sm:$0xf]
    %v238 = vld [vmem:[%s1 + $0x334] sm:$0xf]
    %v239 = vld [vmem:[%s1 + $0x338] sm:$0xf]
    %v240 = vld [vmem:[%s1 + $0x33c] sm:$0xf]
    %v241 = vld [vmem:[%s1 + $0x340] sm:$0xf]
    %v242 = vld [vmem:[%s1 + $0x344] sm:$0xf]
    %v243 = vld [vmem:[%s1 + $0x348] sm:$0xf]
    %v244 = vld [vmem:[%s1 + $0x34c] sm:$0xf]
    %v245 = vld [vmem:[%s1 + $0x350] sm:$0xf]
    %v246 = vld [vmem:[%s1 + $0x354] sm:$0xf]
    %v247 = vld [vmem:[%s1 + $0x358] sm:$0xf]
    %v248 = vld [vmem:[%s1 + $0x35c] sm:$0xf]
    %v249 = vld [vmem:[%s1 + $0x360] sm:$0xf]
    %v250 = vld [vmem:[%s1 + $0x364] sm:$0xf]
    %v251 = vld [vmem:[%s1 + $0x368] sm:$0xf]
    %v252 = vld [vmem:[%s1 + $0x36c] sm:$0xf]
    %v253 = vld [vmem:[%s1 + $0x370] sm:$0xf]
    %v254 = vld [vmem:[%s1 + $0x374] sm:$0xf]
    %v255 = vld [vmem:[%s1 + $0x378] sm:$0xf]
    %v256 = vld [vmem:[%s1 + $0x37c] sm:$0xf]
    %v257 = vld [vmem:[%s1 + $0x380] sm:$0xf]
    %v258 = vld [vmem:[%s1 + $0x384] sm:$0xf]
    %v259 = vld [vmem:[%s1 + $0x388] sm:$0xf]
    %v260 = vld [vmem:[%s1 + $0x38c] sm:$0xf]
    %v261 = vld [vmem:[%s1 + $0x390] sm:$0xf]
    %v262 = vld [vmem:[%s1 + $0x394] sm:$0xf]
    %v263 = vld [vmem:[%s1 + $0x398] sm:$0xf]
    %v264 = vld [vmem:[%s1 + $0x39c] sm:$0xf]
    %v265 = vld [vmem:[%s1 + $0x3a0] sm:$0xf]
    %v266 = vld [vmem:[%s1 + $0x3a4] sm:$0xf]
    %v267 = vld [vmem:[%s1 + $0x3a8] sm:$0xf]
    %v268 = vld [vmem:[%s1 + $0x3ac] sm:$0xf]
    %v269 = vld [vmem:[%s1 + $0x3b0] sm:$0xf]
    %v270 = vld [vmem:[%s1 + $0x3b4] sm:$0xf]
    %v271 = vld [vmem:[%s1 + $0x3b8] sm:$0xf]
    %v272 = vld [vmem:[%s1 + $0x3bc] sm:$0xf]
    %v273 = vld [vmem:[%s1 + $0x3c0] sm:$0xf]
    %v274 = vld [vmem:[%s1 + $0x3c4] sm:$0xf]
    %v275 = vld [vmem:[%s1 + $0x3c8] sm:$0xf]
    %v276 = vld [vmem:[%s1 + $0x3cc] sm:$0xf]
    %v277 = vld [vmem:[%s1 + $0x3d0] sm:$0xf]
    %v278 = vld [vmem:[%s1 + $0x3d4] sm:$0xf]
    %v279 = vld [vmem:[%s1 + $0x3d8] sm:$0xf]
    %v280 = vld [vmem:[%s1 + $0x3dc] sm:$0xf]
    %v281 = vld [vmem:[%s1 + $0x3e0] sm:$0xf]
    %v282 = vld [vmem:[%s1 + $0x3e4] sm:$0xf]
    %v283 = vld [vmem:[%s1 + $0x3e8] sm:$0xf]
    %v284 = vld [vmem:[%s1 + $0x3ec] sm:$0xf]
    %v285 = vld [vmem:[%s1 + $0x3f0] sm:$0xf]
    %v286 = vld [vmem:[%s1 + $0x3f4] sm:$0xf]
    %v287 = vld [vmem:[%s1 + $0x3f8] sm:$0xf]
    %v288 = vld [vmem:[%s1 + $0x3fc] sm:$0xf]
    %v289 = vld [vmem:[%s1 + $0x400] sm:$0xf]
    %v290 = vld [vmem:[%s1 + $0x404] sm:$0xf]
    %v291 = vld [vmem:[%s1 + $0x408] sm:$0xf]
    %v292 = vld [vmem:[%s1 + $0x40c] sm:$0xf]
    %v293 = vld [vmem:[%s1 + $0x410] sm:$0xf]
    %v294 = vld [vmem:[%s1 + $0x414] sm:$0xf]
    %v295 = vld [vmem:[%s1 + $0x418] sm:$0xf]
    %v296 = vld [vmem:[%s1 + $0x41c] sm:$0xf]
    %v297 = vld [vmem:[%s1 + $0x420] sm:$0xf]
    %v298 = vld [vmem:[%s1 + $0x424] sm:$0xf]
    %v299 = vld [vmem:[%s1 + $0x428] sm:$0xf]
    %v300 = vld [vmem:[%s1 + $0x42c] sm:$0xf]
    %v301 = vld [vmem:[%s1 + $0x430] sm:$0xf]
    %v302 = vld [vmem:[%s1 + $0x434] sm:$0xf]
    %v303 = vld [vmem:[%s1 + $0x438] sm:$0xf]
    %v304 = vld [vmem:[%s1 + $0x43c] sm:$0xf]
    %v305 = vld [vmem:[%s1 + $0x440] sm:$0xf]
    %v306 = vld [vmem:[%s1 + $0x444] sm:$0xf]
    %v307 = vld [vmem:[%s1 + $0x448] sm:$0xf]
    %v308 = vld [vmem:[%s1 + $0x44c] sm:$0xf]
    %v309 = vld [vmem:[%s1 + $0x450] sm:$0xf]
    %v310 = vld [vmem:[%s1 + $0x454] sm:$0xf]
    %v311 = vld [vmem:[%s1 + $0x458] sm:$0xf]
    %v312 = vld [vmem:[%s1 + $0x45c] sm:$0xf]
    %v313 = vld [vmem:[%s1 + $0x460] sm:$0xf]
    %v314 = vld [vmem:[%s1 + $0x464] sm:$0xf]
    %v315 = vld [vmem:[%s1 + $0x468] sm:$0xf]
    %v316 = vld [vmem:[%s1 + $0x46c] sm:$0xf]
    %v317 = vld [vmem:[%s1 + $0x470] sm:$0xf]
    %v318 = vld [vmem:[%s1 + $0x474] sm:$0xf]
    %v319 = vld [vmem:[%s1 + $0x478] sm:$0xf]
    %v320 = vld [vmem:[%s1 + $0x47c] sm:$0xf]
    %v321 = vld [vmem:[%s1 + $0x480] sm:$0xf]
    %v322 = vld [vmem:[%s1 + $0x484] sm:$0xf]
    %v323 = vld [vmem:[%s1 + $0x488] sm:$0xf]
    %v324 = vld [vmem:[%s1 + $0x48c] sm:$0xf]
    %v325 = vld [vmem:[%s1 + $0x490] sm:$0xf]
    %v326 = vld [vmem:[%s1 + $0x494] sm:$0xf]
    %v327 = vld [vmem:[%s1 + $0x498] sm:$0xf]
    %v328 = vld [vmem:[%s1 + $0x49c] sm:$0xf]
    %v329 = vld [vmem:[%s1 + $0x4a0] sm:$0xf]
    %v330 = vld [vmem:[%s1 + $0x4a4] sm:$0xf]
    %v331 = vld [vmem:[%s1 + $0x4a8] sm:$0xf]
    %v332 = vld [vmem:[%s1 + $0x4ac] sm:$0xf]
    %v333 = vld [vmem:[%s1 + $0x4b0] sm:$0xf]
    %v334 = vld [vmem:[%s1 + $0x4b4] sm:$0xf]
    %v335 = vld [vmem:[%s1 + $0x4b8] sm:$0xf]
    %v336 = vld [vmem:[%s1 + $0x4bc] sm:$0xf]
    %v337 = vld [vmem:[%s1 + $0x4c0] sm:$0xf]
    %v338 = vld [vmem:[%s1 + $0x4c4] sm:$0xf]
    %v339 = vld [vmem:[%s1 + $0x4c8] sm:$0xf]
    %v340 = vld [vmem:[%s1 + $0x4cc] sm:$0xf]
    %v341 = vld [vmem:[%s1 + $0x4d0] sm:$0xf]
    %v342 = vld [vmem:[%s1 + $0x4d4] sm:$0xf]
    %v343 = vld [vmem:[%s1 + $0x4d8] sm:$0xf]
    %v344 = vld [vmem:[%s1 + $0x4dc] sm:$0xf]
    %v345 = vld [vmem:[%s1 + $0x4e0] sm:$0xf]
    %v346 = vld [vmem:[%s1 + $0x4e4] sm:$0xf]
    %v347 = vld [vmem:[%s1 + $0x4e8] sm:$0xf]
    %v348 = vld [vmem:[%s1 + $0x4ec] sm:$0xf]
    %v349 = vld [vmem:[%s1 + $0x4f0] sm:$0xf]
    %v350 = vld [vmem:[%s1 + $0x4f4] sm:$0xf]
    %v351 = vld [vmem:[%s1 + $0x4f8] sm:$0xf]
    %v352 = vld [vmem:[%s1 + $0x4fc] sm:$0xf]
    %v353 = vld [vmem:[%s1 + $0x500] sm:$0xf]
    %v354 = vld [vmem:[%s1 + $0x504] sm:$0xf]
    %v355 = vld [vmem:[%s1 + $0x508] sm:$0xf]
    %v356 = vld [vmem:[%s1 + $0x50c] sm:$0xf]
    %v357 = vld [vmem:[%s1 + $0x510] sm:$0xf]
    %v358 = vld [vmem:[%s1 + $0x514] sm:$0xf]
    %v359 = vld [vmem:[%s1 + $0x518] sm:$0xf]
    %v360 = vld [vmem:[%s1 + $0x51c] sm:$0xf]
    %v361 = vld [vmem:[%s1 + $0x520] sm:$0xf]
    %v362 = vld [vmem:[%s1 + $0x524] sm:$0xf]
    %v363 = vld [vmem:[%s1 + $0x528] sm:$0xf]
    %v364 = vld [vmem:[%s1 + $0x52c] sm:$0xf]
    %v365 = vld [vmem:[%s1 + $0x530] sm:$0xf]
    %v366 = vld [vmem:[%s1 + $0x534] sm:$0xf]
    %v367 = vld [vmem:[%s1 + $0x538] sm:$0xf]
    %v368 = vld [vmem:[%s1 + $0x53c] sm:$0xf]
    %v369 = vld [vmem:[%s1 + $0x540] sm:$0xf]
    %v370 = vld [vmem:[%s1 + $0x544] sm:$0xf]
    %v371 = vld [vmem:[%s1 + $0x548] sm:$0xf]
    %v372 = vld [vmem:[%s1 + $0x54c] sm:$0xf]
    %v373 = vld [vmem:[%s1 + $0x550] sm:$0xf]
    %v374 = vld [vmem:[%s1 + $0x554] sm:$0xf]
    %v375 = vld [vmem:[%s1 + $0x558] sm:$0xf]
    %v376 = vld [vmem:[%s1 + $0x55c] sm:$0xf]
    %v377 = vld [vmem:[%s1 + $0x560] sm:$0xf]
    %v378 = vld [vmem:[%s1 + $0x564] sm:$0xf]
    %v379 = vld [vmem:[%s1 + $0x568] sm:$0xf]
    %v380 = vld [vmem:[%s1 + $0x56c] sm:$0xf]
    %v381 = vld [vmem:[%s1 + $0x570] sm:$0xf]
    %v382 = vld [vmem:[%s1 + $0x574] sm:$0xf]
    %v383 = vld [vmem:[%s1 + $0x578] sm:$0xf]
    %v384 = vld [vmem:[%s1 + $0x57c] sm:$0xf]
    %v385 = vld [vmem:[%s1 + $0x580] sm:$0xf]
    %v386 = vld [vmem:[%s1 + $0x584] sm:$0xf]
    %v387 = vld [vmem:[%s1 + $0x588] sm:$0xf]
    %v388 = vld [vmem:[%s1 + $0x58c] sm:$0xf]
    %v389 = vld [vmem:[%s1 + $0x590] sm:$0xf]
    %v390 = vld [vmem:[%s1 + $0x594] sm:$0xf]
    %v391 = vld [vmem:[%s1 + $0x598] sm:$0xf]
    %v392 = vld [vmem:[%s1 + $0x59c] sm:$0xf]
    %v393 = vld [vmem:[%s1 + $0x5a0] sm:$0xf]
    %v394 = vld [vmem:[%s1 + $0x5a4] sm:$0xf]
    %v395 = vld [vmem:[%s1 + $0x5a8] sm:$0xf]
    %v396 = vld [vmem:[%s1 + $0x5ac] sm:$0xf]
    %v397 = vld [vmem:[%s1 + $0x5b0] sm:$0xf]
    %v398 = vld [vmem:[%s1 + $0x5b4] sm:$0xf]
    %v399 = vld [vmem:[%s1 + $0x5b8] sm:$0xf]
    %v400 = vld [vmem:[%s1 + $0x5bc] sm:$0xf]
    %v401 = vld [vmem:[%s1 + $0x5c0] sm:$0xf]
    %v402 = vld [vmem:[%s1 + $0x5c4] sm:$0xf]
    %v403 = vld [vmem:[%s1 + $0x5c8] sm:$0xf]
    %v404 = vld [vmem:[%s1 + $0x5cc] sm:$0xf]
    %v405 = vld [vmem:[%s1 + $0x5d0] sm:$0xf]
    %v406 = vld [vmem:[%s1 + $0x5d4] sm:$0xf]
    %v407 = vld [vmem:[%s1 + $0x5d8] sm:$0xf]
    %v408 = vld [vmem:[%s1 + $0x5dc] sm:$0xf]
    %v409 = vld [vmem:[%s1 + $0x5e0] sm:$0xf]
    %v410 = vld [vmem:[%s1 + $0x5e4] sm:$0xf]
    %v411 = vld [vmem:[%s1 + $0x5e8] sm:$0xf]
    %v412 = vld [vmem:[%s1 + $0x5ec] sm:$0xf]
    %v413 = vld [vmem:[%s1 + $0x5f0] sm:$0xf]
    %v414 = vld [vmem:[%s1 + $0x5f4] sm:$0xf]
    %v415 = vld [vmem:[%s1 + $0x5f8] sm:$0xf]
    %v416 = vld [vmem:[%s1 + $0x5fc] sm:$0xf]
    %v417 = vld [vmem:[%s1 + $0x600] sm:$0xf]
    %v418 = vld [vmem:[%s1 + $0x604] sm:$0xf]
    %v419 = vld [vmem:[%s1 + $0x608] sm:$0xf]
    %v420 = vld [vmem:[%s1 + $0x60c] sm:$0xf]
    %v421 = vld [vmem:[%s1 + $0x610] sm:$0xf]
    %v422 = vld [vmem:[%s1 + $0x614] sm:$0xf]
    %v423 = vld [vmem:[%s1 + $0x618] sm:$0xf]
    %v424 = vld [vmem:[%s1 + $0x61c] sm:$0xf]
    %v425 = vld [vmem:[%s1 + $0x620] sm:$0xf]
    %v426 = vld [vmem:[%s1 + $0x624] sm:$0xf]
    %v427 = vld [vmem:[%s1 + $0x628] sm:$0xf]
    %v428 = vld [vmem:[%s1 + $0x62c] sm:$0xf]
    %v429 = vld [vmem:[%s1 + $0x630] sm:$0xf]
    %v430 = vld [vmem:[%s1 + $0x634] sm:$0xf]
    %v431 = vld [vmem:[%s1 + $0x638] sm:$0xf]
    %v432 = vld [vmem:[%s1 + $0x63c] sm:$0xf]
    %v433 = vld [vmem:[%s1 + $0x640] sm:$0xf]
    %v434 = vld [vmem:[%s1 + $0x644] sm:$0xf]
    %v435 = vld [vmem:[%s1 + $0x648] sm:$0xf]
    %v436 = vld [vmem:[%s1 + $0x64c] sm:$0xf]
    %v437 = vld [vmem:[%s1 + $0x650] sm:$0xf]
    %v438 = vld [vmem:[%s1 + $0x654] sm:$0xf]
    %v439 = vld [vmem:[%s1 + $0x658] sm:$0xf]
    %v440 = vld [vmem:[%s1 + $0x65c] sm:$0xf]
    %v441 = vld [vmem:[%s1 + $0x660] sm:$0xf]
    %v442 = vld [vmem:[%s1 + $0x664] sm:$0xf]
    %v443 = vld [vmem:[%s1 + $0x668] sm:$0xf]
    %v444 = vld [vmem:[%s1 + $0x66c] sm:$0xf]
    %v445 = vld [vmem:[%s1 + $0x670] sm:$0xf]
    %v446 = vld [vmem:[%s1 + $0x674] sm:$0xf]
    %v447 = vld [vmem:[%s1 + $0x678] sm:$0xf]
    %v448 = vld [vmem:[%s1 + $0x67c] sm:$0xf]
    %v449 = vld [vmem:[%s1 + $0x680] sm:$0xf]
    %v450 = vld [vmem:[%s1 + $0x684] sm:$0xf]
    %v451 = vld [vmem:[%s1 + $0x688] sm:$0xf]
    %v452 = vld [vmem:[%s1 + $0x68c] sm:$0xf]
    %v453 = vld [vmem:[%s1 + $0x690] sm:$0xf]
    %v454 = vld [vmem:[%s1 + $0x694] sm:$0xf]
    %v455 = vld [vmem:[%s1 + $0x698] sm:$0xf]
    %v456 = vld [vmem:[%s1 + $0x69c] sm:$0xf]
    %v457 = vld [vmem:[%s1 + $0x6a0] sm:$0xf]
    %v458 = vld [vmem:[%s1 + $0x6a4] sm:$0xf]
    %v459 = vld [vmem:[%s1 + $0x6a8] sm:$0xf]
    %v460 = vld [vmem:[%s1 + $0x6ac] sm:$0xf]
    %v461 = vld [vmem:[%s1 + $0x6b0] sm:$0xf]
    %v462 = vld [vmem:[%s1 + $0x6b4] sm:$0xf]
    %v463 = vld [vmem:[%s1 + $0x6b8] sm:$0xf]
    %v464 = vld [vmem:[%s1 + $0x6bc] sm:$0xf]
    %v465 = vld [vmem:[%s1 + $0x6c0] sm:$0xf]
    %v466 = vld [vmem:[%s1 + $0x6c4] sm:$0xf]
    %v467 = vld [vmem:[%s1 + $0x6c8] sm:$0xf]
    %v468 = vld [vmem:[%s1 + $0x6cc] sm:$0xf]
    %v469 = vld [vmem:[%s1 + $0x6d0] sm:$0xf]
    %v470 = vld [vmem:[%s1 + $0x6d4] sm:$0xf]
    %v471 = vld [vmem:[%s1 + $0x6d8] sm:$0xf]
    %v472 = vld [vmem:[%s1 + $0x6dc] sm:$0xf]
    %v473 = vld [vmem:[%s1 + $0x6e0] sm:$0xf]
    %v474 = vld [vmem:[%s1 + $0x6e4] sm:$0xf]
    %v475 = vld [vmem:[%s1 + $0x6e8] sm:$0xf]
    %v476 = vld [vmem:[%s1 + $0x6ec] sm:$0xf]
    %v477 = vld [vmem:[%s1 + $0x6f0] sm:$0xf]
    %v478 = vld [vmem:[%s1 + $0x6f4] sm:$0xf]
    %v479 = vld [vmem:[%s1 + $0x6f8] sm:$0xf]
    %v480 = vld [vmem:[%s1 + $0x6fc] sm:$0xf]
    %v481 = vld [vmem:[%s1 + $0x700] sm:$0xf]
    %v482 = vld [vmem:[%s1 + $0x704] sm:$0xf]
    %v483 = vld [vmem:[%s1 + $0x708] sm:$0xf]
    %v484 = vld [vmem:[%s1 + $0x70c] sm:$0xf]
    %v485 = vld [vmem:[%s1 + $0x710] sm:$0xf]
    %v486 = vld [vmem:[%s1 + $0x714] sm:$0xf]
    %v487 = vld [vmem:[%s1 + $0x718] sm:$0xf]
    %v488 = vld [vmem:[%s1 + $0x71c] sm:$0xf]
    %v489 = vld [vmem:[%s1 + $0x720] sm:$0xf]
    %v490 = vld [vmem:[%s1 + $0x724] sm:$0xf]
    %v491 = vld [vmem:[%s1 + $0x728] sm:$0xf]
    %v492 = vld [vmem:[%s1 + $0x72c] sm:$0xf]
    %v493 = vld [vmem:[%s1 + $0x730] sm:$0xf]
    %v494 = vld [vmem:[%s1 + $0x734] sm:$0xf]
    %v495 = vld [vmem:[%s1 + $0x738] sm:$0xf]
    %v496 = vld [vmem:[%s1 + $0x73c] sm:$0xf]
    %v497 = vld [vmem:[%s1 + $0x740] sm:$0xf]
    %v498 = vld [vmem:[%s1 + $0x744] sm:$0xf]
    %v499 = vld [vmem:[%s1 + $0x748] sm:$0xf]
    %v500 = vld [vmem:[%s1 + $0x74c] sm:$0xf]
    %v501 = vld [vmem:[%s1 + $0x750] sm:$0xf]
    %v502 = vld [vmem:[%s1 + $0x754] sm:$0xf]
    %v503 = vld [vmem:[%s1 + $0x758] sm:$0xf]
    %v504 = vld [vmem:[%s1 + $0x75c] sm:$0xf]
    %v505 = vld [vmem:[%s1 + $0x760] sm:$0xf]
    %v506 = vld [vmem:[%s1 + $0x764] sm:$0xf]
    %v507 = vld [vmem:[%s1 + $0x768] sm:$0xf]
    %v508 = vld [vmem:[%s1 + $0x76c] sm:$0xf]
    %v509 = vld [vmem:[%s1 + $0x770] sm:$0xf]
    %v510 = vld [vmem:[%s1 + $0x774] sm:$0xf]
    %v511 = vld [vmem:[%s1 + $0x778] sm:$0xf]
    %v512 = vld [vmem:[%s1 + $0x77c] sm:$0xf]
    %v513 = vld [vmem:[%s1 + $0x780] sm:$0xf]
    %v514 = vld [vmem:[%s1 + $0x784] sm:$0xf]
    %v515 = vld [vmem:[%s1 + $0x788] sm:$0xf]
    %v516 = vld [vmem:[%s1 + $0x78c] sm:$0xf]
    %v517 = vld [vmem:[%s1 + $0x790] sm:$0xf]
    %v518 = vld [vmem:[%s1 + $0x794] sm:$0xf]
    %v519 = vld [vmem:[%s1 + $0x798] sm:$0xf]
    %v520 = vld [vmem:[%s1 + $0x79c] sm:$0xf]
    %v521 = vld [vmem:[%s1 + $0x7a0] sm:$0xf]
    %v522 = vld [vmem:[%s1 + $0x7a4] sm:$0xf]
    %v523 = vld [vmem:[%s1 + $0x7a8] sm:$0xf]
    %v524 = vld [vmem:[%s1 + $0x7ac] sm:$0xf]
    %v525 = vld [vmem:[%s1 + $0x7b0] sm:$0xf]
    %v526 = vld [vmem:[%s1 + $0x7b4] sm:$0xf]
    %v527 = vld [vmem:[%s1 + $0x7b8] sm:$0xf]
    %v528 = vld [vmem:[%s1 + $0x7bc] sm:$0xf]
    %v529 = vld [vmem:[%s1 + $0x7c0] sm:$0xf]
    %v530 = vld [vmem:[%s1 + $0x7c4] sm:$0xf]
    %v531 = vld [vmem:[%s1 + $0x7c8] sm:$0xf]
    %v532 = vld [vmem:[%s1 + $0x7cc] sm:$0xf]
    %v533 = vld [vmem:[%s1 + $0x7d0] sm:$0xf]
    %v534 = vld [vmem:[%s1 + $0x7d4] sm:$0xf]
    %v535 = vld [vmem:[%s1 + $0x7d8] sm:$0xf]
    %v536 = vld [vmem:[%s1 + $0x7dc] sm:$0xf]
    %v537 = vld [vmem:[%s1 + $0x7e0] sm:$0xf]
    %v538 = vld [vmem:[%s1 + $0x7e4] sm:$0xf]
    %v539 = vld [vmem:[%s1 + $0x7e8] sm:$0xf]
    %v540 = vld [vmem:[%s1 + $0x7ec] sm:$0xf]
    %v541 = vld [vmem:[%s1 + $0x7f0] sm:$0xf]
    %v542 = vld [vmem:[%s1 + $0x7f4] sm:$0xf]
    %v543 = vld [vmem:[%s1 + $0x7f8] sm:$0xf]
    %v544 = vld [vmem:[%s1 + $0x7fc] sm:$0xf]
    %v545 = vld [vmem:[%s2] sm:$0x1]
    %v547 = vperm.slane %v545, 0
    %550 = vst [vmem:[#allocation1] ss:$9 sm:$0xff] %v29
    %v551 = vld [vmem:[#allocation1] sm:$0xff]
    %v552 = vld [vmem:[#allocation1 + $0x9] sm:$0xff]
    %v553 = vld [vmem:[#allocation1 + $0x12] sm:$0xff]
    %v554 = vld [vmem:[#allocation1 + $0x1b] sm:$0xff]
    %v555 = vld [vmem:[#allocation1 + $0x24] sm:$0xff]
    %v556 = vld [vmem:[#allocation1 + $0x2d] sm:$0xff]
    %v557 = vld [vmem:[#allocation1 + $0x36] sm:$0xff]
    %v558 = vld [vmem:[#allocation1 + $0x3f] sm:$0xff]
    %560 = vst [vmem:[#allocation1] ss:$9 sm:$0xff] %v30
    %v561 = vld [vmem:[#allocation1] sm:$0xff]
    %v562 = vld [vmem:[#allocation1 + $0x9] sm:$0xff]
    %v563 = vld [vmem:[#allocation1 + $0x12] sm:$0xff]
    %v564 = vld [vmem:[#allocation1 + $0x1b] sm:$0xff]
    %v565 = vld [vmem:[#allocation1 + $0x24] sm:$0xff]
    %v566 = vld [vmem:[#allocation1 + $0x2d] sm:$0xff]
    %v567 = vld [vmem:[#allocation1 + $0x36] sm:$0xff]
    %v568 = vld [vmem:[#allocation1 + $0x3f] sm:$0xff]
    %570 = vst [vmem:[#allocation1] ss:$9 sm:$0xff] %v31
    %v571 = vld [vmem:[#allocation1] sm:$0xff]
    %v572 = vld [vmem:[#allocation1 + $0x9] sm:$0xff]
    %v573 = vld [vmem:[#allocation1 + $0x12] sm:$0xff]
    %v574 = vld [vmem:[#allocation1 + $0x1b] sm:$0xff]
    %v575 = vld [vmem:[#allocation1 + $0x24] sm:$0xff]
    %v576 = vld [vmem:[#allocation1 + $0x2d] sm:$0xff]
    %v577 = vld [vmem:[#allocation1 + $0x36] sm:$0xff]
    %v578 = vld [vmem:[#allocation1 + $0x3f] sm:$0xff]
    %580 = vst [vmem:[#allocation1] ss:$9 sm:$0xff] %v32
    %v581 = vld [vmem:[#allocation1] sm:$0xff]
    %v582 = vld [vmem:[#allocation1 + $0x9] sm:$0xff]
    %v583 = vld [vmem:[#allocation1 + $0x12] sm:$0xff]
    %v584 = vld [vmem:[#allocation1 + $0x1b] sm:$0xff]
    %v585 = vld [vmem:[#allocation1 + $0x24] sm:$0xff]
    %v586 = vld [vmem:[#allocation1 + $0x2d] sm:$0xff]
    %v587 = vld [vmem:[#allocation1 + $0x36] sm:$0xff]
    %v588 = vld [vmem:[#allocation1 + $0x3f] sm:$0xff]
    %v1133 = vunpack.c.l.b16 %v33
    %v1134 = vunpack.c.l.b16 %v34
    %v1135 = vunpack.c.l.b16 %v35
    %v1136 = vunpack.c.l.b16 %v36
    %v1137 = vunpack.c.l.b16 %v37
    %v1138 = vunpack.c.l.b16 %v38
    %v1139 = vunpack.c.l.b16 %v39
    %v1140 = vunpack.c.l.b16 %v40
    %v1141 = vunpack.c.l.b16 %v41
    %v1142 = vunpack.c.l.b16 %v42
    %v1143 = vunpack.c.l.b16 %v43
    %v1144 = vunpack.c.l.b16 %v44
    %v1145 = vunpack.c.l.b16 %v45
    %v1146 = vunpack.c.l.b16 %v46
    %v1147 = vunpack.c.l.b16 %v47
    %v1148 = vunpack.c.l.b16 %v48
    %v1149 = vunpack.c.l.b16 %v49
    %v1150 = vunpack.c.l.b16 %v50
    %v1151 = vunpack.c.l.b16 %v51
    %v1152 = vunpack.c.l.b16 %v52
    %v1153 = vunpack.c.l.b16 %v53
    %v1154 = vunpack.c.l.b16 %v54
    %v1155 = vunpack.c.l.b16 %v55
    %v1156 = vunpack.c.l.b16 %v56
    %v1157 = vunpack.c.l.b16 %v57
    %v1158 = vunpack.c.l.b16 %v58
    %v1159 = vunpack.c.l.b16 %v59
    %v1160 = vunpack.c.l.b16 %v60
    %v1161 = vunpack.c.l.b16 %v61
    %v1162 = vunpack.c.l.b16 %v62
    %v1163 = vunpack.c.l.b16 %v63
    %v1164 = vunpack.c.l.b16 %v64
    %v1165 = vunpack.c.l.b16 %v65
    %v1166 = vunpack.c.l.b16 %v66
    %v1167 = vunpack.c.l.b16 %v67
    %v1168 = vunpack.c.l.b16 %v68
    %v1169 = vunpack.c.l.b16 %v69
    %v1170 = vunpack.c.l.b16 %v70
    %v1171 = vunpack.c.l.b16 %v71
    %v1172 = vunpack.c.l.b16 %v72
    %v1173 = vunpack.c.l.b16 %v73
    %v1174 = vunpack.c.l.b16 %v74
    %v1175 = vunpack.c.l.b16 %v75
    %v1176 = vunpack.c.l.b16 %v76
    %v1177 = vunpack.c.l.b16 %v77
    %v1178 = vunpack.c.l.b16 %v78
    %v1179 = vunpack.c.l.b16 %v79
    %v1180 = vunpack.c.l.b16 %v80
    %v1181 = vunpack.c.l.b16 %v81
    %v1182 = vunpack.c.l.b16 %v82
    %v1183 = vunpack.c.l.b16 %v83
    %v1184 = vunpack.c.l.b16 %v84
    %v1185 = vunpack.c.l.b16 %v85
    %v1186 = vunpack.c.l.b16 %v86
    %v1187 = vunpack.c.l.b16 %v87
    %v1188 = vunpack.c.l.b16 %v88
    %v1189 = vunpack.c.l.b16 %v89
    %v1190 = vunpack.c.l.b16 %v90
    %v1191 = vunpack.c.l.b16 %v91
    %v1192 = vunpack.c.l.b16 %v92
    %v1193 = vunpack.c.l.b16 %v93
    %v1194 = vunpack.c.l.b16 %v94
    %v1195 = vunpack.c.l.b16 %v95
    %v1196 = vunpack.c.l.b16 %v96
    %v1197 = vunpack.c.l.b16 %v97
    %v1198 = vunpack.c.l.b16 %v98
    %v1199 = vunpack.c.l.b16 %v99
    %v1200 = vunpack.c.l.b16 %v100
    %v1201 = vunpack.c.l.b16 %v101
    %v1202 = vunpack.c.l.b16 %v102
    %v1203 = vunpack.c.l.b16 %v103
    %v1204 = vunpack.c.l.b16 %v104
    %v1205 = vunpack.c.l.b16 %v105
    %v1206 = vunpack.c.l.b16 %v106
    %v1207 = vunpack.c.l.b16 %v107
    %v1208 = vunpack.c.l.b16 %v108
    %v1209 = vunpack.c.l.b16 %v109
    %v1210 = vunpack.c.l.b16 %v110
    %v1211 = vunpack.c.l.b16 %v111
    %v1212 = vunpack.c.l.b16 %v112
    %v1213 = vunpack.c.l.b16 %v113
    %v1214 = vunpack.c.l.b16 %v114
    %v1215 = vunpack.c.l.b16 %v115
    %v1216 = vunpack.c.l.b16 %v116
    %v1217 = vunpack.c.l.b16 %v117
    %v1218 = vunpack.c.l.b16 %v118
    %v1219 = vunpack.c.l.b16 %v119
    %v1220 = vunpack.c.l.b16 %v120
    %v1221 = vunpack.c.l.b16 %v121
    %v1222 = vunpack.c.l.b16 %v122
    %v1223 = vunpack.c.l.b16 %v123
    %v1224 = vunpack.c.l.b16 %v124
    %v1225 = vunpack.c.l.b16 %v125
    %v1226 = vunpack.c.l.b16 %v126
    %v1227 = vunpack.c.l.b16 %v127
    %v1228 = vunpack.c.l.b16 %v128
    %v1229 = vunpack.c.l.b16 %v129
    %v1230 = vunpack.c.l.b16 %v130
    %v1231 = vunpack.c.l.b16 %v131
    %v1232 = vunpack.c.l.b16 %v132
    %v1233 = vunpack.c.l.b16 %v133
    %v1234 = vunpack.c.l.b16 %v134
    %v1235 = vunpack.c.l.b16 %v135
    %v1236 = vunpack.c.l.b16 %v136
    %v1237 = vunpack.c.l.b16 %v137
    %v1238 = vunpack.c.l.b16 %v138
    %v1239 = vunpack.c.l.b16 %v139
    %v1240 = vunpack.c.l.b16 %v140
    %v1241 = vunpack.c.l.b16 %v141
    %v1242 = vunpack.c.l.b16 %v142
    %v1243 = vunpack.c.l.b16 %v143
    %v1244 = vunpack.c.l.b16 %v144
    %v1245 = vunpack.c.l.b16 %v145
    %v1246 = vunpack.c.l.b16 %v146
    %v1247 = vunpack.c.l.b16 %v147
    %v1248 = vunpack.c.l.b16 %v148
    %v1249 = vunpack.c.l.b16 %v149
    %v1250 = vunpack.c.l.b16 %v150
    %v1251 = vunpack.c.l.b16 %v151
    %v1252 = vunpack.c.l.b16 %v152
    %v1253 = vunpack.c.l.b16 %v153
    %v1254 = vunpack.c.l.b16 %v154
    %v1255 = vunpack.c.l.b16 %v155
    %v1256 = vunpack.c.l.b16 %v156
    %v1257 = vunpack.c.l.b16 %v157
    %v1258 = vunpack.c.l.b16 %v158
    %v1259 = vunpack.c.l.b16 %v159
    %v1260 = vunpack.c.l.b16 %v160
    %v1261 = vunpack.c.l.b16 %v161
    %v1262 = vunpack.c.l.b16 %v162
    %v1263 = vunpack.c.l.b16 %v163
    %v1264 = vunpack.c.l.b16 %v164
    %v1265 = vunpack.c.l.b16 %v165
    %v1266 = vunpack.c.l.b16 %v166
    %v1267 = vunpack.c.l.b16 %v167
    %v1268 = vunpack.c.l.b16 %v168
    %v1269 = vunpack.c.l.b16 %v169
    %v1270 = vunpack.c.l.b16 %v170
    %v1271 = vunpack.c.l.b16 %v171
    %v1272 = vunpack.c.l.b16 %v172
    %v1273 = vunpack.c.l.b16 %v173
    %v1274 = vunpack.c.l.b16 %v174
    %v1275 = vunpack.c.l.b16 %v175
    %v1276 = vunpack.c.l.b16 %v176
    %v1277 = vunpack.c.l.b16 %v177
    %v1278 = vunpack.c.l.b16 %v178
    %v1279 = vunpack.c.l.b16 %v179
    %v1280 = vunpack.c.l.b16 %v180
    %v1281 = vunpack.c.l.b16 %v181
    %v1282 = vunpack.c.l.b16 %v182
    %v1283 = vunpack.c.l.b16 %v183
    %v1284 = vunpack.c.l.b16 %v184
    %v1285 = vunpack.c.l.b16 %v185
    %v1286 = vunpack.c.l.b16 %v186
    %v1287 = vunpack.c.l.b16 %v187
    %v1288 = vunpack.c.l.b16 %v188
    %v1289 = vunpack.c.l.b16 %v189
    %v1290 = vunpack.c.l.b16 %v190
    %v1291 = vunpack.c.l.b16 %v191
    %v1292 = vunpack.c.l.b16 %v192
    %v1293 = vunpack.c.l.b16 %v193
    %v1294 = vunpack.c.l.b16 %v194
    %v1295 = vunpack.c.l.b16 %v195
    %v1296 = vunpack.c.l.b16 %v196
    %v1297 = vunpack.c.l.b16 %v197
    %v1298 = vunpack.c.l.b16 %v198
    %v1299 = vunpack.c.l.b16 %v199
    %v1300 = vunpack.c.l.b16 %v200
    %v1301 = vunpack.c.l.b16 %v201
    %v1302 = vunpack.c.l.b16 %v202
    %v1303 = vunpack.c.l.b16 %v203
    %v1304 = vunpack.c.l.b16 %v204
    %v1305 = vunpack.c.l.b16 %v205
    %v1306 = vunpack.c.l.b16 %v206
    %v1307 = vunpack.c.l.b16 %v207
    %v1308 = vunpack.c.l.b16 %v208
    %v1309 = vunpack.c.l.b16 %v209
    %v1310 = vunpack.c.l.b16 %v210
    %v1311 = vunpack.c.l.b16 %v211
    %v1312 = vunpack.c.l.b16 %v212
    %v1313 = vunpack.c.l.b16 %v213
    %v1314 = vunpack.c.l.b16 %v214
    %v1315 = vunpack.c.l.b16 %v215
    %v1316 = vunpack.c.l.b16 %v216
    %v1317 = vunpack.c.l.b16 %v217
    %v1318 = vunpack.c.l.b16 %v218
    %v1319 = vunpack.c.l.b16 %v219
    %v1320 = vunpack.c.l.b16 %v220
    %v1321 = vunpack.c.l.b16 %v221
    %v1322 = vunpack.c.l.b16 %v222
    %v1323 = vunpack.c.l.b16 %v223
    %v1324 = vunpack.c.l.b16 %v224
    %v1325 = vunpack.c.l.b16 %v225
    %v1326 = vunpack.c.l.b16 %v226
    %v1327 = vunpack.c.l.b16 %v227
    %v1328 = vunpack.c.l.b16 %v228
    %v1329 = vunpack.c.l.b16 %v229
    %v1330 = vunpack.c.l.b16 %v230
    %v1331 = vunpack.c.l.b16 %v231
    %v1332 = vunpack.c.l.b16 %v232
    %v1333 = vunpack.c.l.b16 %v233
    %v1334 = vunpack.c.l.b16 %v234
    %v1335 = vunpack.c.l.b16 %v235
    %v1336 = vunpack.c.l.b16 %v236
    %v1337 = vunpack.c.l.b16 %v237
    %v1338 = vunpack.c.l.b16 %v238
    %v1339 = vunpack.c.l.b16 %v239
    %v1340 = vunpack.c.l.b16 %v240
    %v1341 = vunpack.c.l.b16 %v241
    %v1342 = vunpack.c.l.b16 %v242
    %v1343 = vunpack.c.l.b16 %v243
    %v1344 = vunpack.c.l.b16 %v244
    %v1345 = vunpack.c.l.b16 %v245
    %v1346 = vunpack.c.l.b16 %v246
    %v1347 = vunpack.c.l.b16 %v247
    %v1348 = vunpack.c.l.b16 %v248
    %v1349 = vunpack.c.l.b16 %v249
    %v1350 = vunpack.c.l.b16 %v250
    %v1351 = vunpack.c.l.b16 %v251
    %v1352 = vunpack.c.l.b16 %v252
    %v1353 = vunpack.c.l.b16 %v253
    %v1354 = vunpack.c.l.b16 %v254
    %v1355 = vunpack.c.l.b16 %v255
    %v1356 = vunpack.c.l.b16 %v256
    %v1357 = vunpack.c.l.b16 %v257
    %v1358 = vunpack.c.l.b16 %v258
    %v1359 = vunpack.c.l.b16 %v259
    %v1360 = vunpack.c.l.b16 %v260
    %v1361 = vunpack.c.l.b16 %v261
    %v1362 = vunpack.c.l.b16 %v262
    %v1363 = vunpack.c.l.b16 %v263
    %v1364 = vunpack.c.l.b16 %v264
    %v1365 = vunpack.c.l.b16 %v265
    %v1366 = vunpack.c.l.b16 %v266
    %v1367 = vunpack.c.l.b16 %v267
    %v1368 = vunpack.c.l.b16 %v268
    %v1369 = vunpack.c.l.b16 %v269
    %v1370 = vunpack.c.l.b16 %v270
    %v1371 = vunpack.c.l.b16 %v271
    %v1372 = vunpack.c.l.b16 %v272
    %v1373 = vunpack.c.l.b16 %v273
    %v1374 = vunpack.c.l.b16 %v274
    %v1375 = vunpack.c.l.b16 %v275
    %v1376 = vunpack.c.l.b16 %v276
    %v1377 = vunpack.c.l.b16 %v277
    %v1378 = vunpack.c.l.b16 %v278
    %v1379 = vunpack.c.l.b16 %v279
    %v1380 = vunpack.c.l.b16 %v280
    %v1381 = vunpack.c.l.b16 %v281
    %v1382 = vunpack.c.l.b16 %v282
    %v1383 = vunpack.c.l.b16 %v283
    %v1384 = vunpack.c.l.b16 %v284
    %v1385 = vunpack.c.l.b16 %v285
    %v1386 = vunpack.c.l.b16 %v286
    %v1387 = vunpack.c.l.b16 %v287
    %v1388 = vunpack.c.l.b16 %v288
    %v1389 = vunpack.c.l.b16 %v289
    %v1390 = vunpack.c.l.b16 %v290
    %v1391 = vunpack.c.l.b16 %v291
    %v1392 = vunpack.c.l.b16 %v292
    %v1393 = vunpack.c.l.b16 %v293
    %v1394 = vunpack.c.l.b16 %v294
    %v1395 = vunpack.c.l.b16 %v295
    %v1396 = vunpack.c.l.b16 %v296
    %v1397 = vunpack.c.l.b16 %v297
    %v1398 = vunpack.c.l.b16 %v298
    %v1399 = vunpack.c.l.b16 %v299
    %v1400 = vunpack.c.l.b16 %v300
    %v1401 = vunpack.c.l.b16 %v301
    %v1402 = vunpack.c.l.b16 %v302
    %v1403 = vunpack.c.l.b16 %v303
    %v1404 = vunpack.c.l.b16 %v304
    %v1405 = vunpack.c.l.b16 %v305
    %v1406 = vunpack.c.l.b16 %v306
    %v1407 = vunpack.c.l.b16 %v307
    %v1408 = vunpack.c.l.b16 %v308
    %v1409 = vunpack.c.l.b16 %v309
    %v1410 = vunpack.c.l.b16 %v310
    %v1411 = vunpack.c.l.b16 %v311
    %v1412 = vunpack.c.l.b16 %v312
    %v1413 = vunpack.c.l.b16 %v313
    %v1414 = vunpack.c.l.b16 %v314
    %v1415 = vunpack.c.l.b16 %v315
    %v1416 = vunpack.c.l.b16 %v316
    %v1417 = vunpack.c.l.b16 %v317
    %v1418 = vunpack.c.l.b16 %v318
    %v1419 = vunpack.c.l.b16 %v319
    %v1420 = vunpack.c.l.b16 %v320
    %v1421 = vunpack.c.l.b16 %v321
    %v1422 = vunpack.c.l.b16 %v322
    %v1423 = vunpack.c.l.b16 %v323
    %v1424 = vunpack.c.l.b16 %v324
    %v1425 = vunpack.c.l.b16 %v325
    %v1426 = vunpack.c.l.b16 %v326
    %v1427 = vunpack.c.l.b16 %v327
    %v1428 = vunpack.c.l.b16 %v328
    %v1429 = vunpack.c.l.b16 %v329
    %v1430 = vunpack.c.l.b16 %v330
    %v1431 = vunpack.c.l.b16 %v331
    %v1432 = vunpack.c.l.b16 %v332
    %v1433 = vunpack.c.l.b16 %v333
    %v1434 = vunpack.c.l.b16 %v334
    %v1435 = vunpack.c.l.b16 %v335
    %v1436 = vunpack.c.l.b16 %v336
    %v1437 = vunpack.c.l.b16 %v337
    %v1438 = vunpack.c.l.b16 %v338
    %v1439 = vunpack.c.l.b16 %v339
    %v1440 = vunpack.c.l.b16 %v340
    %v1441 = vunpack.c.l.b16 %v341
    %v1442 = vunpack.c.l.b16 %v342
    %v1443 = vunpack.c.l.b16 %v343
    %v1444 = vunpack.c.l.b16 %v344
    %v1445 = vunpack.c.l.b16 %v345
    %v1446 = vunpack.c.l.b16 %v346
    %v1447 = vunpack.c.l.b16 %v347
    %v1448 = vunpack.c.l.b16 %v348
    %v1449 = vunpack.c.l.b16 %v349
    %v1450 = vunpack.c.l.b16 %v350
    %v1451 = vunpack.c.l.b16 %v351
    %v1452 = vunpack.c.l.b16 %v352
    %v1453 = vunpack.c.l.b16 %v353
    %v1454 = vunpack.c.l.b16 %v354
    %v1455 = vunpack.c.l.b16 %v355
    %v1456 = vunpack.c.l.b16 %v356
    %v1457 = vunpack.c.l.b16 %v357
    %v1458 = vunpack.c.l.b16 %v358
    %v1459 = vunpack.c.l.b16 %v359
    %v1460 = vunpack.c.l.b16 %v360
    %v1461 = vunpack.c.l.b16 %v361
    %v1462 = vunpack.c.l.b16 %v362
    %v1463 = vunpack.c.l.b16 %v363
    %v1464 = vunpack.c.l.b16 %v364
    %v1465 = vunpack.c.l.b16 %v365
    %v1466 = vunpack.c.l.b16 %v366
    %v1467 = vunpack.c.l.b16 %v367
    %v1468 = vunpack.c.l.b16 %v368
    %v1469 = vunpack.c.l.b16 %v369
    %v1470 = vunpack.c.l.b16 %v370
    %v1471 = vunpack.c.l.b16 %v371
    %v1472 = vunpack.c.l.b16 %v372
    %v1473 = vunpack.c.l.b16 %v373
    %v1474 = vunpack.c.l.b16 %v374
    %v1475 = vunpack.c.l.b16 %v375
    %v1476 = vunpack.c.l.b16 %v376
    %v1477 = vunpack.c.l.b16 %v377
    %v1478 = vunpack.c.l.b16 %v378
    %v1479 = vunpack.c.l.b16 %v379
    %v1480 = vunpack.c.l.b16 %v380
    %v1481 = vunpack.c.l.b16 %v381
    %v1482 = vunpack.c.l.b16 %v382
    %v1483 = vunpack.c.l.b16 %v383
    %v1484 = vunpack.c.l.b16 %v384
    %v1485 = vunpack.c.l.b16 %v385
    %v1486 = vunpack.c.l.b16 %v386
    %v1487 = vunpack.c.l.b16 %v387
    %v1488 = vunpack.c.l.b16 %v388
    %v1489 = vunpack.c.l.b16 %v389
    %v1490 = vunpack.c.l.b16 %v390
    %v1491 = vunpack.c.l.b16 %v391
    %v1492 = vunpack.c.l.b16 %v392
    %v1493 = vunpack.c.l.b16 %v393
    %v1494 = vunpack.c.l.b16 %v394
    %v1495 = vunpack.c.l.b16 %v395
    %v1496 = vunpack.c.l.b16 %v396
    %v1497 = vunpack.c.l.b16 %v397
    %v1498 = vunpack.c.l.b16 %v398
    %v1499 = vunpack.c.l.b16 %v399
    %v1500 = vunpack.c.l.b16 %v400
    %v1501 = vunpack.c.l.b16 %v401
    %v1502 = vunpack.c.l.b16 %v402
    %v1503 = vunpack.c.l.b16 %v403
    %v1504 = vunpack.c.l.b16 %v404
    %v1505 = vunpack.c.l.b16 %v405
    %v1506 = vunpack.c.l.b16 %v406
    %v1507 = vunpack.c.l.b16 %v407
    %v1508 = vunpack.c.l.b16 %v408
    %v1509 = vunpack.c.l.b16 %v409
    %v1510 = vunpack.c.l.b16 %v410
    %v1511 = vunpack.c.l.b16 %v411
    %v1512 = vunpack.c.l.b16 %v412
    %v1513 = vunpack.c.l.b16 %v413
    %v1514 = vunpack.c.l.b16 %v414
    %v1515 = vunpack.c.l.b16 %v415
    %v1516 = vunpack.c.l.b16 %v416
    %v1517 = vunpack.c.l.b16 %v417
    %v1518 = vunpack.c.l.b16 %v418
    %v1519 = vunpack.c.l.b16 %v419
    %v1520 = vunpack.c.l.b16 %v420
    %v1521 = vunpack.c.l.b16 %v421
    %v1522 = vunpack.c.l.b16 %v422
    %v1523 = vunpack.c.l.b16 %v423
    %v1524 = vunpack.c.l.b16 %v424
    %v1525 = vunpack.c.l.b16 %v425
    %v1526 = vunpack.c.l.b16 %v426
    %v1527 = vunpack.c.l.b16 %v427
    %v1528 = vunpack.c.l.b16 %v428
    %v1529 = vunpack.c.l.b16 %v429
    %v1530 = vunpack.c.l.b16 %v430
    %v1531 = vunpack.c.l.b16 %v431
    %v1532 = vunpack.c.l.b16 %v432
    %v1533 = vunpack.c.l.b16 %v433
    %v1534 = vunpack.c.l.b16 %v434
    %v1535 = vunpack.c.l.b16 %v435
    %v1536 = vunpack.c.l.b16 %v436
    %v1537 = vunpack.c.l.b16 %v437
    %v1538 = vunpack.c.l.b16 %v438
    %v1539 = vunpack.c.l.b16 %v439
    %v1540 = vunpack.c.l.b16 %v440
    %v1541 = vunpack.c.l.b16 %v441
    %v1542 = vunpack.c.l.b16 %v442
    %v1543 = vunpack.c.l.b16 %v443
    %v1544 = vunpack.c.l.b16 %v444
    %v1545 = vunpack.c.l.b16 %v445
    %v1546 = vunpack.c.l.b16 %v446
    %v1547 = vunpack.c.l.b16 %v447
    %v1548 = vunpack.c.l.b16 %v448
    %v1549 = vunpack.c.l.b16 %v449
    %v1550 = vunpack.c.l.b16 %v450
    %v1551 = vunpack.c.l.b16 %v451
    %v1552 = vunpack.c.l.b16 %v452
    %v1553 = vunpack.c.l.b16 %v453
    %v1554 = vunpack.c.l.b16 %v454
    %v1555 = vunpack.c.l.b16 %v455
    %v1556 = vunpack.c.l.b16 %v456
    %v1557 = vunpack.c.l.b16 %v457
    %v1558 = vunpack.c.l.b16 %v458
    %v1559 = vunpack.c.l.b16 %v459
    %v1560 = vunpack.c.l.b16 %v460
    %v1561 = vunpack.c.l.b16 %v461
    %v1562 = vunpack.c.l.b16 %v462
    %v1563 = vunpack.c.l.b16 %v463
    %v1564 = vunpack.c.l.b16 %v464
    %v1565 = vunpack.c.l.b16 %v465
    %v1566 = vunpack.c.l.b16 %v466
    %v1567 = vunpack.c.l.b16 %v467
    %v1568 = vunpack.c.l.b16 %v468
    %v1569 = vunpack.c.l.b16 %v469
    %v1570 = vunpack.c.l.b16 %v470
    %v1571 = vunpack.c.l.b16 %v471
    %v1572 = vunpack.c.l.b16 %v472
    %v1573 = vunpack.c.l.b16 %v473
    %v1574 = vunpack.c.l.b16 %v474
    %v1575 = vunpack.c.l.b16 %v475
    %v1576 = vunpack.c.l.b16 %v476
    %v1577 = vunpack.c.l.b16 %v477
    %v1578 = vunpack.c.l.b16 %v478
    %v1579 = vunpack.c.l.b16 %v479
    %v1580 = vunpack.c.l.b16 %v480
    %v1581 = vunpack.c.l.b16 %v481
    %v1582 = vunpack.c.l.b16 %v482
    %v1583 = vunpack.c.l.b16 %v483
    %v1584 = vunpack.c.l.b16 %v484
    %v1585 = vunpack.c.l.b16 %v485
    %v1586 = vunpack.c.l.b16 %v486
    %v1587 = vunpack.c.l.b16 %v487
    %v1588 = vunpack.c.l.b16 %v488
    %v1589 = vunpack.c.l.b16 %v489
    %v1590 = vunpack.c.l.b16 %v490
    %v1591 = vunpack.c.l.b16 %v491
    %v1592 = vunpack.c.l.b16 %v492
    %v1593 = vunpack.c.l.b16 %v493
    %v1594 = vunpack.c.l.b16 %v494
    %v1595 = vunpack.c.l.b16 %v495
    %v1596 = vunpack.c.l.b16 %v496
    %v1597 = vunpack.c.l.b16 %v497
    %v1598 = vunpack.c.l.b16 %v498
    %v1599 = vunpack.c.l.b16 %v499
    %v1600 = vunpack.c.l.b16 %v500
    %v1601 = vunpack.c.l.b16 %v501
    %v1602 = vunpack.c.l.b16 %v502
    %v1603 = vunpack.c.l.b16 %v503
    %v1604 = vunpack.c.l.b16 %v504
    %v1605 = vunpack.c.l.b16 %v505
    %v1606 = vunpack.c.l.b16 %v506
    %v1607 = vunpack.c.l.b16 %v507
    %v1608 = vunpack.c.l.b16 %v508
    %v1609 = vunpack.c.l.b16 %v509
    %v1610 = vunpack.c.l.b16 %v510
    %v1611 = vunpack.c.l.b16 %v511
    %v1612 = vunpack.c.l.b16 %v512
    %v1613 = vunpack.c.l.b16 %v513
    %v1614 = vunpack.c.l.b16 %v514
    %v1615 = vunpack.c.l.b16 %v515
    %v1616 = vunpack.c.l.b16 %v516
    %v1617 = vunpack.c.l.b16 %v517
    %v1618 = vunpack.c.l.b16 %v518
    %v1619 = vunpack.c.l.b16 %v519
    %v1620 = vunpack.c.l.b16 %v520
    %v1621 = vunpack.c.l.b16 %v521
    %v1622 = vunpack.c.l.b16 %v522
    %v1623 = vunpack.c.l.b16 %v523
    %v1624 = vunpack.c.l.b16 %v524
    %v1625 = vunpack.c.l.b16 %v525
    %v1626 = vunpack.c.l.b16 %v526
    %v1627 = vunpack.c.l.b16 %v527
    %v1628 = vunpack.c.l.b16 %v528
    %v1629 = vunpack.c.l.b16 %v529
    %v1630 = vunpack.c.l.b16 %v530
    %v1631 = vunpack.c.l.b16 %v531
    %v1632 = vunpack.c.l.b16 %v532
    %v1633 = vunpack.c.l.b16 %v533
    %v1634 = vunpack.c.l.b16 %v534
    %v1635 = vunpack.c.l.b16 %v535
    %v1636 = vunpack.c.l.b16 %v536
    %v1637 = vunpack.c.l.b16 %v537
    %v1638 = vunpack.c.l.b16 %v538
    %v1639 = vunpack.c.l.b16 %v539
    %v1640 = vunpack.c.l.b16 %v540
    %v1641 = vunpack.c.l.b16 %v541
    %v1642 = vunpack.c.l.b16 %v542
    %v1643 = vunpack.c.l.b16 %v543
    %v1644 = vunpack.c.l.b16 %v544
    %v1645 = vpack.c.b16 %v1134, %v1133
    %v1646 = vpack.c.b16 %v1136, %v1135
    %v1647 = vpack.c.b16 %v1138, %v1137
    %v1648 = vpack.c.b16 %v1140, %v1139
    %v1649 = vpack.c.b16 %v1142, %v1141
    %v1650 = vpack.c.b16 %v1144, %v1143
    %v1651 = vpack.c.b16 %v1146, %v1145
    %v1652 = vpack.c.b16 %v1148, %v1147
    %v1653 = vpack.c.b16 %v1150, %v1149
    %v1654 = vpack.c.b16 %v1152, %v1151
    %v1655 = vpack.c.b16 %v1154, %v1153
    %v1656 = vpack.c.b16 %v1156, %v1155
    %v1657 = vpack.c.b16 %v1158, %v1157
    %v1658 = vpack.c.b16 %v1160, %v1159
    %v1659 = vpack.c.b16 %v1162, %v1161
    %v1660 = vpack.c.b16 %v1164, %v1163
    %v1661 = vpack.c.b16 %v1166, %v1165
    %v1662 = vpack.c.b16 %v1168, %v1167
    %v1663 = vpack.c.b16 %v1170, %v1169
    %v1664 = vpack.c.b16 %v1172, %v1171
    %v1665 = vpack.c.b16 %v1174, %v1173
    %v1666 = vpack.c.b16 %v1176, %v1175
    %v1667 = vpack.c.b16 %v1178, %v1177
    %v1668 = vpack.c.b16 %v1180, %v1179
    %v1669 = vpack.c.b16 %v1182, %v1181
    %v1670 = vpack.c.b16 %v1184, %v1183
    %v1671 = vpack.c.b16 %v1186, %v1185
    %v1672 = vpack.c.b16 %v1188, %v1187
    %v1673 = vpack.c.b16 %v1190, %v1189
    %v1674 = vpack.c.b16 %v1192, %v1191
    %v1675 = vpack.c.b16 %v1194, %v1193
    %v1676 = vpack.c.b16 %v1196, %v1195
    %v1677 = vpack.c.b16 %v1198, %v1197
    %v1678 = vpack.c.b16 %v1200, %v1199
    %v1679 = vpack.c.b16 %v1202, %v1201
    %v1680 = vpack.c.b16 %v1204, %v1203
    %v1681 = vpack.c.b16 %v1206, %v1205
    %v1682 = vpack.c.b16 %v1208, %v1207
    %v1683 = vpack.c.b16 %v1210, %v1209
    %v1684 = vpack.c.b16 %v1212, %v1211
    %v1685 = vpack.c.b16 %v1214, %v1213
    %v1686 = vpack.c.b16 %v1216, %v1215
    %v1687 = vpack.c.b16 %v1218, %v1217
    %v1688 = vpack.c.b16 %v1220, %v1219
    %v1689 = vpack.c.b16 %v1222, %v1221
    %v1690 = vpack.c.b16 %v1224, %v1223
    %v1691 = vpack.c.b16 %v1226, %v1225
    %v1692 = vpack.c.b16 %v1228, %v1227
    %v1693 = vpack.c.b16 %v1230, %v1229
    %v1694 = vpack.c.b16 %v1232, %v1231
    %v1695 = vpack.c.b16 %v1234, %v1233
    %v1696 = vpack.c.b16 %v1236, %v1235
    %v1697 = vpack.c.b16 %v1238, %v1237
    %v1698 = vpack.c.b16 %v1240, %v1239
    %v1699 = vpack.c.b16 %v1242, %v1241
    %v1700 = vpack.c.b16 %v1244, %v1243
    %v1701 = vpack.c.b16 %v1246, %v1245
    %v1702 = vpack.c.b16 %v1248, %v1247
    %v1703 = vpack.c.b16 %v1250, %v1249
    %v1704 = vpack.c.b16 %v1252, %v1251
    %v1705 = vpack.c.b16 %v1254, %v1253
    %v1706 = vpack.c.b16 %v1256, %v1255
    %v1707 = vpack.c.b16 %v1258, %v1257
    %v1708 = vpack.c.b16 %v1260, %v1259
    %v1709 = vpack.c.b16 %v1262, %v1261
    %v1710 = vpack.c.b16 %v1264, %v1263
    %v1711 = vpack.c.b16 %v1266, %v1265
    %v1712 = vpack.c.b16 %v1268, %v1267
    %v1713 = vpack.c.b16 %v1270, %v1269
    %v1714 = vpack.c.b16 %v1272, %v1271
    %v1715 = vpack.c.b16 %v1274, %v1273
    %v1716 = vpack.c.b16 %v1276, %v1275
    %v1717 = vpack.c.b16 %v1278, %v1277
    %v1718 = vpack.c.b16 %v1280, %v1279
    %v1719 = vpack.c.b16 %v1282, %v1281
    %v1720 = vpack.c.b16 %v1284, %v1283
    %v1721 = vpack.c.b16 %v1286, %v1285
    %v1722 = vpack.c.b16 %v1288, %v1287
    %v1723 = vpack.c.b16 %v1290, %v1289
    %v1724 = vpack.c.b16 %v1292, %v1291
    %v1725 = vpack.c.b16 %v1294, %v1293
    %v1726 = vpack.c.b16 %v1296, %v1295
    %v1727 = vpack.c.b16 %v1298, %v1297
    %v1728 = vpack.c.b16 %v1300, %v1299
    %v1729 = vpack.c.b16 %v1302, %v1301
    %v1730 = vpack.c.b16 %v1304, %v1303
    %v1731 = vpack.c.b16 %v1306, %v1305
    %v1732 = vpack.c.b16 %v1308, %v1307
    %v1733 = vpack.c.b16 %v1310, %v1309
    %v1734 = vpack.c.b16 %v1312, %v1311
    %v1735 = vpack.c.b16 %v1314, %v1313
    %v1736 = vpack.c.b16 %v1316, %v1315
    %v1737 = vpack.c.b16 %v1318, %v1317
    %v1738 = vpack.c.b16 %v1320, %v1319
    %v1739 = vpack.c.b16 %v1322, %v1321
    %v1740 = vpack.c.b16 %v1324, %v1323
    %v1741 = vpack.c.b16 %v1326, %v1325
    %v1742 = vpack.c.b16 %v1328, %v1327
    %v1743 = vpack.c.b16 %v1330, %v1329
    %v1744 = vpack.c.b16 %v1332, %v1331
    %v1745 = vpack.c.b16 %v1334, %v1333
    %v1746 = vpack.c.b16 %v1336, %v1335
    %v1747 = vpack.c.b16 %v1338, %v1337
    %v1748 = vpack.c.b16 %v1340, %v1339
    %v1749 = vpack.c.b16 %v1342, %v1341
    %v1750 = vpack.c.b16 %v1344, %v1343
    %v1751 = vpack.c.b16 %v1346, %v1345
    %v1752 = vpack.c.b16 %v1348, %v1347
    %v1753 = vpack.c.b16 %v1350, %v1349
    %v1754 = vpack.c.b16 %v1352, %v1351
    %v1755 = vpack.c.b16 %v1354, %v1353
    %v1756 = vpack.c.b16 %v1356, %v1355
    %v1757 = vpack.c.b16 %v1358, %v1357
    %v1758 = vpack.c.b16 %v1360, %v1359
    %v1759 = vpack.c.b16 %v1362, %v1361
    %v1760 = vpack.c.b16 %v1364, %v1363
    %v1761 = vpack.c.b16 %v1366, %v1365
    %v1762 = vpack.c.b16 %v1368, %v1367
    %v1763 = vpack.c.b16 %v1370, %v1369
    %v1764 = vpack.c.b16 %v1372, %v1371
    %v1765 = vpack.c.b16 %v1374, %v1373
    %v1766 = vpack.c.b16 %v1376, %v1375
    %v1767 = vpack.c.b16 %v1378, %v1377
    %v1768 = vpack.c.b16 %v1380, %v1379
    %v1769 = vpack.c.b16 %v1382, %v1381
    %v1770 = vpack.c.b16 %v1384, %v1383
    %v1771 = vpack.c.b16 %v1386, %v1385
    %v1772 = vpack.c.b16 %v1388, %v1387
    %v1773 = vpack.c.b16 %v1390, %v1389
    %v1774 = vpack.c.b16 %v1392, %v1391
    %v1775 = vpack.c.b16 %v1394, %v1393
    %v1776 = vpack.c.b16 %v1396, %v1395
    %v1777 = vpack.c.b16 %v1398, %v1397
    %v1778 = vpack.c.b16 %v1400, %v1399
    %v1779 = vpack.c.b16 %v1402, %v1401
    %v1780 = vpack.c.b16 %v1404, %v1403
    %v1781 = vpack.c.b16 %v1406, %v1405
    %v1782 = vpack.c.b16 %v1408, %v1407
    %v1783 = vpack.c.b16 %v1410, %v1409
    %v1784 = vpack.c.b16 %v1412, %v1411
    %v1785 = vpack.c.b16 %v1414, %v1413
    %v1786 = vpack.c.b16 %v1416, %v1415
    %v1787 = vpack.c.b16 %v1418, %v1417
    %v1788 = vpack.c.b16 %v1420, %v1419
    %v1789 = vpack.c.b16 %v1422, %v1421
    %v1790 = vpack.c.b16 %v1424, %v1423
    %v1791 = vpack.c.b16 %v1426, %v1425
    %v1792 = vpack.c.b16 %v1428, %v1427
    %v1793 = vpack.c.b16 %v1430, %v1429
    %v1794 = vpack.c.b16 %v1432, %v1431
    %v1795 = vpack.c.b16 %v1434, %v1433
    %v1796 = vpack.c.b16 %v1436, %v1435
    %v1797 = vpack.c.b16 %v1438, %v1437
    %v1798 = vpack.c.b16 %v1440, %v1439
    %v1799 = vpack.c.b16 %v1442, %v1441
    %v1800 = vpack.c.b16 %v1444, %v1443
    %v1801 = vpack.c.b16 %v1446, %v1445
    %v1802 = vpack.c.b16 %v1448, %v1447
    %v1803 = vpack.c.b16 %v1450, %v1449
    %v1804 = vpack.c.b16 %v1452, %v1451
    %v1805 = vpack.c.b16 %v1454, %v1453
    %v1806 = vpack.c.b16 %v1456, %v1455
    %v1807 = vpack.c.b16 %v1458, %v1457
    %v1808 = vpack.c.b16 %v1460, %v1459
    %v1809 = vpack.c.b16 %v1462, %v1461
    %v1810 = vpack.c.b16 %v1464, %v1463
    %v1811 = vpack.c.b16 %v1466, %v1465
    %v1812 = vpack.c.b16 %v1468, %v1467
    %v1813 = vpack.c.b16 %v1470, %v1469
    %v1814 = vpack.c.b16 %v1472, %v1471
    %v1815 = vpack.c.b16 %v1474, %v1473
    %v1816 = vpack.c.b16 %v1476, %v1475
    %v1817 = vpack.c.b16 %v1478, %v1477
    %v1818 = vpack.c.b16 %v1480, %v1479
    %v1819 = vpack.c.b16 %v1482, %v1481
    %v1820 = vpack.c.b16 %v1484, %v1483
    %v1821 = vpack.c.b16 %v1486, %v1485
    %v1822 = vpack.c.b16 %v1488, %v1487
    %v1823 = vpack.c.b16 %v1490, %v1489
    %v1824 = vpack.c.b16 %v1492, %v1491
    %v1825 = vpack.c.b16 %v1494, %v1493
    %v1826 = vpack.c.b16 %v1496, %v1495
    %v1827 = vpack.c.b16 %v1498, %v1497
    %v1828 = vpack.c.b16 %v1500, %v1499
    %v1829 = vpack.c.b16 %v1502, %v1501
    %v1830 = vpack.c.b16 %v1504, %v1503
    %v1831 = vpack.c.b16 %v1506, %v1505
    %v1832 = vpack.c.b16 %v1508, %v1507
    %v1833 = vpack.c.b16 %v1510, %v1509
    %v1834 = vpack.c.b16 %v1512, %v1511
    %v1835 = vpack.c.b16 %v1514, %v1513
    %v1836 = vpack.c.b16 %v1516, %v1515
    %v1837 = vpack.c.b16 %v1518, %v1517
    %v1838 = vpack.c.b16 %v1520, %v1519
    %v1839 = vpack.c.b16 %v1522, %v1521
    %v1840 = vpack.c.b16 %v1524, %v1523
    %v1841 = vpack.c.b16 %v1526, %v1525
    %v1842 = vpack.c.b16 %v1528, %v1527
    %v1843 = vpack.c.b16 %v1530, %v1529
    %v1844 = vpack.c.b16 %v1532, %v1531
    %v1845 = vpack.c.b16 %v1534, %v1533
    %v1846 = vpack.c.b16 %v1536, %v1535
    %v1847 = vpack.c.b16 %v1538, %v1537
    %v1848 = vpack.c.b16 %v1540, %v1539
    %v1849 = vpack.c.b16 %v1542, %v1541
    %v1850 = vpack.c.b16 %v1544, %v1543
    %v1851 = vpack.c.b16 %v1546, %v1545
    %v1852 = vpack.c.b16 %v1548, %v1547
    %v1853 = vpack.c.b16 %v1550, %v1549
    %v1854 = vpack.c.b16 %v1552, %v1551
    %v1855 = vpack.c.b16 %v1554, %v1553
    %v1856 = vpack.c.b16 %v1556, %v1555
    %v1857 = vpack.c.b16 %v1558, %v1557
    %v1858 = vpack.c.b16 %v1560, %v1559
    %v1859 = vpack.c.b16 %v1562, %v1561
    %v1860 = vpack.c.b16 %v1564, %v1563
    %v1861 = vpack.c.b16 %v1566, %v1565
    %v1862 = vpack.c.b16 %v1568, %v1567
    %v1863 = vpack.c.b16 %v1570, %v1569
    %v1864 = vpack.c.b16 %v1572, %v1571
    %v1865 = vpack.c.b16 %v1574, %v1573
    %v1866 = vpack.c.b16 %v1576, %v1575
    %v1867 = vpack.c.b16 %v1578, %v1577
    %v1868 = vpack.c.b16 %v1580, %v1579
    %v1869 = vpack.c.b16 %v1582, %v1581
    %v1870 = vpack.c.b16 %v1584, %v1583
    %v1871 = vpack.c.b16 %v1586, %v1585
    %v1872 = vpack.c.b16 %v1588, %v1587
    %v1873 = vpack.c.b16 %v1590, %v1589
    %v1874 = vpack.c.b16 %v1592, %v1591
    %v1875 = vpack.c.b16 %v1594, %v1593
    %v1876 = vpack.c.b16 %v1596, %v1595
    %v1877 = vpack.c.b16 %v1598, %v1597
    %v1878 = vpack.c.b16 %v1600, %v1599
    %v1879 = vpack.c.b16 %v1602, %v1601
    %v1880 = vpack.c.b16 %v1604, %v1603
    %v1881 = vpack.c.b16 %v1606, %v1605
    %v1882 = vpack.c.b16 %v1608, %v1607
    %v1883 = vpack.c.b16 %v1610, %v1609
    %v1884 = vpack.c.b16 %v1612, %v1611
    %v1885 = vpack.c.b16 %v1614, %v1613
    %v1886 = vpack.c.b16 %v1616, %v1615
    %v1887 = vpack.c.b16 %v1618, %v1617
    %v1888 = vpack.c.b16 %v1620, %v1619
    %v1889 = vpack.c.b16 %v1622, %v1621
    %v1890 = vpack.c.b16 %v1624, %v1623
    %v1891 = vpack.c.b16 %v1626, %v1625
    %v1892 = vpack.c.b16 %v1628, %v1627
    %v1893 = vpack.c.b16 %v1630, %v1629
    %v1894 = vpack.c.b16 %v1632, %v1631
    %v1895 = vpack.c.b16 %v1634, %v1633
    %v1896 = vpack.c.b16 %v1636, %v1635
    %v1897 = vpack.c.b16 %v1638, %v1637
    %v1898 = vpack.c.b16 %v1640, %v1639
    %v1899 = vpack.c.b16 %v1642, %v1641
    %v1900 = vpack.c.b16 %v1644, %v1643
    %2157 = vmatpush.bf16.msra.mxu0 %v1652
    %2158 = vmatpush.bf16.msra.mxu0 %v1651
    %2159 = vmatpush.bf16.msra.mxu0 %v1650
    %2160 = vmatpush.bf16.msra.mxu0 %v1649
    %2161 = vmatpush.bf16.msra.mxu0 %v1648
    %2162 = vmatpush.bf16.msra.mxu0 %v1647
    %2163 = vmatpush.bf16.msra.mxu0 %v1646
    %2164 = vmatpush.bf16.msra.mxu0 %v1645
    %2165 = vmatmul.bf16.gmra.mxu0 %v551
    %v2166 = vpop.f32.mrf.mxu0
    %v2167 = vadd.f32 %v547, %v2166
    %v2168 = vpop.f32.mrf.mxu0
    %2169 = vdwg.mxu0
    %2170 = vmatpush.bf16.msra.mxu0 %v1660
    %2171 = vmatpush.bf16.msra.mxu0 %v1659
    %2172 = vmatpush.bf16.msra.mxu0 %v1658
    %2173 = vmatpush.bf16.msra.mxu0 %v1657
    %2174 = vmatpush.bf16.msra.mxu0 %v1656
    %2175 = vmatpush.bf16.msra.mxu0 %v1655
    %2176 = vmatpush.bf16.msra.mxu0 %v1654
    %2177 = vmatpush.bf16.msra.mxu0 %v1653
    %2178 = vmatmul.bf16.gmra.mxu0 %v552
    %v2179 = vpop.f32.mrf.mxu0
    %v2180 = vadd.f32 %v2167, %v2179
    %v2181 = vpop.f32.mrf.mxu0
    %2182 = vdwg.mxu0
    %2183 = vmatpush.bf16.msra.mxu0 %v1668
    %2184 = vmatpush.bf16.msra.mxu0 %v1667
    %2185 = vmatpush.bf16.msra.mxu0 %v1666
    %2186 = vmatpush.bf16.msra.mxu0 %v1665
    %2187 = vmatpush.bf16.msra.mxu0 %v1664
    %2188 = vmatpush.bf16.msra.mxu0 %v1663
    %2189 = vmatpush.bf16.msra.mxu0 %v1662
    %2190 = vmatpush.bf16.msra.mxu0 %v1661
    %2191 = vmatmul.bf16.gmra.mxu0 %v553
    %v2192 = vpop.f32.mrf.mxu0
    %v2193 = vadd.f32 %v2180, %v2192
    %v2194 = vpop.f32.mrf.mxu0
    %2195 = vdwg.mxu0
    %2196 = vmatpush.bf16.msra.mxu0 %v1676
    %2197 = vmatpush.bf16.msra.mxu0 %v1675
    %2198 = vmatpush.bf16.msra.mxu0 %v1674
    %2199 = vmatpush.bf16.msra.mxu0 %v1673
    %2200 = vmatpush.bf16.msra.mxu0 %v1672
    %2201 = vmatpush.bf16.msra.mxu0 %v1671
    %2202 = vmatpush.bf16.msra.mxu0 %v1670
    %2203 = vmatpush.bf16.msra.mxu0 %v1669
    %2204 = vmatmul.bf16.gmra.mxu0 %v554
    %v2205 = vpop.f32.mrf.mxu0
    %v2206 = vadd.f32 %v2193, %v2205
    %v2207 = vpop.f32.mrf.mxu0
    %2208 = vdwg.mxu0
    %2209 = vmatpush.bf16.msra.mxu0 %v1684
    %2210 = vmatpush.bf16.msra.mxu0 %v1683
    %2211 = vmatpush.bf16.msra.mxu0 %v1682
    %2212 = vmatpush.bf16.msra.mxu0 %v1681
    %2213 = vmatpush.bf16.msra.mxu0 %v1680
    %2214 = vmatpush.bf16.msra.mxu0 %v1679
    %2215 = vmatpush.bf16.msra.mxu0 %v1678
    %2216 = vmatpush.bf16.msra.mxu0 %v1677
    %2217 = vmatmul.bf16.gmra.mxu0 %v555
    %v2218 = vpop.f32.mrf.mxu0
    %v2219 = vadd.f32 %v2206, %v2218
    %v2220 = vpop.f32.mrf.mxu0
    %2221 = vdwg.mxu0
    %2222 = vmatpush.bf16.msra.mxu0 %v1692
    %2223 = vmatpush.bf16.msra.mxu0 %v1691
    %2224 = vmatpush.bf16.msra.mxu0 %v1690
    %2225 = vmatpush.bf16.msra.mxu0 %v1689
    %2226 = vmatpush.bf16.msra.mxu0 %v1688
    %2227 = vmatpush.bf16.msra.mxu0 %v1687
    %2228 = vmatpush.bf16.msra.mxu0 %v1686
    %2229 = vmatpush.bf16.msra.mxu0 %v1685
    %2230 = vmatmul.bf16.gmra.mxu0 %v556
    %v2231 = vpop.f32.mrf.mxu0
    %v2232 = vadd.f32 %v2219, %v2231
    %v2233 = vpop.f32.mrf.mxu0
    %2234 = vdwg.mxu0
    %2235 = vmatpush.bf16.msra.mxu0 %v1700
    %2236 = vmatpush.bf16.msra.mxu0 %v1699
    %2237 = vmatpush.bf16.msra.mxu0 %v1698
    %2238 = vmatpush.bf16.msra.mxu0 %v1697
    %2239 = vmatpush.bf16.msra.mxu0 %v1696
    %2240 = vmatpush.bf16.msra.mxu0 %v1695
    %2241 = vmatpush.bf16.msra.mxu0 %v1694
    %2242 = vmatpush.bf16.msra.mxu0 %v1693
    %2243 = vmatmul.bf16.gmra.mxu0 %v557
    %v2244 = vpop.f32.mrf.mxu0
    %v2245 = vadd.f32 %v2232, %v2244
    %v2246 = vpop.f32.mrf.mxu0
    %2247 = vdwg.mxu0
    %2248 = vmatpush.bf16.msra.mxu0 %v1708
    %2249 = vmatpush.bf16.msra.mxu0 %v1707
    %2250 = vmatpush.bf16.msra.mxu0 %v1706
    %2251 = vmatpush.bf16.msra.mxu0 %v1705
    %2252 = vmatpush.bf16.msra.mxu0 %v1704
    %2253 = vmatpush.bf16.msra.mxu0 %v1703
    %2254 = vmatpush.bf16.msra.mxu0 %v1702
    %2255 = vmatpush.bf16.msra.mxu0 %v1701
    %2256 = vmatmul.bf16.gmra.mxu0 %v558
    %v2257 = vpop.f32.mrf.mxu0
    %v2258 = vadd.f32 %v2245, %v2257
    %v2259 = vpop.f32.mrf.mxu0
    %2260 = vdwg.mxu0
    %2261 = vmatpush.bf16.msra.mxu0 %v1716
    %2262 = vmatpush.bf16.msra.mxu0 %v1715
    %2263 = vmatpush.bf16.msra.mxu0 %v1714
    %2264 = vmatpush.bf16.msra.mxu0 %v1713
    %2265 = vmatpush.bf16.msra.mxu0 %v1712
    %2266 = vmatpush.bf16.msra.mxu0 %v1711
    %2267 = vmatpush.bf16.msra.mxu0 %v1710
    %2268 = vmatpush.bf16.msra.mxu0 %v1709
    %2269 = vmatmul.bf16.gmra.mxu0 %v561
    %v2270 = vpop.f32.mrf.mxu0
    %v2271 = vadd.f32 %v2258, %v2270
    %v2272 = vpop.f32.mrf.mxu0
    %2273 = vdwg.mxu0
    %2274 = vmatpush.bf16.msra.mxu0 %v1724
    %2275 = vmatpush.bf16.msra.mxu0 %v1723
    %2276 = vmatpush.bf16.msra.mxu0 %v1722
    %2277 = vmatpush.bf16.msra.mxu0 %v1721
    %2278 = vmatpush.bf16.msra.mxu0 %v1720
    %2279 = vmatpush.bf16.msra.mxu0 %v1719
    %2280 = vmatpush.bf16.msra.mxu0 %v1718
    %2281 = vmatpush.bf16.msra.mxu0 %v1717
    %2282 = vmatmul.bf16.gmra.mxu0 %v562
    %v2283 = vpop.f32.mrf.mxu0
    %v2284 = vadd.f32 %v2271, %v2283
    %v2285 = vpop.f32.mrf.mxu0
    %2286 = vdwg.mxu0
    %2287 = vmatpush.bf16.msra.mxu0 %v1732
    %2288 = vmatpush.bf16.msra.mxu0 %v1731
    %2289 = vmatpush.bf16.msra.mxu0 %v1730
    %2290 = vmatpush.bf16.msra.mxu0 %v1729
    %2291 = vmatpush.bf16.msra.mxu0 %v1728
    %2292 = vmatpush.bf16.msra.mxu0 %v1727
    %2293 = vmatpush.bf16.msra.mxu0 %v1726
    %2294 = vmatpush.bf16.msra.mxu0 %v1725
    %2295 = vmatmul.bf16.gmra.mxu0 %v563
    %v2296 = vpop.f32.mrf.mxu0
    %v2297 = vadd.f32 %v2284, %v2296
    %v2298 = vpop.f32.mrf.mxu0
    %2299 = vdwg.mxu0
    %2300 = vmatpush.bf16.msra.mxu0 %v1740
    %2301 = vmatpush.bf16.msra.mxu0 %v1739
    %2302 = vmatpush.bf16.msra.mxu0 %v1738
    %2303 = vmatpush.bf16.msra.mxu0 %v1737
    %2304 = vmatpush.bf16.msra.mxu0 %v1736
    %2305 = vmatpush.bf16.msra.mxu0 %v1735
    %2306 = vmatpush.bf16.msra.mxu0 %v1734
    %2307 = vmatpush.bf16.msra.mxu0 %v1733
    %2308 = vmatmul.bf16.gmra.mxu0 %v564
    %v2309 = vpop.f32.mrf.mxu0
    %v2310 = vadd.f32 %v2297, %v2309
    %v2311 = vpop.f32.mrf.mxu0
    %2312 = vdwg.mxu0
    %2313 = vmatpush.bf16.msra.mxu0 %v1748
    %2314 = vmatpush.bf16.msra.mxu0 %v1747
    %2315 = vmatpush.bf16.msra.mxu0 %v1746
    %2316 = vmatpush.bf16.msra.mxu0 %v1745
    %2317 = vmatpush.bf16.msra.mxu0 %v1744
    %2318 = vmatpush.bf16.msra.mxu0 %v1743
    %2319 = vmatpush.bf16.msra.mxu0 %v1742
    %2320 = vmatpush.bf16.msra.mxu0 %v1741
    %2321 = vmatmul.bf16.gmra.mxu0 %v565
    %v2322 = vpop.f32.mrf.mxu0
    %v2323 = vadd.f32 %v2310, %v2322
    %v2324 = vpop.f32.mrf.mxu0
    %2325 = vdwg.mxu0
    %2326 = vmatpush.bf16.msra.mxu0 %v1756
    %2327 = vmatpush.bf16.msra.mxu0 %v1755
    %2328 = vmatpush.bf16.msra.mxu0 %v1754
    %2329 = vmatpush.bf16.msra.mxu0 %v1753
    %2330 = vmatpush.bf16.msra.mxu0 %v1752
    %2331 = vmatpush.bf16.msra.mxu0 %v1751
    %2332 = vmatpush.bf16.msra.mxu0 %v1750
    %2333 = vmatpush.bf16.msra.mxu0 %v1749
    %2334 = vmatmul.bf16.gmra.mxu0 %v566
    %v2335 = vpop.f32.mrf.mxu0
    %v2336 = vadd.f32 %v2323, %v2335
    %v2337 = vpop.f32.mrf.mxu0
    %2338 = vdwg.mxu0
    %2339 = vmatpush.bf16.msra.mxu0 %v1764
    %2340 = vmatpush.bf16.msra.mxu0 %v1763
    %2341 = vmatpush.bf16.msra.mxu0 %v1762
    %2342 = vmatpush.bf16.msra.mxu0 %v1761
    %2343 = vmatpush.bf16.msra.mxu0 %v1760
    %2344 = vmatpush.bf16.msra.mxu0 %v1759
    %2345 = vmatpush.bf16.msra.mxu0 %v1758
    %2346 = vmatpush.bf16.msra.mxu0 %v1757
    %2347 = vmatmul.bf16.gmra.mxu0 %v567
    %v2348 = vpop.f32.mrf.mxu0
    %v2349 = vadd.f32 %v2336, %v2348
    %v2350 = vpop.f32.mrf.mxu0
    %2351 = vdwg.mxu0
    %2352 = vmatpush.bf16.msra.mxu0 %v1772
    %2353 = vmatpush.bf16.msra.mxu0 %v1771
    %2354 = vmatpush.bf16.msra.mxu0 %v1770
    %2355 = vmatpush.bf16.msra.mxu0 %v1769
    %2356 = vmatpush.bf16.msra.mxu0 %v1768
    %2357 = vmatpush.bf16.msra.mxu0 %v1767
    %2358 = vmatpush.bf16.msra.mxu0 %v1766
    %2359 = vmatpush.bf16.msra.mxu0 %v1765
    %2360 = vmatmul.bf16.gmra.mxu0 %v568
    %v2361 = vpop.f32.mrf.mxu0
    %v2362 = vadd.f32 %v2349, %v2361
    %v2363 = vpop.f32.mrf.mxu0
    %2364 = vdwg.mxu0
    %2365 = vmatpush.bf16.msra.mxu0 %v1780
    %2366 = vmatpush.bf16.msra.mxu0 %v1779
    %2367 = vmatpush.bf16.msra.mxu0 %v1778
    %2368 = vmatpush.bf16.msra.mxu0 %v1777
    %2369 = vmatpush.bf16.msra.mxu0 %v1776
    %2370 = vmatpush.bf16.msra.mxu0 %v1775
    %2371 = vmatpush.bf16.msra.mxu0 %v1774
    %2372 = vmatpush.bf16.msra.mxu0 %v1773
    %2373 = vmatmul.bf16.gmra.mxu0 %v571
    %v2374 = vpop.f32.mrf.mxu0
    %v2375 = vadd.f32 %v2362, %v2374
    %v2376 = vpop.f32.mrf.mxu0
    %2377 = vdwg.mxu0
    %2378 = vmatpush.bf16.msra.mxu0 %v1788
    %2379 = vmatpush.bf16.msra.mxu0 %v1787
    %2380 = vmatpush.bf16.msra.mxu0 %v1786
    %2381 = vmatpush.bf16.msra.mxu0 %v1785
    %2382 = vmatpush.bf16.msra.mxu0 %v1784
    %2383 = vmatpush.bf16.msra.mxu0 %v1783
    %2384 = vmatpush.bf16.msra.mxu0 %v1782
    %2385 = vmatpush.bf16.msra.mxu0 %v1781
    %2386 = vmatmul.bf16.gmra.mxu0 %v572
    %v2387 = vpop.f32.mrf.mxu0
    %v2388 = vadd.f32 %v2375, %v2387
    %v2389 = vpop.f32.mrf.mxu0
    %2390 = vdwg.mxu0
    %2391 = vmatpush.bf16.msra.mxu0 %v1796
    %2392 = vmatpush.bf16.msra.mxu0 %v1795
    %2393 = vmatpush.bf16.msra.mxu0 %v1794
    %2394 = vmatpush.bf16.msra.mxu0 %v1793
    %2395 = vmatpush.bf16.msra.mxu0 %v1792
    %2396 = vmatpush.bf16.msra.mxu0 %v1791
    %2397 = vmatpush.bf16.msra.mxu0 %v1790
    %2398 = vmatpush.bf16.msra.mxu0 %v1789
    %2399 = vmatmul.bf16.gmra.mxu0 %v573
    %v2400 = vpop.f32.mrf.mxu0
    %v2401 = vadd.f32 %v2388, %v2400
    %v2402 = vpop.f32.mrf.mxu0
    %2403 = vdwg.mxu0
    %2404 = vmatpush.bf16.msra.mxu0 %v1804
    %2405 = vmatpush.bf16.msra.mxu0 %v1803
    %2406 = vmatpush.bf16.msra.mxu0 %v1802
    %2407 = vmatpush.bf16.msra.mxu0 %v1801
    %2408 = vmatpush.bf16.msra.mxu0 %v1800
    %2409 = vmatpush.bf16.msra.mxu0 %v1799
    %2410 = vmatpush.bf16.msra.mxu0 %v1798
    %2411 = vmatpush.bf16.msra.mxu0 %v1797
    %2412 = vmatmul.bf16.gmra.mxu0 %v574
    %v2413 = vpop.f32.mrf.mxu0
    %v2414 = vadd.f32 %v2401, %v2413
    %v2415 = vpop.f32.mrf.mxu0
    %2416 = vdwg.mxu0
    %2417 = vmatpush.bf16.msra.mxu0 %v1812
    %2418 = vmatpush.bf16.msra.mxu0 %v1811
    %2419 = vmatpush.bf16.msra.mxu0 %v1810
    %2420 = vmatpush.bf16.msra.mxu0 %v1809
    %2421 = vmatpush.bf16.msra.mxu0 %v1808
    %2422 = vmatpush.bf16.msra.mxu0 %v1807
    %2423 = vmatpush.bf16.msra.mxu0 %v1806
    %2424 = vmatpush.bf16.msra.mxu0 %v1805
    %2425 = vmatmul.bf16.gmra.mxu0 %v575
    %v2426 = vpop.f32.mrf.mxu0
    %v2427 = vadd.f32 %v2414, %v2426
    %v2428 = vpop.f32.mrf.mxu0
    %2429 = vdwg.mxu0
    %2430 = vmatpush.bf16.msra.mxu0 %v1820
    %2431 = vmatpush.bf16.msra.mxu0 %v1819
    %2432 = vmatpush.bf16.msra.mxu0 %v1818
    %2433 = vmatpush.bf16.msra.mxu0 %v1817
    %2434 = vmatpush.bf16.msra.mxu0 %v1816
    %2435 = vmatpush.bf16.msra.mxu0 %v1815
    %2436 = vmatpush.bf16.msra.mxu0 %v1814
    %2437 = vmatpush.bf16.msra.mxu0 %v1813
    %2438 = vmatmul.bf16.gmra.mxu0 %v576
    %v2439 = vpop.f32.mrf.mxu0
    %v2440 = vadd.f32 %v2427, %v2439
    %v2441 = vpop.f32.mrf.mxu0
    %2442 = vdwg.mxu0
    %2443 = vmatpush.bf16.msra.mxu0 %v1828
    %2444 = vmatpush.bf16.msra.mxu0 %v1827
    %2445 = vmatpush.bf16.msra.mxu0 %v1826
    %2446 = vmatpush.bf16.msra.mxu0 %v1825
    %2447 = vmatpush.bf16.msra.mxu0 %v1824
    %2448 = vmatpush.bf16.msra.mxu0 %v1823
    %2449 = vmatpush.bf16.msra.mxu0 %v1822
    %2450 = vmatpush.bf16.msra.mxu0 %v1821
    %2451 = vmatmul.bf16.gmra.mxu0 %v577
    %v2452 = vpop.f32.mrf.mxu0
    %v2453 = vadd.f32 %v2440, %v2452
    %v2454 = vpop.f32.mrf.mxu0
    %2455 = vdwg.mxu0
    %2456 = vmatpush.bf16.msra.mxu0 %v1836
    %2457 = vmatpush.bf16.msra.mxu0 %v1835
    %2458 = vmatpush.bf16.msra.mxu0 %v1834
    %2459 = vmatpush.bf16.msra.mxu0 %v1833
    %2460 = vmatpush.bf16.msra.mxu0 %v1832
    %2461 = vmatpush.bf16.msra.mxu0 %v1831
    %2462 = vmatpush.bf16.msra.mxu0 %v1830
    %2463 = vmatpush.bf16.msra.mxu0 %v1829
    %2464 = vmatmul.bf16.gmra.mxu0 %v578
    %v2465 = vpop.f32.mrf.mxu0
    %v2466 = vadd.f32 %v2453, %v2465
    %v2467 = vpop.f32.mrf.mxu0
    %2468 = vdwg.mxu0
    %2469 = vmatpush.bf16.msra.mxu0 %v1844
    %2470 = vmatpush.bf16.msra.mxu0 %v1843
    %2471 = vmatpush.bf16.msra.mxu0 %v1842
    %2472 = vmatpush.bf16.msra.mxu0 %v1841
    %2473 = vmatpush.bf16.msra.mxu0 %v1840
    %2474 = vmatpush.bf16.msra.mxu0 %v1839
    %2475 = vmatpush.bf16.msra.mxu0 %v1838
    %2476 = vmatpush.bf16.msra.mxu0 %v1837
    %2477 = vmatmul.bf16.gmra.mxu0 %v581
    %v2478 = vpop.f32.mrf.mxu0
    %v2479 = vadd.f32 %v2466, %v2478
    %v2480 = vpop.f32.mrf.mxu0
    %2481 = vdwg.mxu0
    %2482 = vmatpush.bf16.msra.mxu0 %v1852
    %2483 = vmatpush.bf16.msra.mxu0 %v1851
    %2484 = vmatpush.bf16.msra.mxu0 %v1850
    %2485 = vmatpush.bf16.msra.mxu0 %v1849
    %2486 = vmatpush.bf16.msra.mxu0 %v1848
    %2487 = vmatpush.bf16.msra.mxu0 %v1847
    %2488 = vmatpush.bf16.msra.mxu0 %v1846
    %2489 = vmatpush.bf16.msra.mxu0 %v1845
    %2490 = vmatmul.bf16.gmra.mxu0 %v582
    %v2491 = vpop.f32.mrf.mxu0
    %v2492 = vadd.f32 %v2479, %v2491
    %v2493 = vpop.f32.mrf.mxu0
    %2494 = vdwg.mxu0
    %2495 = vmatpush.bf16.msra.mxu0 %v1860
    %2496 = vmatpush.bf16.msra.mxu0 %v1859
    %2497 = vmatpush.bf16.msra.mxu0 %v1858
    %2498 = vmatpush.bf16.msra.mxu0 %v1857
    %2499 = vmatpush.bf16.msra.mxu0 %v1856
    %2500 = vmatpush.bf16.msra.mxu0 %v1855
    %2501 = vmatpush.bf16.msra.mxu0 %v1854
    %2502 = vmatpush.bf16.msra.mxu0 %v1853
    %2503 = vmatmul.bf16.gmra.mxu0 %v583
    %v2504 = vpop.f32.mrf.mxu0
    %v2505 = vadd.f32 %v2492, %v2504
    %v2506 = vpop.f32.mrf.mxu0
    %2507 = vdwg.mxu0
    %2508 = vmatpush.bf16.msra.mxu0 %v1868
    %2509 = vmatpush.bf16.msra.mxu0 %v1867
    %2510 = vmatpush.bf16.msra.mxu0 %v1866
    %2511 = vmatpush.bf16.msra.mxu0 %v1865
    %2512 = vmatpush.bf16.msra.mxu0 %v1864
    %2513 = vmatpush.bf16.msra.mxu0 %v1863
    %2514 = vmatpush.bf16.msra.mxu0 %v1862
    %2515 = vmatpush.bf16.msra.mxu0 %v1861
    %2516 = vmatmul.bf16.gmra.mxu0 %v584
    %v2517 = vpop.f32.mrf.mxu0
    %v2518 = vadd.f32 %v2505, %v2517
    %v2519 = vpop.f32.mrf.mxu0
    %2520 = vdwg.mxu0
    %2521 = vmatpush.bf16.msra.mxu0 %v1876
    %2522 = vmatpush.bf16.msra.mxu0 %v1875
    %2523 = vmatpush.bf16.msra.mxu0 %v1874
    %2524 = vmatpush.bf16.msra.mxu0 %v1873
    %2525 = vmatpush.bf16.msra.mxu0 %v1872
    %2526 = vmatpush.bf16.msra.mxu0 %v1871
    %2527 = vmatpush.bf16.msra.mxu0 %v1870
    %2528 = vmatpush.bf16.msra.mxu0 %v1869
    %2529 = vmatmul.bf16.gmra.mxu0 %v585
    %v2530 = vpop.f32.mrf.mxu0
    %v2531 = vadd.f32 %v2518, %v2530
    %v2532 = vpop.f32.mrf.mxu0
    %2533 = vdwg.mxu0
    %2534 = vmatpush.bf16.msra.mxu0 %v1884
    %2535 = vmatpush.bf16.msra.mxu0 %v1883
    %2536 = vmatpush.bf16.msra.mxu0 %v1882
    %2537 = vmatpush.bf16.msra.mxu0 %v1881
    %2538 = vmatpush.bf16.msra.mxu0 %v1880
    %2539 = vmatpush.bf16.msra.mxu0 %v1879
    %2540 = vmatpush.bf16.msra.mxu0 %v1878
    %2541 = vmatpush.bf16.msra.mxu0 %v1877
    %2542 = vmatmul.bf16.gmra.mxu0 %v586
    %v2543 = vpop.f32.mrf.mxu0
    %v2544 = vadd.f32 %v2531, %v2543
    %v2545 = vpop.f32.mrf.mxu0
    %2546 = vdwg.mxu0
    %2547 = vmatpush.bf16.msra.mxu0 %v1892
    %2548 = vmatpush.bf16.msra.mxu0 %v1891
    %2549 = vmatpush.bf16.msra.mxu0 %v1890
    %2550 = vmatpush.bf16.msra.mxu0 %v1889
    %2551 = vmatpush.bf16.msra.mxu0 %v1888
    %2552 = vmatpush.bf16.msra.mxu0 %v1887
    %2553 = vmatpush.bf16.msra.mxu0 %v1886
    %2554 = vmatpush.bf16.msra.mxu0 %v1885
    %2555 = vmatmul.bf16.gmra.mxu0 %v587
    %v2556 = vpop.f32.mrf.mxu0
    %v2557 = vadd.f32 %v2544, %v2556
    %v2558 = vpop.f32.mrf.mxu0
    %2559 = vdwg.mxu0
    %2560 = vmatpush.bf16.msra.mxu0 %v1900
    %2561 = vmatpush.bf16.msra.mxu0 %v1899
    %2562 = vmatpush.bf16.msra.mxu0 %v1898
    %2563 = vmatpush.bf16.msra.mxu0 %v1897
    %2564 = vmatpush.bf16.msra.mxu0 %v1896
    %2565 = vmatpush.bf16.msra.mxu0 %v1895
    %2566 = vmatpush.bf16.msra.mxu0 %v1894
    %2567 = vmatpush.bf16.msra.mxu0 %v1893
    %2568 = vmatmul.bf16.gmra.mxu0 %v588
    %v2569 = vpop.f32.mrf.mxu0
    %v2570 = vadd.f32 %v2557, %v2569
    %v2571 = vpop.f32.mrf.mxu0
    %2572 = vdwg.mxu0
    %v2573 = vld [vmem:[%s3] sm:$0x3]
    %v2574 = vmul.f32 %v2570, 0.5
    %v2575 = vmul.f32 %v2574, 1.442695
    %v2576 = vpow.pop %v2575
    %2578 = vrot.lane.b32.xlu0 %v2576, 96
    %v2579 = vpop.permute.xlu0 %2578
    %v2581 = vmul.f32 %v2573, %v2579
    %v2582 = vadd.f32 %v2570, %v2581
    %v2583 = vpack.c.bf16 %v2582, %v2582
    %v2584 = vld [vmem:[%s4] sm:$0xff]
    %v2585 = vld [vmem:[%s4 + $0x8] sm:$0xff]
    %v2586 = vld [vmem:[%s4 + $0x10] sm:$0xff]
    %v2587 = vld [vmem:[%s4 + $0x18] sm:$0xff]
    %v2588 = vld [vmem:[%s4 + $0x20] sm:$0xff]
    %v2589 = vld [vmem:[%s4 + $0x28] sm:$0xff]
    %v2590 = vld [vmem:[%s4 + $0x30] sm:$0xff]
    %v2591 = vld [vmem:[%s4 + $0x38] sm:$0xff]
    %v2592 = vld [vmem:[%s4 + $0x40] sm:$0xff]
    %v2593 = vld [vmem:[%s4 + $0x48] sm:$0xff]
    %v2594 = vld [vmem:[%s4 + $0x50] sm:$0xff]
    %v2595 = vld [vmem:[%s4 + $0x58] sm:$0xff]
    %v2596 = vld [vmem:[%s4 + $0x60] sm:$0xff]
    %v2597 = vld [vmem:[%s4 + $0x68] sm:$0xff]
    %v2598 = vld [vmem:[%s4 + $0x70] sm:$0xff]
    %v2599 = vld [vmem:[%s4 + $0x78] sm:$0xff]
    %v2600 = vld [vmem:[%s4 + $0x80] sm:$0xff]
    %v2601 = vld [vmem:[%s4 + $0x88] sm:$0xff]
    %v2602 = vld [vmem:[%s4 + $0x90] sm:$0xff]
    %v2603 = vld [vmem:[%s4 + $0x98] sm:$0xff]
    %v2604 = vld [vmem:[%s4 + $0xa0] sm:$0xff]
    %v2605 = vld [vmem:[%s4 + $0xa8] sm:$0xff]
    %v2606 = vld [vmem:[%s4 + $0xb0] sm:$0xff]
    %v2607 = vld [vmem:[%s4 + $0xb8] sm:$0xff]
    %v2608 = vld [vmem:[%s4 + $0xc0] sm:$0xff]
    %v2609 = vld [vmem:[%s4 + $0xc8] sm:$0xff]
    %v2610 = vld [vmem:[%s4 + $0xd0] sm:$0xff]
    %v2611 = vld [vmem:[%s4 + $0xd8] sm:$0xff]
    %v2612 = vld [vmem:[%s4 + $0xe0] sm:$0xff]
    %v2613 = vld [vmem:[%s4 + $0xe8] sm:$0xff]
    %v2614 = vld [vmem:[%s4 + $0xf0] sm:$0xff]
    %v2615 = vld [vmem:[%s4 + $0xf8] sm:$0xff]
    %v2616 = vld [vmem:[%s5] sm:$0xff]
    %v2617 = vld [vmem:[%s5 + $0x8] sm:$0xff]
    %v2620 = vperm.slane %v2616, 0
    %v2621 = vperm.slane %v2616, 1
    %v2622 = vperm.slane %v2616, 2
    %v2623 = vperm.slane %v2616, 3
    %v2624 = vperm.slane %v2616, 4
    %v2625 = vperm.slane %v2616, 5
    %v2626 = vperm.slane %v2616, 6
    %v2627 = vperm.slane %v2616, 7
    %v2628 = vperm.slane %v2617, 0
    %v2629 = vperm.slane %v2617, 1
    %v2630 = vperm.slane %v2617, 2
    %v2631 = vperm.slane %v2617, 3
    %v2632 = vperm.slane %v2617, 4
    %v2633 = vperm.slane %v2617, 5
    %v2634 = vperm.slane %v2617, 6
    %v2635 = vperm.slane %v2617, 7
    %v2684 = vunpack.c.l.b16 %v2584
    %v2685 = vunpack.c.h.b16 %v2584
    %v2686 = vunpack.c.l.b16 %v2585
    %v2687 = vunpack.c.h.b16 %v2585
    %v2688 = vunpack.c.l.b16 %v2586
    %v2689 = vunpack.c.h.b16 %v2586
    %v2690 = vunpack.c.l.b16 %v2587
    %v2691 = vunpack.c.h.b16 %v2587
    %v2692 = vunpack.c.l.b16 %v2588
    %v2693 = vunpack.c.h.b16 %v2588
    %v2694 = vunpack.c.l.b16 %v2589
    %v2695 = vunpack.c.h.b16 %v2589
    %v2696 = vunpack.c.l.b16 %v2590
    %v2697 = vunpack.c.h.b16 %v2590
    %v2698 = vunpack.c.l.b16 %v2591
    %v2699 = vunpack.c.h.b16 %v2591
    %v2700 = vunpack.c.l.b16 %v2592
    %v2701 = vunpack.c.h.b16 %v2592
    %v2702 = vunpack.c.l.b16 %v2593
    %v2703 = vunpack.c.h.b16 %v2593
    %v2704 = vunpack.c.l.b16 %v2594
    %v2705 = vunpack.c.h.b16 %v2594
    %v2706 = vunpack.c.l.b16 %v2595
    %v2707 = vunpack.c.h.b16 %v2595
    %v2708 = vunpack.c.l.b16 %v2596
    %v2709 = vunpack.c.h.b16 %v2596
    %v2710 = vunpack.c.l.b16 %v2597
    %v2711 = vunpack.c.h.b16 %v2597
    %v2712 = vunpack.c.l.b16 %v2598
    %v2713 = vunpack.c.h.b16 %v2598
    %v2714 = vunpack.c.l.b16 %v2599
    %v2715 = vunpack.c.h.b16 %v2599
    %v2716 = vunpack.c.l.b16 %v2600
    %v2717 = vunpack.c.h.b16 %v2600
    %v2718 = vunpack.c.l.b16 %v2601
    %v2719 = vunpack.c.h.b16 %v2601
    %v2720 = vunpack.c.l.b16 %v2602
    %v2721 = vunpack.c.h.b16 %v2602
    %v2722 = vunpack.c.l.b16 %v2603
    %v2723 = vunpack.c.h.b16 %v2603
    %v2724 = vunpack.c.l.b16 %v2604
    %v2725 = vunpack.c.h.b16 %v2604
    %v2726 = vunpack.c.l.b16 %v2605
    %v2727 = vunpack.c.h.b16 %v2605
    %v2728 = vunpack.c.l.b16 %v2606
    %v2729 = vunpack.c.h.b16 %v2606
    %v2730 = vunpack.c.l.b16 %v2607
    %v2731 = vunpack.c.h.b16 %v2607
    %v2732 = vunpack.c.l.b16 %v2608
    %v2733 = vunpack.c.h.b16 %v2608
    %v2734 = vunpack.c.l.b16 %v2609
    %v2735 = vunpack.c.h.b16 %v2609
    %v2736 = vunpack.c.l.b16 %v2610
    %v2737 = vunpack.c.h.b16 %v2610
    %v2738 = vunpack.c.l.b16 %v2611
    %v2739 = vunpack.c.h.b16 %v2611
    %v2740 = vunpack.c.l.b16 %v2612
    %v2741 = vunpack.c.h.b16 %v2612
    %v2742 = vunpack.c.l.b16 %v2613
    %v2743 = vunpack.c.h.b16 %v2613
    %v2744 = vunpack.c.l.b16 %v2614
    %v2745 = vunpack.c.h.b16 %v2614
    %v2746 = vunpack.c.l.b16 %v2615
    %v2747 = vunpack.c.h.b16 %v2615
    %v2748 = vpack.c.b16 %v2700, %v2684
    %v2749 = vpack.c.b16 %v2701, %v2685
    %v2750 = vpack.c.b16 %v2702, %v2686
    %v2751 = vpack.c.b16 %v2703, %v2687
    %v2752 = vpack.c.b16 %v2704, %v2688
    %v2753 = vpack.c.b16 %v2705, %v2689
    %v2754 = vpack.c.b16 %v2706, %v2690
    %v2755 = vpack.c.b16 %v2707, %v2691
    %v2756 = vpack.c.b16 %v2708, %v2692
    %v2757 = vpack.c.b16 %v2709, %v2693
    %v2758 = vpack.c.b16 %v2710, %v2694
    %v2759 = vpack.c.b16 %v2711, %v2695
    %v2760 = vpack.c.b16 %v2712, %v2696
    %v2761 = vpack.c.b16 %v2713, %v2697
    %v2762 = vpack.c.b16 %v2714, %v2698
    %v2763 = vpack.c.b16 %v2715, %v2699
    %v2764 = vpack.c.b16 %v2732, %v2716
    %v2765 = vpack.c.b16 %v2733, %v2717
    %v2766 = vpack.c.b16 %v2734, %v2718
    %v2767 = vpack.c.b16 %v2735, %v2719
    %v2768 = vpack.c.b16 %v2736, %v2720
    %v2769 = vpack.c.b16 %v2737, %v2721
    %v2770 = vpack.c.b16 %v2738, %v2722
    %v2771 = vpack.c.b16 %v2739, %v2723
    %v2772 = vpack.c.b16 %v2740, %v2724
    %v2773 = vpack.c.b16 %v2741, %v2725
    %v2774 = vpack.c.b16 %v2742, %v2726
    %v2775 = vpack.c.b16 %v2743, %v2727
    %v2776 = vpack.c.b16 %v2744, %v2728
    %v2777 = vpack.c.b16 %v2745, %v2729
    %v2778 = vpack.c.b16 %v2746, %v2730
    %v2779 = vpack.c.b16 %v2747, %v2731
    %vm2812 = vcmask 261120
    %v2814 = vsel %vm2812, %v2583, 0
    %2816 = vmatpush.bf16.msra.mxu0 0
    %2817 = vmatpush.bf16.msra.mxu0 0
    %2818 = vmatpush.bf16.msra.mxu0 0
    %2819 = vmatpush.bf16.msra.mxu0 0
    %2820 = vmatpush.bf16.msra.mxu0 0
    %2821 = vmatpush.bf16.msra.mxu0 0
    %2822 = vmatpush.bf16.msra.mxu0 %v2764
    %2823 = vmatpush.bf16.msra.mxu0 %v2748
    %2824 = vmatmul.bf16.gmra.mxu0 %v2814
    %v2825 = vpop.f32.mrf.mxu0
    %v2826 = vadd.f32 %v2620, %v2825
    %v2827 = vpop.f32.mrf.mxu0
    %2828 = vdwg.mxu0
    %2829 = vmatpush.bf16.msra.mxu0 0
    %2830 = vmatpush.bf16.msra.mxu0 0
    %2831 = vmatpush.bf16.msra.mxu0 0
    %2832 = vmatpush.bf16.msra.mxu0 0
    %2833 = vmatpush.bf16.msra.mxu0 0
    %2834 = vmatpush.bf16.msra.mxu0 0
    %2835 = vmatpush.bf16.msra.mxu0 %v2765
    %2836 = vmatpush.bf16.msra.mxu0 %v2749
    %2837 = vmatmul.bf16.gmra.mxu0 %v2814
    %v2838 = vpop.f32.mrf.mxu0
    %v2839 = vadd.f32 %v2621, %v2838
    %v2840 = vpop.f32.mrf.mxu0
    %2841 = vdwg.mxu0
    %2842 = vmatpush.bf16.msra.mxu0 0
    %2843 = vmatpush.bf16.msra.mxu0 0
    %2844 = vmatpush.bf16.msra.mxu0 0
    %2845 = vmatpush.bf16.msra.mxu0 0
    %2846 = vmatpush.bf16.msra.mxu0 0
    %2847 = vmatpush.bf16.msra.mxu0 0
    %2848 = vmatpush.bf16.msra.mxu0 %v2766
    %2849 = vmatpush.bf16.msra.mxu0 %v2750
    %2850 = vmatmul.bf16.gmra.mxu0 %v2814
    %v2851 = vpop.f32.mrf.mxu0
    %v2852 = vadd.f32 %v2622, %v2851
    %v2853 = vpop.f32.mrf.mxu0
    %2854 = vdwg.mxu0
    %2855 = vmatpush.bf16.msra.mxu0 0
    %2856 = vmatpush.bf16.msra.mxu0 0
    %2857 = vmatpush.bf16.msra.mxu0 0
    %2858 = vmatpush.bf16.msra.mxu0 0
    %2859 = vmatpush.bf16.msra.mxu0 0
    %2860 = vmatpush.bf16.msra.mxu0 0
    %2861 = vmatpush.bf16.msra.mxu0 %v2767
    %2862 = vmatpush.bf16.msra.mxu0 %v2751
    %2863 = vmatmul.bf16.gmra.mxu0 %v2814
    %v2864 = vpop.f32.mrf.mxu0
    %v2865 = vadd.f32 %v2623, %v2864
    %v2866 = vpop.f32.mrf.mxu0
    %2867 = vdwg.mxu0
    %2868 = vmatpush.bf16.msra.mxu0 0
    %2869 = vmatpush.bf16.msra.mxu0 0
    %2870 = vmatpush.bf16.msra.mxu0 0
    %2871 = vmatpush.bf16.msra.mxu0 0
    %2872 = vmatpush.bf16.msra.mxu0 0
    %2873 = vmatpush.bf16.msra.mxu0 0
    %2874 = vmatpush.bf16.msra.mxu0 %v2768
    %2875 = vmatpush.bf16.msra.mxu0 %v2752
    %2876 = vmatmul.bf16.gmra.mxu0 %v2814
    %v2877 = vpop.f32.mrf.mxu0
    %v2878 = vadd.f32 %v2624, %v2877
    %v2879 = vpop.f32.mrf.mxu0
    %2880 = vdwg.mxu0
    %2881 = vmatpush.bf16.msra.mxu0 0
    %2882 = vmatpush.bf16.msra.mxu0 0
    %2883 = vmatpush.bf16.msra.mxu0 0
    %2884 = vmatpush.bf16.msra.mxu0 0
    %2885 = vmatpush.bf16.msra.mxu0 0
    %2886 = vmatpush.bf16.msra.mxu0 0
    %2887 = vmatpush.bf16.msra.mxu0 %v2769
    %2888 = vmatpush.bf16.msra.mxu0 %v2753
    %2889 = vmatmul.bf16.gmra.mxu0 %v2814
    %v2890 = vpop.f32.mrf.mxu0
    %v2891 = vadd.f32 %v2625, %v2890
    %v2892 = vpop.f32.mrf.mxu0
    %2893 = vdwg.mxu0
    %2894 = vmatpush.bf16.msra.mxu0 0
    %2895 = vmatpush.bf16.msra.mxu0 0
    %2896 = vmatpush.bf16.msra.mxu0 0
    %2897 = vmatpush.bf16.msra.mxu0 0
    %2898 = vmatpush.bf16.msra.mxu0 0
    %2899 = vmatpush.bf16.msra.mxu0 0
    %2900 = vmatpush.bf16.msra.mxu0 %v2770
    %2901 = vmatpush.bf16.msra.mxu0 %v2754
    %2902 = vmatmul.bf16.gmra.mxu0 %v2814
    %v2903 = vpop.f32.mrf.mxu0
    %v2904 = vadd.f32 %v2626, %v2903
    %v2905 = vpop.f32.mrf.mxu0
    %2906 = vdwg.mxu0
    %2907 = vmatpush.bf16.msra.mxu0 0
    %2908 = vmatpush.bf16.msra.mxu0 0
    %2909 = vmatpush.bf16.msra.mxu0 0
    %2910 = vmatpush.bf16.msra.mxu0 0
    %2911 = vmatpush.bf16.msra.mxu0 0
    %2912 = vmatpush.bf16.msra.mxu0 0
    %2913 = vmatpush.bf16.msra.mxu0 %v2771
    %2914 = vmatpush.bf16.msra.mxu0 %v2755
    %2915 = vmatmul.bf16.gmra.mxu0 %v2814
    %v2916 = vpop.f32.mrf.mxu0
    %v2917 = vadd.f32 %v2627, %v2916
    %v2918 = vpop.f32.mrf.mxu0
    %2919 = vdwg.mxu0
    %2920 = vmatpush.bf16.msra.mxu0 0
    %2921 = vmatpush.bf16.msra.mxu0 0
    %2922 = vmatpush.bf16.msra.mxu0 0
    %2923 = vmatpush.bf16.msra.mxu0 0
    %2924 = vmatpush.bf16.msra.mxu0 0
    %2925 = vmatpush.bf16.msra.mxu0 0
    %2926 = vmatpush.bf16.msra.mxu0 %v2772
    %2927 = vmatpush.bf16.msra.mxu0 %v2756
    %2928 = vmatmul.bf16.gmra.mxu0 %v2814
    %v2929 = vpop.f32.mrf.mxu0
    %v2930 = vadd.f32 %v2628, %v2929
    %v2931 = vpop.f32.mrf.mxu0
    %2932 = vdwg.mxu0
    %2933 = vmatpush.bf16.msra.mxu0 0
    %2934 = vmatpush.bf16.msra.mxu0 0
    %2935 = vmatpush.bf16.msra.mxu0 0
    %2936 = vmatpush.bf16.msra.mxu0 0
    %2937 = vmatpush.bf16.msra.mxu0 0
    %2938 = vmatpush.bf16.msra.mxu0 0
    %2939 = vmatpush.bf16.msra.mxu0 %v2773
    %2940 = vmatpush.bf16.msra.mxu0 %v2757
    %2941 = vmatmul.bf16.gmra.mxu0 %v2814
    %v2942 = vpop.f32.mrf.mxu0
    %v2943 = vadd.f32 %v2629, %v2942
    %v2944 = vpop.f32.mrf.mxu0
    %2945 = vdwg.mxu0
    %2946 = vmatpush.bf16.msra.mxu0 0
    %2947 = vmatpush.bf16.msra.mxu0 0
    %2948 = vmatpush.bf16.msra.mxu0 0
    %2949 = vmatpush.bf16.msra.mxu0 0
    %2950 = vmatpush.bf16.msra.mxu0 0
    %2951 = vmatpush.bf16.msra.mxu0 0
    %2952 = vmatpush.bf16.msra.mxu0 %v2774
    %2953 = vmatpush.bf16.msra.mxu0 %v2758
    %2954 = vmatmul.bf16.gmra.mxu0 %v2814
    %v2955 = vpop.f32.mrf.mxu0
    %v2956 = vadd.f32 %v2630, %v2955
    %v2957 = vpop.f32.mrf.mxu0
    %2958 = vdwg.mxu0
    %2959 = vmatpush.bf16.msra.mxu0 0
    %2960 = vmatpush.bf16.msra.mxu0 0
    %2961 = vmatpush.bf16.msra.mxu0 0
    %2962 = vmatpush.bf16.msra.mxu0 0
    %2963 = vmatpush.bf16.msra.mxu0 0
    %2964 = vmatpush.bf16.msra.mxu0 0
    %2965 = vmatpush.bf16.msra.mxu0 %v2775
    %2966 = vmatpush.bf16.msra.mxu0 %v2759
    %2967 = vmatmul.bf16.gmra.mxu0 %v2814
    %v2968 = vpop.f32.mrf.mxu0
    %v2969 = vadd.f32 %v2631, %v2968
    %v2970 = vpop.f32.mrf.mxu0
    %2971 = vdwg.mxu0
    %2972 = vmatpush.bf16.msra.mxu0 0
    %2973 = vmatpush.bf16.msra.mxu0 0
    %2974 = vmatpush.bf16.msra.mxu0 0
    %2975 = vmatpush.bf16.msra.mxu0 0
    %2976 = vmatpush.bf16.msra.mxu0 0
    %2977 = vmatpush.bf16.msra.mxu0 0
    %2978 = vmatpush.bf16.msra.mxu0 %v2776
    %2979 = vmatpush.bf16.msra.mxu0 %v2760
    %2980 = vmatmul.bf16.gmra.mxu0 %v2814
    %v2981 = vpop.f32.mrf.mxu0
    %v2982 = vadd.f32 %v2632, %v2981
    %v2983 = vpop.f32.mrf.mxu0
    %2984 = vdwg.mxu0
    %2985 = vmatpush.bf16.msra.mxu0 0
    %2986 = vmatpush.bf16.msra.mxu0 0
    %2987 = vmatpush.bf16.msra.mxu0 0
    %2988 = vmatpush.bf16.msra.mxu0 0
    %2989 = vmatpush.bf16.msra.mxu0 0
    %2990 = vmatpush.bf16.msra.mxu0 0
    %2991 = vmatpush.bf16.msra.mxu0 %v2777
    %2992 = vmatpush.bf16.msra.mxu0 %v2761
    %2993 = vmatmul.bf16.gmra.mxu0 %v2814
    %v2994 = vpop.f32.mrf.mxu0
    %v2995 = vadd.f32 %v2633, %v2994
    %v2996 = vpop.f32.mrf.mxu0
    %2997 = vdwg.mxu0
    %2998 = vmatpush.bf16.msra.mxu0 0
    %2999 = vmatpush.bf16.msra.mxu0 0
    %3000 = vmatpush.bf16.msra.mxu0 0
    %3001 = vmatpush.bf16.msra.mxu0 0
    %3002 = vmatpush.bf16.msra.mxu0 0
    %3003 = vmatpush.bf16.msra.mxu0 0
    %3004 = vmatpush.bf16.msra.mxu0 %v2778
    %3005 = vmatpush.bf16.msra.mxu0 %v2762
    %3006 = vmatmul.bf16.gmra.mxu0 %v2814
    %v3007 = vpop.f32.mrf.mxu0
    %v3008 = vadd.f32 %v2634, %v3007
    %v3009 = vpop.f32.mrf.mxu0
    %3010 = vdwg.mxu0
    %3011 = vmatpush.bf16.msra.mxu0 0
    %3012 = vmatpush.bf16.msra.mxu0 0
    %3013 = vmatpush.bf16.msra.mxu0 0
    %3014 = vmatpush.bf16.msra.mxu0 0
    %3015 = vmatpush.bf16.msra.mxu0 0
    %3016 = vmatpush.bf16.msra.mxu0 0
    %3017 = vmatpush.bf16.msra.mxu0 %v2779
    %3018 = vmatpush.bf16.msra.mxu0 %v2763
    %3019 = vmatmul.bf16.gmra.mxu0 %v2814
    %v3020 = vpop.f32.mrf.mxu0
    %v3021 = vadd.f32 %v2635, %v3020
    %v3022 = vpop.f32.mrf.mxu0
    %3023 = vdwg.mxu0
    %v3024 = vmax.f32 %v2826, 0.0
    %v3025 = vmax.f32 %v2839, 0.0
    %v3026 = vmax.f32 %v2852, 0.0
    %v3027 = vmax.f32 %v2865, 0.0
    %v3028 = vmax.f32 %v2878, 0.0
    %v3029 = vmax.f32 %v2891, 0.0
    %v3030 = vmax.f32 %v2904, 0.0
    %v3031 = vmax.f32 %v2917, 0.0
    %v3032 = vmax.f32 %v2930, 0.0
    %v3033 = vmax.f32 %v2943, 0.0
    %v3034 = vmax.f32 %v2956, 0.0
    %v3035 = vmax.f32 %v2969, 0.0
    %v3036 = vmax.f32 %v2982, 0.0
    %v3037 = vmax.f32 %v2995, 0.0
    %v3038 = vmax.f32 %v3008, 0.0
    %v3039 = vmax.f32 %v3021, 0.0
    %vm3040 = vcmask 254976
    %3041 = vst.msk [vmem:[#allocation2] sm:$0x3] %vm3040, %v2570
    %3043 = vrot.lane.b32.xlu0 %v2570, 96
    %v3044 = vpop.permute.xlu0 %3043
    %3046 = vst.msk [vmem:[#allocation4] sm:$0x3] %vm3040, %v3044
    %v3047 = vpack.c.bf16 %v3025, %v3024
    %v3048 = vpack.c.bf16 %v3027, %v3026
    %v3049 = vpack.c.bf16 %v3029, %v3028
    %v3050 = vpack.c.bf16 %v3031, %v3030
    %v3051 = vpack.c.bf16 %v3033, %v3032
    %v3052 = vpack.c.bf16 %v3035, %v3034
    %v3053 = vpack.c.bf16 %v3037, %v3036
    %v3054 = vpack.c.bf16 %v3039, %v3038
    %v3063 = vrot.slane %v3047, 3
    %v3064 = vrot.slane %v3048, 6
    %v3065 = vrot.slane %v3048, 1
    %v3066 = vrot.slane %v3049, 4
    %v3067 = vrot.slane %v3049, 7
    %v3068 = vrot.slane %v3050, 2
    %v3069 = vrot.slane %v3050, 5
    %v3070 = vrot.slane %v3051, 3
    %v3071 = vrot.slane %v3052, 6
    %v3072 = vrot.slane %v3052, 1
    %v3073 = vrot.slane %v3053, 4
    %v3074 = vrot.slane %v3053, 7
    %v3075 = vrot.slane %v3054, 2
    %v3076 = vrot.slane %v3054, 5
    %vm3077 = vcmask 1040384
    %v3080 = vsel %vm3077, %v3047, %v3063
    %vm3081 = vcmask 1042434
    %v3084 = vsel %vm3081, %v3064, %v3065
    %vm3085 = vcmask 1041408
    %v3086 = vsel %vm3085, %v3080, %v3084
    %vm3087 = vcmask 1044484
    %v3090 = vsel %vm3087, %v3066, %v3067
    %vm3091 = vcmask 1046534
    %v3094 = vsel %vm3091, %v3068, %v3069
    %vm3095 = vcmask 1045508
    %v3096 = vsel %vm3095, %v3090, %v3094
    %vm3097 = vcmask 1043456
    %v3098 = vsel %vm3097, %v3086, %v3096
    %v3101 = vsel %vm3077, %v3051, %v3070
    %v3104 = vsel %vm3081, %v3071, %v3072
    %v3105 = vsel %vm3085, %v3101, %v3104
    %v3108 = vsel %vm3087, %v3073, %v3074
    %v3111 = vsel %vm3091, %v3075, %v3076
    %v3112 = vsel %vm3095, %v3108, %v3111
    %v3113 = vsel %vm3097, %v3105, %v3112
    %3116 = vst [vmem:[%s8] sm:$0xff] %v3098
    %3117 = vst [vmem:[%s8 + $0x8] sm:$0xff] %v3113
    // Predicated region
    $region26: #{_lambda_.14} parent=1 // pred_check
      _
    $region27: #{_lambda_.14} parent=1 // pred_check_branch
      %3119 = sbr.rel (0) target = $region29
    $region28: #{_lambda_.14} parent=1 // pred_region
      %3121 = vsyncadd [#allocation3], 0
      %s3123 = sshll.u32 [#allocation2], 4
      %s3124 = int_to_ptr.vmem [resolvable:$true] %s3123
      %s3125 = sshll.u32 %s6, 4
      %s3126 = int_to_ptr.hbm [resolvable:$true] %s3125
      %3128 = dma.vmem_to_hbm [thread:$0]  %s3124, 32, %s3126, [#allocation3]
    $region29: #{_lambda_.14} parent=1 // pred_fallthru
      _
    // Predicated region
    $region30: #{_lambda_.14} parent=1 // pred_check
      _
    $region31: #{_lambda_.14} parent=1 // pred_check_branch
      %3130 = sbr.rel (0) target = $region33
    $region32: #{_lambda_.14} parent=1 // pred_region
      %3132 = vsyncadd [#allocation5], 0
      %s3134 = sshll.u32 [#allocation4], 4
      %s3135 = int_to_ptr.vmem [resolvable:$true] %s3134
      %s3136 = sshll.u32 %s7, 4
      %s3137 = int_to_ptr.hbm [resolvable:$true] %s3136
      %3139 = dma.vmem_to_hbm [thread:$0]  %s3135, 32, %s3137, [#allocation5]
    $region33: #{_lambda_.14} parent=1 // pred_fallthru
      _
    // Predicated region
    $region34: #{_lambda_.14} parent=1 // pred_check
      _
    $region35: #{_lambda_.14} parent=1 // pred_check_branch
      %3141 = sbr.rel (0) target = $region37
    $region36: #{_lambda_.14} parent=1 // pred_region
      _
    $region37: #{_lambda_.14} parent=1 // pred_fallthru
      _
    // Predicated region
    $region38: #{_lambda_.14} parent=1 // pred_check
      _
    $region39: #{_lambda_.14} parent=1 // pred_check_branch
      %3143 = sbr.rel (0) target = $region41
    $region40: #{_lambda_.14} parent=1 // pred_region
      %3145 = dma.done [#allocation3], 32
    $region41: #{_lambda_.14} parent=1 // pred_fallthru
      _
    // Predicated region
    $region42: #{_lambda_.14} parent=1 // pred_check
      _
    $region43: #{_lambda_.14} parent=1 // pred_check_branch
      %3147 = sbr.rel (0) target = $region45
    $region44: #{_lambda_.14} parent=1 // pred_region
      %3149 = dma.done [#allocation5], 32
    $region45: #{_lambda_.14} parent=1 // pred_fallthru
      _
    // Predicated region
    $region46: #{_lambda_.14} parent=1 // pred_check
      _
    $region47: #{_lambda_.14} parent=1 // pred_check_branch
      %3151 = sbr.rel (0) target = $region49
    $region48: #{_lambda_.14} parent=1 // pred_region
      _
    $region49: #{_lambda_.14} parent=1 // pred_fallthru
      _
    %3152 = vsyncpa [#allocation3], 1
    %3153 = vsyncpa [#allocation5], 1

// kernel: _lambda_.18
$region0: #{_lambda_.18}
  #allocation0 [shape = 'u32[]', space=smem, size = 0x4, offset = 0x4, fixed_abs, tag = 'smem constant byte address 0x4 - core index']
  #allocation1 [shape = 'u32[72,128]{1,0:T(1,128)}', space=vmem, size = 0x9000, scoped, tag = 'internal scratch']
  %s0 = inlined_call_operand.vmem [shape: bf16[512,256], index: 0, kind: input, shape index: {}]
  %s1 = inlined_call_operand.vmem [shape: bf16[256,128], index: 1, kind: input, shape index: {}]
  %s2 = inlined_call_operand.vmem [shape: f32[1,128], index: 2, kind: input, shape index: {}]
  %s3 = inlined_call_operand.vmem [shape: bf16[512,128], index: 3, kind: output, shape index: {}]
  %s4 = sld [smem:[#allocation0]]
  $region22: #{_lambda_.18} parent=0
    _
  %s6 = ssub.s32 1, %s4
  %s7 = scalar_select 0, %s6, %s4
  // Predicated region
  $region2: #{_lambda_.18} parent=0 // pred_check
    _
  $region3: #{_lambda_.18} parent=0 // pred_check_branch
    %9 = sbr.rel (0) target = $region5
  $region4: #{_lambda_.18} parent=0 // pred_region
    _
  $region5: #{_lambda_.18} parent=0 // pred_fallthru
    _
  // Predicated region
  $region6: #{_lambda_.18} parent=0 // pred_check
    _
  $region7: #{_lambda_.18} parent=0 // pred_check_branch
    %11 = sbr.rel (0) target = $region9
  $region8: #{_lambda_.18} parent=0 // pred_region
    _
  $region9: #{_lambda_.18} parent=0 // pred_fallthru
    _
  // Predicated region
  $region10: #{_lambda_.18} parent=0 // pred_check
    _
  $region11: #{_lambda_.18} parent=0 // pred_check_branch
    %13 = sbr.rel (0) target = $region13
  $region12: #{_lambda_.18} parent=0 // pred_region
    _
  $region13: #{_lambda_.18} parent=0 // pred_fallthru
    _
  %v14 = vld [vmem:[%s0] sm:$0xff]
  %v15 = vld [vmem:[%s0 + $0x8] sm:$0xff]
  %v16 = vld [vmem:[%s0 + $0x10] sm:$0xff]
  %v17 = vld [vmem:[%s0 + $0x18] sm:$0xff]
  %v18 = vld [vmem:[%s0 + $0x20] sm:$0xff]
  %v19 = vld [vmem:[%s0 + $0x28] sm:$0xff]
  %v20 = vld [vmem:[%s0 + $0x30] sm:$0xff]
  %v21 = vld [vmem:[%s0 + $0x38] sm:$0xff]
  %v22 = vld [vmem:[%s0 + $0x40] sm:$0xff]
  %v23 = vld [vmem:[%s0 + $0x48] sm:$0xff]
  %v24 = vld [vmem:[%s0 + $0x50] sm:$0xff]
  %v25 = vld [vmem:[%s0 + $0x58] sm:$0xff]
  %v26 = vld [vmem:[%s0 + $0x60] sm:$0xff]
  %v27 = vld [vmem:[%s0 + $0x68] sm:$0xff]
  %v28 = vld [vmem:[%s0 + $0x70] sm:$0xff]
  %v29 = vld [vmem:[%s0 + $0x78] sm:$0xff]
  %v30 = vld [vmem:[%s0 + $0x80] sm:$0xff]
  %v31 = vld [vmem:[%s0 + $0x88] sm:$0xff]
  %v32 = vld [vmem:[%s0 + $0x90] sm:$0xff]
  %v33 = vld [vmem:[%s0 + $0x98] sm:$0xff]
  %v34 = vld [vmem:[%s0 + $0xa0] sm:$0xff]
  %v35 = vld [vmem:[%s0 + $0xa8] sm:$0xff]
  %v36 = vld [vmem:[%s0 + $0xb0] sm:$0xff]
  %v37 = vld [vmem:[%s0 + $0xb8] sm:$0xff]
  %v38 = vld [vmem:[%s0 + $0xc0] sm:$0xff]
  %v39 = vld [vmem:[%s0 + $0xc8] sm:$0xff]
  %v40 = vld [vmem:[%s0 + $0xd0] sm:$0xff]
  %v41 = vld [vmem:[%s0 + $0xd8] sm:$0xff]
  %v42 = vld [vmem:[%s0 + $0xe0] sm:$0xff]
  %v43 = vld [vmem:[%s0 + $0xe8] sm:$0xff]
  %v44 = vld [vmem:[%s0 + $0xf0] sm:$0xff]
  %v45 = vld [vmem:[%s0 + $0xf8] sm:$0xff]
  %v46 = vld [vmem:[%s0 + $0x100] sm:$0xff]
  %v47 = vld [vmem:[%s0 + $0x108] sm:$0xff]
  %v48 = vld [vmem:[%s0 + $0x110] sm:$0xff]
  %v49 = vld [vmem:[%s0 + $0x118] sm:$0xff]
  %v50 = vld [vmem:[%s0 + $0x120] sm:$0xff]
  %v51 = vld [vmem:[%s0 + $0x128] sm:$0xff]
  %v52 = vld [vmem:[%s0 + $0x130] sm:$0xff]
  %v53 = vld [vmem:[%s0 + $0x138] sm:$0xff]
  %v54 = vld [vmem:[%s0 + $0x140] sm:$0xff]
  %v55 = vld [vmem:[%s0 + $0x148] sm:$0xff]
  %v56 = vld [vmem:[%s0 + $0x150] sm:$0xff]
  %v57 = vld [vmem:[%s0 + $0x158] sm:$0xff]
  %v58 = vld [vmem:[%s0 + $0x160] sm:$0xff]
  %v59 = vld [vmem:[%s0 + $0x168] sm:$0xff]
  %v60 = vld [vmem:[%s0 + $0x170] sm:$0xff]
  %v61 = vld [vmem:[%s0 + $0x178] sm:$0xff]
  %v62 = vld [vmem:[%s0 + $0x180] sm:$0xff]
  %v63 = vld [vmem:[%s0 + $0x188] sm:$0xff]
  %v64 = vld [vmem:[%s0 + $0x190] sm:$0xff]
  %v65 = vld [vmem:[%s0 + $0x198] sm:$0xff]
  %v66 = vld [vmem:[%s0 + $0x1a0] sm:$0xff]
  %v67 = vld [vmem:[%s0 + $0x1a8] sm:$0xff]
  %v68 = vld [vmem:[%s0 + $0x1b0] sm:$0xff]
  %v69 = vld [vmem:[%s0 + $0x1b8] sm:$0xff]
  %v70 = vld [vmem:[%s0 + $0x1c0] sm:$0xff]
  %v71 = vld [vmem:[%s0 + $0x1c8] sm:$0xff]
  %v72 = vld [vmem:[%s0 + $0x1d0] sm:$0xff]
  %v73 = vld [vmem:[%s0 + $0x1d8] sm:$0xff]
  %v74 = vld [vmem:[%s0 + $0x1e0] sm:$0xff]
  %v75 = vld [vmem:[%s0 + $0x1e8] sm:$0xff]
  %v76 = vld [vmem:[%s0 + $0x1f0] sm:$0xff]
  %v77 = vld [vmem:[%s0 + $0x1f8] sm:$0xff]
  %v78 = vld [vmem:[%s1] sm:$0xf]
  %v79 = vld [vmem:[%s1 + $0x4] sm:$0xf]
  %v80 = vld [vmem:[%s1 + $0x8] sm:$0xf]
  %v81 = vld [vmem:[%s1 + $0xc] sm:$0xf]
  %v82 = vld [vmem:[%s1 + $0x10] sm:$0xf]
  %v83 = vld [vmem:[%s1 + $0x14] sm:$0xf]
  %v84 = vld [vmem:[%s1 + $0x18] sm:$0xf]
  %v85 = vld [vmem:[%s1 + $0x1c] sm:$0xf]
  %v86 = vld [vmem:[%s1 + $0x20] sm:$0xf]
  %v87 = vld [vmem:[%s1 + $0x24] sm:$0xf]
  %v88 = vld [vmem:[%s1 + $0x28] sm:$0xf]
  %v89 = vld [vmem:[%s1 + $0x2c] sm:$0xf]
  %v90 = vld [vmem:[%s1 + $0x30] sm:$0xf]
  %v91 = vld [vmem:[%s1 + $0x34] sm:$0xf]
  %v92 = vld [vmem:[%s1 + $0x38] sm:$0xf]
  %v93 = vld [vmem:[%s1 + $0x3c] sm:$0xf]
  %v94 = vld [vmem:[%s1 + $0x40] sm:$0xf]
  %v95 = vld [vmem:[%s1 + $0x44] sm:$0xf]
  %v96 = vld [vmem:[%s1 + $0x48] sm:$0xf]
  %v97 = vld [vmem:[%s1 + $0x4c] sm:$0xf]
  %v98 = vld [vmem:[%s1 + $0x50] sm:$0xf]
  %v99 = vld [vmem:[%s1 + $0x54] sm:$0xf]
  %v100 = vld [vmem:[%s1 + $0x58] sm:$0xf]
  %v101 = vld [vmem:[%s1 + $0x5c] sm:$0xf]
  %v102 = vld [vmem:[%s1 + $0x60] sm:$0xf]
  %v103 = vld [vmem:[%s1 + $0x64] sm:$0xf]
  %v104 = vld [vmem:[%s1 + $0x68] sm:$0xf]
  %v105 = vld [vmem:[%s1 + $0x6c] sm:$0xf]
  %v106 = vld [vmem:[%s1 + $0x70] sm:$0xf]
  %v107 = vld [vmem:[%s1 + $0x74] sm:$0xf]
  %v108 = vld [vmem:[%s1 + $0x78] sm:$0xf]
  %v109 = vld [vmem:[%s1 + $0x7c] sm:$0xf]
  %v110 = vld [vmem:[%s2] sm:$0x1]
  %v112 = vperm.slane %v110, 0
  %v178 = vunpack.c.l.b16 %v14
  %v179 = vunpack.c.h.b16 %v14
  %v180 = vunpack.c.l.b16 %v15
  %v181 = vunpack.c.h.b16 %v15
  %v182 = vunpack.c.l.b16 %v16
  %v183 = vunpack.c.h.b16 %v16
  %v184 = vunpack.c.l.b16 %v17
  %v185 = vunpack.c.h.b16 %v17
  %v186 = vunpack.c.l.b16 %v18
  %v187 = vunpack.c.h.b16 %v18
  %v188 = vunpack.c.l.b16 %v19
  %v189 = vunpack.c.h.b16 %v19
  %v190 = vunpack.c.l.b16 %v20
  %v191 = vunpack.c.h.b16 %v20
  %v192 = vunpack.c.l.b16 %v21
  %v193 = vunpack.c.h.b16 %v21
  %v194 = vunpack.c.l.b16 %v22
  %v195 = vunpack.c.h.b16 %v22
  %v196 = vunpack.c.l.b16 %v23
  %v197 = vunpack.c.h.b16 %v23
  %v198 = vunpack.c.l.b16 %v24
  %v199 = vunpack.c.h.b16 %v24
  %v200 = vunpack.c.l.b16 %v25
  %v201 = vunpack.c.h.b16 %v25
  %v202 = vunpack.c.l.b16 %v26
  %v203 = vunpack.c.h.b16 %v26
  %v204 = vunpack.c.l.b16 %v27
  %v205 = vunpack.c.h.b16 %v27
  %v206 = vunpack.c.l.b16 %v28
  %v207 = vunpack.c.h.b16 %v28
  %v208 = vunpack.c.l.b16 %v29
  %v209 = vunpack.c.h.b16 %v29
  %v210 = vunpack.c.l.b16 %v30
  %v211 = vunpack.c.h.b16 %v30
  %v212 = vunpack.c.l.b16 %v31
  %v213 = vunpack.c.h.b16 %v31
  %v214 = vunpack.c.l.b16 %v32
  %v215 = vunpack.c.h.b16 %v32
  %v216 = vunpack.c.l.b16 %v33
  %v217 = vunpack.c.h.b16 %v33
  %v218 = vunpack.c.l.b16 %v34
  %v219 = vunpack.c.h.b16 %v34
  %v220 = vunpack.c.l.b16 %v35
  %v221 = vunpack.c.h.b16 %v35
  %v222 = vunpack.c.l.b16 %v36
  %v223 = vunpack.c.h.b16 %v36
  %v224 = vunpack.c.l.b16 %v37
  %v225 = vunpack.c.h.b16 %v37
  %v226 = vunpack.c.l.b16 %v38
  %v227 = vunpack.c.h.b16 %v38
  %v228 = vunpack.c.l.b16 %v39
  %v229 = vunpack.c.h.b16 %v39
  %v230 = vunpack.c.l.b16 %v40
  %v231 = vunpack.c.h.b16 %v40
  %v232 = vunpack.c.l.b16 %v41
  %v233 = vunpack.c.h.b16 %v41
  %v234 = vunpack.c.l.b16 %v42
  %v235 = vunpack.c.h.b16 %v42
  %v236 = vunpack.c.l.b16 %v43
  %v237 = vunpack.c.h.b16 %v43
  %v238 = vunpack.c.l.b16 %v44
  %v239 = vunpack.c.h.b16 %v44
  %v240 = vunpack.c.l.b16 %v45
  %v241 = vunpack.c.h.b16 %v45
  %v242 = vunpack.c.l.b16 %v46
  %v243 = vunpack.c.h.b16 %v46
  %v244 = vunpack.c.l.b16 %v47
  %v245 = vunpack.c.h.b16 %v47
  %v246 = vunpack.c.l.b16 %v48
  %v247 = vunpack.c.h.b16 %v48
  %v248 = vunpack.c.l.b16 %v49
  %v249 = vunpack.c.h.b16 %v49
  %v250 = vunpack.c.l.b16 %v50
  %v251 = vunpack.c.h.b16 %v50
  %v252 = vunpack.c.l.b16 %v51
  %v253 = vunpack.c.h.b16 %v51
  %v254 = vunpack.c.l.b16 %v52
  %v255 = vunpack.c.h.b16 %v52
  %v256 = vunpack.c.l.b16 %v53
  %v257 = vunpack.c.h.b16 %v53
  %v258 = vunpack.c.l.b16 %v54
  %v259 = vunpack.c.h.b16 %v54
  %v260 = vunpack.c.l.b16 %v55
  %v261 = vunpack.c.h.b16 %v55
  %v262 = vunpack.c.l.b16 %v56
  %v263 = vunpack.c.h.b16 %v56
  %v264 = vunpack.c.l.b16 %v57
  %v265 = vunpack.c.h.b16 %v57
  %v266 = vunpack.c.l.b16 %v58
  %v267 = vunpack.c.h.b16 %v58
  %v268 = vunpack.c.l.b16 %v59
  %v269 = vunpack.c.h.b16 %v59
  %v270 = vunpack.c.l.b16 %v60
  %v271 = vunpack.c.h.b16 %v60
  %v272 = vunpack.c.l.b16 %v61
  %v273 = vunpack.c.h.b16 %v61
  %v274 = vunpack.c.l.b16 %v62
  %v275 = vunpack.c.h.b16 %v62
  %v276 = vunpack.c.l.b16 %v63
  %v277 = vunpack.c.h.b16 %v63
  %v278 = vunpack.c.l.b16 %v64
  %v279 = vunpack.c.h.b16 %v64
  %v280 = vunpack.c.l.b16 %v65
  %v281 = vunpack.c.h.b16 %v65
  %v282 = vunpack.c.l.b16 %v66
  %v283 = vunpack.c.h.b16 %v66
  %v284 = vunpack.c.l.b16 %v67
  %v285 = vunpack.c.h.b16 %v67
  %v286 = vunpack.c.l.b16 %v68
  %v287 = vunpack.c.h.b16 %v68
  %v288 = vunpack.c.l.b16 %v69
  %v289 = vunpack.c.h.b16 %v69
  %v290 = vunpack.c.l.b16 %v70
  %v291 = vunpack.c.h.b16 %v70
  %v292 = vunpack.c.l.b16 %v71
  %v293 = vunpack.c.h.b16 %v71
  %v294 = vunpack.c.l.b16 %v72
  %v295 = vunpack.c.h.b16 %v72
  %v296 = vunpack.c.l.b16 %v73
  %v297 = vunpack.c.h.b16 %v73
  %v298 = vunpack.c.l.b16 %v74
  %v299 = vunpack.c.h.b16 %v74
  %v300 = vunpack.c.l.b16 %v75
  %v301 = vunpack.c.h.b16 %v75
  %v302 = vunpack.c.l.b16 %v76
  %v303 = vunpack.c.h.b16 %v76
  %v304 = vunpack.c.l.b16 %v77
  %v305 = vunpack.c.h.b16 %v77
  %v306 = vpack.c.b16 %v180, %v178
  %v307 = vpack.c.b16 %v181, %v179
  %v308 = vpack.c.b16 %v184, %v182
  %v309 = vpack.c.b16 %v185, %v183
  %v310 = vpack.c.b16 %v188, %v186
  %v311 = vpack.c.b16 %v189, %v187
  %v312 = vpack.c.b16 %v192, %v190
  %v313 = vpack.c.b16 %v193, %v191
  %v314 = vpack.c.b16 %v196, %v194
  %v315 = vpack.c.b16 %v197, %v195
  %v316 = vpack.c.b16 %v200, %v198
  %v317 = vpack.c.b16 %v201, %v199
  %v318 = vpack.c.b16 %v204, %v202
  %v319 = vpack.c.b16 %v205, %v203
  %v320 = vpack.c.b16 %v208, %v206
  %v321 = vpack.c.b16 %v209, %v207
  %v322 = vpack.c.b16 %v212, %v210
  %v323 = vpack.c.b16 %v213, %v211
  %v324 = vpack.c.b16 %v216, %v214
  %v325 = vpack.c.b16 %v217, %v215
  %v326 = vpack.c.b16 %v220, %v218
  %v327 = vpack.c.b16 %v221, %v219
  %v328 = vpack.c.b16 %v224, %v222
  %v329 = vpack.c.b16 %v225, %v223
  %v330 = vpack.c.b16 %v228, %v226
  %v331 = vpack.c.b16 %v229, %v227
  %v332 = vpack.c.b16 %v232, %v230
  %v333 = vpack.c.b16 %v233, %v231
  %v334 = vpack.c.b16 %v236, %v234
  %v335 = vpack.c.b16 %v237, %v235
  %v336 = vpack.c.b16 %v240, %v238
  %v337 = vpack.c.b16 %v241, %v239
  %v338 = vpack.c.b16 %v244, %v242
  %v339 = vpack.c.b16 %v245, %v243
  %v340 = vpack.c.b16 %v248, %v246
  %v341 = vpack.c.b16 %v249, %v247
  %v342 = vpack.c.b16 %v252, %v250
  %v343 = vpack.c.b16 %v253, %v251
  %v344 = vpack.c.b16 %v256, %v254
  %v345 = vpack.c.b16 %v257, %v255
  %v346 = vpack.c.b16 %v260, %v258
  %v347 = vpack.c.b16 %v261, %v259
  %v348 = vpack.c.b16 %v264, %v262
  %v349 = vpack.c.b16 %v265, %v263
  %v350 = vpack.c.b16 %v268, %v266
  %v351 = vpack.c.b16 %v269, %v267
  %v352 = vpack.c.b16 %v272, %v270
  %v353 = vpack.c.b16 %v273, %v271
  %v354 = vpack.c.b16 %v276, %v274
  %v355 = vpack.c.b16 %v277, %v275
  %v356 = vpack.c.b16 %v280, %v278
  %v357 = vpack.c.b16 %v281, %v279
  %v358 = vpack.c.b16 %v284, %v282
  %v359 = vpack.c.b16 %v285, %v283
  %v360 = vpack.c.b16 %v288, %v286
  %v361 = vpack.c.b16 %v289, %v287
  %v362 = vpack.c.b16 %v292, %v290
  %v363 = vpack.c.b16 %v293, %v291
  %v364 = vpack.c.b16 %v296, %v294
  %v365 = vpack.c.b16 %v297, %v295
  %v366 = vpack.c.b16 %v300, %v298
  %v367 = vpack.c.b16 %v301, %v299
  %v368 = vpack.c.b16 %v304, %v302
  %v369 = vpack.c.b16 %v305, %v303
  %v466 = vunpack.c.l.b16 %v78
  %v467 = vunpack.c.l.b16 %v79
  %v468 = vunpack.c.l.b16 %v80
  %v469 = vunpack.c.l.b16 %v81
  %v470 = vunpack.c.l.b16 %v82
  %v471 = vunpack.c.l.b16 %v83
  %v472 = vunpack.c.l.b16 %v84
  %v473 = vunpack.c.l.b16 %v85
  %v474 = vunpack.c.l.b16 %v86
  %v475 = vunpack.c.l.b16 %v87
  %v476 = vunpack.c.l.b16 %v88
  %v477 = vunpack.c.l.b16 %v89
  %v478 = vunpack.c.l.b16 %v90
  %v479 = vunpack.c.l.b16 %v91
  %v480 = vunpack.c.l.b16 %v92
  %v481 = vunpack.c.l.b16 %v93
  %v482 = vunpack.c.l.b16 %v94
  %v483 = vunpack.c.l.b16 %v95
  %v484 = vunpack.c.l.b16 %v96
  %v485 = vunpack.c.l.b16 %v97
  %v486 = vunpack.c.l.b16 %v98
  %v487 = vunpack.c.l.b16 %v99
  %v488 = vunpack.c.l.b16 %v100
  %v489 = vunpack.c.l.b16 %v101
  %v490 = vunpack.c.l.b16 %v102
  %v491 = vunpack.c.l.b16 %v103
  %v492 = vunpack.c.l.b16 %v104
  %v493 = vunpack.c.l.b16 %v105
  %v494 = vunpack.c.l.b16 %v106
  %v495 = vunpack.c.l.b16 %v107
  %v496 = vunpack.c.l.b16 %v108
  %v497 = vunpack.c.l.b16 %v109
  %v498 = vpack.c.b16 %v467, %v466
  %v499 = vpack.c.b16 %v469, %v468
  %v500 = vpack.c.b16 %v471, %v470
  %v501 = vpack.c.b16 %v473, %v472
  %v502 = vpack.c.b16 %v475, %v474
  %v503 = vpack.c.b16 %v477, %v476
  %v504 = vpack.c.b16 %v479, %v478
  %v505 = vpack.c.b16 %v481, %v480
  %v506 = vpack.c.b16 %v483, %v482
  %v507 = vpack.c.b16 %v485, %v484
  %v508 = vpack.c.b16 %v487, %v486
  %v509 = vpack.c.b16 %v489, %v488
  %v510 = vpack.c.b16 %v491, %v490
  %v511 = vpack.c.b16 %v493, %v492
  %v512 = vpack.c.b16 %v495, %v494
  %v513 = vpack.c.b16 %v497, %v496
  %530 = vmatpush.bf16.msra.mxu0 %v505
  %531 = vmatpush.bf16.msra.mxu0 %v504
  %532 = vmatpush.bf16.msra.mxu0 %v503
  %533 = vmatpush.bf16.msra.mxu0 %v502
  %534 = vmatpush.bf16.msra.mxu0 %v501
  %535 = vmatpush.bf16.msra.mxu0 %v500
  %536 = vmatpush.bf16.msra.mxu0 %v499
  %537 = vmatpush.bf16.msra.mxu0 %v498
  %538 = vmatmul.bf16.gmra.mxu0 %v306
  %v539 = vpop.f32.mrf.mxu0
  %v540 = vadd.f32 %v112, %v539
  %v541 = vpop.f32.mrf.mxu0
  %v542 = vadd.f32 %v112, %v541
  %543 = vmatmul.bf16.gmra.mxu0 %v308
  %v544 = vpop.f32.mrf.mxu0
  %v545 = vadd.f32 %v112, %v544
  %v546 = vpop.f32.mrf.mxu0
  %v547 = vadd.f32 %v112, %v546
  %548 = vmatmul.bf16.gmra.mxu0 %v310
  %v549 = vpop.f32.mrf.mxu0
  %v550 = vadd.f32 %v112, %v549
  %v551 = vpop.f32.mrf.mxu0
  %v552 = vadd.f32 %v112, %v551
  %553 = vmatmul.bf16.gmra.mxu0 %v312
  %v554 = vpop.f32.mrf.mxu0
  %v555 = vadd.f32 %v112, %v554
  %v556 = vpop.f32.mrf.mxu0
  %v557 = vadd.f32 %v112, %v556
  %558 = vmatmul.bf16.gmra.mxu0 %v314
  %v559 = vpop.f32.mrf.mxu0
  %v560 = vadd.f32 %v112, %v559
  %v561 = vpop.f32.mrf.mxu0
  %v562 = vadd.f32 %v112, %v561
  %563 = vmatmul.bf16.gmra.mxu0 %v316
  %v564 = vpop.f32.mrf.mxu0
  %v565 = vadd.f32 %v112, %v564
  %v566 = vpop.f32.mrf.mxu0
  %v567 = vadd.f32 %v112, %v566
  %568 = vmatmul.bf16.gmra.mxu0 %v318
  %v569 = vpop.f32.mrf.mxu0
  %v570 = vadd.f32 %v112, %v569
  %v571 = vpop.f32.mrf.mxu0
  %v572 = vadd.f32 %v112, %v571
  %573 = vmatmul.bf16.gmra.mxu0 %v320
  %v574 = vpop.f32.mrf.mxu0
  %v575 = vadd.f32 %v112, %v574
  %v576 = vpop.f32.mrf.mxu0
  %v577 = vadd.f32 %v112, %v576
  %578 = vmatmul.bf16.gmra.mxu0 %v322
  %v579 = vpop.f32.mrf.mxu0
  %v580 = vadd.f32 %v112, %v579
  %v581 = vpop.f32.mrf.mxu0
  %v582 = vadd.f32 %v112, %v581
  %583 = vmatmul.bf16.gmra.mxu0 %v324
  %v584 = vpop.f32.mrf.mxu0
  %v585 = vadd.f32 %v112, %v584
  %v586 = vpop.f32.mrf.mxu0
  %v587 = vadd.f32 %v112, %v586
  %588 = vmatmul.bf16.gmra.mxu0 %v326
  %v589 = vpop.f32.mrf.mxu0
  %v590 = vadd.f32 %v112, %v589
  %v591 = vpop.f32.mrf.mxu0
  %v592 = vadd.f32 %v112, %v591
  %593 = vmatmul.bf16.gmra.mxu0 %v328
  %v594 = vpop.f32.mrf.mxu0
  %v595 = vadd.f32 %v112, %v594
  %v596 = vpop.f32.mrf.mxu0
  %v597 = vadd.f32 %v112, %v596
  %598 = vmatmul.bf16.gmra.mxu0 %v330
  %v599 = vpop.f32.mrf.mxu0
  %v600 = vadd.f32 %v112, %v599
  %v601 = vpop.f32.mrf.mxu0
  %v602 = vadd.f32 %v112, %v601
  %603 = vmatmul.bf16.gmra.mxu0 %v332
  %v604 = vpop.f32.mrf.mxu0
  %v605 = vadd.f32 %v112, %v604
  %v606 = vpop.f32.mrf.mxu0
  %v607 = vadd.f32 %v112, %v606
  %608 = vmatmul.bf16.gmra.mxu0 %v334
  %v609 = vpop.f32.mrf.mxu0
  %v610 = vadd.f32 %v112, %v609
  %v611 = vpop.f32.mrf.mxu0
  %v612 = vadd.f32 %v112, %v611
  %613 = vmatmul.bf16.gmra.mxu0 %v336
  %v614 = vpop.f32.mrf.mxu0
  %v615 = vadd.f32 %v112, %v614
  %v616 = vpop.f32.mrf.mxu0
  %v617 = vadd.f32 %v112, %v616
  %618 = vmatmul.bf16.gmra.mxu0 %v338
  %v619 = vpop.f32.mrf.mxu0
  %v620 = vadd.f32 %v112, %v619
  %v621 = vpop.f32.mrf.mxu0
  %v622 = vadd.f32 %v112, %v621
  %623 = vmatmul.bf16.gmra.mxu0 %v340
  %v624 = vpop.f32.mrf.mxu0
  %v625 = vadd.f32 %v112, %v624
  %v626 = vpop.f32.mrf.mxu0
  %v627 = vadd.f32 %v112, %v626
  %628 = vmatmul.bf16.gmra.mxu0 %v342
  %v629 = vpop.f32.mrf.mxu0
  %v630 = vadd.f32 %v112, %v629
  %v631 = vpop.f32.mrf.mxu0
  %v632 = vadd.f32 %v112, %v631
  %633 = vmatmul.bf16.gmra.mxu0 %v344
  %v634 = vpop.f32.mrf.mxu0
  %v635 = vadd.f32 %v112, %v634
  %v636 = vpop.f32.mrf.mxu0
  %v637 = vadd.f32 %v112, %v636
  %638 = vmatmul.bf16.gmra.mxu0 %v346
  %v639 = vpop.f32.mrf.mxu0
  %v640 = vadd.f32 %v112, %v639
  %v641 = vpop.f32.mrf.mxu0
  %v642 = vadd.f32 %v112, %v641
  %643 = vmatmul.bf16.gmra.mxu0 %v348
  %v644 = vpop.f32.mrf.mxu0
  %v645 = vadd.f32 %v112, %v644
  %v646 = vpop.f32.mrf.mxu0
  %v647 = vadd.f32 %v112, %v646
  %648 = vmatmul.bf16.gmra.mxu0 %v350
  %v649 = vpop.f32.mrf.mxu0
  %v650 = vadd.f32 %v112, %v649
  %v651 = vpop.f32.mrf.mxu0
  %v652 = vadd.f32 %v112, %v651
  %653 = vmatmul.bf16.gmra.mxu0 %v352
  %v654 = vpop.f32.mrf.mxu0
  %v655 = vadd.f32 %v112, %v654
  %v656 = vpop.f32.mrf.mxu0
  %v657 = vadd.f32 %v112, %v656
  %658 = vmatmul.bf16.gmra.mxu0 %v354
  %v659 = vpop.f32.mrf.mxu0
  %v660 = vadd.f32 %v112, %v659
  %v661 = vpop.f32.mrf.mxu0
  %v662 = vadd.f32 %v112, %v661
  %663 = vmatmul.bf16.gmra.mxu0 %v356
  %v664 = vpop.f32.mrf.mxu0
  %v665 = vadd.f32 %v112, %v664
  %v666 = vpop.f32.mrf.mxu0
  %v667 = vadd.f32 %v112, %v666
  %668 = vmatmul.bf16.gmra.mxu0 %v358
  %v669 = vpop.f32.mrf.mxu0
  %v670 = vadd.f32 %v112, %v669
  %v671 = vpop.f32.mrf.mxu0
  %v672 = vadd.f32 %v112, %v671
  %673 = vmatmul.bf16.gmra.mxu0 %v360
  %v674 = vpop.f32.mrf.mxu0
  %v675 = vadd.f32 %v112, %v674
  %v676 = vpop.f32.mrf.mxu0
  %v677 = vadd.f32 %v112, %v676
  %678 = vmatmul.bf16.gmra.mxu0 %v362
  %v679 = vpop.f32.mrf.mxu0
  %v680 = vadd.f32 %v112, %v679
  %v681 = vpop.f32.mrf.mxu0
  %v682 = vadd.f32 %v112, %v681
  %683 = vmatmul.bf16.gmra.mxu0 %v364
  %v684 = vpop.f32.mrf.mxu0
  %v685 = vadd.f32 %v112, %v684
  %v686 = vpop.f32.mrf.mxu0
  %v687 = vadd.f32 %v112, %v686
  %688 = vmatmul.bf16.gmra.mxu0 %v366
  %v689 = vpop.f32.mrf.mxu0
  %v690 = vadd.f32 %v112, %v689
  %v691 = vpop.f32.mrf.mxu0
  %v692 = vadd.f32 %v112, %v691
  %693 = vmatmul.bf16.gmra.mxu0 %v368
  %v694 = vpop.f32.mrf.mxu0
  %v695 = vadd.f32 %v112, %v694
  %v696 = vpop.f32.mrf.mxu0
  %v697 = vadd.f32 %v112, %v696
  %698 = vdwg.mxu0
  %699 = vmatpush.bf16.msra.mxu0 %v513
  %700 = vmatpush.bf16.msra.mxu0 %v512
  %701 = vmatpush.bf16.msra.mxu0 %v511
  %702 = vmatpush.bf16.msra.mxu0 %v510
  %703 = vmatpush.bf16.msra.mxu0 %v509
  %704 = vmatpush.bf16.msra.mxu0 %v508
  %705 = vmatpush.bf16.msra.mxu0 %v507
  %706 = vmatpush.bf16.msra.mxu0 %v506
  %707 = vmatmul.bf16.gmra.mxu0 %v307
  %v708 = vpop.f32.mrf.mxu0
  %v709 = vadd.f32 %v540, %v708
  %v710 = vpop.f32.mrf.mxu0
  %v711 = vadd.f32 %v542, %v710
  %712 = vmatmul.bf16.gmra.mxu0 %v309
  %v713 = vpop.f32.mrf.mxu0
  %v714 = vadd.f32 %v545, %v713
  %v715 = vpop.f32.mrf.mxu0
  %v716 = vadd.f32 %v547, %v715
  %717 = vmatmul.bf16.gmra.mxu0 %v311
  %v718 = vpop.f32.mrf.mxu0
  %v719 = vadd.f32 %v550, %v718
  %v720 = vpop.f32.mrf.mxu0
  %v721 = vadd.f32 %v552, %v720
  %722 = vmatmul.bf16.gmra.mxu0 %v313
  %v723 = vpop.f32.mrf.mxu0
  %v724 = vadd.f32 %v555, %v723
  %v725 = vpop.f32.mrf.mxu0
  %v726 = vadd.f32 %v557, %v725
  %727 = vmatmul.bf16.gmra.mxu0 %v315
  %v728 = vpop.f32.mrf.mxu0
  %v729 = vadd.f32 %v560, %v728
  %v730 = vpop.f32.mrf.mxu0
  %v731 = vadd.f32 %v562, %v730
  %732 = vmatmul.bf16.gmra.mxu0 %v317
  %v733 = vpop.f32.mrf.mxu0
  %v734 = vadd.f32 %v565, %v733
  %v735 = vpop.f32.mrf.mxu0
  %v736 = vadd.f32 %v567, %v735
  %737 = vmatmul.bf16.gmra.mxu0 %v319
  %v738 = vpop.f32.mrf.mxu0
  %v739 = vadd.f32 %v570, %v738
  %v740 = vpop.f32.mrf.mxu0
  %v741 = vadd.f32 %v572, %v740
  %742 = vmatmul.bf16.gmra.mxu0 %v321
  %v743 = vpop.f32.mrf.mxu0
  %v744 = vadd.f32 %v575, %v743
  %v745 = vpop.f32.mrf.mxu0
  %v746 = vadd.f32 %v577, %v745
  %747 = vmatmul.bf16.gmra.mxu0 %v323
  %v748 = vpop.f32.mrf.mxu0
  %v749 = vadd.f32 %v580, %v748
  %v750 = vpop.f32.mrf.mxu0
  %v751 = vadd.f32 %v582, %v750
  %752 = vmatmul.bf16.gmra.mxu0 %v325
  %v753 = vpop.f32.mrf.mxu0
  %v754 = vadd.f32 %v585, %v753
  %v755 = vpop.f32.mrf.mxu0
  %v756 = vadd.f32 %v587, %v755
  %757 = vmatmul.bf16.gmra.mxu0 %v327
  %v758 = vpop.f32.mrf.mxu0
  %v759 = vadd.f32 %v590, %v758
  %v760 = vpop.f32.mrf.mxu0
  %v761 = vadd.f32 %v592, %v760
  %762 = vmatmul.bf16.gmra.mxu0 %v329
  %v763 = vpop.f32.mrf.mxu0
  %v764 = vadd.f32 %v595, %v763
  %v765 = vpop.f32.mrf.mxu0
  %v766 = vadd.f32 %v597, %v765
  %767 = vmatmul.bf16.gmra.mxu0 %v331
  %v768 = vpop.f32.mrf.mxu0
  %v769 = vadd.f32 %v600, %v768
  %v770 = vpop.f32.mrf.mxu0
  %v771 = vadd.f32 %v602, %v770
  %772 = vmatmul.bf16.gmra.mxu0 %v333
  %v773 = vpop.f32.mrf.mxu0
  %v774 = vadd.f32 %v605, %v773
  %v775 = vpop.f32.mrf.mxu0
  %v776 = vadd.f32 %v607, %v775
  %777 = vmatmul.bf16.gmra.mxu0 %v335
  %v778 = vpop.f32.mrf.mxu0
  %v779 = vadd.f32 %v610, %v778
  %v780 = vpop.f32.mrf.mxu0
  %v781 = vadd.f32 %v612, %v780
  %782 = vmatmul.bf16.gmra.mxu0 %v337
  %v783 = vpop.f32.mrf.mxu0
  %v784 = vadd.f32 %v615, %v783
  %v785 = vpop.f32.mrf.mxu0
  %v786 = vadd.f32 %v617, %v785
  %787 = vmatmul.bf16.gmra.mxu0 %v339
  %v788 = vpop.f32.mrf.mxu0
  %v789 = vadd.f32 %v620, %v788
  %v790 = vpop.f32.mrf.mxu0
  %v791 = vadd.f32 %v622, %v790
  %792 = vmatmul.bf16.gmra.mxu0 %v341
  %v793 = vpop.f32.mrf.mxu0
  %v794 = vadd.f32 %v625, %v793
  %v795 = vpop.f32.mrf.mxu0
  %v796 = vadd.f32 %v627, %v795
  %797 = vmatmul.bf16.gmra.mxu0 %v343
  %v798 = vpop.f32.mrf.mxu0
  %v799 = vadd.f32 %v630, %v798
  %v800 = vpop.f32.mrf.mxu0
  %v801 = vadd.f32 %v632, %v800
  %802 = vmatmul.bf16.gmra.mxu0 %v345
  %v803 = vpop.f32.mrf.mxu0
  %v804 = vadd.f32 %v635, %v803
  %v805 = vpop.f32.mrf.mxu0
  %v806 = vadd.f32 %v637, %v805
  %807 = vmatmul.bf16.gmra.mxu0 %v347
  %v808 = vpop.f32.mrf.mxu0
  %v809 = vadd.f32 %v640, %v808
  %v810 = vpop.f32.mrf.mxu0
  %v811 = vadd.f32 %v642, %v810
  %812 = vmatmul.bf16.gmra.mxu0 %v349
  %v813 = vpop.f32.mrf.mxu0
  %v814 = vadd.f32 %v645, %v813
  %v815 = vpop.f32.mrf.mxu0
  %v816 = vadd.f32 %v647, %v815
  %817 = vmatmul.bf16.gmra.mxu0 %v351
  %v818 = vpop.f32.mrf.mxu0
  %v819 = vadd.f32 %v650, %v818
  %v820 = vpop.f32.mrf.mxu0
  %v821 = vadd.f32 %v652, %v820
  %822 = vmatmul.bf16.gmra.mxu0 %v353
  %v823 = vpop.f32.mrf.mxu0
  %v824 = vadd.f32 %v655, %v823
  %v825 = vpop.f32.mrf.mxu0
  %v826 = vadd.f32 %v657, %v825
  %827 = vmatmul.bf16.gmra.mxu0 %v355
  %v828 = vpop.f32.mrf.mxu0
  %v829 = vadd.f32 %v660, %v828
  %v830 = vpop.f32.mrf.mxu0
  %v831 = vadd.f32 %v662, %v830
  %832 = vmatmul.bf16.gmra.mxu0 %v357
  %v833 = vpop.f32.mrf.mxu0
  %v834 = vadd.f32 %v665, %v833
  %v835 = vpop.f32.mrf.mxu0
  %v836 = vadd.f32 %v667, %v835
  %837 = vmatmul.bf16.gmra.mxu0 %v359
  %v838 = vpop.f32.mrf.mxu0
  %v839 = vadd.f32 %v670, %v838
  %v840 = vpop.f32.mrf.mxu0
  %v841 = vadd.f32 %v672, %v840
  %842 = vmatmul.bf16.gmra.mxu0 %v361
  %v843 = vpop.f32.mrf.mxu0
  %v844 = vadd.f32 %v675, %v843
  %v845 = vpop.f32.mrf.mxu0
  %v846 = vadd.f32 %v677, %v845
  %847 = vmatmul.bf16.gmra.mxu0 %v363
  %v848 = vpop.f32.mrf.mxu0
  %v849 = vadd.f32 %v680, %v848
  %v850 = vpop.f32.mrf.mxu0
  %v851 = vadd.f32 %v682, %v850
  %852 = vmatmul.bf16.gmra.mxu0 %v365
  %v853 = vpop.f32.mrf.mxu0
  %v854 = vadd.f32 %v685, %v853
  %v855 = vpop.f32.mrf.mxu0
  %v856 = vadd.f32 %v687, %v855
  %857 = vmatmul.bf16.gmra.mxu0 %v367
  %v858 = vpop.f32.mrf.mxu0
  %v859 = vadd.f32 %v690, %v858
  %v860 = vpop.f32.mrf.mxu0
  %v861 = vadd.f32 %v692, %v860
  %862 = vmatmul.bf16.gmra.mxu0 %v369
  %v863 = vpop.f32.mrf.mxu0
  %v864 = vadd.f32 %v695, %v863
  %v865 = vpop.f32.mrf.mxu0
  %v866 = vadd.f32 %v697, %v865
  %867 = vdwg.mxu0
  %v868 = vmax.f32 %v709, 0.0
  %v869 = vmax.f32 %v711, 0.0
  %v870 = vmax.f32 %v714, 0.0
  %v871 = vmax.f32 %v716, 0.0
  %v872 = vmax.f32 %v719, 0.0
  %v873 = vmax.f32 %v721, 0.0
  %v874 = vmax.f32 %v724, 0.0
  %v875 = vmax.f32 %v726, 0.0
  %v876 = vmax.f32 %v729, 0.0
  %v877 = vmax.f32 %v731, 0.0
  %v878 = vmax.f32 %v734, 0.0
  %v879 = vmax.f32 %v736, 0.0
  %v880 = vmax.f32 %v739, 0.0
  %v881 = vmax.f32 %v741, 0.0
  %v882 = vmax.f32 %v744, 0.0
  %v883 = vmax.f32 %v746, 0.0
  %v884 = vmax.f32 %v749, 0.0
  %v885 = vmax.f32 %v751, 0.0
  %v886 = vmax.f32 %v754, 0.0
  %v887 = vmax.f32 %v756, 0.0
  %v888 = vmax.f32 %v759, 0.0
  %v889 = vmax.f32 %v761, 0.0
  %v890 = vmax.f32 %v764, 0.0
  %v891 = vmax.f32 %v766, 0.0
  %v892 = vmax.f32 %v769, 0.0
  %v893 = vmax.f32 %v771, 0.0
  %v894 = vmax.f32 %v774, 0.0
  %v895 = vmax.f32 %v776, 0.0
  %v896 = vmax.f32 %v779, 0.0
  %v897 = vmax.f32 %v781, 0.0
  %v898 = vmax.f32 %v784, 0.0
  %v899 = vmax.f32 %v786, 0.0
  %v900 = vmax.f32 %v789, 0.0
  %v901 = vmax.f32 %v791, 0.0
  %v902 = vmax.f32 %v794, 0.0
  %v903 = vmax.f32 %v796, 0.0
  %v904 = vmax.f32 %v799, 0.0
  %v905 = vmax.f32 %v801, 0.0
  %v906 = vmax.f32 %v804, 0.0
  %v907 = vmax.f32 %v806, 0.0
  %v908 = vmax.f32 %v809, 0.0
  %v909 = vmax.f32 %v811, 0.0
  %v910 = vmax.f32 %v814, 0.0
  %v911 = vmax.f32 %v816, 0.0
  %v912 = vmax.f32 %v819, 0.0
  %v913 = vmax.f32 %v821, 0.0
  %v914 = vmax.f32 %v824, 0.0
  %v915 = vmax.f32 %v826, 0.0
  %v916 = vmax.f32 %v829, 0.0
  %v917 = vmax.f32 %v831, 0.0
  %v918 = vmax.f32 %v834, 0.0
  %v919 = vmax.f32 %v836, 0.0
  %v920 = vmax.f32 %v839, 0.0
  %v921 = vmax.f32 %v841, 0.0
  %v922 = vmax.f32 %v844, 0.0
  %v923 = vmax.f32 %v846, 0.0
  %v924 = vmax.f32 %v849, 0.0
  %v925 = vmax.f32 %v851, 0.0
  %v926 = vmax.f32 %v854, 0.0
  %v927 = vmax.f32 %v856, 0.0
  %v928 = vmax.f32 %v859, 0.0
  %v929 = vmax.f32 %v861, 0.0
  %v930 = vmax.f32 %v864, 0.0
  %v931 = vmax.f32 %v866, 0.0
  %v932 = vpack.c.bf16 %v868, %v868
  %v933 = vpack.c.bf16 %v869, %v869
  %v934 = vpack.c.bf16 %v870, %v870
  %v935 = vpack.c.bf16 %v871, %v871
  %v936 = vpack.c.bf16 %v872, %v872
  %v937 = vpack.c.bf16 %v873, %v873
  %v938 = vpack.c.bf16 %v874, %v874
  %v939 = vpack.c.bf16 %v875, %v875
  %v940 = vpack.c.bf16 %v876, %v876
  %v941 = vpack.c.bf16 %v877, %v877
  %v942 = vpack.c.bf16 %v878, %v878
  %v943 = vpack.c.bf16 %v879, %v879
  %v944 = vpack.c.bf16 %v880, %v880
  %v945 = vpack.c.bf16 %v881, %v881
  %v946 = vpack.c.bf16 %v882, %v882
  %v947 = vpack.c.bf16 %v883, %v883
  %v948 = vpack.c.bf16 %v884, %v884
  %v949 = vpack.c.bf16 %v885, %v885
  %v950 = vpack.c.bf16 %v886, %v886
  %v951 = vpack.c.bf16 %v887, %v887
  %v952 = vpack.c.bf16 %v888, %v888
  %v953 = vpack.c.bf16 %v889, %v889
  %v954 = vpack.c.bf16 %v890, %v890
  %v955 = vpack.c.bf16 %v891, %v891
  %v956 = vpack.c.bf16 %v892, %v892
  %v957 = vpack.c.bf16 %v893, %v893
  %v958 = vpack.c.bf16 %v894, %v894
  %v959 = vpack.c.bf16 %v895, %v895
  %v960 = vpack.c.bf16 %v896, %v896
  %v961 = vpack.c.bf16 %v897, %v897
  %v962 = vpack.c.bf16 %v898, %v898
  %v963 = vpack.c.bf16 %v899, %v899
  %v964 = vpack.c.bf16 %v900, %v900
  %v965 = vpack.c.bf16 %v901, %v901
  %v966 = vpack.c.bf16 %v902, %v902
  %v967 = vpack.c.bf16 %v903, %v903
  %v968 = vpack.c.bf16 %v904, %v904
  %v969 = vpack.c.bf16 %v905, %v905
  %v970 = vpack.c.bf16 %v906, %v906
  %v971 = vpack.c.bf16 %v907, %v907
  %v972 = vpack.c.bf16 %v908, %v908
  %v973 = vpack.c.bf16 %v909, %v909
  %v974 = vpack.c.bf16 %v910, %v910
  %v975 = vpack.c.bf16 %v911, %v911
  %v976 = vpack.c.bf16 %v912, %v912
  %v977 = vpack.c.bf16 %v913, %v913
  %v978 = vpack.c.bf16 %v914, %v914
  %v979 = vpack.c.bf16 %v915, %v915
  %v980 = vpack.c.bf16 %v916, %v916
  %v981 = vpack.c.bf16 %v917, %v917
  %v982 = vpack.c.bf16 %v918, %v918
  %v983 = vpack.c.bf16 %v919, %v919
  %v984 = vpack.c.bf16 %v920, %v920
  %v985 = vpack.c.bf16 %v921, %v921
  %v986 = vpack.c.bf16 %v922, %v922
  %v987 = vpack.c.bf16 %v923, %v923
  %v988 = vpack.c.bf16 %v924, %v924
  %v989 = vpack.c.bf16 %v925, %v925
  %v990 = vpack.c.bf16 %v926, %v926
  %v991 = vpack.c.bf16 %v927, %v927
  %v992 = vpack.c.bf16 %v928, %v928
  %v993 = vpack.c.bf16 %v929, %v929
  %v994 = vpack.c.bf16 %v930, %v930
  %v995 = vpack.c.bf16 %v931, %v931
  %996 = vst [vmem:[%s3] sm:$0xf] %v932
  %997 = vst [vmem:[%s3 + $0x4] sm:$0xf] %v933
  %998 = vst [vmem:[%s3 + $0x8] sm:$0xf] %v934
  %999 = vst [vmem:[%s3 + $0xc] sm:$0xf] %v935
  %1000 = vst [vmem:[%s3 + $0x10] sm:$0xf] %v936
  %1001 = vst [vmem:[%s3 + $0x14] sm:$0xf] %v937
  %1002 = vst [vmem:[%s3 + $0x18] sm:$0xf] %v938
  %1003 = vst [vmem:[%s3 + $0x1c] sm:$0xf] %v939
  %1004 = vst [vmem:[%s3 + $0x20] sm:$0xf] %v940
  %1005 = vst [vmem:[%s3 + $0x24] sm:$0xf] %v941
  %1006 = vst [vmem:[%s3 + $0x28] sm:$0xf] %v942
  %1007 = vst [vmem:[%s3 + $0x2c] sm:$0xf] %v943
  %1008 = vst [vmem:[%s3 + $0x30] sm:$0xf] %v944
  %1009 = vst [vmem:[%s3 + $0x34] sm:$0xf] %v945
  %1010 = vst [vmem:[%s3 + $0x38] sm:$0xf] %v946
  %1011 = vst [vmem:[%s3 + $0x3c] sm:$0xf] %v947
  %1012 = vst [vmem:[%s3 + $0x40] sm:$0xf] %v948
  %1013 = vst [vmem:[%s3 + $0x44] sm:$0xf] %v949
  %1014 = vst [vmem:[%s3 + $0x48] sm:$0xf] %v950
  %1015 = vst [vmem:[%s3 + $0x4c] sm:$0xf] %v951
  %1016 = vst [vmem:[%s3 + $0x50] sm:$0xf] %v952
  %1017 = vst [vmem:[%s3 + $0x54] sm:$0xf] %v953
  %1018 = vst [vmem:[%s3 + $0x58] sm:$0xf] %v954
  %1019 = vst [vmem:[%s3 + $0x5c] sm:$0xf] %v955
  %1020 = vst [vmem:[%s3 + $0x60] sm:$0xf] %v956
  %1021 = vst [vmem:[%s3 + $0x64] sm:$0xf] %v957
  %1022 = vst [vmem:[%s3 + $0x68] sm:$0xf] %v958
  %1023 = vst [vmem:[%s3 + $0x6c] sm:$0xf] %v959
  %1024 = vst [vmem:[%s3 + $0x70] sm:$0xf] %v960
  %1025 = vst [vmem:[%s3 + $0x74] sm:$0xf] %v961
  %1026 = vst [vmem:[%s3 + $0x78] sm:$0xf] %v962
  %1027 = vst [vmem:[%s3 + $0x7c] sm:$0xf] %v963
  %1028 = vst [vmem:[%s3 + $0x80] sm:$0xf] %v964
  %1029 = vst [vmem:[%s3 + $0x84] sm:$0xf] %v965
  %1030 = vst [vmem:[%s3 + $0x88] sm:$0xf] %v966
  %1031 = vst [vmem:[%s3 + $0x8c] sm:$0xf] %v967
  %1032 = vst [vmem:[%s3 + $0x90] sm:$0xf] %v968
  %1033 = vst [vmem:[%s3 + $0x94] sm:$0xf] %v969
  %1034 = vst [vmem:[%s3 + $0x98] sm:$0xf] %v970
  %1035 = vst [vmem:[%s3 + $0x9c] sm:$0xf] %v971
  %1036 = vst [vmem:[%s3 + $0xa0] sm:$0xf] %v972
  %1037 = vst [vmem:[%s3 + $0xa4] sm:$0xf] %v973
  %1038 = vst [vmem:[%s3 + $0xa8] sm:$0xf] %v974
  %1039 = vst [vmem:[%s3 + $0xac] sm:$0xf] %v975
  %1040 = vst [vmem:[%s3 + $0xb0] sm:$0xf] %v976
  %1041 = vst [vmem:[%s3 + $0xb4] sm:$0xf] %v977
  %1042 = vst [vmem:[%s3 + $0xb8] sm:$0xf] %v978
  %1043 = vst [vmem:[%s3 + $0xbc] sm:$0xf] %v979
  %1044 = vst [vmem:[%s3 + $0xc0] sm:$0xf] %v980
  %1045 = vst [vmem:[%s3 + $0xc4] sm:$0xf] %v981
  %1046 = vst [vmem:[%s3 + $0xc8] sm:$0xf] %v982
  %1047 = vst [vmem:[%s3 + $0xcc] sm:$0xf] %v983
  %1048 = vst [vmem:[%s3 + $0xd0] sm:$0xf] %v984
  %1049 = vst [vmem:[%s3 + $0xd4] sm:$0xf] %v985
  %1050 = vst [vmem:[%s3 + $0xd8] sm:$0xf] %v986
  %1051 = vst [vmem:[%s3 + $0xdc] sm:$0xf] %v987
  %1052 = vst [vmem:[%s3 + $0xe0] sm:$0xf] %v988
  %1053 = vst [vmem:[%s3 + $0xe4] sm:$0xf] %v989
  %1054 = vst [vmem:[%s3 + $0xe8] sm:$0xf] %v990
  %1055 = vst [vmem:[%s3 + $0xec] sm:$0xf] %v991
  %1056 = vst [vmem:[%s3 + $0xf0] sm:$0xf] %v992
  %1057 = vst [vmem:[%s3 + $0xf4] sm:$0xf] %v993
  %1058 = vst [vmem:[%s3 + $0xf8] sm:$0xf] %v994
  %1059 = vst [vmem:[%s3 + $0xfc] sm:$0xf] %v995
  // Predicated region
  $region14: #{_lambda_.18} parent=0 // pred_check
    _
  $region15: #{_lambda_.18} parent=0 // pred_check_branch
    %1061 = sbr.rel (0) target = $region17
  $region16: #{_lambda_.18} parent=0 // pred_region
    _
  $region17: #{_lambda_.18} parent=0 // pred_fallthru
    _
  // Predicated region
  $region18: #{_lambda_.18} parent=0 // pred_check
    _
  $region19: #{_lambda_.18} parent=0 // pred_check_branch
    %1063 = sbr.rel (0) target = $region21
  $region20: #{_lambda_.18} parent=0 // pred_region
    _
  $region21: #{_lambda_.18} parent=0 // pred_fallthru
    _

// kernel: _lambda_.19
$region0: #{_lambda_.19}
  #allocation0 [shape = 'u32[]', space=smem, size = 0x4, offset = 0x4, fixed_abs, tag = 'smem constant byte address 0x4 - core index']
  #allocation1 [shape = 'u32[72,128]{1,0:T(1,128)}', space=vmem, size = 0x9000, scoped, tag = 'internal scratch']
  %s0 = inlined_call_operand.vmem [shape: bf16[2048,128], index: 0, kind: input, shape index: {}]
  %s1 = inlined_call_operand.vmem [shape: bf16[128,128], index: 1, kind: input, shape index: {}]
  %s2 = inlined_call_operand.vmem [shape: f32[1,128], index: 2, kind: input, shape index: {}]
  %s3 = inlined_call_operand.vmem [shape: bf16[2048,128], index: 3, kind: output, shape index: {}]
  %s4 = sld [smem:[#allocation0]]
  $region45: #{_lambda_.19} parent=0
    _
  %s6 = ssub.s32 1, %s4
  %s7 = scalar_select 0, %s6, %s4
  loop: start=0, step=1, limit=4
  $region2: #{_lambda_.19} parent=0 // loop_pre_header
    _
  $region3: #{_lambda_.19} parent=0 // loop_header
    %s9 = sphi 0, %s13
    %p10 = scmp.ge.s32.totalorder %s9, 4
    %s19 = sphi 0, %s21
    %s22 = sphi 0, %s19
    %s23 = sphi 0, %s22
    %s39 = sphi 0, %s23
    %s43 = sphi 0, %s43
    %s45 = sphi 0, %s43
    %s46 = sphi 0, %s45
    %s60 = sphi 0, %s46
    %s64 = sphi 0, %s64
    %s66 = sphi 0, %s64
    %s67 = sphi 0, %s66
    %s81 = sphi 0, %s67
    %s87 = sphi 0, %s89
    %s90 = sphi 0, %s87
    %s91 = sphi 0, %s90
    %s107 = sphi 0, %s91
  $region4: #{_lambda_.19} parent=0 // loop_header_branch
    %12 = sbr.rel (%p10) target = $region8
  $region5: #{_lambda_.19} parent=0 // loop_body
    %s14 = ssub.s32 %s9, 1
    %s15 = ssub.s32 %s9, 2
    %s16 = sadd.s32 %s9, 1
    %s17 = ssub.s32 %s9, %s16
    %p18 = scmp.eq.s32.totalorder %s17, 0
    %s20 = sadd.s32 %s19, 1
    %s21 = scalar_select %p18, %s19, %s20
    %p24 = pneg %p18
    %p25 = scmp.eq.s32.totalorder %s9, 1
    %p26 = por %p24, %p25
    %p27 = scmp.ne.s32.totalorder %s19, %s22
    %p28 = scmp.eq.s32.totalorder %s9, 0
    %p29 = por %p27, %p28
    %p30 = scmp.ne.s32.totalorder %s19, %s22
    %p31 = scmp.eq.s32.totalorder %s14, 1
    %p32 = por %p30, %p31
    %p33 = scmp.ne.s32.totalorder %s22, %s23
    %p34 = scmp.eq.s32.totalorder %s14, 0
    %p35 = por %p33, %p34
    %p36 = scmp.ne.s32.totalorder %s22, %s23
    %p37 = scmp.eq.s32.totalorder %s15, 1
    %p38 = por %p36, %p37
    %p40 = scmp.ne.s32.totalorder %s23, %s39
    %p41 = scmp.eq.s32.totalorder %s15, 0
    %p42 = por %p40, %p41
    %s44 = sadd.s32 %s43, 1
    %p47 = scmp.eq.s32.totalorder %s9, 1
    %p48 = scmp.ne.s32.totalorder %s43, %s45
    %p49 = scmp.eq.s32.totalorder %s9, 0
    %p50 = por %p48, %p49
    %p51 = scmp.ne.s32.totalorder %s43, %s45
    %p52 = scmp.eq.s32.totalorder %s14, 1
    %p53 = por %p51, %p52
    %p54 = scmp.ne.s32.totalorder %s45, %s46
    %p55 = scmp.eq.s32.totalorder %s14, 0
    %p56 = por %p54, %p55
    %p57 = scmp.ne.s32.totalorder %s45, %s46
    %p58 = scmp.eq.s32.totalorder %s15, 1
    %p59 = por %p57, %p58
    %p61 = scmp.ne.s32.totalorder %s46, %s60
    %p62 = scmp.eq.s32.totalorder %s15, 0
    %p63 = por %p61, %p62
    %s65 = sadd.s32 %s64, 1
    %p68 = scmp.eq.s32.totalorder %s9, 1
    %p69 = scmp.ne.s32.totalorder %s64, %s66
    %p70 = scmp.eq.s32.totalorder %s9, 0
    %p71 = por %p69, %p70
    %p72 = scmp.ne.s32.totalorder %s64, %s66
    %p73 = scmp.eq.s32.totalorder %s14, 1
    %p74 = por %p72, %p73
    %p75 = scmp.ne.s32.totalorder %s66, %s67
    %p76 = scmp.eq.s32.totalorder %s14, 0
    %p77 = por %p75, %p76
    %p78 = scmp.ne.s32.totalorder %s66, %s67
    %p79 = scmp.eq.s32.totalorder %s15, 1
    %p80 = por %p78, %p79
    %p82 = scmp.ne.s32.totalorder %s67, %s81
    %p83 = scmp.eq.s32.totalorder %s15, 0
    %p84 = por %p82, %p83
    %s85 = ssub.s32 %s9, %s16
    %p86 = scmp.eq.s32.totalorder %s85, 0
    %s88 = sadd.s32 %s87, 1
    %s89 = scalar_select %p86, %s87, %s88
    %p92 = pneg %p86
    %p93 = scmp.eq.s32.totalorder %s9, 1
    %p94 = por %p92, %p93
    %p95 = scmp.ne.s32.totalorder %s87, %s90
    %p96 = scmp.eq.s32.totalorder %s9, 0
    %p97 = por %p95, %p96
    %p98 = scmp.ne.s32.totalorder %s87, %s90
    %p99 = scmp.eq.s32.totalorder %s14, 1
    %p100 = por %p98, %p99
    %p101 = scmp.ne.s32.totalorder %s90, %s91
    %p102 = scmp.eq.s32.totalorder %s14, 0
    %p103 = por %p101, %p102
    %p104 = scmp.ne.s32.totalorder %s90, %s91
    %p105 = scmp.eq.s32.totalorder %s15, 1
    %p106 = por %p104, %p105
    %p108 = scmp.ne.s32.totalorder %s91, %s107
    %p109 = scmp.eq.s32.totalorder %s15, 0
    %p110 = por %p108, %p109
    %p111 = scmp.le.s32.totalorder 1, %s9
    %p112 = scmp.lt.s32.totalorder %s9, 3
    %p113 = pnand %p111, %p112
    %p114 = pneg %p113
    // Predicated region
    $region9: #{_lambda_.19} parent=5 // pred_check
      _
    $region10: #{_lambda_.19} parent=5 // pred_check_branch
      %116 = sbr.rel (%p113) target = $region12
    $region11: #{_lambda_.19} parent=5 // pred_region
      %s117 = ssub.s32 %s9, 1
      // Predicated region
      $region13: #{_lambda_.19} parent=11 // pred_check
        %p118 = pneg %p56
      $region14: #{_lambda_.19} parent=11 // pred_check_branch
        %120 = sbr.rel (%p118) target = $region16
      $region15: #{_lambda_.19} parent=11 // pred_region
        _
      $region16: #{_lambda_.19} parent=11 // pred_fallthru
        _
      // Predicated region
      $region17: #{_lambda_.19} parent=11 // pred_check
        %p121 = pneg %p77
      $region18: #{_lambda_.19} parent=11 // pred_check_branch
        %123 = sbr.rel (%p121) target = $region20
      $region19: #{_lambda_.19} parent=11 // pred_region
        _
      $region20: #{_lambda_.19} parent=11 // pred_fallthru
        _
    $region12: #{_lambda_.19} parent=5 // pred_fallthru
      _
    %p124 = scmp.lt.s32.totalorder %s9, 2
    // Predicated region
    $region21: #{_lambda_.19} parent=5 // pred_check
      %p125 = pneg %p124
    $region22: #{_lambda_.19} parent=5 // pred_check_branch
      %127 = sbr.rel (%p125) target = $region24
    $region23: #{_lambda_.19} parent=5 // pred_region
      // Predicated region
      $region25: #{_lambda_.19} parent=23 // pred_check
        %p128 = pneg %p29
      $region26: #{_lambda_.19} parent=23 // pred_check_branch
        %130 = sbr.rel (%p128) target = $region28
      $region27: #{_lambda_.19} parent=23 // pred_region
        %s131 = smul.u32 128, %s9
        %p132 = scmp.lt.s32.totalorder %s131, 255
        %s133 = scalar_select %p132, %s131, 255
        %s134 = smul.addr %s133, 4
        %s135 = scalar_lea.vmem %s0, %s134
        %s136 = smul.u32 128, %s9
      $region28: #{_lambda_.19} parent=23 // pred_fallthru
        _
    $region24: #{_lambda_.19} parent=5 // pred_fallthru
      _
    %p137 = scmp.le.s32.totalorder 1, %s9
    %p138 = scmp.lt.s32.totalorder %s9, 3
    %p139 = pnand %p137, %p138
    %p140 = pneg %p139
    // Predicated region
    $region29: #{_lambda_.19} parent=5 // pred_check
      _
    $region30: #{_lambda_.19} parent=5 // pred_check_branch
      %142 = sbr.rel (%p139) target = $region32
    $region31: #{_lambda_.19} parent=5 // pred_region
      %s143 = ssub.s32 %s9, 1
      %s144 = smul.u32 128, %s14
      %p145 = scmp.lt.s32.totalorder %s144, 255
      %s146 = scalar_select %p145, %s144, 255
      %s147 = smul.addr %s146, 4
      %s148 = scalar_lea.vmem %s0, %s147
      %p149 = pneg %p35
      %p150 = pneg %p32
      %p151 = pneg %p56
      %p152 = pneg %p53
      %p153 = pneg %p77
      %p154 = pneg %p74
      %p155 = pneg %p103
      %p156 = pneg %p100
      %s157 = smul.u32 128, %s14
      %p158 = scmp.lt.s32.totalorder %s157, 255
      %s159 = scalar_select %p158, %s157, 255
      %s160 = smul.addr %s159, 4
      %s161 = scalar_lea.vmem %s3, %s160
      %s162 = smul.u32 128, %s14
      %p163 = scmp.lt.s32.totalorder %s162, 255
      %s164 = scalar_select %p163, %s162, 255
      %s165 = smul.addr %s164, 4
      %s166 = scalar_lea.vmem %s0, %s165
      %s167 = smul.u32 128, %s14
      %s168 = smul.u32 128, %s14
      %p169 = scmp.lt.s32.totalorder %s168, 255
      %s170 = scalar_select %p169, %s168, 255
      %s171 = smul.addr %s170, 4
      %s172 = scalar_lea.vmem %s3, %s171
      %s173 = smul.u32 128, %s14
      %v174 = vld [vmem:[%s166] sm:$0xf]
      %v175 = vld [vmem:[%s166 + $0x4] sm:$0xf]
      %v176 = vld [vmem:[%s166 + $0x8] sm:$0xf]
      %v177 = vld [vmem:[%s166 + $0xc] sm:$0xf]
      %v178 = vld [vmem:[%s166 + $0x10] sm:$0xf]
      %v179 = vld [vmem:[%s166 + $0x14] sm:$0xf]
      %v180 = vld [vmem:[%s166 + $0x18] sm:$0xf]
      %v181 = vld [vmem:[%s166 + $0x1c] sm:$0xf]
      %v182 = vld [vmem:[%s166 + $0x20] sm:$0xf]
      %v183 = vld [vmem:[%s166 + $0x24] sm:$0xf]
      %v184 = vld [vmem:[%s166 + $0x28] sm:$0xf]
      %v185 = vld [vmem:[%s166 + $0x2c] sm:$0xf]
      %v186 = vld [vmem:[%s166 + $0x30] sm:$0xf]
      %v187 = vld [vmem:[%s166 + $0x34] sm:$0xf]
      %v188 = vld [vmem:[%s166 + $0x38] sm:$0xf]
      %v189 = vld [vmem:[%s166 + $0x3c] sm:$0xf]
      %v190 = vld [vmem:[%s166 + $0x40] sm:$0xf]
      %v191 = vld [vmem:[%s166 + $0x44] sm:$0xf]
      %v192 = vld [vmem:[%s166 + $0x48] sm:$0xf]
      %v193 = vld [vmem:[%s166 + $0x4c] sm:$0xf]
      %v194 = vld [vmem:[%s166 + $0x50] sm:$0xf]
      %v195 = vld [vmem:[%s166 + $0x54] sm:$0xf]
      %v196 = vld [vmem:[%s166 + $0x58] sm:$0xf]
      %v197 = vld [vmem:[%s166 + $0x5c] sm:$0xf]
      %v198 = vld [vmem:[%s166 + $0x60] sm:$0xf]
      %v199 = vld [vmem:[%s166 + $0x64] sm:$0xf]
      %v200 = vld [vmem:[%s166 + $0x68] sm:$0xf]
      %v201 = vld [vmem:[%s166 + $0x6c] sm:$0xf]
      %v202 = vld [vmem:[%s166 + $0x70] sm:$0xf]
      %v203 = vld [vmem:[%s166 + $0x74] sm:$0xf]
      %v204 = vld [vmem:[%s166 + $0x78] sm:$0xf]
      %v205 = vld [vmem:[%s166 + $0x7c] sm:$0xf]
      %v206 = vld [vmem:[%s166 + $0x80] sm:$0xf]
      %v207 = vld [vmem:[%s166 + $0x84] sm:$0xf]
      %v208 = vld [vmem:[%s166 + $0x88] sm:$0xf]
      %v209 = vld [vmem:[%s166 + $0x8c] sm:$0xf]
      %v210 = vld [vmem:[%s166 + $0x90] sm:$0xf]
      %v211 = vld [vmem:[%s166 + $0x94] sm:$0xf]
      %v212 = vld [vmem:[%s166 + $0x98] sm:$0xf]
      %v213 = vld [vmem:[%s166 + $0x9c] sm:$0xf]
      %v214 = vld [vmem:[%s166 + $0xa0] sm:$0xf]
      %v215 = vld [vmem:[%s166 + $0xa4] sm:$0xf]
      %v216 = vld [vmem:[%s166 + $0xa8] sm:$0xf]
      %v217 = vld [vmem:[%s166 + $0xac] sm:$0xf]
      %v218 = vld [vmem:[%s166 + $0xb0] sm:$0xf]
      %v219 = vld [vmem:[%s166 + $0xb4] sm:$0xf]
      %v220 = vld [vmem:[%s166 + $0xb8] sm:$0xf]
      %v221 = vld [vmem:[%s166 + $0xbc] sm:$0xf]
      %v222 = vld [vmem:[%s166 + $0xc0] sm:$0xf]
      %v223 = vld [vmem:[%s166 + $0xc4] sm:$0xf]
      %v224 = vld [vmem:[%s166 + $0xc8] sm:$0xf]
      %v225 = vld [vmem:[%s166 + $0xcc] sm:$0xf]
      %v226 = vld [vmem:[%s166 + $0xd0] sm:$0xf]
      %v227 = vld [vmem:[%s166 + $0xd4] sm:$0xf]
      %v228 = vld [vmem:[%s166 + $0xd8] sm:$0xf]
      %v229 = vld [vmem:[%s166 + $0xdc] sm:$0xf]
      %v230 = vld [vmem:[%s166 + $0xe0] sm:$0xf]
      %v231 = vld [vmem:[%s166 + $0xe4] sm:$0xf]
      %v232 = vld [vmem:[%s166 + $0xe8] sm:$0xf]
      %v233 = vld [vmem:[%s166 + $0xec] sm:$0xf]
      %v234 = vld [vmem:[%s166 + $0xf0] sm:$0xf]
      %v235 = vld [vmem:[%s166 + $0xf4] sm:$0xf]
      %v236 = vld [vmem:[%s166 + $0xf8] sm:$0xf]
      %v237 = vld [vmem:[%s166 + $0xfc] sm:$0xf]
      %v238 = vld [vmem:[%s166 + $0x100] sm:$0xf]
      %v239 = vld [vmem:[%s166 + $0x104] sm:$0xf]
      %v240 = vld [vmem:[%s166 + $0x108] sm:$0xf]
      %v241 = vld [vmem:[%s166 + $0x10c] sm:$0xf]
      %v242 = vld [vmem:[%s166 + $0x110] sm:$0xf]
      %v243 = vld [vmem:[%s166 + $0x114] sm:$0xf]
      %v244 = vld [vmem:[%s166 + $0x118] sm:$0xf]
      %v245 = vld [vmem:[%s166 + $0x11c] sm:$0xf]
      %v246 = vld [vmem:[%s166 + $0x120] sm:$0xf]
      %v247 = vld [vmem:[%s166 + $0x124] sm:$0xf]
      %v248 = vld [vmem:[%s166 + $0x128] sm:$0xf]
      %v249 = vld [vmem:[%s166 + $0x12c] sm:$0xf]
      %v250 = vld [vmem:[%s166 + $0x130] sm:$0xf]
      %v251 = vld [vmem:[%s166 + $0x134] sm:$0xf]
      %v252 = vld [vmem:[%s166 + $0x138] sm:$0xf]
      %v253 = vld [vmem:[%s166 + $0x13c] sm:$0xf]
      %v254 = vld [vmem:[%s166 + $0x140] sm:$0xf]
      %v255 = vld [vmem:[%s166 + $0x144] sm:$0xf]
      %v256 = vld [vmem:[%s166 + $0x148] sm:$0xf]
      %v257 = vld [vmem:[%s166 + $0x14c] sm:$0xf]
      %v258 = vld [vmem:[%s166 + $0x150] sm:$0xf]
      %v259 = vld [vmem:[%s166 + $0x154] sm:$0xf]
      %v260 = vld [vmem:[%s166 + $0x158] sm:$0xf]
      %v261 = vld [vmem:[%s166 + $0x15c] sm:$0xf]
      %v262 = vld [vmem:[%s166 + $0x160] sm:$0xf]
      %v263 = vld [vmem:[%s166 + $0x164] sm:$0xf]
      %v264 = vld [vmem:[%s166 + $0x168] sm:$0xf]
      %v265 = vld [vmem:[%s166 + $0x16c] sm:$0xf]
      %v266 = vld [vmem:[%s166 + $0x170] sm:$0xf]
      %v267 = vld [vmem:[%s166 + $0x174] sm:$0xf]
      %v268 = vld [vmem:[%s166 + $0x178] sm:$0xf]
      %v269 = vld [vmem:[%s166 + $0x17c] sm:$0xf]
      %v270 = vld [vmem:[%s166 + $0x180] sm:$0xf]
      %v271 = vld [vmem:[%s166 + $0x184] sm:$0xf]
      %v272 = vld [vmem:[%s166 + $0x188] sm:$0xf]
      %v273 = vld [vmem:[%s166 + $0x18c] sm:$0xf]
      %v274 = vld [vmem:[%s166 + $0x190] sm:$0xf]
      %v275 = vld [vmem:[%s166 + $0x194] sm:$0xf]
      %v276 = vld [vmem:[%s166 + $0x198] sm:$0xf]
      %v277 = vld [vmem:[%s166 + $0x19c] sm:$0xf]
      %v278 = vld [vmem:[%s166 + $0x1a0] sm:$0xf]
      %v279 = vld [vmem:[%s166 + $0x1a4] sm:$0xf]
      %v280 = vld [vmem:[%s166 + $0x1a8] sm:$0xf]
      %v281 = vld [vmem:[%s166 + $0x1ac] sm:$0xf]
      %v282 = vld [vmem:[%s166 + $0x1b0] sm:$0xf]
      %v283 = vld [vmem:[%s166 + $0x1b4] sm:$0xf]
      %v284 = vld [vmem:[%s166 + $0x1b8] sm:$0xf]
      %v285 = vld [vmem:[%s166 + $0x1bc] sm:$0xf]
      %v286 = vld [vmem:[%s166 + $0x1c0] sm:$0xf]
      %v287 = vld [vmem:[%s166 + $0x1c4] sm:$0xf]
      %v288 = vld [vmem:[%s166 + $0x1c8] sm:$0xf]
      %v289 = vld [vmem:[%s166 + $0x1cc] sm:$0xf]
      %v290 = vld [vmem:[%s166 + $0x1d0] sm:$0xf]
      %v291 = vld [vmem:[%s166 + $0x1d4] sm:$0xf]
      %v292 = vld [vmem:[%s166 + $0x1d8] sm:$0xf]
      %v293 = vld [vmem:[%s166 + $0x1dc] sm:$0xf]
      %v294 = vld [vmem:[%s166 + $0x1e0] sm:$0xf]
      %v295 = vld [vmem:[%s166 + $0x1e4] sm:$0xf]
      %v296 = vld [vmem:[%s166 + $0x1e8] sm:$0xf]
      %v297 = vld [vmem:[%s166 + $0x1ec] sm:$0xf]
      %v298 = vld [vmem:[%s166 + $0x1f0] sm:$0xf]
      %v299 = vld [vmem:[%s166 + $0x1f4] sm:$0xf]
      %v300 = vld [vmem:[%s166 + $0x1f8] sm:$0xf]
      %v301 = vld [vmem:[%s166 + $0x1fc] sm:$0xf]
      %v302 = vld [vmem:[%s1] sm:$0xf]
      %v303 = vld [vmem:[%s1 + $0x4] sm:$0xf]
      %v304 = vld [vmem:[%s1 + $0x8] sm:$0xf]
      %v305 = vld [vmem:[%s1 + $0xc] sm:$0xf]
      %v306 = vld [vmem:[%s1 + $0x10] sm:$0xf]
      %v307 = vld [vmem:[%s1 + $0x14] sm:$0xf]
      %v308 = vld [vmem:[%s1 + $0x18] sm:$0xf]
      %v309 = vld [vmem:[%s1 + $0x1c] sm:$0xf]
      %v310 = vld [vmem:[%s1 + $0x20] sm:$0xf]
      %v311 = vld [vmem:[%s1 + $0x24] sm:$0xf]
      %v312 = vld [vmem:[%s1 + $0x28] sm:$0xf]
      %v313 = vld [vmem:[%s1 + $0x2c] sm:$0xf]
      %v314 = vld [vmem:[%s1 + $0x30] sm:$0xf]
      %v315 = vld [vmem:[%s1 + $0x34] sm:$0xf]
      %v316 = vld [vmem:[%s1 + $0x38] sm:$0xf]
      %v317 = vld [vmem:[%s1 + $0x3c] sm:$0xf]
      %v318 = vld [vmem:[%s2] sm:$0x1]
      %v320 = vperm.slane %v318, 0
      %v450 = vunpack.c.l.b16 %v174
      %v451 = vunpack.c.l.b16 %v175
      %v452 = vunpack.c.l.b16 %v176
      %v453 = vunpack.c.l.b16 %v177
      %v454 = vunpack.c.l.b16 %v178
      %v455 = vunpack.c.l.b16 %v179
      %v456 = vunpack.c.l.b16 %v180
      %v457 = vunpack.c.l.b16 %v181
      %v458 = vunpack.c.l.b16 %v182
      %v459 = vunpack.c.l.b16 %v183
      %v460 = vunpack.c.l.b16 %v184
      %v461 = vunpack.c.l.b16 %v185
      %v462 = vunpack.c.l.b16 %v186
      %v463 = vunpack.c.l.b16 %v187
      %v464 = vunpack.c.l.b16 %v188
      %v465 = vunpack.c.l.b16 %v189
      %v466 = vunpack.c.l.b16 %v190
      %v467 = vunpack.c.l.b16 %v191
      %v468 = vunpack.c.l.b16 %v192
      %v469 = vunpack.c.l.b16 %v193
      %v470 = vunpack.c.l.b16 %v194
      %v471 = vunpack.c.l.b16 %v195
      %v472 = vunpack.c.l.b16 %v196
      %v473 = vunpack.c.l.b16 %v197
      %v474 = vunpack.c.l.b16 %v198
      %v475 = vunpack.c.l.b16 %v199
      %v476 = vunpack.c.l.b16 %v200
      %v477 = vunpack.c.l.b16 %v201
      %v478 = vunpack.c.l.b16 %v202
      %v479 = vunpack.c.l.b16 %v203
      %v480 = vunpack.c.l.b16 %v204
      %v481 = vunpack.c.l.b16 %v205
      %v482 = vunpack.c.l.b16 %v206
      %v483 = vunpack.c.l.b16 %v207
      %v484 = vunpack.c.l.b16 %v208
      %v485 = vunpack.c.l.b16 %v209
      %v486 = vunpack.c.l.b16 %v210
      %v487 = vunpack.c.l.b16 %v211
      %v488 = vunpack.c.l.b16 %v212
      %v489 = vunpack.c.l.b16 %v213
      %v490 = vunpack.c.l.b16 %v214
      %v491 = vunpack.c.l.b16 %v215
      %v492 = vunpack.c.l.b16 %v216
      %v493 = vunpack.c.l.b16 %v217
      %v494 = vunpack.c.l.b16 %v218
      %v495 = vunpack.c.l.b16 %v219
      %v496 = vunpack.c.l.b16 %v220
      %v497 = vunpack.c.l.b16 %v221
      %v498 = vunpack.c.l.b16 %v222
      %v499 = vunpack.c.l.b16 %v223
      %v500 = vunpack.c.l.b16 %v224
      %v501 = vunpack.c.l.b16 %v225
      %v502 = vunpack.c.l.b16 %v226
      %v503 = vunpack.c.l.b16 %v227
      %v504 = vunpack.c.l.b16 %v228
      %v505 = vunpack.c.l.b16 %v229
      %v506 = vunpack.c.l.b16 %v230
      %v507 = vunpack.c.l.b16 %v231
      %v508 = vunpack.c.l.b16 %v232
      %v509 = vunpack.c.l.b16 %v233
      %v510 = vunpack.c.l.b16 %v234
      %v511 = vunpack.c.l.b16 %v235
      %v512 = vunpack.c.l.b16 %v236
      %v513 = vunpack.c.l.b16 %v237
      %v514 = vunpack.c.l.b16 %v238
      %v515 = vunpack.c.l.b16 %v239
      %v516 = vunpack.c.l.b16 %v240
      %v517 = vunpack.c.l.b16 %v241
      %v518 = vunpack.c.l.b16 %v242
      %v519 = vunpack.c.l.b16 %v243
      %v520 = vunpack.c.l.b16 %v244
      %v521 = vunpack.c.l.b16 %v245
      %v522 = vunpack.c.l.b16 %v246
      %v523 = vunpack.c.l.b16 %v247
      %v524 = vunpack.c.l.b16 %v248
      %v525 = vunpack.c.l.b16 %v249
      %v526 = vunpack.c.l.b16 %v250
      %v527 = vunpack.c.l.b16 %v251
      %v528 = vunpack.c.l.b16 %v252
      %v529 = vunpack.c.l.b16 %v253
      %v530 = vunpack.c.l.b16 %v254
      %v531 = vunpack.c.l.b16 %v255
      %v532 = vunpack.c.l.b16 %v256
      %v533 = vunpack.c.l.b16 %v257
      %v534 = vunpack.c.l.b16 %v258
      %v535 = vunpack.c.l.b16 %v259
      %v536 = vunpack.c.l.b16 %v260
      %v537 = vunpack.c.l.b16 %v261
      %v538 = vunpack.c.l.b16 %v262
      %v539 = vunpack.c.l.b16 %v263
      %v540 = vunpack.c.l.b16 %v264
      %v541 = vunpack.c.l.b16 %v265
      %v542 = vunpack.c.l.b16 %v266
      %v543 = vunpack.c.l.b16 %v267
      %v544 = vunpack.c.l.b16 %v268
      %v545 = vunpack.c.l.b16 %v269
      %v546 = vunpack.c.l.b16 %v270
      %v547 = vunpack.c.l.b16 %v271
      %v548 = vunpack.c.l.b16 %v272
      %v549 = vunpack.c.l.b16 %v273
      %v550 = vunpack.c.l.b16 %v274
      %v551 = vunpack.c.l.b16 %v275
      %v552 = vunpack.c.l.b16 %v276
      %v553 = vunpack.c.l.b16 %v277
      %v554 = vunpack.c.l.b16 %v278
      %v555 = vunpack.c.l.b16 %v279
      %v556 = vunpack.c.l.b16 %v280
      %v557 = vunpack.c.l.b16 %v281
      %v558 = vunpack.c.l.b16 %v282
      %v559 = vunpack.c.l.b16 %v283
      %v560 = vunpack.c.l.b16 %v284
      %v561 = vunpack.c.l.b16 %v285
      %v562 = vunpack.c.l.b16 %v286
      %v563 = vunpack.c.l.b16 %v287
      %v564 = vunpack.c.l.b16 %v288
      %v565 = vunpack.c.l.b16 %v289
      %v566 = vunpack.c.l.b16 %v290
      %v567 = vunpack.c.l.b16 %v291
      %v568 = vunpack.c.l.b16 %v292
      %v569 = vunpack.c.l.b16 %v293
      %v570 = vunpack.c.l.b16 %v294
      %v571 = vunpack.c.l.b16 %v295
      %v572 = vunpack.c.l.b16 %v296
      %v573 = vunpack.c.l.b16 %v297
      %v574 = vunpack.c.l.b16 %v298
      %v575 = vunpack.c.l.b16 %v299
      %v576 = vunpack.c.l.b16 %v300
      %v577 = vunpack.c.l.b16 %v301
      %v578 = vpack.c.b16 %v451, %v450
      %v579 = vpack.c.b16 %v453, %v452
      %v580 = vpack.c.b16 %v455, %v454
      %v581 = vpack.c.b16 %v457, %v456
      %v582 = vpack.c.b16 %v459, %v458
      %v583 = vpack.c.b16 %v461, %v460
      %v584 = vpack.c.b16 %v463, %v462
      %v585 = vpack.c.b16 %v465, %v464
      %v586 = vpack.c.b16 %v467, %v466
      %v587 = vpack.c.b16 %v469, %v468
      %v588 = vpack.c.b16 %v471, %v470
      %v589 = vpack.c.b16 %v473, %v472
      %v590 = vpack.c.b16 %v475, %v474
      %v591 = vpack.c.b16 %v477, %v476
      %v592 = vpack.c.b16 %v479, %v478
      %v593 = vpack.c.b16 %v481, %v480
      %v594 = vpack.c.b16 %v483, %v482
      %v595 = vpack.c.b16 %v485, %v484
      %v596 = vpack.c.b16 %v487, %v486
      %v597 = vpack.c.b16 %v489, %v488
      %v598 = vpack.c.b16 %v491, %v490
      %v599 = vpack.c.b16 %v493, %v492
      %v600 = vpack.c.b16 %v495, %v494
      %v601 = vpack.c.b16 %v497, %v496
      %v602 = vpack.c.b16 %v499, %v498
      %v603 = vpack.c.b16 %v501, %v500
      %v604 = vpack.c.b16 %v503, %v502
      %v605 = vpack.c.b16 %v505, %v504
      %v606 = vpack.c.b16 %v507, %v506
      %v607 = vpack.c.b16 %v509, %v508
      %v608 = vpack.c.b16 %v511, %v510
      %v609 = vpack.c.b16 %v513, %v512
      %v610 = vpack.c.b16 %v515, %v514
      %v611 = vpack.c.b16 %v517, %v516
      %v612 = vpack.c.b16 %v519, %v518
      %v613 = vpack.c.b16 %v521, %v520
      %v614 = vpack.c.b16 %v523, %v522
      %v615 = vpack.c.b16 %v525, %v524
      %v616 = vpack.c.b16 %v527, %v526
      %v617 = vpack.c.b16 %v529, %v528
      %v618 = vpack.c.b16 %v531, %v530
      %v619 = vpack.c.b16 %v533, %v532
      %v620 = vpack.c.b16 %v535, %v534
      %v621 = vpack.c.b16 %v537, %v536
      %v622 = vpack.c.b16 %v539, %v538
      %v623 = vpack.c.b16 %v541, %v540
      %v624 = vpack.c.b16 %v543, %v542
      %v625 = vpack.c.b16 %v545, %v544
      %v626 = vpack.c.b16 %v547, %v546
      %v627 = vpack.c.b16 %v549, %v548
      %v628 = vpack.c.b16 %v551, %v550
      %v629 = vpack.c.b16 %v553, %v552
      %v630 = vpack.c.b16 %v555, %v554
      %v631 = vpack.c.b16 %v557, %v556
      %v632 = vpack.c.b16 %v559, %v558
      %v633 = vpack.c.b16 %v561, %v560
      %v634 = vpack.c.b16 %v563, %v562
      %v635 = vpack.c.b16 %v565, %v564
      %v636 = vpack.c.b16 %v567, %v566
      %v637 = vpack.c.b16 %v569, %v568
      %v638 = vpack.c.b16 %v571, %v570
      %v639 = vpack.c.b16 %v573, %v572
      %v640 = vpack.c.b16 %v575, %v574
      %v641 = vpack.c.b16 %v577, %v576
      %v722 = vunpack.c.l.b16 %v302
      %v723 = vunpack.c.l.b16 %v303
      %v724 = vunpack.c.l.b16 %v304
      %v725 = vunpack.c.l.b16 %v305
      %v726 = vunpack.c.l.b16 %v306
      %v727 = vunpack.c.l.b16 %v307
      %v728 = vunpack.c.l.b16 %v308
      %v729 = vunpack.c.l.b16 %v309
      %v730 = vunpack.c.l.b16 %v310
      %v731 = vunpack.c.l.b16 %v311
      %v732 = vunpack.c.l.b16 %v312
      %v733 = vunpack.c.l.b16 %v313
      %v734 = vunpack.c.l.b16 %v314
      %v735 = vunpack.c.l.b16 %v315
      %v736 = vunpack.c.l.b16 %v316
      %v737 = vunpack.c.l.b16 %v317
      %v738 = vpack.c.b16 %v723, %v722
      %v739 = vpack.c.b16 %v725, %v724
      %v740 = vpack.c.b16 %v727, %v726
      %v741 = vpack.c.b16 %v729, %v728
      %v742 = vpack.c.b16 %v731, %v730
      %v743 = vpack.c.b16 %v733, %v732
      %v744 = vpack.c.b16 %v735, %v734
      %v745 = vpack.c.b16 %v737, %v736
      %754 = vmatpush.bf16.msra.mxu0 %v745
      %755 = vmatpush.bf16.msra.mxu0 %v744
      %756 = vmatpush.bf16.msra.mxu0 %v743
      %757 = vmatpush.bf16.msra.mxu0 %v742
      %758 = vmatpush.bf16.msra.mxu0 %v741
      %759 = vmatpush.bf16.msra.mxu0 %v740
      %760 = vmatpush.bf16.msra.mxu0 %v739
      %761 = vmatpush.bf16.msra.mxu0 %v738
      %762 = vmatmul.bf16.gmra.mxu0 %v578
      %v763 = vpop.f32.mrf.mxu0
      %v764 = vadd.f32 %v320, %v763
      %v765 = vpop.f32.mrf.mxu0
      %v766 = vadd.f32 %v320, %v765
      %767 = vmatmul.bf16.gmra.mxu0 %v579
      %v768 = vpop.f32.mrf.mxu0
      %v769 = vadd.f32 %v320, %v768
      %v770 = vpop.f32.mrf.mxu0
      %v771 = vadd.f32 %v320, %v770
      %772 = vmatmul.bf16.gmra.mxu0 %v580
      %v773 = vpop.f32.mrf.mxu0
      %v774 = vadd.f32 %v320, %v773
      %v775 = vpop.f32.mrf.mxu0
      %v776 = vadd.f32 %v320, %v775
      %777 = vmatmul.bf16.gmra.mxu0 %v581
      %v778 = vpop.f32.mrf.mxu0
      %v779 = vadd.f32 %v320, %v778
      %v780 = vpop.f32.mrf.mxu0
      %v781 = vadd.f32 %v320, %v780
      %782 = vmatmul.bf16.gmra.mxu0 %v582
      %v783 = vpop.f32.mrf.mxu0
      %v784 = vadd.f32 %v320, %v783
      %v785 = vpop.f32.mrf.mxu0
      %v786 = vadd.f32 %v320, %v785
      %787 = vmatmul.bf16.gmra.mxu0 %v583
      %v788 = vpop.f32.mrf.mxu0
      %v789 = vadd.f32 %v320, %v788
      %v790 = vpop.f32.mrf.mxu0
      %v791 = vadd.f32 %v320, %v790
      %792 = vmatmul.bf16.gmra.mxu0 %v584
      %v793 = vpop.f32.mrf.mxu0
      %v794 = vadd.f32 %v320, %v793
      %v795 = vpop.f32.mrf.mxu0
      %v796 = vadd.f32 %v320, %v795
      %797 = vmatmul.bf16.gmra.mxu0 %v585
      %v798 = vpop.f32.mrf.mxu0
      %v799 = vadd.f32 %v320, %v798
      %v800 = vpop.f32.mrf.mxu0
      %v801 = vadd.f32 %v320, %v800
      %802 = vmatmul.bf16.gmra.mxu0 %v586
      %v803 = vpop.f32.mrf.mxu0
      %v804 = vadd.f32 %v320, %v803
      %v805 = vpop.f32.mrf.mxu0
      %v806 = vadd.f32 %v320, %v805
      %807 = vmatmul.bf16.gmra.mxu0 %v587
      %v808 = vpop.f32.mrf.mxu0
      %v809 = vadd.f32 %v320, %v808
      %v810 = vpop.f32.mrf.mxu0
      %v811 = vadd.f32 %v320, %v810
      %812 = vmatmul.bf16.gmra.mxu0 %v588
      %v813 = vpop.f32.mrf.mxu0
      %v814 = vadd.f32 %v320, %v813
      %v815 = vpop.f32.mrf.mxu0
      %v816 = vadd.f32 %v320, %v815
      %817 = vmatmul.bf16.gmra.mxu0 %v589
      %v818 = vpop.f32.mrf.mxu0
      %v819 = vadd.f32 %v320, %v818
      %v820 = vpop.f32.mrf.mxu0
      %v821 = vadd.f32 %v320, %v820
      %822 = vmatmul.bf16.gmra.mxu0 %v590
      %v823 = vpop.f32.mrf.mxu0
      %v824 = vadd.f32 %v320, %v823
      %v825 = vpop.f32.mrf.mxu0
      %v826 = vadd.f32 %v320, %v825
      %827 = vmatmul.bf16.gmra.mxu0 %v591
      %v828 = vpop.f32.mrf.mxu0
      %v829 = vadd.f32 %v320, %v828
      %v830 = vpop.f32.mrf.mxu0
      %v831 = vadd.f32 %v320, %v830
      %832 = vmatmul.bf16.gmra.mxu0 %v592
      %v833 = vpop.f32.mrf.mxu0
      %v834 = vadd.f32 %v320, %v833
      %v835 = vpop.f32.mrf.mxu0
      %v836 = vadd.f32 %v320, %v835
      %837 = vmatmul.bf16.gmra.mxu0 %v593
      %v838 = vpop.f32.mrf.mxu0
      %v839 = vadd.f32 %v320, %v838
      %v840 = vpop.f32.mrf.mxu0
      %v841 = vadd.f32 %v320, %v840
      %842 = vmatmul.bf16.gmra.mxu0 %v594
      %v843 = vpop.f32.mrf.mxu0
      %v844 = vadd.f32 %v320, %v843
      %v845 = vpop.f32.mrf.mxu0
      %v846 = vadd.f32 %v320, %v845
      %847 = vmatmul.bf16.gmra.mxu0 %v595
      %v848 = vpop.f32.mrf.mxu0
      %v849 = vadd.f32 %v320, %v848
      %v850 = vpop.f32.mrf.mxu0
      %v851 = vadd.f32 %v320, %v850
      %852 = vmatmul.bf16.gmra.mxu0 %v596
      %v853 = vpop.f32.mrf.mxu0
      %v854 = vadd.f32 %v320, %v853
      %v855 = vpop.f32.mrf.mxu0
      %v856 = vadd.f32 %v320, %v855
      %857 = vmatmul.bf16.gmra.mxu0 %v597
      %v858 = vpop.f32.mrf.mxu0
      %v859 = vadd.f32 %v320, %v858
      %v860 = vpop.f32.mrf.mxu0
      %v861 = vadd.f32 %v320, %v860
      %862 = vmatmul.bf16.gmra.mxu0 %v598
      %v863 = vpop.f32.mrf.mxu0
      %v864 = vadd.f32 %v320, %v863
      %v865 = vpop.f32.mrf.mxu0
      %v866 = vadd.f32 %v320, %v865
      %867 = vmatmul.bf16.gmra.mxu0 %v599
      %v868 = vpop.f32.mrf.mxu0
      %v869 = vadd.f32 %v320, %v868
      %v870 = vpop.f32.mrf.mxu0
      %v871 = vadd.f32 %v320, %v870
      %872 = vmatmul.bf16.gmra.mxu0 %v600
      %v873 = vpop.f32.mrf.mxu0
      %v874 = vadd.f32 %v320, %v873
      %v875 = vpop.f32.mrf.mxu0
      %v876 = vadd.f32 %v320, %v875
      %877 = vmatmul.bf16.gmra.mxu0 %v601
      %v878 = vpop.f32.mrf.mxu0
      %v879 = vadd.f32 %v320, %v878
      %v880 = vpop.f32.mrf.mxu0
      %v881 = vadd.f32 %v320, %v880
      %882 = vmatmul.bf16.gmra.mxu0 %v602
      %v883 = vpop.f32.mrf.mxu0
      %v884 = vadd.f32 %v320, %v883
      %v885 = vpop.f32.mrf.mxu0
      %v886 = vadd.f32 %v320, %v885
      %887 = vmatmul.bf16.gmra.mxu0 %v603
      %v888 = vpop.f32.mrf.mxu0
      %v889 = vadd.f32 %v320, %v888
      %v890 = vpop.f32.mrf.mxu0
      %v891 = vadd.f32 %v320, %v890
      %892 = vmatmul.bf16.gmra.mxu0 %v604
      %v893 = vpop.f32.mrf.mxu0
      %v894 = vadd.f32 %v320, %v893
      %v895 = vpop.f32.mrf.mxu0
      %v896 = vadd.f32 %v320, %v895
      %897 = vmatmul.bf16.gmra.mxu0 %v605
      %v898 = vpop.f32.mrf.mxu0
      %v899 = vadd.f32 %v320, %v898
      %v900 = vpop.f32.mrf.mxu0
      %v901 = vadd.f32 %v320, %v900
      %902 = vmatmul.bf16.gmra.mxu0 %v606
      %v903 = vpop.f32.mrf.mxu0
      %v904 = vadd.f32 %v320, %v903
      %v905 = vpop.f32.mrf.mxu0
      %v906 = vadd.f32 %v320, %v905
      %907 = vmatmul.bf16.gmra.mxu0 %v607
      %v908 = vpop.f32.mrf.mxu0
      %v909 = vadd.f32 %v320, %v908
      %v910 = vpop.f32.mrf.mxu0
      %v911 = vadd.f32 %v320, %v910
      %912 = vmatmul.bf16.gmra.mxu0 %v608
      %v913 = vpop.f32.mrf.mxu0
      %v914 = vadd.f32 %v320, %v913
      %v915 = vpop.f32.mrf.mxu0
      %v916 = vadd.f32 %v320, %v915
      %917 = vmatmul.bf16.gmra.mxu0 %v609
      %v918 = vpop.f32.mrf.mxu0
      %v919 = vadd.f32 %v320, %v918
      %v920 = vpop.f32.mrf.mxu0
      %v921 = vadd.f32 %v320, %v920
      %922 = vmatmul.bf16.gmra.mxu0 %v610
      %v923 = vpop.f32.mrf.mxu0
      %v924 = vadd.f32 %v320, %v923
      %v925 = vpop.f32.mrf.mxu0
      %v926 = vadd.f32 %v320, %v925
      %927 = vmatmul.bf16.gmra.mxu0 %v611
      %v928 = vpop.f32.mrf.mxu0
      %v929 = vadd.f32 %v320, %v928
      %v930 = vpop.f32.mrf.mxu0
      %v931 = vadd.f32 %v320, %v930
      %932 = vmatmul.bf16.gmra.mxu0 %v612
      %v933 = vpop.f32.mrf.mxu0
      %v934 = vadd.f32 %v320, %v933
      %v935 = vpop.f32.mrf.mxu0
      %v936 = vadd.f32 %v320, %v935
      %937 = vmatmul.bf16.gmra.mxu0 %v613
      %v938 = vpop.f32.mrf.mxu0
      %v939 = vadd.f32 %v320, %v938
      %v940 = vpop.f32.mrf.mxu0
      %v941 = vadd.f32 %v320, %v940
      %942 = vmatmul.bf16.gmra.mxu0 %v614
      %v943 = vpop.f32.mrf.mxu0
      %v944 = vadd.f32 %v320, %v943
      %v945 = vpop.f32.mrf.mxu0
      %v946 = vadd.f32 %v320, %v945
      %947 = vmatmul.bf16.gmra.mxu0 %v615
      %v948 = vpop.f32.mrf.mxu0
      %v949 = vadd.f32 %v320, %v948
      %v950 = vpop.f32.mrf.mxu0
      %v951 = vadd.f32 %v320, %v950
      %952 = vmatmul.bf16.gmra.mxu0 %v616
      %v953 = vpop.f32.mrf.mxu0
      %v954 = vadd.f32 %v320, %v953
      %v955 = vpop.f32.mrf.mxu0
      %v956 = vadd.f32 %v320, %v955
      %957 = vmatmul.bf16.gmra.mxu0 %v617
      %v958 = vpop.f32.mrf.mxu0
      %v959 = vadd.f32 %v320, %v958
      %v960 = vpop.f32.mrf.mxu0
      %v961 = vadd.f32 %v320, %v960
      %962 = vmatmul.bf16.gmra.mxu0 %v618
      %v963 = vpop.f32.mrf.mxu0
      %v964 = vadd.f32 %v320, %v963
      %v965 = vpop.f32.mrf.mxu0
      %v966 = vadd.f32 %v320, %v965
      %967 = vmatmul.bf16.gmra.mxu0 %v619
      %v968 = vpop.f32.mrf.mxu0
      %v969 = vadd.f32 %v320, %v968
      %v970 = vpop.f32.mrf.mxu0
      %v971 = vadd.f32 %v320, %v970
      %972 = vmatmul.bf16.gmra.mxu0 %v620
      %v973 = vpop.f32.mrf.mxu0
      %v974 = vadd.f32 %v320, %v973
      %v975 = vpop.f32.mrf.mxu0
      %v976 = vadd.f32 %v320, %v975
      %977 = vmatmul.bf16.gmra.mxu0 %v621
      %v978 = vpop.f32.mrf.mxu0
      %v979 = vadd.f32 %v320, %v978
      %v980 = vpop.f32.mrf.mxu0
      %v981 = vadd.f32 %v320, %v980
      %982 = vmatmul.bf16.gmra.mxu0 %v622
      %v983 = vpop.f32.mrf.mxu0
      %v984 = vadd.f32 %v320, %v983
      %v985 = vpop.f32.mrf.mxu0
      %v986 = vadd.f32 %v320, %v985
      %987 = vmatmul.bf16.gmra.mxu0 %v623
      %v988 = vpop.f32.mrf.mxu0
      %v989 = vadd.f32 %v320, %v988
      %v990 = vpop.f32.mrf.mxu0
      %v991 = vadd.f32 %v320, %v990
      %992 = vmatmul.bf16.gmra.mxu0 %v624
      %v993 = vpop.f32.mrf.mxu0
      %v994 = vadd.f32 %v320, %v993
      %v995 = vpop.f32.mrf.mxu0
      %v996 = vadd.f32 %v320, %v995
      %997 = vmatmul.bf16.gmra.mxu0 %v625
      %v998 = vpop.f32.mrf.mxu0
      %v999 = vadd.f32 %v320, %v998
      %v1000 = vpop.f32.mrf.mxu0
      %v1001 = vadd.f32 %v320, %v1000
      %1002 = vmatmul.bf16.gmra.mxu0 %v626
      %v1003 = vpop.f32.mrf.mxu0
      %v1004 = vadd.f32 %v320, %v1003
      %v1005 = vpop.f32.mrf.mxu0
      %v1006 = vadd.f32 %v320, %v1005
      %1007 = vmatmul.bf16.gmra.mxu0 %v627
      %v1008 = vpop.f32.mrf.mxu0
      %v1009 = vadd.f32 %v320, %v1008
      %v1010 = vpop.f32.mrf.mxu0
      %v1011 = vadd.f32 %v320, %v1010
      %1012 = vmatmul.bf16.gmra.mxu0 %v628
      %v1013 = vpop.f32.mrf.mxu0
      %v1014 = vadd.f32 %v320, %v1013
      %v1015 = vpop.f32.mrf.mxu0
      %v1016 = vadd.f32 %v320, %v1015
      %1017 = vmatmul.bf16.gmra.mxu0 %v629
      %v1018 = vpop.f32.mrf.mxu0
      %v1019 = vadd.f32 %v320, %v1018
      %v1020 = vpop.f32.mrf.mxu0
      %v1021 = vadd.f32 %v320, %v1020
      %1022 = vmatmul.bf16.gmra.mxu0 %v630
      %v1023 = vpop.f32.mrf.mxu0
      %v1024 = vadd.f32 %v320, %v1023
      %v1025 = vpop.f32.mrf.mxu0
      %v1026 = vadd.f32 %v320, %v1025
      %1027 = vmatmul.bf16.gmra.mxu0 %v631
      %v1028 = vpop.f32.mrf.mxu0
      %v1029 = vadd.f32 %v320, %v1028
      %v1030 = vpop.f32.mrf.mxu0
      %v1031 = vadd.f32 %v320, %v1030
      %1032 = vmatmul.bf16.gmra.mxu0 %v632
      %v1033 = vpop.f32.mrf.mxu0
      %v1034 = vadd.f32 %v320, %v1033
      %v1035 = vpop.f32.mrf.mxu0
      %v1036 = vadd.f32 %v320, %v1035
      %1037 = vmatmul.bf16.gmra.mxu0 %v633
      %v1038 = vpop.f32.mrf.mxu0
      %v1039 = vadd.f32 %v320, %v1038
      %v1040 = vpop.f32.mrf.mxu0
      %v1041 = vadd.f32 %v320, %v1040
      %1042 = vmatmul.bf16.gmra.mxu0 %v634
      %v1043 = vpop.f32.mrf.mxu0
      %v1044 = vadd.f32 %v320, %v1043
      %v1045 = vpop.f32.mrf.mxu0
      %v1046 = vadd.f32 %v320, %v1045
      %1047 = vmatmul.bf16.gmra.mxu0 %v635
      %v1048 = vpop.f32.mrf.mxu0
      %v1049 = vadd.f32 %v320, %v1048
      %v1050 = vpop.f32.mrf.mxu0
      %v1051 = vadd.f32 %v320, %v1050
      %1052 = vmatmul.bf16.gmra.mxu0 %v636
      %v1053 = vpop.f32.mrf.mxu0
      %v1054 = vadd.f32 %v320, %v1053
      %v1055 = vpop.f32.mrf.mxu0
      %v1056 = vadd.f32 %v320, %v1055
      %1057 = vmatmul.bf16.gmra.mxu0 %v637
      %v1058 = vpop.f32.mrf.mxu0
      %v1059 = vadd.f32 %v320, %v1058
      %v1060 = vpop.f32.mrf.mxu0
      %v1061 = vadd.f32 %v320, %v1060
      %1062 = vmatmul.bf16.gmra.mxu0 %v638
      %v1063 = vpop.f32.mrf.mxu0
      %v1064 = vadd.f32 %v320, %v1063
      %v1065 = vpop.f32.mrf.mxu0
      %v1066 = vadd.f32 %v320, %v1065
      %1067 = vmatmul.bf16.gmra.mxu0 %v639
      %v1068 = vpop.f32.mrf.mxu0
      %v1069 = vadd.f32 %v320, %v1068
      %v1070 = vpop.f32.mrf.mxu0
      %v1071 = vadd.f32 %v320, %v1070
      %1072 = vmatmul.bf16.gmra.mxu0 %v640
      %v1073 = vpop.f32.mrf.mxu0
      %v1074 = vadd.f32 %v320, %v1073
      %v1075 = vpop.f32.mrf.mxu0
      %v1076 = vadd.f32 %v320, %v1075
      %1077 = vmatmul.bf16.gmra.mxu0 %v641
      %v1078 = vpop.f32.mrf.mxu0
      %v1079 = vadd.f32 %v320, %v1078
      %v1080 = vpop.f32.mrf.mxu0
      %v1081 = vadd.f32 %v320, %v1080
      %1082 = vdwg.mxu0
      %v1083 = vpack.c.bf16 %v764, %v764
      %v1084 = vpack.c.bf16 %v766, %v766
      %v1085 = vpack.c.bf16 %v769, %v769
      %v1086 = vpack.c.bf16 %v771, %v771
      %v1087 = vpack.c.bf16 %v774, %v774
      %v1088 = vpack.c.bf16 %v776, %v776
      %v1089 = vpack.c.bf16 %v779, %v779
      %v1090 = vpack.c.bf16 %v781, %v781
      %v1091 = vpack.c.bf16 %v784, %v784
      %v1092 = vpack.c.bf16 %v786, %v786
      %v1093 = vpack.c.bf16 %v789, %v789
      %v1094 = vpack.c.bf16 %v791, %v791
      %v1095 = vpack.c.bf16 %v794, %v794
      %v1096 = vpack.c.bf16 %v796, %v796
      %v1097 = vpack.c.bf16 %v799, %v799
      %v1098 = vpack.c.bf16 %v801, %v801
      %v1099 = vpack.c.bf16 %v804, %v804
      %v1100 = vpack.c.bf16 %v806, %v806
      %v1101 = vpack.c.bf16 %v809, %v809
      %v1102 = vpack.c.bf16 %v811, %v811
      %v1103 = vpack.c.bf16 %v814, %v814
      %v1104 = vpack.c.bf16 %v816, %v816
      %v1105 = vpack.c.bf16 %v819, %v819
      %v1106 = vpack.c.bf16 %v821, %v821
      %v1107 = vpack.c.bf16 %v824, %v824
      %v1108 = vpack.c.bf16 %v826, %v826
      %v1109 = vpack.c.bf16 %v829, %v829
      %v1110 = vpack.c.bf16 %v831, %v831
      %v1111 = vpack.c.bf16 %v834, %v834
      %v1112 = vpack.c.bf16 %v836, %v836
      %v1113 = vpack.c.bf16 %v839, %v839
      %v1114 = vpack.c.bf16 %v841, %v841
      %v1115 = vpack.c.bf16 %v844, %v844
      %v1116 = vpack.c.bf16 %v846, %v846
      %v1117 = vpack.c.bf16 %v849, %v849
      %v1118 = vpack.c.bf16 %v851, %v851
      %v1119 = vpack.c.bf16 %v854, %v854
      %v1120 = vpack.c.bf16 %v856, %v856
      %v1121 = vpack.c.bf16 %v859, %v859
      %v1122 = vpack.c.bf16 %v861, %v861
      %v1123 = vpack.c.bf16 %v864, %v864
      %v1124 = vpack.c.bf16 %v866, %v866
      %v1125 = vpack.c.bf16 %v869, %v869
      %v1126 = vpack.c.bf16 %v871, %v871
      %v1127 = vpack.c.bf16 %v874, %v874
      %v1128 = vpack.c.bf16 %v876, %v876
      %v1129 = vpack.c.bf16 %v879, %v879
      %v1130 = vpack.c.bf16 %v881, %v881
      %v1131 = vpack.c.bf16 %v884, %v884
      %v1132 = vpack.c.bf16 %v886, %v886
      %v1133 = vpack.c.bf16 %v889, %v889
      %v1134 = vpack.c.bf16 %v891, %v891
      %v1135 = vpack.c.bf16 %v894, %v894
      %v1136 = vpack.c.bf16 %v896, %v896
      %v1137 = vpack.c.bf16 %v899, %v899
      %v1138 = vpack.c.bf16 %v901, %v901
      %v1139 = vpack.c.bf16 %v904, %v904
      %v1140 = vpack.c.bf16 %v906, %v906
      %v1141 = vpack.c.bf16 %v909, %v909
      %v1142 = vpack.c.bf16 %v911, %v911
      %v1143 = vpack.c.bf16 %v914, %v914
      %v1144 = vpack.c.bf16 %v916, %v916
      %v1145 = vpack.c.bf16 %v919, %v919
      %v1146 = vpack.c.bf16 %v921, %v921
      %v1147 = vpack.c.bf16 %v924, %v924
      %v1148 = vpack.c.bf16 %v926, %v926
      %v1149 = vpack.c.bf16 %v929, %v929
      %v1150 = vpack.c.bf16 %v931, %v931
      %v1151 = vpack.c.bf16 %v934, %v934
      %v1152 = vpack.c.bf16 %v936, %v936
      %v1153 = vpack.c.bf16 %v939, %v939
      %v1154 = vpack.c.bf16 %v941, %v941
      %v1155 = vpack.c.bf16 %v944, %v944
      %v1156 = vpack.c.bf16 %v946, %v946
      %v1157 = vpack.c.bf16 %v949, %v949
      %v1158 = vpack.c.bf16 %v951, %v951
      %v1159 = vpack.c.bf16 %v954, %v954
      %v1160 = vpack.c.bf16 %v956, %v956
      %v1161 = vpack.c.bf16 %v959, %v959
      %v1162 = vpack.c.bf16 %v961, %v961
      %v1163 = vpack.c.bf16 %v964, %v964
      %v1164 = vpack.c.bf16 %v966, %v966
      %v1165 = vpack.c.bf16 %v969, %v969
      %v1166 = vpack.c.bf16 %v971, %v971
      %v1167 = vpack.c.bf16 %v974, %v974
      %v1168 = vpack.c.bf16 %v976, %v976
      %v1169 = vpack.c.bf16 %v979, %v979
      %v1170 = vpack.c.bf16 %v981, %v981
      %v1171 = vpack.c.bf16 %v984, %v984
      %v1172 = vpack.c.bf16 %v986, %v986
      %v1173 = vpack.c.bf16 %v989, %v989
      %v1174 = vpack.c.bf16 %v991, %v991
      %v1175 = vpack.c.bf16 %v994, %v994
      %v1176 = vpack.c.bf16 %v996, %v996
      %v1177 = vpack.c.bf16 %v999, %v999
      %v1178 = vpack.c.bf16 %v1001, %v1001
      %v1179 = vpack.c.bf16 %v1004, %v1004
      %v1180 = vpack.c.bf16 %v1006, %v1006
      %v1181 = vpack.c.bf16 %v1009, %v1009
      %v1182 = vpack.c.bf16 %v1011, %v1011
      %v1183 = vpack.c.bf16 %v1014, %v1014
      %v1184 = vpack.c.bf16 %v1016, %v1016
      %v1185 = vpack.c.bf16 %v1019, %v1019
      %v1186 = vpack.c.bf16 %v1021, %v1021
      %v1187 = vpack.c.bf16 %v1024, %v1024
      %v1188 = vpack.c.bf16 %v1026, %v1026
      %v1189 = vpack.c.bf16 %v1029, %v1029
      %v1190 = vpack.c.bf16 %v1031, %v1031
      %v1191 = vpack.c.bf16 %v1034, %v1034
      %v1192 = vpack.c.bf16 %v1036, %v1036
      %v1193 = vpack.c.bf16 %v1039, %v1039
      %v1194 = vpack.c.bf16 %v1041, %v1041
      %v1195 = vpack.c.bf16 %v1044, %v1044
      %v1196 = vpack.c.bf16 %v1046, %v1046
      %v1197 = vpack.c.bf16 %v1049, %v1049
      %v1198 = vpack.c.bf16 %v1051, %v1051
      %v1199 = vpack.c.bf16 %v1054, %v1054
      %v1200 = vpack.c.bf16 %v1056, %v1056
      %v1201 = vpack.c.bf16 %v1059, %v1059
      %v1202 = vpack.c.bf16 %v1061, %v1061
      %v1203 = vpack.c.bf16 %v1064, %v1064
      %v1204 = vpack.c.bf16 %v1066, %v1066
      %v1205 = vpack.c.bf16 %v1069, %v1069
      %v1206 = vpack.c.bf16 %v1071, %v1071
      %v1207 = vpack.c.bf16 %v1074, %v1074
      %v1208 = vpack.c.bf16 %v1076, %v1076
      %v1209 = vpack.c.bf16 %v1079, %v1079
      %v1210 = vpack.c.bf16 %v1081, %v1081
      %1211 = vst [vmem:[%s172] sm:$0xf] %v1083
      %1212 = vst [vmem:[%s172 + $0x4] sm:$0xf] %v1084
      %1213 = vst [vmem:[%s172 + $0x8] sm:$0xf] %v1085
      %1214 = vst [vmem:[%s172 + $0xc] sm:$0xf] %v1086
      %1215 = vst [vmem:[%s172 + $0x10] sm:$0xf] %v1087
      %1216 = vst [vmem:[%s172 + $0x14] sm:$0xf] %v1088
      %1217 = vst [vmem:[%s172 + $0x18] sm:$0xf] %v1089
      %1218 = vst [vmem:[%s172 + $0x1c] sm:$0xf] %v1090
      %1219 = vst [vmem:[%s172 + $0x20] sm:$0xf] %v1091
      %1220 = vst [vmem:[%s172 + $0x24] sm:$0xf] %v1092
      %1221 = vst [vmem:[%s172 + $0x28] sm:$0xf] %v1093
      %1222 = vst [vmem:[%s172 + $0x2c] sm:$0xf] %v1094
      %1223 = vst [vmem:[%s172 + $0x30] sm:$0xf] %v1095
      %1224 = vst [vmem:[%s172 + $0x34] sm:$0xf] %v1096
      %1225 = vst [vmem:[%s172 + $0x38] sm:$0xf] %v1097
      %1226 = vst [vmem:[%s172 + $0x3c] sm:$0xf] %v1098
      %1227 = vst [vmem:[%s172 + $0x40] sm:$0xf] %v1099
      %1228 = vst [vmem:[%s172 + $0x44] sm:$0xf] %v1100
      %1229 = vst [vmem:[%s172 + $0x48] sm:$0xf] %v1101
      %1230 = vst [vmem:[%s172 + $0x4c] sm:$0xf] %v1102
      %1231 = vst [vmem:[%s172 + $0x50] sm:$0xf] %v1103
      %1232 = vst [vmem:[%s172 + $0x54] sm:$0xf] %v1104
      %1233 = vst [vmem:[%s172 + $0x58] sm:$0xf] %v1105
      %1234 = vst [vmem:[%s172 + $0x5c] sm:$0xf] %v1106
      %1235 = vst [vmem:[%s172 + $0x60] sm:$0xf] %v1107
      %1236 = vst [vmem:[%s172 + $0x64] sm:$0xf] %v1108
      %1237 = vst [vmem:[%s172 + $0x68] sm:$0xf] %v1109
      %1238 = vst [vmem:[%s172 + $0x6c] sm:$0xf] %v1110
      %1239 = vst [vmem:[%s172 + $0x70] sm:$0xf] %v1111
      %1240 = vst [vmem:[%s172 + $0x74] sm:$0xf] %v1112
      %1241 = vst [vmem:[%s172 + $0x78] sm:$0xf] %v1113
      %1242 = vst [vmem:[%s172 + $0x7c] sm:$0xf] %v1114
      %1243 = vst [vmem:[%s172 + $0x80] sm:$0xf] %v1115
      %1244 = vst [vmem:[%s172 + $0x84] sm:$0xf] %v1116
      %1245 = vst [vmem:[%s172 + $0x88] sm:$0xf] %v1117
      %1246 = vst [vmem:[%s172 + $0x8c] sm:$0xf] %v1118
      %1247 = vst [vmem:[%s172 + $0x90] sm:$0xf] %v1119
      %1248 = vst [vmem:[%s172 + $0x94] sm:$0xf] %v1120
      %1249 = vst [vmem:[%s172 + $0x98] sm:$0xf] %v1121
      %1250 = vst [vmem:[%s172 + $0x9c] sm:$0xf] %v1122
      %1251 = vst [vmem:[%s172 + $0xa0] sm:$0xf] %v1123
      %1252 = vst [vmem:[%s172 + $0xa4] sm:$0xf] %v1124
      %1253 = vst [vmem:[%s172 + $0xa8] sm:$0xf] %v1125
      %1254 = vst [vmem:[%s172 + $0xac] sm:$0xf] %v1126
      %1255 = vst [vmem:[%s172 + $0xb0] sm:$0xf] %v1127
      %1256 = vst [vmem:[%s172 + $0xb4] sm:$0xf] %v1128
      %1257 = vst [vmem:[%s172 + $0xb8] sm:$0xf] %v1129
      %1258 = vst [vmem:[%s172 + $0xbc] sm:$0xf] %v1130
      %1259 = vst [vmem:[%s172 + $0xc0] sm:$0xf] %v1131
      %1260 = vst [vmem:[%s172 + $0xc4] sm:$0xf] %v1132
      %1261 = vst [vmem:[%s172 + $0xc8] sm:$0xf] %v1133
      %1262 = vst [vmem:[%s172 + $0xcc] sm:$0xf] %v1134
      %1263 = vst [vmem:[%s172 + $0xd0] sm:$0xf] %v1135
      %1264 = vst [vmem:[%s172 + $0xd4] sm:$0xf] %v1136
      %1265 = vst [vmem:[%s172 + $0xd8] sm:$0xf] %v1137
      %1266 = vst [vmem:[%s172 + $0xdc] sm:$0xf] %v1138
      %1267 = vst [vmem:[%s172 + $0xe0] sm:$0xf] %v1139
      %1268 = vst [vmem:[%s172 + $0xe4] sm:$0xf] %v1140
      %1269 = vst [vmem:[%s172 + $0xe8] sm:$0xf] %v1141
      %1270 = vst [vmem:[%s172 + $0xec] sm:$0xf] %v1142
      %1271 = vst [vmem:[%s172 + $0xf0] sm:$0xf] %v1143
      %1272 = vst [vmem:[%s172 + $0xf4] sm:$0xf] %v1144
      %1273 = vst [vmem:[%s172 + $0xf8] sm:$0xf] %v1145
      %1274 = vst [vmem:[%s172 + $0xfc] sm:$0xf] %v1146
      %1275 = vst [vmem:[%s172 + $0x100] sm:$0xf] %v1147
      %1276 = vst [vmem:[%s172 + $0x104] sm:$0xf] %v1148
      %1277 = vst [vmem:[%s172 + $0x108] sm:$0xf] %v1149
      %1278 = vst [vmem:[%s172 + $0x10c] sm:$0xf] %v1150
      %1279 = vst [vmem:[%s172 + $0x110] sm:$0xf] %v1151
      %1280 = vst [vmem:[%s172 + $0x114] sm:$0xf] %v1152
      %1281 = vst [vmem:[%s172 + $0x118] sm:$0xf] %v1153
      %1282 = vst [vmem:[%s172 + $0x11c] sm:$0xf] %v1154
      %1283 = vst [vmem:[%s172 + $0x120] sm:$0xf] %v1155
      %1284 = vst [vmem:[%s172 + $0x124] sm:$0xf] %v1156
      %1285 = vst [vmem:[%s172 + $0x128] sm:$0xf] %v1157
      %1286 = vst [vmem:[%s172 + $0x12c] sm:$0xf] %v1158
      %1287 = vst [vmem:[%s172 + $0x130] sm:$0xf] %v1159
      %1288 = vst [vmem:[%s172 + $0x134] sm:$0xf] %v1160
      %1289 = vst [vmem:[%s172 + $0x138] sm:$0xf] %v1161
      %1290 = vst [vmem:[%s172 + $0x13c] sm:$0xf] %v1162
      %1291 = vst [vmem:[%s172 + $0x140] sm:$0xf] %v1163
      %1292 = vst [vmem:[%s172 + $0x144] sm:$0xf] %v1164
      %1293 = vst [vmem:[%s172 + $0x148] sm:$0xf] %v1165
      %1294 = vst [vmem:[%s172 + $0x14c] sm:$0xf] %v1166
      %1295 = vst [vmem:[%s172 + $0x150] sm:$0xf] %v1167
      %1296 = vst [vmem:[%s172 + $0x154] sm:$0xf] %v1168
      %1297 = vst [vmem:[%s172 + $0x158] sm:$0xf] %v1169
      %1298 = vst [vmem:[%s172 + $0x15c] sm:$0xf] %v1170
      %1299 = vst [vmem:[%s172 + $0x160] sm:$0xf] %v1171
      %1300 = vst [vmem:[%s172 + $0x164] sm:$0xf] %v1172
      %1301 = vst [vmem:[%s172 + $0x168] sm:$0xf] %v1173
      %1302 = vst [vmem:[%s172 + $0x16c] sm:$0xf] %v1174
      %1303 = vst [vmem:[%s172 + $0x170] sm:$0xf] %v1175
      %1304 = vst [vmem:[%s172 + $0x174] sm:$0xf] %v1176
      %1305 = vst [vmem:[%s172 + $0x178] sm:$0xf] %v1177
      %1306 = vst [vmem:[%s172 + $0x17c] sm:$0xf] %v1178
      %1307 = vst [vmem:[%s172 + $0x180] sm:$0xf] %v1179
      %1308 = vst [vmem:[%s172 + $0x184] sm:$0xf] %v1180
      %1309 = vst [vmem:[%s172 + $0x188] sm:$0xf] %v1181
      %1310 = vst [vmem:[%s172 + $0x18c] sm:$0xf] %v1182
      %1311 = vst [vmem:[%s172 + $0x190] sm:$0xf] %v1183
      %1312 = vst [vmem:[%s172 + $0x194] sm:$0xf] %v1184
      %1313 = vst [vmem:[%s172 + $0x198] sm:$0xf] %v1185
      %1314 = vst [vmem:[%s172 + $0x19c] sm:$0xf] %v1186
      %1315 = vst [vmem:[%s172 + $0x1a0] sm:$0xf] %v1187
      %1316 = vst [vmem:[%s172 + $0x1a4] sm:$0xf] %v1188
      %1317 = vst [vmem:[%s172 + $0x1a8] sm:$0xf] %v1189
      %1318 = vst [vmem:[%s172 + $0x1ac] sm:$0xf] %v1190
      %1319 = vst [vmem:[%s172 + $0x1b0] sm:$0xf] %v1191
      %1320 = vst [vmem:[%s172 + $0x1b4] sm:$0xf] %v1192
      %1321 = vst [vmem:[%s172 + $0x1b8] sm:$0xf] %v1193
      %1322 = vst [vmem:[%s172 + $0x1bc] sm:$0xf] %v1194
      %1323 = vst [vmem:[%s172 + $0x1c0] sm:$0xf] %v1195
      %1324 = vst [vmem:[%s172 + $0x1c4] sm:$0xf] %v1196
      %1325 = vst [vmem:[%s172 + $0x1c8] sm:$0xf] %v1197
      %1326 = vst [vmem:[%s172 + $0x1cc] sm:$0xf] %v1198
      %1327 = vst [vmem:[%s172 + $0x1d0] sm:$0xf] %v1199
      %1328 = vst [vmem:[%s172 + $0x1d4] sm:$0xf] %v1200
      %1329 = vst [vmem:[%s172 + $0x1d8] sm:$0xf] %v1201
      %1330 = vst [vmem:[%s172 + $0x1dc] sm:$0xf] %v1202
      %1331 = vst [vmem:[%s172 + $0x1e0] sm:$0xf] %v1203
      %1332 = vst [vmem:[%s172 + $0x1e4] sm:$0xf] %v1204
      %1333 = vst [vmem:[%s172 + $0x1e8] sm:$0xf] %v1205
      %1334 = vst [vmem:[%s172 + $0x1ec] sm:$0xf] %v1206
      %1335 = vst [vmem:[%s172 + $0x1f0] sm:$0xf] %v1207
      %1336 = vst [vmem:[%s172 + $0x1f4] sm:$0xf] %v1208
      %1337 = vst [vmem:[%s172 + $0x1f8] sm:$0xf] %v1209
      %1338 = vst [vmem:[%s172 + $0x1fc] sm:$0xf] %v1210
      %s1339 = smul.u32 128, %s14
      %p1340 = scmp.lt.s32.totalorder %s1339, 255
      %s1341 = scalar_select %p1340, %s1339, 255
      %s1342 = smul.addr %s1341, 4
      %s1343 = scalar_lea.vmem %s3, %s1342
      // Predicated region
      $region33: #{_lambda_.19} parent=31 // pred_check
        %p1344 = pneg %p100
      $region34: #{_lambda_.19} parent=31 // pred_check_branch
        %1346 = sbr.rel (%p1344) target = $region36
      $region35: #{_lambda_.19} parent=31 // pred_region
        %s1347 = smul.u32 128, %s14
      $region36: #{_lambda_.19} parent=31 // pred_fallthru
        _
    $region32: #{_lambda_.19} parent=5 // pred_fallthru
      _
    %p1348 = scmp.le.s32.totalorder 2, %s9
    // Predicated region
    $region37: #{_lambda_.19} parent=5 // pred_check
      %p1349 = pneg %p1348
    $region38: #{_lambda_.19} parent=5 // pred_check_branch
      %1351 = sbr.rel (%p1349) target = $region40
    $region39: #{_lambda_.19} parent=5 // pred_region
      %s1352 = ssub.s32 %s9, 2
      // Predicated region
      $region41: #{_lambda_.19} parent=39 // pred_check
        %p1353 = pneg %p106
      $region42: #{_lambda_.19} parent=39 // pred_check_branch
        %1355 = sbr.rel (%p1353) target = $region44
      $region43: #{_lambda_.19} parent=39 // pred_region
        %s1356 = smul.u32 128, %s15
        %p1357 = scmp.lt.s32.totalorder %s1356, 255
        %s1358 = scalar_select %p1357, %s1356, 255
        %s1359 = smul.addr %s1358, 4
        %s1360 = scalar_lea.vmem %s3, %s1359
      $region44: #{_lambda_.19} parent=39 // pred_fallthru
        _
    $region40: #{_lambda_.19} parent=5 // pred_fallthru
      _
  $region6: #{_lambda_.19} parent=0 // loop_footer
    %s13 = sadd.s32 1, %s9
  $region7: #{_lambda_.19} parent=0 // loop_footer_branch
    %8 = sbr.rel target = $region3
  $region8: #{_lambda_.19} parent=0 // loop_exit
    _

</llo_original>
